<compile_context>
chip_gen: v7x
topology: tpu7x:2x2x1
jax: 0.10.0
libtpu: 0.0.40
codegen_flags: <defaults>
</compile_context>

<pallas_src>
import functools

import jax
import jax.numpy as jnp
from jax.experimental import pallas as pl
from jax.experimental.pallas import tpu as pltpu


def _chunk_kernel(w_ref, bias_ref, x_ref, y_ref, *, chunk, T):
    """One grid step == forward_batch on one batch block.

    w_ref:    (K_pad, C)       bf16  channel-mixing weights (zero-padded rows)
    bias_ref: (K_pad, 1)       f32
    x_ref:    (C, T*chunk)     bf16  block stripe, lanes = (time-major, batch-minor)
    y_ref:    (K_pad, chunk)   f32   block output, batch in lanes (lane-dense)
    """
    # Single long-N MXU matmul with f32 accumulation:
    #   (K_pad, C) @ (C, T*chunk) -> (K_pad, T*chunk),  s[k, t*chunk + b].
    s = jnp.dot(w_ref[...], x_ref[...], preferred_element_type=jnp.float32)
    b = bias_ref[...]  # (K_pad, 1), broadcast over lanes

    # Time mean WITHOUT the old block-diagonal pooling matmul: chunk % 128 == 0
    # so every time step t is a whole lane-aligned slab of s; static slices are
    # pure vreg selection and the reduction is plain VPU adds (pairwise tree ->
    # log2(T) dependency depth).  Bias + ReLU stay in f32 on the VPU.
    parts = [jnp.maximum(s[:, t * chunk:(t + 1) * chunk] + b, 0.0) for t in range(T)]
    while len(parts) > 1:
        nxt = [parts[j] + parts[j + 1] for j in range(0, len(parts) - 1, 2)]
        if len(parts) % 2:
            nxt.append(parts[-1])
        parts = nxt
    y_ref[...] = parts[0] * jnp.float32(1.0 / T)


def _vmem_capacity_bytes():
    """Physical VMEM per TensorCore; conservative (v7x-sized) default if unknown."""
    try:
        cap = getattr(pltpu.get_tpu_info(), "vmem_capacity_bytes", None)
        if cap:
            return int(cap)
    except Exception:
        pass
    return 64 * 1024 * 1024


def _pick_block_batch(B_pad, C, T, K_pad, vmem_cap):
    """Per-step batch block size.

    Must be a multiple of 128 (so in-kernel time slices stay lane-aligned) and
    divide the padded batch.  VMEM accounting counts the double-buffered bf16
    x block, the f32 matmul intermediate, the double-buffered f32 output block
    and the resident params, with 30% headroom against ~30% of physical VMEM.
    On small-VMEM parts (v7x: 64 MiB/TC, 2 TCs) prefer an even number (>=2) of
    grid steps so megacore can split them; on 128 MiB single-TC parts
    (v5e/v6e) prefer the fewest, largest steps.
    """
    budget = int(0.30 * vmem_cap)
    small_vmem = vmem_cap <= 96 * 1024 * 1024  # v7x-like

    def live_bytes(c):
        x_blk = 2 * C * c * T * 2            # bf16 input block, double-buffered
        s_blk = K_pad * c * T * 4            # f32 matmul intermediate
        y_blk = 2 * K_pad * c * 4            # f32 output block, double-buffered
        params = 2 * (K_pad * C * 2 + K_pad * 4)  # resident weights + bias
        return int(1.3 * (x_blk + s_blk + y_blk + params))

    best_any = best_pref = None
    for c in range(128, B_pad + 1, 128):
        if B_pad % c or live_bytes(c) > budget:
            continue
        best_any = c
        nblocks = B_pad // c
        if (not small_vmem) or (nblocks >= 2 and nblocks % 2 == 0):
            best_pref = c
    if best_pref is not None:
        return best_pref
    if best_any is not None:
        return best_any
    # Nothing fits: degrade to the smallest lane-aligned block (never the biggest).
    # TODO(synk): for very large T even chunk=128 can overflow VMEM; the
    #             structural fix is a trailing 'arbitrary' grid axis over T
    #             tiles with a pl.when-initialised accumulator (demo T=128).
    return 128


@functools.partial(jax.jit, static_argnames=("nchunks",))
def chunked_forward(x, w, bias, *, nchunks):
    """Pallas equivalent of ChunkedModule.forward.

    x: (B, C, T) f32, w: (K, C) f32, bias: (1, K) f32  ->  y: (B, K) f32
    ChunkedModule.forward maps forward_batch over batch chunks and concatenates,
    so any chunking yields the identical result; `nchunks` is kept for interface
    parity while the TPU block size is chosen from hardware budgets.
    """
    del nchunks
    B, C, T = x.shape
    K = w.shape[0]
    assert T % 128 == 0, "time axis must be a multiple of the 128-lane width"
    # TODO(synk): general T needs zero-padding plus a validity mask in the mean
    #             (or a trailing T-tile grid axis); not needed at demo shapes.

    K_pad = ((K + 7) // 8) * 8                      # sublane-align only (not 128)
    B_pad = ((B + 127) // 128) * 128                # batch padded to lane width
    vmem_cap = _vmem_capacity_bytes()
    chunk = _pick_block_batch(B_pad, C, T, K_pad, vmem_cap)
    num_blocks = B_pad // chunk

    # Wrapper-side layout plumbing only (single fused transpose+cast pass):
    #  * zero-pad batch to B_pad (padded rows are sliced off below),
    #  * per block, present x channel-major as a contiguous (C, T*chunk) stripe
    #    whose lanes are time-major / batch-minor so the in-kernel time-mean is
    #    lane-aligned vreg adds instead of a pooling matmul,
    #  * bf16 halves HBM traffic; accumulation stays f32 in the kernel.
    x_p = x if B_pad == B else jnp.pad(x, ((0, B_pad - B), (0, 0), (0, 0)))
    x_cm = (x_p.reshape(num_blocks, chunk, C, T)
                .transpose(2, 0, 3, 1)              # (C, nblk, T, chunk)
                .reshape(C, B_pad * T)
                .astype(jnp.bfloat16))
    w_pad = jnp.zeros((K_pad, C), jnp.float32).at[:K, :].set(w).astype(jnp.bfloat16)
    bias_pad = jnp.zeros((K_pad, 1), jnp.float32).at[:K, 0].set(bias[0])

    grid_spec = pltpu.PrefetchScalarGridSpec(
        num_scalar_prefetch=0,
        grid=(num_blocks,),
        in_specs=[
            pl.BlockSpec((K_pad, C), lambda i: (0, 0)),         # weights: resident
            pl.BlockSpec((K_pad, 1), lambda i: (0, 0)),         # bias:    resident
            pl.BlockSpec((C, chunk * T), lambda i: (0, i)),     # one batch block / step
        ],
        out_specs=pl.BlockSpec((K_pad, chunk), lambda i: (0, i)),  # lane-dense output
    )

    # Generation-aware scoped-VMEM limit: ~38 MiB on v7x (64 MiB/TC physical),
    # ~77 MiB on v5e/v6e (128 MiB physical), never below 32 MiB.
    vmem_limit = max(32 * 1024 * 1024, min(int(0.6 * vmem_cap), 96 * 1024 * 1024))

    y_kb = pl.pallas_call(
        functools.partial(_chunk_kernel, chunk=chunk, T=T),
        out_shape=jax.ShapeDtypeStruct((K_pad, B_pad), jnp.float32),
        grid_spec=grid_spec,
        compiler_params=pltpu.CompilerParams(
            dimension_semantics=("parallel",),      # batch blocks are independent
            vmem_limit_bytes=vmem_limit,
        ),
    )(w_pad, bias_pad, x_cm)

    # Tiny (K_pad, B_pad) result: drop the zero padding, transpose in the wrapper.
    return y_kb[:K, :B].T


def _reference(x, w, bias):
    s = jnp.einsum("kc,bct->bkt", w, x) + bias[0][None, :, None]
    return jnp.maximum(s, 0.0).mean(axis=-1)


if __name__ == "__main__":
    # Small shapes consistent with the module: B x C x T time series -> B x K.
    B, C, T, K = 256, 4, 128, 32
    NCHUNKS = 64                          # ChunkedModule's user-facing chunk size

    key = jax.random.PRNGKey(0)
    kx, kw, kb = jax.random.split(key, 3)

    x = jax.random.normal(kx, (B, C, T), dtype=jnp.float32)
    # Deterministic in-script parameter init (synthetic, not a checkpoint load).
    w = jax.random.normal(kw, (K, C), dtype=jnp.float32) / jnp.sqrt(C)
    bias = 0.01 * jax.random.normal(kb, (1, K), dtype=jnp.float32)

    y = jax.block_until_ready(chunked_forward(x, w, bias, nchunks=NCHUNKS))
    assert y.shape == (B, K)

    # x/W stream in bf16 (the f32 intermediate is no longer cast to bf16), so
    # compare against the f32 reference with a bf16-input-sized tolerance.
    y_ref = _reference(x, w, bias)
    assert jnp.allclose(y, y_ref, rtol=2e-2, atol=2e-2), "mismatch vs. reference"

    print("KERNEL_OK")
</pallas_src>

<mosaic_0001>
module attributes {stable_mosaic.version = 11 : i64} {
  func.func @_chunk_kernel(%arg0: i32, %arg1: memref<32x4xbf16, #tpu.memory_space<vmem>>, %arg2: memref<32x1xf32, #tpu.memory_space<vmem>>, %arg3: memref<4x16384xbf16, #tpu.memory_space<vmem>>, %arg4: memref<32x128xf32, #tpu.memory_space<vmem>>) attributes {dimension_semantics = [#tpu.dimension_semantics<parallel>], iteration_bounds = array<i64: 2>, scalar_prefetch = 0 : i64, scratch_operands = 0 : i64, tpu.core_type = #tpu.core_type<tc>, window_params = [{pipeline_mode = #tpu.pipeline_mode<synchronous>, transform_indices = @transform_0, window_bounds = array<i64: 32, 4>}, {pipeline_mode = #tpu.pipeline_mode<synchronous>, transform_indices = @transform_1, window_bounds = array<i64: 32, 1>}, {transform_indices = @transform_2, window_bounds = array<i64: 4, 16384>}, {transform_indices = @transform_3, window_bounds = array<i64: 32, 128>}]} {
    %c0 = arith.constant 0 : index
    %c0_0 = arith.constant 0 : index
    %0 = vector.load %arg1[%c0, %c0_0] : memref<32x4xbf16, #tpu.memory_space<vmem>>, vector<32x4xbf16>
    %c0_1 = arith.constant 0 : index
    %c0_2 = arith.constant 0 : index
    %1 = vector.load %arg3[%c0_1, %c0_2] : memref<4x16384xbf16, #tpu.memory_space<vmem>>, vector<4x16384xbf16>
    %cst = arith.constant dense<0.000000e+00> : vector<32x16384xf32>
    %2 = tpu.matmul %0, %1, %cst {dimension_numbers = #tpu.dot_dimension_numbers<[1], [0], [0], [1], [0, 0, 1, 1], [], []>} : vector<32x4xbf16>, vector<4x16384xbf16>, vector<32x16384xf32> -> vector<32x16384xf32>
    %c0_3 = arith.constant 0 : index
    %c0_4 = arith.constant 0 : index
    %3 = vector.load %arg2[%c0_3, %c0_4] : memref<32x1xf32, #tpu.memory_space<vmem>>, vector<32x1xf32>
    %4 = vector.extract_strided_slice %2 {offsets = [0, 0], sizes = [32, 128], strides = [1, 1]} : vector<32x16384xf32> to vector<32x128xf32>
    %5 = vector.broadcast %3 : vector<32x1xf32> to vector<32x128xf32>
    %6 = arith.addf %4, %5 : vector<32x128xf32>
    %cst_5 = arith.constant 0.000000e+00 : f32
    %7 = vector.broadcast %cst_5 : f32 to vector<32x128xf32>
    %8 = arith.maximumf %6, %7 : vector<32x128xf32>
    %9 = vector.extract_strided_slice %2 {offsets = [0, 128], sizes = [32, 128], strides = [1, 1]} : vector<32x16384xf32> to vector<32x128xf32>
    %10 = vector.broadcast %3 : vector<32x1xf32> to vector<32x128xf32>
    %11 = arith.addf %9, %10 : vector<32x128xf32>
    %cst_6 = arith.constant 0.000000e+00 : f32
    %12 = vector.broadcast %cst_6 : f32 to vector<32x128xf32>
    %13 = arith.maximumf %11, %12 : vector<32x128xf32>
    %14 = vector.extract_strided_slice %2 {offsets = [0, 256], sizes = [32, 128], strides = [1, 1]} : vector<32x16384xf32> to vector<32x128xf32>
    %15 = vector.broadcast %3 : vector<32x1xf32> to vector<32x128xf32>
    %16 = arith.addf %14, %15 : vector<32x128xf32>
    %cst_7 = arith.constant 0.000000e+00 : f32
    %17 = vector.broadcast %cst_7 : f32 to vector<32x128xf32>
    %18 = arith.maximumf %16, %17 : vector<32x128xf32>
    %19 = vector.extract_strided_slice %2 {offsets = [0, 384], sizes = [32, 128], strides = [1, 1]} : vector<32x16384xf32> to vector<32x128xf32>
    %20 = vector.broadcast %3 : vector<32x1xf32> to vector<32x128xf32>
    %21 = arith.addf %19, %20 : vector<32x128xf32>
    %cst_8 = arith.constant 0.000000e+00 : f32
    %22 = vector.broadcast %cst_8 : f32 to vector<32x128xf32>
    %23 = arith.maximumf %21, %22 : vector<32x128xf32>
    %24 = vector.extract_strided_slice %2 {offsets = [0, 512], sizes = [32, 128], strides = [1, 1]} : vector<32x16384xf32> to vector<32x128xf32>
    %25 = vector.broadcast %3 : vector<32x1xf32> to vector<32x128xf32>
    %26 = arith.addf %24, %25 : vector<32x128xf32>
    %cst_9 = arith.constant 0.000000e+00 : f32
    %27 = vector.broadcast %cst_9 : f32 to vector<32x128xf32>
    %28 = arith.maximumf %26, %27 : vector<32x128xf32>
    %29 = vector.extract_strided_slice %2 {offsets = [0, 640], sizes = [32, 128], strides = [1, 1]} : vector<32x16384xf32> to vector<32x128xf32>
    %30 = vector.broadcast %3 : vector<32x1xf32> to vector<32x128xf32>
    %31 = arith.addf %29, %30 : vector<32x128xf32>
    %cst_10 = arith.constant 0.000000e+00 : f32
    %32 = vector.broadcast %cst_10 : f32 to vector<32x128xf32>
    %33 = arith.maximumf %31, %32 : vector<32x128xf32>
    %34 = vector.extract_strided_slice %2 {offsets = [0, 768], sizes = [32, 128], strides = [1, 1]} : vector<32x16384xf32> to vector<32x128xf32>
    %35 = vector.broadcast %3 : vector<32x1xf32> to vector<32x128xf32>
    %36 = arith.addf %34, %35 : vector<32x128xf32>
    %cst_11 = arith.constant 0.000000e+00 : f32
    %37 = vector.broadcast %cst_11 : f32 to vector<32x128xf32>
    %38 = arith.maximumf %36, %37 : vector<32x128xf32>
    %39 = vector.extract_strided_slice %2 {offsets = [0, 896], sizes = [32, 128], strides = [1, 1]} : vector<32x16384xf32> to vector<32x128xf32>
    %40 = vector.broadcast %3 : vector<32x1xf32> to vector<32x128xf32>
    %41 = arith.addf %39, %40 : vector<32x128xf32>
    %cst_12 = arith.constant 0.000000e+00 : f32
    %42 = vector.broadcast %cst_12 : f32 to vector<32x128xf32>
    %43 = arith.maximumf %41, %42 : vector<32x128xf32>
    %44 = vector.extract_strided_slice %2 {offsets = [0, 1024], sizes = [32, 128], strides = [1, 1]} : vector<32x16384xf32> to vector<32x128xf32>
    %45 = vector.broadcast %3 : vector<32x1xf32> to vector<32x128xf32>
    %46 = arith.addf %44, %45 : vector<32x128xf32>
    %cst_13 = arith.constant 0.000000e+00 : f32
    %47 = vector.broadcast %cst_13 : f32 to vector<32x128xf32>
    %48 = arith.maximumf %46, %47 : vector<32x128xf32>
    %49 = vector.extract_strided_slice %2 {offsets = [0, 1152], sizes = [32, 128], strides = [1, 1]} : vector<32x16384xf32> to vector<32x128xf32>
    %50 = vector.broadcast %3 : vector<32x1xf32> to vector<32x128xf32>
    %51 = arith.addf %49, %50 : vector<32x128xf32>
    %cst_14 = arith.constant 0.000000e+00 : f32
    %52 = vector.broadcast %cst_14 : f32 to vector<32x128xf32>
    %53 = arith.maximumf %51, %52 : vector<32x128xf32>
    %54 = vector.extract_strided_slice %2 {offsets = [0, 1280], sizes = [32, 128], strides = [1, 1]} : vector<32x16384xf32> to vector<32x128xf32>
    %55 = vector.broadcast %3 : vector<32x1xf32> to vector<32x128xf32>
    %56 = arith.addf %54, %55 : vector<32x128xf32>
    %cst_15 = arith.constant 0.000000e+00 : f32
    %57 = vector.broadcast %cst_15 : f32 to vector<32x128xf32>
    %58 = arith.maximumf %56, %57 : vector<32x128xf32>
    %59 = vector.extract_strided_slice %2 {offsets = [0, 1408], sizes = [32, 128], strides = [1, 1]} : vector<32x16384xf32> to vector<32x128xf32>
    %60 = vector.broadcast %3 : vector<32x1xf32> to vector<32x128xf32>
    %61 = arith.addf %59, %60 : vector<32x128xf32>
    %cst_16 = arith.constant 0.000000e+00 : f32
    %62 = vector.broadcast %cst_16 : f32 to vector<32x128xf32>
    %63 = arith.maximumf %61, %62 : vector<32x128xf32>
    %64 = vector.extract_strided_slice %2 {offsets = [0, 1536], sizes = [32, 128], strides = [1, 1]} : vector<32x16384xf32> to vector<32x128xf32>
    %65 = vector.broadcast %3 : vector<32x1xf32> to vector<32x128xf32>
    %66 = arith.addf %64, %65 : vector<32x128xf32>
    %cst_17 = arith.constant 0.000000e+00 : f32
    %67 = vector.broadcast %cst_17 : f32 to vector<32x128xf32>
    %68 = arith.maximumf %66, %67 : vector<32x128xf32>
    %69 = vector.extract_strided_slice %2 {offsets = [0, 1664], sizes = [32, 128], strides = [1, 1]} : vector<32x16384xf32> to vector<32x128xf32>
    %70 = vector.broadcast %3 : vector<32x1xf32> to vector<32x128xf32>
    %71 = arith.addf %69, %70 : vector<32x128xf32>
    %cst_18 = arith.constant 0.000000e+00 : f32
    %72 = vector.broadcast %cst_18 : f32 to vector<32x128xf32>
    %73 = arith.maximumf %71, %72 : vector<32x128xf32>
    %74 = vector.extract_strided_slice %2 {offsets = [0, 1792], sizes = [32, 128], strides = [1, 1]} : vector<32x16384xf32> to vector<32x128xf32>
    %75 = vector.broadcast %3 : vector<32x1xf32> to vector<32x128xf32>
    %76 = arith.addf %74, %75 : vector<32x128xf32>
    %cst_19 = arith.constant 0.000000e+00 : f32
    %77 = vector.broadcast %cst_19 : f32 to vector<32x128xf32>
    %78 = arith.maximumf %76, %77 : vector<32x128xf32>
    %79 = vector.extract_strided_slice %2 {offsets = [0, 1920], sizes = [32, 128], strides = [1, 1]} : vector<32x16384xf32> to vector<32x128xf32>
    %80 = vector.broadcast %3 : vector<32x1xf32> to vector<32x128xf32>
    %81 = arith.addf %79, %80 : vector<32x128xf32>
    %cst_20 = arith.constant 0.000000e+00 : f32
    %82 = vector.broadcast %cst_20 : f32 to vector<32x128xf32>
    %83 = arith.maximumf %81, %82 : vector<32x128xf32>
    %84 = vector.extract_strided_slice %2 {offsets = [0, 2048], sizes = [32, 128], strides = [1, 1]} : vector<32x16384xf32> to vector<32x128xf32>
    %85 = vector.broadcast %3 : vector<32x1xf32> to vector<32x128xf32>
    %86 = arith.addf %84, %85 : vector<32x128xf32>
    %cst_21 = arith.constant 0.000000e+00 : f32
    %87 = vector.broadcast %cst_21 : f32 to vector<32x128xf32>
    %88 = arith.maximumf %86, %87 : vector<32x128xf32>
    %89 = vector.extract_strided_slice %2 {offsets = [0, 2176], sizes = [32, 128], strides = [1, 1]} : vector<32x16384xf32> to vector<32x128xf32>
    %90 = vector.broadcast %3 : vector<32x1xf32> to vector<32x128xf32>
    %91 = arith.addf %89, %90 : vector<32x128xf32>
    %cst_22 = arith.constant 0.000000e+00 : f32
    %92 = vector.broadcast %cst_22 : f32 to vector<32x128xf32>
    %93 = arith.maximumf %91, %92 : vector<32x128xf32>
    %94 = vector.extract_strided_slice %2 {offsets = [0, 2304], sizes = [32, 128], strides = [1, 1]} : vector<32x16384xf32> to vector<32x128xf32>
    %95 = vector.broadcast %3 : vector<32x1xf32> to vector<32x128xf32>
    %96 = arith.addf %94, %95 : vector<32x128xf32>
    %cst_23 = arith.constant 0.000000e+00 : f32
    %97 = vector.broadcast %cst_23 : f32 to vector<32x128xf32>
    %98 = arith.maximumf %96, %97 : vector<32x128xf32>
    %99 = vector.extract_strided_slice %2 {offsets = [0, 2432], sizes = [32, 128], strides = [1, 1]} : vector<32x16384xf32> to vector<32x128xf32>
    %100 = vector.broadcast %3 : vector<32x1xf32> to vector<32x128xf32>
    %101 = arith.addf %99, %100 : vector<32x128xf32>
    %cst_24 = arith.constant 0.000000e+00 : f32
    %102 = vector.broadcast %cst_24 : f32 to vector<32x128xf32>
    %103 = arith.maximumf %101, %102 : vector<32x128xf32>
    %104 = vector.extract_strided_slice %2 {offsets = [0, 2560], sizes = [32, 128], strides = [1, 1]} : vector<32x16384xf32> to vector<32x128xf32>
    %105 = vector.broadcast %3 : vector<32x1xf32> to vector<32x128xf32>
    %106 = arith.addf %104, %105 : vector<32x128xf32>
    %cst_25 = arith.constant 0.000000e+00 : f32
    %107 = vector.broadcast %cst_25 : f32 to vector<32x128xf32>
    %108 = arith.maximumf %106, %107 : vector<32x128xf32>
    %109 = vector.extract_strided_slice %2 {offsets = [0, 2688], sizes = [32, 128], strides = [1, 1]} : vector<32x16384xf32> to vector<32x128xf32>
    %110 = vector.broadcast %3 : vector<32x1xf32> to vector<32x128xf32>
    %111 = arith.addf %109, %110 : vector<32x128xf32>
    %cst_26 = arith.constant 0.000000e+00 : f32
    %112 = vector.broadcast %cst_26 : f32 to vector<32x128xf32>
    %113 = arith.maximumf %111, %112 : vector<32x128xf32>
    %114 = vector.extract_strided_slice %2 {offsets = [0, 2816], sizes = [32, 128], strides = [1, 1]} : vector<32x16384xf32> to vector<32x128xf32>
    %115 = vector.broadcast %3 : vector<32x1xf32> to vector<32x128xf32>
    %116 = arith.addf %114, %115 : vector<32x128xf32>
    %cst_27 = arith.constant 0.000000e+00 : f32
    %117 = vector.broadcast %cst_27 : f32 to vector<32x128xf32>
    %118 = arith.maximumf %116, %117 : vector<32x128xf32>
    %119 = vector.extract_strided_slice %2 {offsets = [0, 2944], sizes = [32, 128], strides = [1, 1]} : vector<32x16384xf32> to vector<32x128xf32>
    %120 = vector.broadcast %3 : vector<32x1xf32> to vector<32x128xf32>
    %121 = arith.addf %119, %120 : vector<32x128xf32>
    %cst_28 = arith.constant 0.000000e+00 : f32
    %122 = vector.broadcast %cst_28 : f32 to vector<32x128xf32>
    %123 = arith.maximumf %121, %122 : vector<32x128xf32>
    %124 = vector.extract_strided_slice %2 {offsets = [0, 3072], sizes = [32, 128], strides = [1, 1]} : vector<32x16384xf32> to vector<32x128xf32>
    %125 = vector.broadcast %3 : vector<32x1xf32> to vector<32x128xf32>
    %126 = arith.addf %124, %125 : vector<32x128xf32>
    %cst_29 = arith.constant 0.000000e+00 : f32
    %127 = vector.broadcast %cst_29 : f32 to vector<32x128xf32>
    %128 = arith.maximumf %126, %127 : vector<32x128xf32>
    %129 = vector.extract_strided_slice %2 {offsets = [0, 3200], sizes = [32, 128], strides = [1, 1]} : vector<32x16384xf32> to vector<32x128xf32>
    %130 = vector.broadcast %3 : vector<32x1xf32> to vector<32x128xf32>
    %131 = arith.addf %129, %130 : vector<32x128xf32>
    %cst_30 = arith.constant 0.000000e+00 : f32
    %132 = vector.broadcast %cst_30 : f32 to vector<32x128xf32>
    %133 = arith.maximumf %131, %132 : vector<32x128xf32>
    %134 = vector.extract_strided_slice %2 {offsets = [0, 3328], sizes = [32, 128], strides = [1, 1]} : vector<32x16384xf32> to vector<32x128xf32>
    %135 = vector.broadcast %3 : vector<32x1xf32> to vector<32x128xf32>
    %136 = arith.addf %134, %135 : vector<32x128xf32>
    %cst_31 = arith.constant 0.000000e+00 : f32
    %137 = vector.broadcast %cst_31 : f32 to vector<32x128xf32>
    %138 = arith.maximumf %136, %137 : vector<32x128xf32>
    %139 = vector.extract_strided_slice %2 {offsets = [0, 3456], sizes = [32, 128], strides = [1, 1]} : vector<32x16384xf32> to vector<32x128xf32>
    %140 = vector.broadcast %3 : vector<32x1xf32> to vector<32x128xf32>
    %141 = arith.addf %139, %140 : vector<32x128xf32>
    %cst_32 = arith.constant 0.000000e+00 : f32
    %142 = vector.broadcast %cst_32 : f32 to vector<32x128xf32>
    %143 = arith.maximumf %141, %142 : vector<32x128xf32>
    %144 = vector.extract_strided_slice %2 {offsets = [0, 3584], sizes = [32, 128], strides = [1, 1]} : vector<32x16384xf32> to vector<32x128xf32>
    %145 = vector.broadcast %3 : vector<32x1xf32> to vector<32x128xf32>
    %146 = arith.addf %144, %145 : vector<32x128xf32>
    %cst_33 = arith.constant 0.000000e+00 : f32
    %147 = vector.broadcast %cst_33 : f32 to vector<32x128xf32>
    %148 = arith.maximumf %146, %147 : vector<32x128xf32>
    %149 = vector.extract_strided_slice %2 {offsets = [0, 3712], sizes = [32, 128], strides = [1, 1]} : vector<32x16384xf32> to vector<32x128xf32>
    %150 = vector.broadcast %3 : vector<32x1xf32> to vector<32x128xf32>
    %151 = arith.addf %149, %150 : vector<32x128xf32>
    %cst_34 = arith.constant 0.000000e+00 : f32
    %152 = vector.broadcast %cst_34 : f32 to vector<32x128xf32>
    %153 = arith.maximumf %151, %152 : vector<32x128xf32>
    %154 = vector.extract_strided_slice %2 {offsets = [0, 3840], sizes = [32, 128], strides = [1, 1]} : vector<32x16384xf32> to vector<32x128xf32>
    %155 = vector.broadcast %3 : vector<32x1xf32> to vector<32x128xf32>
    %156 = arith.addf %154, %155 : vector<32x128xf32>
    %cst_35 = arith.constant 0.000000e+00 : f32
    %157 = vector.broadcast %cst_35 : f32 to vector<32x128xf32>
    %158 = arith.maximumf %156, %157 : vector<32x128xf32>
    %159 = vector.extract_strided_slice %2 {offsets = [0, 3968], sizes = [32, 128], strides = [1, 1]} : vector<32x16384xf32> to vector<32x128xf32>
    %160 = vector.broadcast %3 : vector<32x1xf32> to vector<32x128xf32>
    %161 = arith.addf %159, %160 : vector<32x128xf32>
    %cst_36 = arith.constant 0.000000e+00 : f32
    %162 = vector.broadcast %cst_36 : f32 to vector<32x128xf32>
    %163 = arith.maximumf %161, %162 : vector<32x128xf32>
    %164 = vector.extract_strided_slice %2 {offsets = [0, 4096], sizes = [32, 128], strides = [1, 1]} : vector<32x16384xf32> to vector<32x128xf32>
    %165 = vector.broadcast %3 : vector<32x1xf32> to vector<32x128xf32>
    %166 = arith.addf %164, %165 : vector<32x128xf32>
    %cst_37 = arith.constant 0.000000e+00 : f32
    %167 = vector.broadcast %cst_37 : f32 to vector<32x128xf32>
    %168 = arith.maximumf %166, %167 : vector<32x128xf32>
    %169 = vector.extract_strided_slice %2 {offsets = [0, 4224], sizes = [32, 128], strides = [1, 1]} : vector<32x16384xf32> to vector<32x128xf32>
    %170 = vector.broadcast %3 : vector<32x1xf32> to vector<32x128xf32>
    %171 = arith.addf %169, %170 : vector<32x128xf32>
    %cst_38 = arith.constant 0.000000e+00 : f32
    %172 = vector.broadcast %cst_38 : f32 to vector<32x128xf32>
    %173 = arith.maximumf %171, %172 : vector<32x128xf32>
    %174 = vector.extract_strided_slice %2 {offsets = [0, 4352], sizes = [32, 128], strides = [1, 1]} : vector<32x16384xf32> to vector<32x128xf32>
    %175 = vector.broadcast %3 : vector<32x1xf32> to vector<32x128xf32>
    %176 = arith.addf %174, %175 : vector<32x128xf32>
    %cst_39 = arith.constant 0.000000e+00 : f32
    %177 = vector.broadcast %cst_39 : f32 to vector<32x128xf32>
    %178 = arith.maximumf %176, %177 : vector<32x128xf32>
    %179 = vector.extract_strided_slice %2 {offsets = [0, 4480], sizes = [32, 128], strides = [1, 1]} : vector<32x16384xf32> to vector<32x128xf32>
    %180 = vector.broadcast %3 : vector<32x1xf32> to vector<32x128xf32>
    %181 = arith.addf %179, %180 : vector<32x128xf32>
    %cst_40 = arith.constant 0.000000e+00 : f32
    %182 = vector.broadcast %cst_40 : f32 to vector<32x128xf32>
    %183 = arith.maximumf %181, %182 : vector<32x128xf32>
    %184 = vector.extract_strided_slice %2 {offsets = [0, 4608], sizes = [32, 128], strides = [1, 1]} : vector<32x16384xf32> to vector<32x128xf32>
    %185 = vector.broadcast %3 : vector<32x1xf32> to vector<32x128xf32>
    %186 = arith.addf %184, %185 : vector<32x128xf32>
    %cst_41 = arith.constant 0.000000e+00 : f32
    %187 = vector.broadcast %cst_41 : f32 to vector<32x128xf32>
    %188 = arith.maximumf %186, %187 : vector<32x128xf32>
    %189 = vector.extract_strided_slice %2 {offsets = [0, 4736], sizes = [32, 128], strides = [1, 1]} : vector<32x16384xf32> to vector<32x128xf32>
    %190 = vector.broadcast %3 : vector<32x1xf32> to vector<32x128xf32>
    %191 = arith.addf %189, %190 : vector<32x128xf32>
    %cst_42 = arith.constant 0.000000e+00 : f32
    %192 = vector.broadcast %cst_42 : f32 to vector<32x128xf32>
    %193 = arith.maximumf %191, %192 : vector<32x128xf32>
    %194 = vector.extract_strided_slice %2 {offsets = [0, 4864], sizes = [32, 128], strides = [1, 1]} : vector<32x16384xf32> to vector<32x128xf32>
    %195 = vector.broadcast %3 : vector<32x1xf32> to vector<32x128xf32>
    %196 = arith.addf %194, %195 : vector<32x128xf32>
    %cst_43 = arith.constant 0.000000e+00 : f32
    %197 = vector.broadcast %cst_43 : f32 to vector<32x128xf32>
    %198 = arith.maximumf %196, %197 : vector<32x128xf32>
    %199 = vector.extract_strided_slice %2 {offsets = [0, 4992], sizes = [32, 128], strides = [1, 1]} : vector<32x16384xf32> to vector<32x128xf32>
    %200 = vector.broadcast %3 : vector<32x1xf32> to vector<32x128xf32>
    %201 = arith.addf %199, %200 : vector<32x128xf32>
    %cst_44 = arith.constant 0.000000e+00 : f32
    %202 = vector.broadcast %cst_44 : f32 to vector<32x128xf32>
    %203 = arith.maximumf %201, %202 : vector<32x128xf32>
    %204 = vector.extract_strided_slice %2 {offsets = [0, 5120], sizes = [32, 128], strides = [1, 1]} : vector<32x16384xf32> to vector<32x128xf32>
    %205 = vector.broadcast %3 : vector<32x1xf32> to vector<32x128xf32>
    %206 = arith.addf %204, %205 : vector<32x128xf32>
    %cst_45 = arith.constant 0.000000e+00 : f32
    %207 = vector.broadcast %cst_45 : f32 to vector<32x128xf32>
    %208 = arith.maximumf %206, %207 : vector<32x128xf32>
    %209 = vector.extract_strided_slice %2 {offsets = [0, 5248], sizes = [32, 128], strides = [1, 1]} : vector<32x16384xf32> to vector<32x128xf32>
    %210 = vector.broadcast %3 : vector<32x1xf32> to vector<32x128xf32>
    %211 = arith.addf %209, %210 : vector<32x128xf32>
    %cst_46 = arith.constant 0.000000e+00 : f32
    %212 = vector.broadcast %cst_46 : f32 to vector<32x128xf32>
    %213 = arith.maximumf %211, %212 : vector<32x128xf32>
    %214 = vector.extract_strided_slice %2 {offsets = [0, 5376], sizes = [32, 128], strides = [1, 1]} : vector<32x16384xf32> to vector<32x128xf32>
    %215 = vector.broadcast %3 : vector<32x1xf32> to vector<32x128xf32>
    %216 = arith.addf %214, %215 : vector<32x128xf32>
    %cst_47 = arith.constant 0.000000e+00 : f32
    %217 = vector.broadcast %cst_47 : f32 to vector<32x128xf32>
    %218 = arith.maximumf %216, %217 : vector<32x128xf32>
    %219 = vector.extract_strided_slice %2 {offsets = [0, 5504], sizes = [32, 128], strides = [1, 1]} : vector<32x16384xf32> to vector<32x128xf32>
    %220 = vector.broadcast %3 : vector<32x1xf32> to vector<32x128xf32>
    %221 = arith.addf %219, %220 : vector<32x128xf32>
    %cst_48 = arith.constant 0.000000e+00 : f32
    %222 = vector.broadcast %cst_48 : f32 to vector<32x128xf32>
    %223 = arith.maximumf %221, %222 : vector<32x128xf32>
    %224 = vector.extract_strided_slice %2 {offsets = [0, 5632], sizes = [32, 128], strides = [1, 1]} : vector<32x16384xf32> to vector<32x128xf32>
    %225 = vector.broadcast %3 : vector<32x1xf32> to vector<32x128xf32>
    %226 = arith.addf %224, %225 : vector<32x128xf32>
    %cst_49 = arith.constant 0.000000e+00 : f32
    %227 = vector.broadcast %cst_49 : f32 to vector<32x128xf32>
    %228 = arith.maximumf %226, %227 : vector<32x128xf32>
    %229 = vector.extract_strided_slice %2 {offsets = [0, 5760], sizes = [32, 128], strides = [1, 1]} : vector<32x16384xf32> to vector<32x128xf32>
    %230 = vector.broadcast %3 : vector<32x1xf32> to vector<32x128xf32>
    %231 = arith.addf %229, %230 : vector<32x128xf32>
    %cst_50 = arith.constant 0.000000e+00 : f32
    %232 = vector.broadcast %cst_50 : f32 to vector<32x128xf32>
    %233 = arith.maximumf %231, %232 : vector<32x128xf32>
    %234 = vector.extract_strided_slice %2 {offsets = [0, 5888], sizes = [32, 128], strides = [1, 1]} : vector<32x16384xf32> to vector<32x128xf32>
    %235 = vector.broadcast %3 : vector<32x1xf32> to vector<32x128xf32>
    %236 = arith.addf %234, %235 : vector<32x128xf32>
    %cst_51 = arith.constant 0.000000e+00 : f32
    %237 = vector.broadcast %cst_51 : f32 to vector<32x128xf32>
    %238 = arith.maximumf %236, %237 : vector<32x128xf32>
    %239 = vector.extract_strided_slice %2 {offsets = [0, 6016], sizes = [32, 128], strides = [1, 1]} : vector<32x16384xf32> to vector<32x128xf32>
    %240 = vector.broadcast %3 : vector<32x1xf32> to vector<32x128xf32>
    %241 = arith.addf %239, %240 : vector<32x128xf32>
    %cst_52 = arith.constant 0.000000e+00 : f32
    %242 = vector.broadcast %cst_52 : f32 to vector<32x128xf32>
    %243 = arith.maximumf %241, %242 : vector<32x128xf32>
    %244 = vector.extract_strided_slice %2 {offsets = [0, 6144], sizes = [32, 128], strides = [1, 1]} : vector<32x16384xf32> to vector<32x128xf32>
    %245 = vector.broadcast %3 : vector<32x1xf32> to vector<32x128xf32>
    %246 = arith.addf %244, %245 : vector<32x128xf32>
    %cst_53 = arith.constant 0.000000e+00 : f32
    %247 = vector.broadcast %cst_53 : f32 to vector<32x128xf32>
    %248 = arith.maximumf %246, %247 : vector<32x128xf32>
    %249 = vector.extract_strided_slice %2 {offsets = [0, 6272], sizes = [32, 128], strides = [1, 1]} : vector<32x16384xf32> to vector<32x128xf32>
    %250 = vector.broadcast %3 : vector<32x1xf32> to vector<32x128xf32>
    %251 = arith.addf %249, %250 : vector<32x128xf32>
    %cst_54 = arith.constant 0.000000e+00 : f32
    %252 = vector.broadcast %cst_54 : f32 to vector<32x128xf32>
    %253 = arith.maximumf %251, %252 : vector<32x128xf32>
    %254 = vector.extract_strided_slice %2 {offsets = [0, 6400], sizes = [32, 128], strides = [1, 1]} : vector<32x16384xf32> to vector<32x128xf32>
    %255 = vector.broadcast %3 : vector<32x1xf32> to vector<32x128xf32>
    %256 = arith.addf %254, %255 : vector<32x128xf32>
    %cst_55 = arith.constant 0.000000e+00 : f32
    %257 = vector.broadcast %cst_55 : f32 to vector<32x128xf32>
    %258 = arith.maximumf %256, %257 : vector<32x128xf32>
    %259 = vector.extract_strided_slice %2 {offsets = [0, 6528], sizes = [32, 128], strides = [1, 1]} : vector<32x16384xf32> to vector<32x128xf32>
    %260 = vector.broadcast %3 : vector<32x1xf32> to vector<32x128xf32>
    %261 = arith.addf %259, %260 : vector<32x128xf32>
    %cst_56 = arith.constant 0.000000e+00 : f32
    %262 = vector.broadcast %cst_56 : f32 to vector<32x128xf32>
    %263 = arith.maximumf %261, %262 : vector<32x128xf32>
    %264 = vector.extract_strided_slice %2 {offsets = [0, 6656], sizes = [32, 128], strides = [1, 1]} : vector<32x16384xf32> to vector<32x128xf32>
    %265 = vector.broadcast %3 : vector<32x1xf32> to vector<32x128xf32>
    %266 = arith.addf %264, %265 : vector<32x128xf32>
    %cst_57 = arith.constant 0.000000e+00 : f32
    %267 = vector.broadcast %cst_57 : f32 to vector<32x128xf32>
    %268 = arith.maximumf %266, %267 : vector<32x128xf32>
    %269 = vector.extract_strided_slice %2 {offsets = [0, 6784], sizes = [32, 128], strides = [1, 1]} : vector<32x16384xf32> to vector<32x128xf32>
    %270 = vector.broadcast %3 : vector<32x1xf32> to vector<32x128xf32>
    %271 = arith.addf %269, %270 : vector<32x128xf32>
    %cst_58 = arith.constant 0.000000e+00 : f32
    %272 = vector.broadcast %cst_58 : f32 to vector<32x128xf32>
    %273 = arith.maximumf %271, %272 : vector<32x128xf32>
    %274 = vector.extract_strided_slice %2 {offsets = [0, 6912], sizes = [32, 128], strides = [1, 1]} : vector<32x16384xf32> to vector<32x128xf32>
    %275 = vector.broadcast %3 : vector<32x1xf32> to vector<32x128xf32>
    %276 = arith.addf %274, %275 : vector<32x128xf32>
    %cst_59 = arith.constant 0.000000e+00 : f32
    %277 = vector.broadcast %cst_59 : f32 to vector<32x128xf32>
    %278 = arith.maximumf %276, %277 : vector<32x128xf32>
    %279 = vector.extract_strided_slice %2 {offsets = [0, 7040], sizes = [32, 128], strides = [1, 1]} : vector<32x16384xf32> to vector<32x128xf32>
    %280 = vector.broadcast %3 : vector<32x1xf32> to vector<32x128xf32>
    %281 = arith.addf %279, %280 : vector<32x128xf32>
    %cst_60 = arith.constant 0.000000e+00 : f32
    %282 = vector.broadcast %cst_60 : f32 to vector<32x128xf32>
    %283 = arith.maximumf %281, %282 : vector<32x128xf32>
    %284 = vector.extract_strided_slice %2 {offsets = [0, 7168], sizes = [32, 128], strides = [1, 1]} : vector<32x16384xf32> to vector<32x128xf32>
    %285 = vector.broadcast %3 : vector<32x1xf32> to vector<32x128xf32>
    %286 = arith.addf %284, %285 : vector<32x128xf32>
    %cst_61 = arith.constant 0.000000e+00 : f32
    %287 = vector.broadcast %cst_61 : f32 to vector<32x128xf32>
    %288 = arith.maximumf %286, %287 : vector<32x128xf32>
    %289 = vector.extract_strided_slice %2 {offsets = [0, 7296], sizes = [32, 128], strides = [1, 1]} : vector<32x16384xf32> to vector<32x128xf32>
    %290 = vector.broadcast %3 : vector<32x1xf32> to vector<32x128xf32>
    %291 = arith.addf %289, %290 : vector<32x128xf32>
    %cst_62 = arith.constant 0.000000e+00 : f32
    %292 = vector.broadcast %cst_62 : f32 to vector<32x128xf32>
    %293 = arith.maximumf %291, %292 : vector<32x128xf32>
    %294 = vector.extract_strided_slice %2 {offsets = [0, 7424], sizes = [32, 128], strides = [1, 1]} : vector<32x16384xf32> to vector<32x128xf32>
    %295 = vector.broadcast %3 : vector<32x1xf32> to vector<32x128xf32>
    %296 = arith.addf %294, %295 : vector<32x128xf32>
    %cst_63 = arith.constant 0.000000e+00 : f32
    %297 = vector.broadcast %cst_63 : f32 to vector<32x128xf32>
    %298 = arith.maximumf %296, %297 : vector<32x128xf32>
    %299 = vector.extract_strided_slice %2 {offsets = [0, 7552], sizes = [32, 128], strides = [1, 1]} : vector<32x16384xf32> to vector<32x128xf32>
    %300 = vector.broadcast %3 : vector<32x1xf32> to vector<32x128xf32>
    %301 = arith.addf %299, %300 : vector<32x128xf32>
    %cst_64 = arith.constant 0.000000e+00 : f32
    %302 = vector.broadcast %cst_64 : f32 to vector<32x128xf32>
    %303 = arith.maximumf %301, %302 : vector<32x128xf32>
    %304 = vector.extract_strided_slice %2 {offsets = [0, 7680], sizes = [32, 128], strides = [1, 1]} : vector<32x16384xf32> to vector<32x128xf32>
    %305 = vector.broadcast %3 : vector<32x1xf32> to vector<32x128xf32>
    %306 = arith.addf %304, %305 : vector<32x128xf32>
    %cst_65 = arith.constant 0.000000e+00 : f32
    %307 = vector.broadcast %cst_65 : f32 to vector<32x128xf32>
    %308 = arith.maximumf %306, %307 : vector<32x128xf32>
    %309 = vector.extract_strided_slice %2 {offsets = [0, 7808], sizes = [32, 128], strides = [1, 1]} : vector<32x16384xf32> to vector<32x128xf32>
    %310 = vector.broadcast %3 : vector<32x1xf32> to vector<32x128xf32>
    %311 = arith.addf %309, %310 : vector<32x128xf32>
    %cst_66 = arith.constant 0.000000e+00 : f32
    %312 = vector.broadcast %cst_66 : f32 to vector<32x128xf32>
    %313 = arith.maximumf %311, %312 : vector<32x128xf32>
    %314 = vector.extract_strided_slice %2 {offsets = [0, 7936], sizes = [32, 128], strides = [1, 1]} : vector<32x16384xf32> to vector<32x128xf32>
    %315 = vector.broadcast %3 : vector<32x1xf32> to vector<32x128xf32>
    %316 = arith.addf %314, %315 : vector<32x128xf32>
    %cst_67 = arith.constant 0.000000e+00 : f32
    %317 = vector.broadcast %cst_67 : f32 to vector<32x128xf32>
    %318 = arith.maximumf %316, %317 : vector<32x128xf32>
    %319 = vector.extract_strided_slice %2 {offsets = [0, 8064], sizes = [32, 128], strides = [1, 1]} : vector<32x16384xf32> to vector<32x128xf32>
    %320 = vector.broadcast %3 : vector<32x1xf32> to vector<32x128xf32>
    %321 = arith.addf %319, %320 : vector<32x128xf32>
    %cst_68 = arith.constant 0.000000e+00 : f32
    %322 = vector.broadcast %cst_68 : f32 to vector<32x128xf32>
    %323 = arith.maximumf %321, %322 : vector<32x128xf32>
    %324 = vector.extract_strided_slice %2 {offsets = [0, 8192], sizes = [32, 128], strides = [1, 1]} : vector<32x16384xf32> to vector<32x128xf32>
    %325 = vector.broadcast %3 : vector<32x1xf32> to vector<32x128xf32>
    %326 = arith.addf %324, %325 : vector<32x128xf32>
    %cst_69 = arith.constant 0.000000e+00 : f32
    %327 = vector.broadcast %cst_69 : f32 to vector<32x128xf32>
    %328 = arith.maximumf %326, %327 : vector<32x128xf32>
    %329 = vector.extract_strided_slice %2 {offsets = [0, 8320], sizes = [32, 128], strides = [1, 1]} : vector<32x16384xf32> to vector<32x128xf32>
    %330 = vector.broadcast %3 : vector<32x1xf32> to vector<32x128xf32>
    %331 = arith.addf %329, %330 : vector<32x128xf32>
    %cst_70 = arith.constant 0.000000e+00 : f32
    %332 = vector.broadcast %cst_70 : f32 to vector<32x128xf32>
    %333 = arith.maximumf %331, %332 : vector<32x128xf32>
    %334 = vector.extract_strided_slice %2 {offsets = [0, 8448], sizes = [32, 128], strides = [1, 1]} : vector<32x16384xf32> to vector<32x128xf32>
    %335 = vector.broadcast %3 : vector<32x1xf32> to vector<32x128xf32>
    %336 = arith.addf %334, %335 : vector<32x128xf32>
    %cst_71 = arith.constant 0.000000e+00 : f32
    %337 = vector.broadcast %cst_71 : f32 to vector<32x128xf32>
    %338 = arith.maximumf %336, %337 : vector<32x128xf32>
    %339 = vector.extract_strided_slice %2 {offsets = [0, 8576], sizes = [32, 128], strides = [1, 1]} : vector<32x16384xf32> to vector<32x128xf32>
    %340 = vector.broadcast %3 : vector<32x1xf32> to vector<32x128xf32>
    %341 = arith.addf %339, %340 : vector<32x128xf32>
    %cst_72 = arith.constant 0.000000e+00 : f32
    %342 = vector.broadcast %cst_72 : f32 to vector<32x128xf32>
    %343 = arith.maximumf %341, %342 : vector<32x128xf32>
    %344 = vector.extract_strided_slice %2 {offsets = [0, 8704], sizes = [32, 128], strides = [1, 1]} : vector<32x16384xf32> to vector<32x128xf32>
    %345 = vector.broadcast %3 : vector<32x1xf32> to vector<32x128xf32>
    %346 = arith.addf %344, %345 : vector<32x128xf32>
    %cst_73 = arith.constant 0.000000e+00 : f32
    %347 = vector.broadcast %cst_73 : f32 to vector<32x128xf32>
    %348 = arith.maximumf %346, %347 : vector<32x128xf32>
    %349 = vector.extract_strided_slice %2 {offsets = [0, 8832], sizes = [32, 128], strides = [1, 1]} : vector<32x16384xf32> to vector<32x128xf32>
    %350 = vector.broadcast %3 : vector<32x1xf32> to vector<32x128xf32>
    %351 = arith.addf %349, %350 : vector<32x128xf32>
    %cst_74 = arith.constant 0.000000e+00 : f32
    %352 = vector.broadcast %cst_74 : f32 to vector<32x128xf32>
    %353 = arith.maximumf %351, %352 : vector<32x128xf32>
    %354 = vector.extract_strided_slice %2 {offsets = [0, 8960], sizes = [32, 128], strides = [1, 1]} : vector<32x16384xf32> to vector<32x128xf32>
    %355 = vector.broadcast %3 : vector<32x1xf32> to vector<32x128xf32>
    %356 = arith.addf %354, %355 : vector<32x128xf32>
    %cst_75 = arith.constant 0.000000e+00 : f32
    %357 = vector.broadcast %cst_75 : f32 to vector<32x128xf32>
    %358 = arith.maximumf %356, %357 : vector<32x128xf32>
    %359 = vector.extract_strided_slice %2 {offsets = [0, 9088], sizes = [32, 128], strides = [1, 1]} : vector<32x16384xf32> to vector<32x128xf32>
    %360 = vector.broadcast %3 : vector<32x1xf32> to vector<32x128xf32>
    %361 = arith.addf %359, %360 : vector<32x128xf32>
    %cst_76 = arith.constant 0.000000e+00 : f32
    %362 = vector.broadcast %cst_76 : f32 to vector<32x128xf32>
    %363 = arith.maximumf %361, %362 : vector<32x128xf32>
    %364 = vector.extract_strided_slice %2 {offsets = [0, 9216], sizes = [32, 128], strides = [1, 1]} : vector<32x16384xf32> to vector<32x128xf32>
    %365 = vector.broadcast %3 : vector<32x1xf32> to vector<32x128xf32>
    %366 = arith.addf %364, %365 : vector<32x128xf32>
    %cst_77 = arith.constant 0.000000e+00 : f32
    %367 = vector.broadcast %cst_77 : f32 to vector<32x128xf32>
    %368 = arith.maximumf %366, %367 : vector<32x128xf32>
    %369 = vector.extract_strided_slice %2 {offsets = [0, 9344], sizes = [32, 128], strides = [1, 1]} : vector<32x16384xf32> to vector<32x128xf32>
    %370 = vector.broadcast %3 : vector<32x1xf32> to vector<32x128xf32>
    %371 = arith.addf %369, %370 : vector<32x128xf32>
    %cst_78 = arith.constant 0.000000e+00 : f32
    %372 = vector.broadcast %cst_78 : f32 to vector<32x128xf32>
    %373 = arith.maximumf %371, %372 : vector<32x128xf32>
    %374 = vector.extract_strided_slice %2 {offsets = [0, 9472], sizes = [32, 128], strides = [1, 1]} : vector<32x16384xf32> to vector<32x128xf32>
    %375 = vector.broadcast %3 : vector<32x1xf32> to vector<32x128xf32>
    %376 = arith.addf %374, %375 : vector<32x128xf32>
    %cst_79 = arith.constant 0.000000e+00 : f32
    %377 = vector.broadcast %cst_79 : f32 to vector<32x128xf32>
    %378 = arith.maximumf %376, %377 : vector<32x128xf32>
    %379 = vector.extract_strided_slice %2 {offsets = [0, 9600], sizes = [32, 128], strides = [1, 1]} : vector<32x16384xf32> to vector<32x128xf32>
    %380 = vector.broadcast %3 : vector<32x1xf32> to vector<32x128xf32>
    %381 = arith.addf %379, %380 : vector<32x128xf32>
    %cst_80 = arith.constant 0.000000e+00 : f32
    %382 = vector.broadcast %cst_80 : f32 to vector<32x128xf32>
    %383 = arith.maximumf %381, %382 : vector<32x128xf32>
    %384 = vector.extract_strided_slice %2 {offsets = [0, 9728], sizes = [32, 128], strides = [1, 1]} : vector<32x16384xf32> to vector<32x128xf32>
    %385 = vector.broadcast %3 : vector<32x1xf32> to vector<32x128xf32>
    %386 = arith.addf %384, %385 : vector<32x128xf32>
    %cst_81 = arith.constant 0.000000e+00 : f32
    %387 = vector.broadcast %cst_81 : f32 to vector<32x128xf32>
    %388 = arith.maximumf %386, %387 : vector<32x128xf32>
    %389 = vector.extract_strided_slice %2 {offsets = [0, 9856], sizes = [32, 128], strides = [1, 1]} : vector<32x16384xf32> to vector<32x128xf32>
    %390 = vector.broadcast %3 : vector<32x1xf32> to vector<32x128xf32>
    %391 = arith.addf %389, %390 : vector<32x128xf32>
    %cst_82 = arith.constant 0.000000e+00 : f32
    %392 = vector.broadcast %cst_82 : f32 to vector<32x128xf32>
    %393 = arith.maximumf %391, %392 : vector<32x128xf32>
    %394 = vector.extract_strided_slice %2 {offsets = [0, 9984], sizes = [32, 128], strides = [1, 1]} : vector<32x16384xf32> to vector<32x128xf32>
    %395 = vector.broadcast %3 : vector<32x1xf32> to vector<32x128xf32>
    %396 = arith.addf %394, %395 : vector<32x128xf32>
    %cst_83 = arith.constant 0.000000e+00 : f32
    %397 = vector.broadcast %cst_83 : f32 to vector<32x128xf32>
    %398 = arith.maximumf %396, %397 : vector<32x128xf32>
    %399 = vector.extract_strided_slice %2 {offsets = [0, 10112], sizes = [32, 128], strides = [1, 1]} : vector<32x16384xf32> to vector<32x128xf32>
    %400 = vector.broadcast %3 : vector<32x1xf32> to vector<32x128xf32>
    %401 = arith.addf %399, %400 : vector<32x128xf32>
    %cst_84 = arith.constant 0.000000e+00 : f32
    %402 = vector.broadcast %cst_84 : f32 to vector<32x128xf32>
    %403 = arith.maximumf %401, %402 : vector<32x128xf32>
    %404 = vector.extract_strided_slice %2 {offsets = [0, 10240], sizes = [32, 128], strides = [1, 1]} : vector<32x16384xf32> to vector<32x128xf32>
    %405 = vector.broadcast %3 : vector<32x1xf32> to vector<32x128xf32>
    %406 = arith.addf %404, %405 : vector<32x128xf32>
    %cst_85 = arith.constant 0.000000e+00 : f32
    %407 = vector.broadcast %cst_85 : f32 to vector<32x128xf32>
    %408 = arith.maximumf %406, %407 : vector<32x128xf32>
    %409 = vector.extract_strided_slice %2 {offsets = [0, 10368], sizes = [32, 128], strides = [1, 1]} : vector<32x16384xf32> to vector<32x128xf32>
    %410 = vector.broadcast %3 : vector<32x1xf32> to vector<32x128xf32>
    %411 = arith.addf %409, %410 : vector<32x128xf32>
    %cst_86 = arith.constant 0.000000e+00 : f32
    %412 = vector.broadcast %cst_86 : f32 to vector<32x128xf32>
    %413 = arith.maximumf %411, %412 : vector<32x128xf32>
    %414 = vector.extract_strided_slice %2 {offsets = [0, 10496], sizes = [32, 128], strides = [1, 1]} : vector<32x16384xf32> to vector<32x128xf32>
    %415 = vector.broadcast %3 : vector<32x1xf32> to vector<32x128xf32>
    %416 = arith.addf %414, %415 : vector<32x128xf32>
    %cst_87 = arith.constant 0.000000e+00 : f32
    %417 = vector.broadcast %cst_87 : f32 to vector<32x128xf32>
    %418 = arith.maximumf %416, %417 : vector<32x128xf32>
    %419 = vector.extract_strided_slice %2 {offsets = [0, 10624], sizes = [32, 128], strides = [1, 1]} : vector<32x16384xf32> to vector<32x128xf32>
    %420 = vector.broadcast %3 : vector<32x1xf32> to vector<32x128xf32>
    %421 = arith.addf %419, %420 : vector<32x128xf32>
    %cst_88 = arith.constant 0.000000e+00 : f32
    %422 = vector.broadcast %cst_88 : f32 to vector<32x128xf32>
    %423 = arith.maximumf %421, %422 : vector<32x128xf32>
    %424 = vector.extract_strided_slice %2 {offsets = [0, 10752], sizes = [32, 128], strides = [1, 1]} : vector<32x16384xf32> to vector<32x128xf32>
    %425 = vector.broadcast %3 : vector<32x1xf32> to vector<32x128xf32>
    %426 = arith.addf %424, %425 : vector<32x128xf32>
    %cst_89 = arith.constant 0.000000e+00 : f32
    %427 = vector.broadcast %cst_89 : f32 to vector<32x128xf32>
    %428 = arith.maximumf %426, %427 : vector<32x128xf32>
    %429 = vector.extract_strided_slice %2 {offsets = [0, 10880], sizes = [32, 128], strides = [1, 1]} : vector<32x16384xf32> to vector<32x128xf32>
    %430 = vector.broadcast %3 : vector<32x1xf32> to vector<32x128xf32>
    %431 = arith.addf %429, %430 : vector<32x128xf32>
    %cst_90 = arith.constant 0.000000e+00 : f32
    %432 = vector.broadcast %cst_90 : f32 to vector<32x128xf32>
    %433 = arith.maximumf %431, %432 : vector<32x128xf32>
    %434 = vector.extract_strided_slice %2 {offsets = [0, 11008], sizes = [32, 128], strides = [1, 1]} : vector<32x16384xf32> to vector<32x128xf32>
    %435 = vector.broadcast %3 : vector<32x1xf32> to vector<32x128xf32>
    %436 = arith.addf %434, %435 : vector<32x128xf32>
    %cst_91 = arith.constant 0.000000e+00 : f32
    %437 = vector.broadcast %cst_91 : f32 to vector<32x128xf32>
    %438 = arith.maximumf %436, %437 : vector<32x128xf32>
    %439 = vector.extract_strided_slice %2 {offsets = [0, 11136], sizes = [32, 128], strides = [1, 1]} : vector<32x16384xf32> to vector<32x128xf32>
    %440 = vector.broadcast %3 : vector<32x1xf32> to vector<32x128xf32>
    %441 = arith.addf %439, %440 : vector<32x128xf32>
    %cst_92 = arith.constant 0.000000e+00 : f32
    %442 = vector.broadcast %cst_92 : f32 to vector<32x128xf32>
    %443 = arith.maximumf %441, %442 : vector<32x128xf32>
    %444 = vector.extract_strided_slice %2 {offsets = [0, 11264], sizes = [32, 128], strides = [1, 1]} : vector<32x16384xf32> to vector<32x128xf32>
    %445 = vector.broadcast %3 : vector<32x1xf32> to vector<32x128xf32>
    %446 = arith.addf %444, %445 : vector<32x128xf32>
    %cst_93 = arith.constant 0.000000e+00 : f32
    %447 = vector.broadcast %cst_93 : f32 to vector<32x128xf32>
    %448 = arith.maximumf %446, %447 : vector<32x128xf32>
    %449 = vector.extract_strided_slice %2 {offsets = [0, 11392], sizes = [32, 128], strides = [1, 1]} : vector<32x16384xf32> to vector<32x128xf32>
    %450 = vector.broadcast %3 : vector<32x1xf32> to vector<32x128xf32>
    %451 = arith.addf %449, %450 : vector<32x128xf32>
    %cst_94 = arith.constant 0.000000e+00 : f32
    %452 = vector.broadcast %cst_94 : f32 to vector<32x128xf32>
    %453 = arith.maximumf %451, %452 : vector<32x128xf32>
    %454 = vector.extract_strided_slice %2 {offsets = [0, 11520], sizes = [32, 128], strides = [1, 1]} : vector<32x16384xf32> to vector<32x128xf32>
    %455 = vector.broadcast %3 : vector<32x1xf32> to vector<32x128xf32>
    %456 = arith.addf %454, %455 : vector<32x128xf32>
    %cst_95 = arith.constant 0.000000e+00 : f32
    %457 = vector.broadcast %cst_95 : f32 to vector<32x128xf32>
    %458 = arith.maximumf %456, %457 : vector<32x128xf32>
    %459 = vector.extract_strided_slice %2 {offsets = [0, 11648], sizes = [32, 128], strides = [1, 1]} : vector<32x16384xf32> to vector<32x128xf32>
    %460 = vector.broadcast %3 : vector<32x1xf32> to vector<32x128xf32>
    %461 = arith.addf %459, %460 : vector<32x128xf32>
    %cst_96 = arith.constant 0.000000e+00 : f32
    %462 = vector.broadcast %cst_96 : f32 to vector<32x128xf32>
    %463 = arith.maximumf %461, %462 : vector<32x128xf32>
    %464 = vector.extract_strided_slice %2 {offsets = [0, 11776], sizes = [32, 128], strides = [1, 1]} : vector<32x16384xf32> to vector<32x128xf32>
    %465 = vector.broadcast %3 : vector<32x1xf32> to vector<32x128xf32>
    %466 = arith.addf %464, %465 : vector<32x128xf32>
    %cst_97 = arith.constant 0.000000e+00 : f32
    %467 = vector.broadcast %cst_97 : f32 to vector<32x128xf32>
    %468 = arith.maximumf %466, %467 : vector<32x128xf32>
    %469 = vector.extract_strided_slice %2 {offsets = [0, 11904], sizes = [32, 128], strides = [1, 1]} : vector<32x16384xf32> to vector<32x128xf32>
    %470 = vector.broadcast %3 : vector<32x1xf32> to vector<32x128xf32>
    %471 = arith.addf %469, %470 : vector<32x128xf32>
    %cst_98 = arith.constant 0.000000e+00 : f32
    %472 = vector.broadcast %cst_98 : f32 to vector<32x128xf32>
    %473 = arith.maximumf %471, %472 : vector<32x128xf32>
    %474 = vector.extract_strided_slice %2 {offsets = [0, 12032], sizes = [32, 128], strides = [1, 1]} : vector<32x16384xf32> to vector<32x128xf32>
    %475 = vector.broadcast %3 : vector<32x1xf32> to vector<32x128xf32>
    %476 = arith.addf %474, %475 : vector<32x128xf32>
    %cst_99 = arith.constant 0.000000e+00 : f32
    %477 = vector.broadcast %cst_99 : f32 to vector<32x128xf32>
    %478 = arith.maximumf %476, %477 : vector<32x128xf32>
    %479 = vector.extract_strided_slice %2 {offsets = [0, 12160], sizes = [32, 128], strides = [1, 1]} : vector<32x16384xf32> to vector<32x128xf32>
    %480 = vector.broadcast %3 : vector<32x1xf32> to vector<32x128xf32>
    %481 = arith.addf %479, %480 : vector<32x128xf32>
    %cst_100 = arith.constant 0.000000e+00 : f32
    %482 = vector.broadcast %cst_100 : f32 to vector<32x128xf32>
    %483 = arith.maximumf %481, %482 : vector<32x128xf32>
    %484 = vector.extract_strided_slice %2 {offsets = [0, 12288], sizes = [32, 128], strides = [1, 1]} : vector<32x16384xf32> to vector<32x128xf32>
    %485 = vector.broadcast %3 : vector<32x1xf32> to vector<32x128xf32>
    %486 = arith.addf %484, %485 : vector<32x128xf32>
    %cst_101 = arith.constant 0.000000e+00 : f32
    %487 = vector.broadcast %cst_101 : f32 to vector<32x128xf32>
    %488 = arith.maximumf %486, %487 : vector<32x128xf32>
    %489 = vector.extract_strided_slice %2 {offsets = [0, 12416], sizes = [32, 128], strides = [1, 1]} : vector<32x16384xf32> to vector<32x128xf32>
    %490 = vector.broadcast %3 : vector<32x1xf32> to vector<32x128xf32>
    %491 = arith.addf %489, %490 : vector<32x128xf32>
    %cst_102 = arith.constant 0.000000e+00 : f32
    %492 = vector.broadcast %cst_102 : f32 to vector<32x128xf32>
    %493 = arith.maximumf %491, %492 : vector<32x128xf32>
    %494 = vector.extract_strided_slice %2 {offsets = [0, 12544], sizes = [32, 128], strides = [1, 1]} : vector<32x16384xf32> to vector<32x128xf32>
    %495 = vector.broadcast %3 : vector<32x1xf32> to vector<32x128xf32>
    %496 = arith.addf %494, %495 : vector<32x128xf32>
    %cst_103 = arith.constant 0.000000e+00 : f32
    %497 = vector.broadcast %cst_103 : f32 to vector<32x128xf32>
    %498 = arith.maximumf %496, %497 : vector<32x128xf32>
    %499 = vector.extract_strided_slice %2 {offsets = [0, 12672], sizes = [32, 128], strides = [1, 1]} : vector<32x16384xf32> to vector<32x128xf32>
    %500 = vector.broadcast %3 : vector<32x1xf32> to vector<32x128xf32>
    %501 = arith.addf %499, %500 : vector<32x128xf32>
    %cst_104 = arith.constant 0.000000e+00 : f32
    %502 = vector.broadcast %cst_104 : f32 to vector<32x128xf32>
    %503 = arith.maximumf %501, %502 : vector<32x128xf32>
    %504 = vector.extract_strided_slice %2 {offsets = [0, 12800], sizes = [32, 128], strides = [1, 1]} : vector<32x16384xf32> to vector<32x128xf32>
    %505 = vector.broadcast %3 : vector<32x1xf32> to vector<32x128xf32>
    %506 = arith.addf %504, %505 : vector<32x128xf32>
    %cst_105 = arith.constant 0.000000e+00 : f32
    %507 = vector.broadcast %cst_105 : f32 to vector<32x128xf32>
    %508 = arith.maximumf %506, %507 : vector<32x128xf32>
    %509 = vector.extract_strided_slice %2 {offsets = [0, 12928], sizes = [32, 128], strides = [1, 1]} : vector<32x16384xf32> to vector<32x128xf32>
    %510 = vector.broadcast %3 : vector<32x1xf32> to vector<32x128xf32>
    %511 = arith.addf %509, %510 : vector<32x128xf32>
    %cst_106 = arith.constant 0.000000e+00 : f32
    %512 = vector.broadcast %cst_106 : f32 to vector<32x128xf32>
    %513 = arith.maximumf %511, %512 : vector<32x128xf32>
    %514 = vector.extract_strided_slice %2 {offsets = [0, 13056], sizes = [32, 128], strides = [1, 1]} : vector<32x16384xf32> to vector<32x128xf32>
    %515 = vector.broadcast %3 : vector<32x1xf32> to vector<32x128xf32>
    %516 = arith.addf %514, %515 : vector<32x128xf32>
    %cst_107 = arith.constant 0.000000e+00 : f32
    %517 = vector.broadcast %cst_107 : f32 to vector<32x128xf32>
    %518 = arith.maximumf %516, %517 : vector<32x128xf32>
    %519 = vector.extract_strided_slice %2 {offsets = [0, 13184], sizes = [32, 128], strides = [1, 1]} : vector<32x16384xf32> to vector<32x128xf32>
    %520 = vector.broadcast %3 : vector<32x1xf32> to vector<32x128xf32>
    %521 = arith.addf %519, %520 : vector<32x128xf32>
    %cst_108 = arith.constant 0.000000e+00 : f32
    %522 = vector.broadcast %cst_108 : f32 to vector<32x128xf32>
    %523 = arith.maximumf %521, %522 : vector<32x128xf32>
    %524 = vector.extract_strided_slice %2 {offsets = [0, 13312], sizes = [32, 128], strides = [1, 1]} : vector<32x16384xf32> to vector<32x128xf32>
    %525 = vector.broadcast %3 : vector<32x1xf32> to vector<32x128xf32>
    %526 = arith.addf %524, %525 : vector<32x128xf32>
    %cst_109 = arith.constant 0.000000e+00 : f32
    %527 = vector.broadcast %cst_109 : f32 to vector<32x128xf32>
    %528 = arith.maximumf %526, %527 : vector<32x128xf32>
    %529 = vector.extract_strided_slice %2 {offsets = [0, 13440], sizes = [32, 128], strides = [1, 1]} : vector<32x16384xf32> to vector<32x128xf32>
    %530 = vector.broadcast %3 : vector<32x1xf32> to vector<32x128xf32>
    %531 = arith.addf %529, %530 : vector<32x128xf32>
    %cst_110 = arith.constant 0.000000e+00 : f32
    %532 = vector.broadcast %cst_110 : f32 to vector<32x128xf32>
    %533 = arith.maximumf %531, %532 : vector<32x128xf32>
    %534 = vector.extract_strided_slice %2 {offsets = [0, 13568], sizes = [32, 128], strides = [1, 1]} : vector<32x16384xf32> to vector<32x128xf32>
    %535 = vector.broadcast %3 : vector<32x1xf32> to vector<32x128xf32>
    %536 = arith.addf %534, %535 : vector<32x128xf32>
    %cst_111 = arith.constant 0.000000e+00 : f32
    %537 = vector.broadcast %cst_111 : f32 to vector<32x128xf32>
    %538 = arith.maximumf %536, %537 : vector<32x128xf32>
    %539 = vector.extract_strided_slice %2 {offsets = [0, 13696], sizes = [32, 128], strides = [1, 1]} : vector<32x16384xf32> to vector<32x128xf32>
    %540 = vector.broadcast %3 : vector<32x1xf32> to vector<32x128xf32>
    %541 = arith.addf %539, %540 : vector<32x128xf32>
    %cst_112 = arith.constant 0.000000e+00 : f32
    %542 = vector.broadcast %cst_112 : f32 to vector<32x128xf32>
    %543 = arith.maximumf %541, %542 : vector<32x128xf32>
    %544 = vector.extract_strided_slice %2 {offsets = [0, 13824], sizes = [32, 128], strides = [1, 1]} : vector<32x16384xf32> to vector<32x128xf32>
    %545 = vector.broadcast %3 : vector<32x1xf32> to vector<32x128xf32>
    %546 = arith.addf %544, %545 : vector<32x128xf32>
    %cst_113 = arith.constant 0.000000e+00 : f32
    %547 = vector.broadcast %cst_113 : f32 to vector<32x128xf32>
    %548 = arith.maximumf %546, %547 : vector<32x128xf32>
    %549 = vector.extract_strided_slice %2 {offsets = [0, 13952], sizes = [32, 128], strides = [1, 1]} : vector<32x16384xf32> to vector<32x128xf32>
    %550 = vector.broadcast %3 : vector<32x1xf32> to vector<32x128xf32>
    %551 = arith.addf %549, %550 : vector<32x128xf32>
    %cst_114 = arith.constant 0.000000e+00 : f32
    %552 = vector.broadcast %cst_114 : f32 to vector<32x128xf32>
    %553 = arith.maximumf %551, %552 : vector<32x128xf32>
    %554 = vector.extract_strided_slice %2 {offsets = [0, 14080], sizes = [32, 128], strides = [1, 1]} : vector<32x16384xf32> to vector<32x128xf32>
    %555 = vector.broadcast %3 : vector<32x1xf32> to vector<32x128xf32>
    %556 = arith.addf %554, %555 : vector<32x128xf32>
    %cst_115 = arith.constant 0.000000e+00 : f32
    %557 = vector.broadcast %cst_115 : f32 to vector<32x128xf32>
    %558 = arith.maximumf %556, %557 : vector<32x128xf32>
    %559 = vector.extract_strided_slice %2 {offsets = [0, 14208], sizes = [32, 128], strides = [1, 1]} : vector<32x16384xf32> to vector<32x128xf32>
    %560 = vector.broadcast %3 : vector<32x1xf32> to vector<32x128xf32>
    %561 = arith.addf %559, %560 : vector<32x128xf32>
    %cst_116 = arith.constant 0.000000e+00 : f32
    %562 = vector.broadcast %cst_116 : f32 to vector<32x128xf32>
    %563 = arith.maximumf %561, %562 : vector<32x128xf32>
    %564 = vector.extract_strided_slice %2 {offsets = [0, 14336], sizes = [32, 128], strides = [1, 1]} : vector<32x16384xf32> to vector<32x128xf32>
    %565 = vector.broadcast %3 : vector<32x1xf32> to vector<32x128xf32>
    %566 = arith.addf %564, %565 : vector<32x128xf32>
    %cst_117 = arith.constant 0.000000e+00 : f32
    %567 = vector.broadcast %cst_117 : f32 to vector<32x128xf32>
    %568 = arith.maximumf %566, %567 : vector<32x128xf32>
    %569 = vector.extract_strided_slice %2 {offsets = [0, 14464], sizes = [32, 128], strides = [1, 1]} : vector<32x16384xf32> to vector<32x128xf32>
    %570 = vector.broadcast %3 : vector<32x1xf32> to vector<32x128xf32>
    %571 = arith.addf %569, %570 : vector<32x128xf32>
    %cst_118 = arith.constant 0.000000e+00 : f32
    %572 = vector.broadcast %cst_118 : f32 to vector<32x128xf32>
    %573 = arith.maximumf %571, %572 : vector<32x128xf32>
    %574 = vector.extract_strided_slice %2 {offsets = [0, 14592], sizes = [32, 128], strides = [1, 1]} : vector<32x16384xf32> to vector<32x128xf32>
    %575 = vector.broadcast %3 : vector<32x1xf32> to vector<32x128xf32>
    %576 = arith.addf %574, %575 : vector<32x128xf32>
    %cst_119 = arith.constant 0.000000e+00 : f32
    %577 = vector.broadcast %cst_119 : f32 to vector<32x128xf32>
    %578 = arith.maximumf %576, %577 : vector<32x128xf32>
    %579 = vector.extract_strided_slice %2 {offsets = [0, 14720], sizes = [32, 128], strides = [1, 1]} : vector<32x16384xf32> to vector<32x128xf32>
    %580 = vector.broadcast %3 : vector<32x1xf32> to vector<32x128xf32>
    %581 = arith.addf %579, %580 : vector<32x128xf32>
    %cst_120 = arith.constant 0.000000e+00 : f32
    %582 = vector.broadcast %cst_120 : f32 to vector<32x128xf32>
    %583 = arith.maximumf %581, %582 : vector<32x128xf32>
    %584 = vector.extract_strided_slice %2 {offsets = [0, 14848], sizes = [32, 128], strides = [1, 1]} : vector<32x16384xf32> to vector<32x128xf32>
    %585 = vector.broadcast %3 : vector<32x1xf32> to vector<32x128xf32>
    %586 = arith.addf %584, %585 : vector<32x128xf32>
    %cst_121 = arith.constant 0.000000e+00 : f32
    %587 = vector.broadcast %cst_121 : f32 to vector<32x128xf32>
    %588 = arith.maximumf %586, %587 : vector<32x128xf32>
    %589 = vector.extract_strided_slice %2 {offsets = [0, 14976], sizes = [32, 128], strides = [1, 1]} : vector<32x16384xf32> to vector<32x128xf32>
    %590 = vector.broadcast %3 : vector<32x1xf32> to vector<32x128xf32>
    %591 = arith.addf %589, %590 : vector<32x128xf32>
    %cst_122 = arith.constant 0.000000e+00 : f32
    %592 = vector.broadcast %cst_122 : f32 to vector<32x128xf32>
    %593 = arith.maximumf %591, %592 : vector<32x128xf32>
    %594 = vector.extract_strided_slice %2 {offsets = [0, 15104], sizes = [32, 128], strides = [1, 1]} : vector<32x16384xf32> to vector<32x128xf32>
    %595 = vector.broadcast %3 : vector<32x1xf32> to vector<32x128xf32>
    %596 = arith.addf %594, %595 : vector<32x128xf32>
    %cst_123 = arith.constant 0.000000e+00 : f32
    %597 = vector.broadcast %cst_123 : f32 to vector<32x128xf32>
    %598 = arith.maximumf %596, %597 : vector<32x128xf32>
    %599 = vector.extract_strided_slice %2 {offsets = [0, 15232], sizes = [32, 128], strides = [1, 1]} : vector<32x16384xf32> to vector<32x128xf32>
    %600 = vector.broadcast %3 : vector<32x1xf32> to vector<32x128xf32>
    %601 = arith.addf %599, %600 : vector<32x128xf32>
    %cst_124 = arith.constant 0.000000e+00 : f32
    %602 = vector.broadcast %cst_124 : f32 to vector<32x128xf32>
    %603 = arith.maximumf %601, %602 : vector<32x128xf32>
    %604 = vector.extract_strided_slice %2 {offsets = [0, 15360], sizes = [32, 128], strides = [1, 1]} : vector<32x16384xf32> to vector<32x128xf32>
    %605 = vector.broadcast %3 : vector<32x1xf32> to vector<32x128xf32>
    %606 = arith.addf %604, %605 : vector<32x128xf32>
    %cst_125 = arith.constant 0.000000e+00 : f32
    %607 = vector.broadcast %cst_125 : f32 to vector<32x128xf32>
    %608 = arith.maximumf %606, %607 : vector<32x128xf32>
    %609 = vector.extract_strided_slice %2 {offsets = [0, 15488], sizes = [32, 128], strides = [1, 1]} : vector<32x16384xf32> to vector<32x128xf32>
    %610 = vector.broadcast %3 : vector<32x1xf32> to vector<32x128xf32>
    %611 = arith.addf %609, %610 : vector<32x128xf32>
    %cst_126 = arith.constant 0.000000e+00 : f32
    %612 = vector.broadcast %cst_126 : f32 to vector<32x128xf32>
    %613 = arith.maximumf %611, %612 : vector<32x128xf32>
    %614 = vector.extract_strided_slice %2 {offsets = [0, 15616], sizes = [32, 128], strides = [1, 1]} : vector<32x16384xf32> to vector<32x128xf32>
    %615 = vector.broadcast %3 : vector<32x1xf32> to vector<32x128xf32>
    %616 = arith.addf %614, %615 : vector<32x128xf32>
    %cst_127 = arith.constant 0.000000e+00 : f32
    %617 = vector.broadcast %cst_127 : f32 to vector<32x128xf32>
    %618 = arith.maximumf %616, %617 : vector<32x128xf32>
    %619 = vector.extract_strided_slice %2 {offsets = [0, 15744], sizes = [32, 128], strides = [1, 1]} : vector<32x16384xf32> to vector<32x128xf32>
    %620 = vector.broadcast %3 : vector<32x1xf32> to vector<32x128xf32>
    %621 = arith.addf %619, %620 : vector<32x128xf32>
    %cst_128 = arith.constant 0.000000e+00 : f32
    %622 = vector.broadcast %cst_128 : f32 to vector<32x128xf32>
    %623 = arith.maximumf %621, %622 : vector<32x128xf32>
    %624 = vector.extract_strided_slice %2 {offsets = [0, 15872], sizes = [32, 128], strides = [1, 1]} : vector<32x16384xf32> to vector<32x128xf32>
    %625 = vector.broadcast %3 : vector<32x1xf32> to vector<32x128xf32>
    %626 = arith.addf %624, %625 : vector<32x128xf32>
    %cst_129 = arith.constant 0.000000e+00 : f32
    %627 = vector.broadcast %cst_129 : f32 to vector<32x128xf32>
    %628 = arith.maximumf %626, %627 : vector<32x128xf32>
    %629 = vector.extract_strided_slice %2 {offsets = [0, 16000], sizes = [32, 128], strides = [1, 1]} : vector<32x16384xf32> to vector<32x128xf32>
    %630 = vector.broadcast %3 : vector<32x1xf32> to vector<32x128xf32>
    %631 = arith.addf %629, %630 : vector<32x128xf32>
    %cst_130 = arith.constant 0.000000e+00 : f32
    %632 = vector.broadcast %cst_130 : f32 to vector<32x128xf32>
    %633 = arith.maximumf %631, %632 : vector<32x128xf32>
    %634 = vector.extract_strided_slice %2 {offsets = [0, 16128], sizes = [32, 128], strides = [1, 1]} : vector<32x16384xf32> to vector<32x128xf32>
    %635 = vector.broadcast %3 : vector<32x1xf32> to vector<32x128xf32>
    %636 = arith.addf %634, %635 : vector<32x128xf32>
    %cst_131 = arith.constant 0.000000e+00 : f32
    %637 = vector.broadcast %cst_131 : f32 to vector<32x128xf32>
    %638 = arith.maximumf %636, %637 : vector<32x128xf32>
    %639 = vector.extract_strided_slice %2 {offsets = [0, 16256], sizes = [32, 128], strides = [1, 1]} : vector<32x16384xf32> to vector<32x128xf32>
    %640 = vector.broadcast %3 : vector<32x1xf32> to vector<32x128xf32>
    %641 = arith.addf %639, %640 : vector<32x128xf32>
    %cst_132 = arith.constant 0.000000e+00 : f32
    %642 = vector.broadcast %cst_132 : f32 to vector<32x128xf32>
    %643 = arith.maximumf %641, %642 : vector<32x128xf32>
    %644 = arith.addf %8, %13 : vector<32x128xf32>
    %645 = arith.addf %18, %23 : vector<32x128xf32>
    %646 = arith.addf %28, %33 : vector<32x128xf32>
    %647 = arith.addf %38, %43 : vector<32x128xf32>
    %648 = arith.addf %48, %53 : vector<32x128xf32>
    %649 = arith.addf %58, %63 : vector<32x128xf32>
    %650 = arith.addf %68, %73 : vector<32x128xf32>
    %651 = arith.addf %78, %83 : vector<32x128xf32>
    %652 = arith.addf %88, %93 : vector<32x128xf32>
    %653 = arith.addf %98, %103 : vector<32x128xf32>
    %654 = arith.addf %108, %113 : vector<32x128xf32>
    %655 = arith.addf %118, %123 : vector<32x128xf32>
    %656 = arith.addf %128, %133 : vector<32x128xf32>
    %657 = arith.addf %138, %143 : vector<32x128xf32>
    %658 = arith.addf %148, %153 : vector<32x128xf32>
    %659 = arith.addf %158, %163 : vector<32x128xf32>
    %660 = arith.addf %168, %173 : vector<32x128xf32>
    %661 = arith.addf %178, %183 : vector<32x128xf32>
    %662 = arith.addf %188, %193 : vector<32x128xf32>
    %663 = arith.addf %198, %203 : vector<32x128xf32>
    %664 = arith.addf %208, %213 : vector<32x128xf32>
    %665 = arith.addf %218, %223 : vector<32x128xf32>
    %666 = arith.addf %228, %233 : vector<32x128xf32>
    %667 = arith.addf %238, %243 : vector<32x128xf32>
    %668 = arith.addf %248, %253 : vector<32x128xf32>
    %669 = arith.addf %258, %263 : vector<32x128xf32>
    %670 = arith.addf %268, %273 : vector<32x128xf32>
    %671 = arith.addf %278, %283 : vector<32x128xf32>
    %672 = arith.addf %288, %293 : vector<32x128xf32>
    %673 = arith.addf %298, %303 : vector<32x128xf32>
    %674 = arith.addf %308, %313 : vector<32x128xf32>
    %675 = arith.addf %318, %323 : vector<32x128xf32>
    %676 = arith.addf %328, %333 : vector<32x128xf32>
    %677 = arith.addf %338, %343 : vector<32x128xf32>
    %678 = arith.addf %348, %353 : vector<32x128xf32>
    %679 = arith.addf %358, %363 : vector<32x128xf32>
    %680 = arith.addf %368, %373 : vector<32x128xf32>
    %681 = arith.addf %378, %383 : vector<32x128xf32>
    %682 = arith.addf %388, %393 : vector<32x128xf32>
    %683 = arith.addf %398, %403 : vector<32x128xf32>
    %684 = arith.addf %408, %413 : vector<32x128xf32>
    %685 = arith.addf %418, %423 : vector<32x128xf32>
    %686 = arith.addf %428, %433 : vector<32x128xf32>
    %687 = arith.addf %438, %443 : vector<32x128xf32>
    %688 = arith.addf %448, %453 : vector<32x128xf32>
    %689 = arith.addf %458, %463 : vector<32x128xf32>
    %690 = arith.addf %468, %473 : vector<32x128xf32>
    %691 = arith.addf %478, %483 : vector<32x128xf32>
    %692 = arith.addf %488, %493 : vector<32x128xf32>
    %693 = arith.addf %498, %503 : vector<32x128xf32>
    %694 = arith.addf %508, %513 : vector<32x128xf32>
    %695 = arith.addf %518, %523 : vector<32x128xf32>
    %696 = arith.addf %528, %533 : vector<32x128xf32>
    %697 = arith.addf %538, %543 : vector<32x128xf32>
    %698 = arith.addf %548, %553 : vector<32x128xf32>
    %699 = arith.addf %558, %563 : vector<32x128xf32>
    %700 = arith.addf %568, %573 : vector<32x128xf32>
    %701 = arith.addf %578, %583 : vector<32x128xf32>
    %702 = arith.addf %588, %593 : vector<32x128xf32>
    %703 = arith.addf %598, %603 : vector<32x128xf32>
    %704 = arith.addf %608, %613 : vector<32x128xf32>
    %705 = arith.addf %618, %623 : vector<32x128xf32>
    %706 = arith.addf %628, %633 : vector<32x128xf32>
    %707 = arith.addf %638, %643 : vector<32x128xf32>
    %708 = arith.addf %644, %645 : vector<32x128xf32>
    %709 = arith.addf %646, %647 : vector<32x128xf32>
    %710 = arith.addf %648, %649 : vector<32x128xf32>
    %711 = arith.addf %650, %651 : vector<32x128xf32>
    %712 = arith.addf %652, %653 : vector<32x128xf32>
    %713 = arith.addf %654, %655 : vector<32x128xf32>
    %714 = arith.addf %656, %657 : vector<32x128xf32>
    %715 = arith.addf %658, %659 : vector<32x128xf32>
    %716 = arith.addf %660, %661 : vector<32x128xf32>
    %717 = arith.addf %662, %663 : vector<32x128xf32>
    %718 = arith.addf %664, %665 : vector<32x128xf32>
    %719 = arith.addf %666, %667 : vector<32x128xf32>
    %720 = arith.addf %668, %669 : vector<32x128xf32>
    %721 = arith.addf %670, %671 : vector<32x128xf32>
    %722 = arith.addf %672, %673 : vector<32x128xf32>
    %723 = arith.addf %674, %675 : vector<32x128xf32>
    %724 = arith.addf %676, %677 : vector<32x128xf32>
    %725 = arith.addf %678, %679 : vector<32x128xf32>
    %726 = arith.addf %680, %681 : vector<32x128xf32>
    %727 = arith.addf %682, %683 : vector<32x128xf32>
    %728 = arith.addf %684, %685 : vector<32x128xf32>
    %729 = arith.addf %686, %687 : vector<32x128xf32>
    %730 = arith.addf %688, %689 : vector<32x128xf32>
    %731 = arith.addf %690, %691 : vector<32x128xf32>
    %732 = arith.addf %692, %693 : vector<32x128xf32>
    %733 = arith.addf %694, %695 : vector<32x128xf32>
    %734 = arith.addf %696, %697 : vector<32x128xf32>
    %735 = arith.addf %698, %699 : vector<32x128xf32>
    %736 = arith.addf %700, %701 : vector<32x128xf32>
    %737 = arith.addf %702, %703 : vector<32x128xf32>
    %738 = arith.addf %704, %705 : vector<32x128xf32>
    %739 = arith.addf %706, %707 : vector<32x128xf32>
    %740 = arith.addf %708, %709 : vector<32x128xf32>
    %741 = arith.addf %710, %711 : vector<32x128xf32>
    %742 = arith.addf %712, %713 : vector<32x128xf32>
    %743 = arith.addf %714, %715 : vector<32x128xf32>
    %744 = arith.addf %716, %717 : vector<32x128xf32>
    %745 = arith.addf %718, %719 : vector<32x128xf32>
    %746 = arith.addf %720, %721 : vector<32x128xf32>
    %747 = arith.addf %722, %723 : vector<32x128xf32>
    %748 = arith.addf %724, %725 : vector<32x128xf32>
    %749 = arith.addf %726, %727 : vector<32x128xf32>
    %750 = arith.addf %728, %729 : vector<32x128xf32>
    %751 = arith.addf %730, %731 : vector<32x128xf32>
    %752 = arith.addf %732, %733 : vector<32x128xf32>
    %753 = arith.addf %734, %735 : vector<32x128xf32>
    %754 = arith.addf %736, %737 : vector<32x128xf32>
    %755 = arith.addf %738, %739 : vector<32x128xf32>
    %756 = arith.addf %740, %741 : vector<32x128xf32>
    %757 = arith.addf %742, %743 : vector<32x128xf32>
    %758 = arith.addf %744, %745 : vector<32x128xf32>
    %759 = arith.addf %746, %747 : vector<32x128xf32>
    %760 = arith.addf %748, %749 : vector<32x128xf32>
    %761 = arith.addf %750, %751 : vector<32x128xf32>
    %762 = arith.addf %752, %753 : vector<32x128xf32>
    %763 = arith.addf %754, %755 : vector<32x128xf32>
    %764 = arith.addf %756, %757 : vector<32x128xf32>
    %765 = arith.addf %758, %759 : vector<32x128xf32>
    %766 = arith.addf %760, %761 : vector<32x128xf32>
    %767 = arith.addf %762, %763 : vector<32x128xf32>
    %768 = arith.addf %764, %765 : vector<32x128xf32>
    %769 = arith.addf %766, %767 : vector<32x128xf32>
    %770 = arith.addf %768, %769 : vector<32x128xf32>
    %cst_133 = arith.constant 7.812500e-03 : f32
    %771 = vector.broadcast %cst_133 : f32 to vector<32x128xf32>
    %772 = arith.mulf %770, %771 : vector<32x128xf32>
    %c0_134 = arith.constant 0 : index
    %c0_135 = arith.constant 0 : index
    %773 = vector.load %arg4[%c0_134, %c0_135] : memref<32x128xf32, #tpu.memory_space<vmem>>, vector<32x128xf32>
    tpu.vector_store %arg4[%c0_134, %c0_135], %772 {strides = array<i32>} : memref<32x128xf32, #tpu.memory_space<vmem>>, vector<32x128xf32>,
    return
  }
  func.func @transform_0(%arg0: i32) -> (i32, i32) {
    %c0_i32 = arith.constant 0 : i32
    %c0_i32_0 = arith.constant 0 : i32
    %c0_i32_1 = arith.constant 0 : i32
    return %c0_i32, %c0_i32_0 : i32, i32
  }
  func.func @transform_1(%arg0: i32) -> (i32, i32) {
    %c0_i32 = arith.constant 0 : i32
    %c0_i32_0 = arith.constant 0 : i32
    %c0_i32_1 = arith.constant 0 : i32
    return %c0_i32, %c0_i32_0 : i32, i32
  }
  func.func @transform_2(%arg0: i32) -> (i32, i32) {
    %c0_i32 = arith.constant 0 : i32
    %c0_i32_0 = arith.constant 0 : i32
    return %c0_i32, %arg0 : i32, i32
  }
  func.func @transform_3(%arg0: i32) -> (i32, i32) {
    %c0_i32 = arith.constant 0 : i32
    %c0_i32_0 = arith.constant 0 : i32
    return %c0_i32, %arg0 : i32, i32
  }
}

</mosaic_0001>

<llo_original>
// kernel: chunked_forward.1
$region0: #{chunked_forward.1}
  #allocation0 [shape = 'u32[]', space=smem, size = 0x4, offset = 0x4, fixed_abs, tag = 'smem constant byte address 0x4 - core index']
  #allocation1 [shape = 'u32[144,128]{1,0:T(1,128)}', space=vmem, size = 0x12000, scoped, tag = 'internal scratch']
  %s0 = inlined_call_operand.vmem [shape: bf16[32,4], index: 0, kind: input, shape index: {}]
  %s1 = inlined_call_operand.vmem [shape: f32[32,1], index: 1, kind: input, shape index: {}]
  %s2 = inlined_call_operand.vmem [shape: bf16[4,32768], index: 2, kind: input, shape index: {}]
  %s3 = inlined_call_operand.hbm [shape: f32[32,256], index: 3, kind: output, shape index: {}]
  %s4 = sld [smem:[#allocation0]]
  $region45: #{chunked_forward.1} parent=0
    _
  %s6 = ssub.s32 1, %s4
  %s7 = scalar_select 0, %s6, %s4
  $region1: #{chunked_forward.1} parent=0
    #allocation2 [shape = 'u8[32768]{0}', space=vmem, size = 0x8000, scoped, tag = 'output window, operand 0']
    #allocation3 [shape = 's32[2]{0}', space=sflag, size = 0x8, scoped, tag = 'scoped memory for chunked_forward.1']
    %8 = vsyncpa [#allocation3], 0
    %s9 = scalar_lea.sflag [#allocation3], 1
    %10 = vsyncpa %s9, 0
    loop: start=0, step=1, limit=4
    $region2: #{chunked_forward.1} parent=1 // loop_pre_header
      _
    $region3: #{chunked_forward.1} parent=1 // loop_header
      %s12 = sphi 0, %s16
      %p13 = scmp.ge.s32.totalorder %s12, 4
      %s20 = sphi 0, %s20
      %s22 = sphi 0, %s20
      %s23 = sphi 0, %s22
      %s37 = sphi 0, %s23
      %s41 = sphi 0, %s41
      %s43 = sphi 0, %s41
      %s44 = sphi 0, %s43
      %s58 = sphi 0, %s44
      %s64 = sphi 0, %s66
      %s67 = sphi 0, %s64
      %s68 = sphi 0, %s67
      %s84 = sphi 0, %s68
      %s90 = sphi 0, %s92
      %s93 = sphi 0, %s90
      %s94 = sphi 0, %s93
      %s110 = sphi 0, %s94
    $region4: #{chunked_forward.1} parent=1 // loop_header_branch
      %15 = sbr.rel (%p13) target = $region8
    $region5: #{chunked_forward.1} parent=1 // loop_body
      %s17 = ssub.s32 %s12, 1
      %s18 = ssub.s32 %s12, 2
      %s19 = sadd.s32 %s12, 1
      %s21 = sadd.s32 %s20, 1
      %p24 = scmp.eq.s32.totalorder %s12, 1
      %p25 = scmp.ne.s32.totalorder %s20, %s22
      %p26 = scmp.eq.s32.totalorder %s12, 0
      %p27 = por %p25, %p26
      %p28 = scmp.ne.s32.totalorder %s20, %s22
      %p29 = scmp.eq.s32.totalorder %s17, 1
      %p30 = por %p28, %p29
      %p31 = scmp.ne.s32.totalorder %s22, %s23
      %p32 = scmp.eq.s32.totalorder %s17, 0
      %p33 = por %p31, %p32
      %p34 = scmp.ne.s32.totalorder %s22, %s23
      %p35 = scmp.eq.s32.totalorder %s18, 1
      %p36 = por %p34, %p35
      %p38 = scmp.ne.s32.totalorder %s23, %s37
      %p39 = scmp.eq.s32.totalorder %s18, 0
      %p40 = por %p38, %p39
      %s42 = sadd.s32 %s41, 1
      %p45 = scmp.eq.s32.totalorder %s12, 1
      %p46 = scmp.ne.s32.totalorder %s41, %s43
      %p47 = scmp.eq.s32.totalorder %s12, 0
      %p48 = por %p46, %p47
      %p49 = scmp.ne.s32.totalorder %s41, %s43
      %p50 = scmp.eq.s32.totalorder %s17, 1
      %p51 = por %p49, %p50
      %p52 = scmp.ne.s32.totalorder %s43, %s44
      %p53 = scmp.eq.s32.totalorder %s17, 0
      %p54 = por %p52, %p53
      %p55 = scmp.ne.s32.totalorder %s43, %s44
      %p56 = scmp.eq.s32.totalorder %s18, 1
      %p57 = por %p55, %p56
      %p59 = scmp.ne.s32.totalorder %s44, %s58
      %p60 = scmp.eq.s32.totalorder %s18, 0
      %p61 = por %p59, %p60
      %s62 = ssub.s32 %s12, %s19
      %p63 = scmp.eq.s32.totalorder %s62, 0
      %s65 = sadd.s32 %s64, 1
      %s66 = scalar_select %p63, %s64, %s65
      %p69 = pneg %p63
      %p70 = scmp.eq.s32.totalorder %s12, 1
      %p71 = por %p69, %p70
      %p72 = scmp.ne.s32.totalorder %s64, %s67
      %p73 = scmp.eq.s32.totalorder %s12, 0
      %p74 = por %p72, %p73
      %p75 = scmp.ne.s32.totalorder %s64, %s67
      %p76 = scmp.eq.s32.totalorder %s17, 1
      %p77 = por %p75, %p76
      %p78 = scmp.ne.s32.totalorder %s67, %s68
      %p79 = scmp.eq.s32.totalorder %s17, 0
      %p80 = por %p78, %p79
      %p81 = scmp.ne.s32.totalorder %s67, %s68
      %p82 = scmp.eq.s32.totalorder %s18, 1
      %p83 = por %p81, %p82
      %p85 = scmp.ne.s32.totalorder %s68, %s84
      %p86 = scmp.eq.s32.totalorder %s18, 0
      %p87 = por %p85, %p86
      %s88 = ssub.s32 %s12, %s19
      %p89 = scmp.eq.s32.totalorder %s88, 0
      %s91 = sadd.s32 %s90, 1
      %s92 = scalar_select %p89, %s90, %s91
      %p95 = pneg %p89
      %p96 = scmp.eq.s32.totalorder %s12, 1
      %p97 = por %p95, %p96
      %p98 = scmp.ne.s32.totalorder %s90, %s93
      %p99 = scmp.eq.s32.totalorder %s12, 0
      %p100 = por %p98, %p99
      %p101 = scmp.ne.s32.totalorder %s90, %s93
      %p102 = scmp.eq.s32.totalorder %s17, 1
      %p103 = por %p101, %p102
      %p104 = scmp.ne.s32.totalorder %s93, %s94
      %p105 = scmp.eq.s32.totalorder %s17, 0
      %p106 = por %p104, %p105
      %p107 = scmp.ne.s32.totalorder %s93, %s94
      %p108 = scmp.eq.s32.totalorder %s18, 1
      %p109 = por %p107, %p108
      %p111 = scmp.ne.s32.totalorder %s94, %s110
      %p112 = scmp.eq.s32.totalorder %s18, 0
      %p113 = por %p111, %p112
      %p114 = scmp.le.s32.totalorder 1, %s12
      %p115 = scmp.lt.s32.totalorder %s12, 3
      %p116 = pnand %p114, %p115
      %p117 = pneg %p116
      // Predicated region
      $region9: #{chunked_forward.1} parent=5 // pred_check
        _
      $region10: #{chunked_forward.1} parent=5 // pred_check_branch
        %119 = sbr.rel (%p116) target = $region12
      $region11: #{chunked_forward.1} parent=5 // pred_region
        %s120 = ssub.s32 %s12, 1
        // Predicated region
        $region13: #{chunked_forward.1} parent=11 // pred_check
          %p121 = pneg %p33
        $region14: #{chunked_forward.1} parent=11 // pred_check_branch
          %123 = sbr.rel (%p121) target = $region16
        $region15: #{chunked_forward.1} parent=11 // pred_region
          _
        $region16: #{chunked_forward.1} parent=11 // pred_fallthru
          _
        // Predicated region
        $region17: #{chunked_forward.1} parent=11 // pred_check
          %p124 = pneg %p54
        $region18: #{chunked_forward.1} parent=11 // pred_check_branch
          %126 = sbr.rel (%p124) target = $region20
        $region19: #{chunked_forward.1} parent=11 // pred_region
          _
        $region20: #{chunked_forward.1} parent=11 // pred_fallthru
          _
      $region12: #{chunked_forward.1} parent=5 // pred_fallthru
        _
      %p127 = scmp.lt.s32.totalorder %s12, 2
      // Predicated region
      $region21: #{chunked_forward.1} parent=5 // pred_check
        %p128 = pneg %p127
      $region22: #{chunked_forward.1} parent=5 // pred_check_branch
        %130 = sbr.rel (%p128) target = $region24
      $region23: #{chunked_forward.1} parent=5 // pred_region
        // Predicated region
        $region25: #{chunked_forward.1} parent=23 // pred_check
          %p131 = pneg %p74
        $region26: #{chunked_forward.1} parent=23 // pred_check_branch
          %133 = sbr.rel (%p131) target = $region28
        $region27: #{chunked_forward.1} parent=23 // pred_region
          %s134 = smul.u32 128, %s12
          %p135 = scmp.lt.s32.totalorder %s134, 255
          %s136 = scalar_select %p135, %s134, 255
          %s137 = smul.addr %s136, 2
          %s138 = scalar_lea.vmem %s2, %s137
          %s139 = smul.u32 128, %s12
        $region28: #{chunked_forward.1} parent=23 // pred_fallthru
          _
      $region24: #{chunked_forward.1} parent=5 // pred_fallthru
        _
      %p140 = scmp.le.s32.totalorder 1, %s12
      %p141 = scmp.lt.s32.totalorder %s12, 3
      %p142 = pnand %p140, %p141
      %p143 = pneg %p142
      // Predicated region
      $region29: #{chunked_forward.1} parent=5 // pred_check
        _
      $region30: #{chunked_forward.1} parent=5 // pred_check_branch
        %145 = sbr.rel (%p142) target = $region32
      $region31: #{chunked_forward.1} parent=5 // pred_region
        %s146 = ssub.s32 %s12, 1
        %p147 = pneg %p33
        %p148 = pneg %p30
        %p149 = pneg %p54
        %p150 = pneg %p51
        %s151 = smul.u32 128, %s17
        %p152 = scmp.lt.s32.totalorder %s151, 255
        %s153 = scalar_select %p152, %s151, 255
        %s154 = smul.addr %s153, 2
        %s155 = scalar_lea.vmem %s2, %s154
        %p156 = pneg %p80
        %p157 = pneg %p77
        %p158 = pneg %p106
        %p159 = pneg %p103
        %s160 = sand.u32 %s93, 1
        %s161 = scalar_lea.sflag [#allocation3], %s160
        %s162 = sand.u32 %s93, 1
        %s163 = smul.addr %s162, 32
        %s164 = scalar_lea.vmem [#allocation2], %s163
        %s165 = smul.u32 128, %s17
        %p166 = scmp.lt.s32.totalorder %s165, 255
        %s167 = scalar_select %p166, %s165, 255
        %s168 = smul.addr %s167, 2
        %s169 = scalar_lea.vmem %s2, %s168
        %s170 = smul.u32 128, %s17
        %v172 = vld [vmem:[%s0] sm:$0xf]
        %v173 = vld [vmem:[%s0 + $0x4] sm:$0xf]
        %v174 = vld [vmem:[%s0 + $0x8] sm:$0xf]
        %v175 = vld [vmem:[%s0 + $0xc] sm:$0xf]
        %v176 = vld [vmem:[%s169] sm:$0xff]
        %v177 = vld [vmem:[%s169 + $0x8] sm:$0xff]
        %v178 = vld [vmem:[%s169 + $0x10] sm:$0xff]
        %v179 = vld [vmem:[%s169 + $0x18] sm:$0xff]
        %v180 = vld [vmem:[%s169 + $0x20] sm:$0xff]
        %v181 = vld [vmem:[%s169 + $0x28] sm:$0xff]
        %v182 = vld [vmem:[%s169 + $0x30] sm:$0xff]
        %v183 = vld [vmem:[%s169 + $0x38] sm:$0xff]
        %v184 = vld [vmem:[%s169 + $0x40] sm:$0xff]
        %v185 = vld [vmem:[%s169 + $0x48] sm:$0xff]
        %v186 = vld [vmem:[%s169 + $0x50] sm:$0xff]
        %v187 = vld [vmem:[%s169 + $0x58] sm:$0xff]
        %v188 = vld [vmem:[%s169 + $0x60] sm:$0xff]
        %v189 = vld [vmem:[%s169 + $0x68] sm:$0xff]
        %v190 = vld [vmem:[%s169 + $0x70] sm:$0xff]
        %v191 = vld [vmem:[%s169 + $0x78] sm:$0xff]
        %v192 = vld [vmem:[%s169 + $0x80] sm:$0xff]
        %v193 = vld [vmem:[%s169 + $0x88] sm:$0xff]
        %v194 = vld [vmem:[%s169 + $0x90] sm:$0xff]
        %v195 = vld [vmem:[%s169 + $0x98] sm:$0xff]
        %v196 = vld [vmem:[%s169 + $0xa0] sm:$0xff]
        %v197 = vld [vmem:[%s169 + $0xa8] sm:$0xff]
        %v198 = vld [vmem:[%s169 + $0xb0] sm:$0xff]
        %v199 = vld [vmem:[%s169 + $0xb8] sm:$0xff]
        %v200 = vld [vmem:[%s169 + $0xc0] sm:$0xff]
        %v201 = vld [vmem:[%s169 + $0xc8] sm:$0xff]
        %v202 = vld [vmem:[%s169 + $0xd0] sm:$0xff]
        %v203 = vld [vmem:[%s169 + $0xd8] sm:$0xff]
        %v204 = vld [vmem:[%s169 + $0xe0] sm:$0xff]
        %v205 = vld [vmem:[%s169 + $0xe8] sm:$0xff]
        %v206 = vld [vmem:[%s169 + $0xf0] sm:$0xff]
        %v207 = vld [vmem:[%s169 + $0xf8] sm:$0xff]
        %v212 = vunpack.c.l.b16 %v172
        %v213 = vunpack.c.l.b16 %v173
        %v214 = vunpack.c.l.b16 %v174
        %v215 = vunpack.c.l.b16 %v175
        %v216 = vpack.c.b16 %v213, %v212
        %v217 = vpack.c.b16 %v215, %v214
        %v250 = vcombine.high %v176, %v176
        %v252 = vunpack.c.l.s4 1983009808
        %v253 = vunpack.c.0.s8 %v252
        %v254 = vlaneseq
        %v255 = vshrl.u32 %v254, 7
        %v256 = vsub.s32 %v253, %v255
        %v257 = vrot.slane %v176, %v256
        %v259 = vunpack.c.l.s4 1983009808
        %v260 = vunpack.c.0.s8 %v259
        %v261 = vlaneseq
        %v262 = vshrl.u32 %v261, 7
        %v263 = vsub.s32 %v260, %v262
        %v264 = vrot.slane %v250, %v263
        %v265 = vcombine.high %v257, %v257
        %v266 = vcombine.high %v264, %v264
        %v267 = vcombine.high %v177, %v177
        %v269 = vunpack.c.l.s4 1983009808
        %v270 = vunpack.c.0.s8 %v269
        %v271 = vlaneseq
        %v272 = vshrl.u32 %v271, 7
        %v273 = vsub.s32 %v270, %v272
        %v274 = vrot.slane %v177, %v273
        %v276 = vunpack.c.l.s4 1983009808
        %v277 = vunpack.c.0.s8 %v276
        %v278 = vlaneseq
        %v279 = vshrl.u32 %v278, 7
        %v280 = vsub.s32 %v277, %v279
        %v281 = vrot.slane %v267, %v280
        %v282 = vcombine.high %v274, %v274
        %v283 = vcombine.high %v281, %v281
        %v284 = vcombine.high %v178, %v178
        %v286 = vunpack.c.l.s4 1983009808
        %v287 = vunpack.c.0.s8 %v286
        %v288 = vlaneseq
        %v289 = vshrl.u32 %v288, 7
        %v290 = vsub.s32 %v287, %v289
        %v291 = vrot.slane %v178, %v290
        %v293 = vunpack.c.l.s4 1983009808
        %v294 = vunpack.c.0.s8 %v293
        %v295 = vlaneseq
        %v296 = vshrl.u32 %v295, 7
        %v297 = vsub.s32 %v294, %v296
        %v298 = vrot.slane %v284, %v297
        %v299 = vcombine.high %v291, %v291
        %v300 = vcombine.high %v298, %v298
        %v301 = vcombine.high %v179, %v179
        %v303 = vunpack.c.l.s4 1983009808
        %v304 = vunpack.c.0.s8 %v303
        %v305 = vlaneseq
        %v306 = vshrl.u32 %v305, 7
        %v307 = vsub.s32 %v304, %v306
        %v308 = vrot.slane %v179, %v307
        %v310 = vunpack.c.l.s4 1983009808
        %v311 = vunpack.c.0.s8 %v310
        %v312 = vlaneseq
        %v313 = vshrl.u32 %v312, 7
        %v314 = vsub.s32 %v311, %v313
        %v315 = vrot.slane %v301, %v314
        %v316 = vcombine.high %v308, %v308
        %v317 = vcombine.high %v315, %v315
        %v318 = vcombine.high %v180, %v180
        %v320 = vunpack.c.l.s4 1983009808
        %v321 = vunpack.c.0.s8 %v320
        %v322 = vlaneseq
        %v323 = vshrl.u32 %v322, 7
        %v324 = vsub.s32 %v321, %v323
        %v325 = vrot.slane %v180, %v324
        %v327 = vunpack.c.l.s4 1983009808
        %v328 = vunpack.c.0.s8 %v327
        %v329 = vlaneseq
        %v330 = vshrl.u32 %v329, 7
        %v331 = vsub.s32 %v328, %v330
        %v332 = vrot.slane %v318, %v331
        %v333 = vcombine.high %v325, %v325
        %v334 = vcombine.high %v332, %v332
        %v335 = vcombine.high %v181, %v181
        %v337 = vunpack.c.l.s4 1983009808
        %v338 = vunpack.c.0.s8 %v337
        %v339 = vlaneseq
        %v340 = vshrl.u32 %v339, 7
        %v341 = vsub.s32 %v338, %v340
        %v342 = vrot.slane %v181, %v341
        %v344 = vunpack.c.l.s4 1983009808
        %v345 = vunpack.c.0.s8 %v344
        %v346 = vlaneseq
        %v347 = vshrl.u32 %v346, 7
        %v348 = vsub.s32 %v345, %v347
        %v349 = vrot.slane %v335, %v348
        %v350 = vcombine.high %v342, %v342
        %v351 = vcombine.high %v349, %v349
        %v352 = vcombine.high %v182, %v182
        %v354 = vunpack.c.l.s4 1983009808
        %v355 = vunpack.c.0.s8 %v354
        %v356 = vlaneseq
        %v357 = vshrl.u32 %v356, 7
        %v358 = vsub.s32 %v355, %v357
        %v359 = vrot.slane %v182, %v358
        %v361 = vunpack.c.l.s4 1983009808
        %v362 = vunpack.c.0.s8 %v361
        %v363 = vlaneseq
        %v364 = vshrl.u32 %v363, 7
        %v365 = vsub.s32 %v362, %v364
        %v366 = vrot.slane %v352, %v365
        %v367 = vcombine.high %v359, %v359
        %v368 = vcombine.high %v366, %v366
        %v369 = vcombine.high %v183, %v183
        %v371 = vunpack.c.l.s4 1983009808
        %v372 = vunpack.c.0.s8 %v371
        %v373 = vlaneseq
        %v374 = vshrl.u32 %v373, 7
        %v375 = vsub.s32 %v372, %v374
        %v376 = vrot.slane %v183, %v375
        %v378 = vunpack.c.l.s4 1983009808
        %v379 = vunpack.c.0.s8 %v378
        %v380 = vlaneseq
        %v381 = vshrl.u32 %v380, 7
        %v382 = vsub.s32 %v379, %v381
        %v383 = vrot.slane %v369, %v382
        %v384 = vcombine.high %v376, %v376
        %v385 = vcombine.high %v383, %v383
        %v386 = vcombine.high %v184, %v184
        %v388 = vunpack.c.l.s4 1983009808
        %v389 = vunpack.c.0.s8 %v388
        %v390 = vlaneseq
        %v391 = vshrl.u32 %v390, 7
        %v392 = vsub.s32 %v389, %v391
        %v393 = vrot.slane %v184, %v392
        %v395 = vunpack.c.l.s4 1983009808
        %v396 = vunpack.c.0.s8 %v395
        %v397 = vlaneseq
        %v398 = vshrl.u32 %v397, 7
        %v399 = vsub.s32 %v396, %v398
        %v400 = vrot.slane %v386, %v399
        %v401 = vcombine.high %v393, %v393
        %v402 = vcombine.high %v400, %v400
        %v403 = vcombine.high %v185, %v185
        %v405 = vunpack.c.l.s4 1983009808
        %v406 = vunpack.c.0.s8 %v405
        %v407 = vlaneseq
        %v408 = vshrl.u32 %v407, 7
        %v409 = vsub.s32 %v406, %v408
        %v410 = vrot.slane %v185, %v409
        %v412 = vunpack.c.l.s4 1983009808
        %v413 = vunpack.c.0.s8 %v412
        %v414 = vlaneseq
        %v415 = vshrl.u32 %v414, 7
        %v416 = vsub.s32 %v413, %v415
        %v417 = vrot.slane %v403, %v416
        %v418 = vcombine.high %v410, %v410
        %v419 = vcombine.high %v417, %v417
        %v420 = vcombine.high %v186, %v186
        %v422 = vunpack.c.l.s4 1983009808
        %v423 = vunpack.c.0.s8 %v422
        %v424 = vlaneseq
        %v425 = vshrl.u32 %v424, 7
        %v426 = vsub.s32 %v423, %v425
        %v427 = vrot.slane %v186, %v426
        %v429 = vunpack.c.l.s4 1983009808
        %v430 = vunpack.c.0.s8 %v429
        %v431 = vlaneseq
        %v432 = vshrl.u32 %v431, 7
        %v433 = vsub.s32 %v430, %v432
        %v434 = vrot.slane %v420, %v433
        %v435 = vcombine.high %v427, %v427
        %v436 = vcombine.high %v434, %v434
        %v437 = vcombine.high %v187, %v187
        %v439 = vunpack.c.l.s4 1983009808
        %v440 = vunpack.c.0.s8 %v439
        %v441 = vlaneseq
        %v442 = vshrl.u32 %v441, 7
        %v443 = vsub.s32 %v440, %v442
        %v444 = vrot.slane %v187, %v443
        %v446 = vunpack.c.l.s4 1983009808
        %v447 = vunpack.c.0.s8 %v446
        %v448 = vlaneseq
        %v449 = vshrl.u32 %v448, 7
        %v450 = vsub.s32 %v447, %v449
        %v451 = vrot.slane %v437, %v450
        %v452 = vcombine.high %v444, %v444
        %v453 = vcombine.high %v451, %v451
        %v454 = vcombine.high %v188, %v188
        %v456 = vunpack.c.l.s4 1983009808
        %v457 = vunpack.c.0.s8 %v456
        %v458 = vlaneseq
        %v459 = vshrl.u32 %v458, 7
        %v460 = vsub.s32 %v457, %v459
        %v461 = vrot.slane %v188, %v460
        %v463 = vunpack.c.l.s4 1983009808
        %v464 = vunpack.c.0.s8 %v463
        %v465 = vlaneseq
        %v466 = vshrl.u32 %v465, 7
        %v467 = vsub.s32 %v464, %v466
        %v468 = vrot.slane %v454, %v467
        %v469 = vcombine.high %v461, %v461
        %v470 = vcombine.high %v468, %v468
        %v471 = vcombine.high %v189, %v189
        %v473 = vunpack.c.l.s4 1983009808
        %v474 = vunpack.c.0.s8 %v473
        %v475 = vlaneseq
        %v476 = vshrl.u32 %v475, 7
        %v477 = vsub.s32 %v474, %v476
        %v478 = vrot.slane %v189, %v477
        %v480 = vunpack.c.l.s4 1983009808
        %v481 = vunpack.c.0.s8 %v480
        %v482 = vlaneseq
        %v483 = vshrl.u32 %v482, 7
        %v484 = vsub.s32 %v481, %v483
        %v485 = vrot.slane %v471, %v484
        %v486 = vcombine.high %v478, %v478
        %v487 = vcombine.high %v485, %v485
        %v488 = vcombine.high %v190, %v190
        %v490 = vunpack.c.l.s4 1983009808
        %v491 = vunpack.c.0.s8 %v490
        %v492 = vlaneseq
        %v493 = vshrl.u32 %v492, 7
        %v494 = vsub.s32 %v491, %v493
        %v495 = vrot.slane %v190, %v494
        %v497 = vunpack.c.l.s4 1983009808
        %v498 = vunpack.c.0.s8 %v497
        %v499 = vlaneseq
        %v500 = vshrl.u32 %v499, 7
        %v501 = vsub.s32 %v498, %v500
        %v502 = vrot.slane %v488, %v501
        %v503 = vcombine.high %v495, %v495
        %v504 = vcombine.high %v502, %v502
        %v505 = vcombine.high %v191, %v191
        %v507 = vunpack.c.l.s4 1983009808
        %v508 = vunpack.c.0.s8 %v507
        %v509 = vlaneseq
        %v510 = vshrl.u32 %v509, 7
        %v511 = vsub.s32 %v508, %v510
        %v512 = vrot.slane %v191, %v511
        %v514 = vunpack.c.l.s4 1983009808
        %v515 = vunpack.c.0.s8 %v514
        %v516 = vlaneseq
        %v517 = vshrl.u32 %v516, 7
        %v518 = vsub.s32 %v515, %v517
        %v519 = vrot.slane %v505, %v518
        %v520 = vcombine.high %v512, %v512
        %v521 = vcombine.high %v519, %v519
        %v522 = vcombine.high %v192, %v192
        %v524 = vunpack.c.l.s4 1983009808
        %v525 = vunpack.c.0.s8 %v524
        %v526 = vlaneseq
        %v527 = vshrl.u32 %v526, 7
        %v528 = vsub.s32 %v525, %v527
        %v529 = vrot.slane %v192, %v528
        %v531 = vunpack.c.l.s4 1983009808
        %v532 = vunpack.c.0.s8 %v531
        %v533 = vlaneseq
        %v534 = vshrl.u32 %v533, 7
        %v535 = vsub.s32 %v532, %v534
        %v536 = vrot.slane %v522, %v535
        %v537 = vcombine.high %v529, %v529
        %v538 = vcombine.high %v536, %v536
        %v539 = vcombine.high %v193, %v193
        %v541 = vunpack.c.l.s4 1983009808
        %v542 = vunpack.c.0.s8 %v541
        %v543 = vlaneseq
        %v544 = vshrl.u32 %v543, 7
        %v545 = vsub.s32 %v542, %v544
        %v546 = vrot.slane %v193, %v545
        %v548 = vunpack.c.l.s4 1983009808
        %v549 = vunpack.c.0.s8 %v548
        %v550 = vlaneseq
        %v551 = vshrl.u32 %v550, 7
        %v552 = vsub.s32 %v549, %v551
        %v553 = vrot.slane %v539, %v552
        %v554 = vcombine.high %v546, %v546
        %v555 = vcombine.high %v553, %v553
        %v556 = vcombine.high %v194, %v194
        %v558 = vunpack.c.l.s4 1983009808
        %v559 = vunpack.c.0.s8 %v558
        %v560 = vlaneseq
        %v561 = vshrl.u32 %v560, 7
        %v562 = vsub.s32 %v559, %v561
        %v563 = vrot.slane %v194, %v562
        %v565 = vunpack.c.l.s4 1983009808
        %v566 = vunpack.c.0.s8 %v565
        %v567 = vlaneseq
        %v568 = vshrl.u32 %v567, 7
        %v569 = vsub.s32 %v566, %v568
        %v570 = vrot.slane %v556, %v569
        %v571 = vcombine.high %v563, %v563
        %v572 = vcombine.high %v570, %v570
        %v573 = vcombine.high %v195, %v195
        %v575 = vunpack.c.l.s4 1983009808
        %v576 = vunpack.c.0.s8 %v575
        %v577 = vlaneseq
        %v578 = vshrl.u32 %v577, 7
        %v579 = vsub.s32 %v576, %v578
        %v580 = vrot.slane %v195, %v579
        %v582 = vunpack.c.l.s4 1983009808
        %v583 = vunpack.c.0.s8 %v582
        %v584 = vlaneseq
        %v585 = vshrl.u32 %v584, 7
        %v586 = vsub.s32 %v583, %v585
        %v587 = vrot.slane %v573, %v586
        %v588 = vcombine.high %v580, %v580
        %v589 = vcombine.high %v587, %v587
        %v590 = vcombine.high %v196, %v196
        %v592 = vunpack.c.l.s4 1983009808
        %v593 = vunpack.c.0.s8 %v592
        %v594 = vlaneseq
        %v595 = vshrl.u32 %v594, 7
        %v596 = vsub.s32 %v593, %v595
        %v597 = vrot.slane %v196, %v596
        %v599 = vunpack.c.l.s4 1983009808
        %v600 = vunpack.c.0.s8 %v599
        %v601 = vlaneseq
        %v602 = vshrl.u32 %v601, 7
        %v603 = vsub.s32 %v600, %v602
        %v604 = vrot.slane %v590, %v603
        %v605 = vcombine.high %v597, %v597
        %v606 = vcombine.high %v604, %v604
        %v607 = vcombine.high %v197, %v197
        %v609 = vunpack.c.l.s4 1983009808
        %v610 = vunpack.c.0.s8 %v609
        %v611 = vlaneseq
        %v612 = vshrl.u32 %v611, 7
        %v613 = vsub.s32 %v610, %v612
        %v614 = vrot.slane %v197, %v613
        %v616 = vunpack.c.l.s4 1983009808
        %v617 = vunpack.c.0.s8 %v616
        %v618 = vlaneseq
        %v619 = vshrl.u32 %v618, 7
        %v620 = vsub.s32 %v617, %v619
        %v621 = vrot.slane %v607, %v620
        %v622 = vcombine.high %v614, %v614
        %v623 = vcombine.high %v621, %v621
        %v624 = vcombine.high %v198, %v198
        %v626 = vunpack.c.l.s4 1983009808
        %v627 = vunpack.c.0.s8 %v626
        %v628 = vlaneseq
        %v629 = vshrl.u32 %v628, 7
        %v630 = vsub.s32 %v627, %v629
        %v631 = vrot.slane %v198, %v630
        %v633 = vunpack.c.l.s4 1983009808
        %v634 = vunpack.c.0.s8 %v633
        %v635 = vlaneseq
        %v636 = vshrl.u32 %v635, 7
        %v637 = vsub.s32 %v634, %v636
        %v638 = vrot.slane %v624, %v637
        %v639 = vcombine.high %v631, %v631
        %v640 = vcombine.high %v638, %v638
        %v641 = vcombine.high %v199, %v199
        %v643 = vunpack.c.l.s4 1983009808
        %v644 = vunpack.c.0.s8 %v643
        %v645 = vlaneseq
        %v646 = vshrl.u32 %v645, 7
        %v647 = vsub.s32 %v644, %v646
        %v648 = vrot.slane %v199, %v647
        %v650 = vunpack.c.l.s4 1983009808
        %v651 = vunpack.c.0.s8 %v650
        %v652 = vlaneseq
        %v653 = vshrl.u32 %v652, 7
        %v654 = vsub.s32 %v651, %v653
        %v655 = vrot.slane %v641, %v654
        %v656 = vcombine.high %v648, %v648
        %v657 = vcombine.high %v655, %v655
        %v658 = vcombine.high %v200, %v200
        %v660 = vunpack.c.l.s4 1983009808
        %v661 = vunpack.c.0.s8 %v660
        %v662 = vlaneseq
        %v663 = vshrl.u32 %v662, 7
        %v664 = vsub.s32 %v661, %v663
        %v665 = vrot.slane %v200, %v664
        %v667 = vunpack.c.l.s4 1983009808
        %v668 = vunpack.c.0.s8 %v667
        %v669 = vlaneseq
        %v670 = vshrl.u32 %v669, 7
        %v671 = vsub.s32 %v668, %v670
        %v672 = vrot.slane %v658, %v671
        %v673 = vcombine.high %v665, %v665
        %v674 = vcombine.high %v672, %v672
        %v675 = vcombine.high %v201, %v201
        %v677 = vunpack.c.l.s4 1983009808
        %v678 = vunpack.c.0.s8 %v677
        %v679 = vlaneseq
        %v680 = vshrl.u32 %v679, 7
        %v681 = vsub.s32 %v678, %v680
        %v682 = vrot.slane %v201, %v681
        %v684 = vunpack.c.l.s4 1983009808
        %v685 = vunpack.c.0.s8 %v684
        %v686 = vlaneseq
        %v687 = vshrl.u32 %v686, 7
        %v688 = vsub.s32 %v685, %v687
        %v689 = vrot.slane %v675, %v688
        %v690 = vcombine.high %v682, %v682
        %v691 = vcombine.high %v689, %v689
        %v692 = vcombine.high %v202, %v202
        %v694 = vunpack.c.l.s4 1983009808
        %v695 = vunpack.c.0.s8 %v694
        %v696 = vlaneseq
        %v697 = vshrl.u32 %v696, 7
        %v698 = vsub.s32 %v695, %v697
        %v699 = vrot.slane %v202, %v698
        %v701 = vunpack.c.l.s4 1983009808
        %v702 = vunpack.c.0.s8 %v701
        %v703 = vlaneseq
        %v704 = vshrl.u32 %v703, 7
        %v705 = vsub.s32 %v702, %v704
        %v706 = vrot.slane %v692, %v705
        %v707 = vcombine.high %v699, %v699
        %v708 = vcombine.high %v706, %v706
        %v709 = vcombine.high %v203, %v203
        %v711 = vunpack.c.l.s4 1983009808
        %v712 = vunpack.c.0.s8 %v711
        %v713 = vlaneseq
        %v714 = vshrl.u32 %v713, 7
        %v715 = vsub.s32 %v712, %v714
        %v716 = vrot.slane %v203, %v715
        %v718 = vunpack.c.l.s4 1983009808
        %v719 = vunpack.c.0.s8 %v718
        %v720 = vlaneseq
        %v721 = vshrl.u32 %v720, 7
        %v722 = vsub.s32 %v719, %v721
        %v723 = vrot.slane %v709, %v722
        %v724 = vcombine.high %v716, %v716
        %v725 = vcombine.high %v723, %v723
        %v726 = vcombine.high %v204, %v204
        %v728 = vunpack.c.l.s4 1983009808
        %v729 = vunpack.c.0.s8 %v728
        %v730 = vlaneseq
        %v731 = vshrl.u32 %v730, 7
        %v732 = vsub.s32 %v729, %v731
        %v733 = vrot.slane %v204, %v732
        %v735 = vunpack.c.l.s4 1983009808
        %v736 = vunpack.c.0.s8 %v735
        %v737 = vlaneseq
        %v738 = vshrl.u32 %v737, 7
        %v739 = vsub.s32 %v736, %v738
        %v740 = vrot.slane %v726, %v739
        %v741 = vcombine.high %v733, %v733
        %v742 = vcombine.high %v740, %v740
        %v743 = vcombine.high %v205, %v205
        %v745 = vunpack.c.l.s4 1983009808
        %v746 = vunpack.c.0.s8 %v745
        %v747 = vlaneseq
        %v748 = vshrl.u32 %v747, 7
        %v749 = vsub.s32 %v746, %v748
        %v750 = vrot.slane %v205, %v749
        %v752 = vunpack.c.l.s4 1983009808
        %v753 = vunpack.c.0.s8 %v752
        %v754 = vlaneseq
        %v755 = vshrl.u32 %v754, 7
        %v756 = vsub.s32 %v753, %v755
        %v757 = vrot.slane %v743, %v756
        %v758 = vcombine.high %v750, %v750
        %v759 = vcombine.high %v757, %v757
        %v760 = vcombine.high %v206, %v206
        %v762 = vunpack.c.l.s4 1983009808
        %v763 = vunpack.c.0.s8 %v762
        %v764 = vlaneseq
        %v765 = vshrl.u32 %v764, 7
        %v766 = vsub.s32 %v763, %v765
        %v767 = vrot.slane %v206, %v766
        %v769 = vunpack.c.l.s4 1983009808
        %v770 = vunpack.c.0.s8 %v769
        %v771 = vlaneseq
        %v772 = vshrl.u32 %v771, 7
        %v773 = vsub.s32 %v770, %v772
        %v774 = vrot.slane %v760, %v773
        %v775 = vcombine.high %v767, %v767
        %v776 = vcombine.high %v774, %v774
        %v777 = vcombine.high %v207, %v207
        %v779 = vunpack.c.l.s4 1983009808
        %v780 = vunpack.c.0.s8 %v779
        %v781 = vlaneseq
        %v782 = vshrl.u32 %v781, 7
        %v783 = vsub.s32 %v780, %v782
        %v784 = vrot.slane %v207, %v783
        %v786 = vunpack.c.l.s4 1983009808
        %v787 = vunpack.c.0.s8 %v786
        %v788 = vlaneseq
        %v789 = vshrl.u32 %v788, 7
        %v790 = vsub.s32 %v787, %v789
        %v791 = vrot.slane %v777, %v790
        %v792 = vcombine.high %v784, %v784
        %v793 = vcombine.high %v791, %v791
        %vm794 = vcmask 31744
        %v796 = vsel %vm794, %v216, 0
        %v799 = vsel %vm794, %v217, 0
        %vm801 = vcmask 1041408
        %v803 = vsel %vm801, %v257, 0
        %v806 = vsel %vm801, %v265, 0
        %v809 = vsel %vm801, %v264, 0
        %v812 = vsel %vm801, %v266, 0
        %v815 = vsel %vm801, %v274, 0
        %v818 = vsel %vm801, %v282, 0
        %v821 = vsel %vm801, %v281, 0
        %v824 = vsel %vm801, %v283, 0
        %v827 = vsel %vm801, %v291, 0
        %v830 = vsel %vm801, %v299, 0
        %v833 = vsel %vm801, %v298, 0
        %v836 = vsel %vm801, %v300, 0
        %v839 = vsel %vm801, %v308, 0
        %v842 = vsel %vm801, %v316, 0
        %v845 = vsel %vm801, %v315, 0
        %v848 = vsel %vm801, %v317, 0
        %v851 = vsel %vm801, %v325, 0
        %v854 = vsel %vm801, %v333, 0
        %v857 = vsel %vm801, %v332, 0
        %v860 = vsel %vm801, %v334, 0
        %v863 = vsel %vm801, %v342, 0
        %v866 = vsel %vm801, %v350, 0
        %v869 = vsel %vm801, %v349, 0
        %v872 = vsel %vm801, %v351, 0
        %v875 = vsel %vm801, %v359, 0
        %v878 = vsel %vm801, %v367, 0
        %v881 = vsel %vm801, %v366, 0
        %v884 = vsel %vm801, %v368, 0
        %v887 = vsel %vm801, %v376, 0
        %v890 = vsel %vm801, %v384, 0
        %v893 = vsel %vm801, %v383, 0
        %v896 = vsel %vm801, %v385, 0
        %v899 = vsel %vm801, %v393, 0
        %v902 = vsel %vm801, %v401, 0
        %v905 = vsel %vm801, %v400, 0
        %v908 = vsel %vm801, %v402, 0
        %v911 = vsel %vm801, %v410, 0
        %v914 = vsel %vm801, %v418, 0
        %v917 = vsel %vm801, %v417, 0
        %v920 = vsel %vm801, %v419, 0
        %v923 = vsel %vm801, %v427, 0
        %v926 = vsel %vm801, %v435, 0
        %v929 = vsel %vm801, %v434, 0
        %v932 = vsel %vm801, %v436, 0
        %v935 = vsel %vm801, %v444, 0
        %v938 = vsel %vm801, %v452, 0
        %v941 = vsel %vm801, %v451, 0
        %v944 = vsel %vm801, %v453, 0
        %v947 = vsel %vm801, %v461, 0
        %v950 = vsel %vm801, %v469, 0
        %v953 = vsel %vm801, %v468, 0
        %v956 = vsel %vm801, %v470, 0
        %v959 = vsel %vm801, %v478, 0
        %v962 = vsel %vm801, %v486, 0
        %v965 = vsel %vm801, %v485, 0
        %v968 = vsel %vm801, %v487, 0
        %v971 = vsel %vm801, %v495, 0
        %v974 = vsel %vm801, %v503, 0
        %v977 = vsel %vm801, %v502, 0
        %v980 = vsel %vm801, %v504, 0
        %v983 = vsel %vm801, %v512, 0
        %v986 = vsel %vm801, %v520, 0
        %v989 = vsel %vm801, %v519, 0
        %v992 = vsel %vm801, %v521, 0
        %v995 = vsel %vm801, %v529, 0
        %v998 = vsel %vm801, %v537, 0
        %v1001 = vsel %vm801, %v536, 0
        %v1004 = vsel %vm801, %v538, 0
        %v1007 = vsel %vm801, %v546, 0
        %v1010 = vsel %vm801, %v554, 0
        %v1013 = vsel %vm801, %v553, 0
        %v1016 = vsel %vm801, %v555, 0
        %v1019 = vsel %vm801, %v563, 0
        %v1022 = vsel %vm801, %v571, 0
        %v1025 = vsel %vm801, %v570, 0
        %v1028 = vsel %vm801, %v572, 0
        %v1031 = vsel %vm801, %v580, 0
        %v1034 = vsel %vm801, %v588, 0
        %v1037 = vsel %vm801, %v587, 0
        %v1040 = vsel %vm801, %v589, 0
        %v1043 = vsel %vm801, %v597, 0
        %v1046 = vsel %vm801, %v605, 0
        %v1049 = vsel %vm801, %v604, 0
        %v1052 = vsel %vm801, %v606, 0
        %v1055 = vsel %vm801, %v614, 0
        %v1058 = vsel %vm801, %v622, 0
        %v1061 = vsel %vm801, %v621, 0
        %v1064 = vsel %vm801, %v623, 0
        %v1067 = vsel %vm801, %v631, 0
        %v1070 = vsel %vm801, %v639, 0
        %v1073 = vsel %vm801, %v638, 0
        %v1076 = vsel %vm801, %v640, 0
        %v1079 = vsel %vm801, %v648, 0
        %v1082 = vsel %vm801, %v656, 0
        %v1085 = vsel %vm801, %v655, 0
        %v1088 = vsel %vm801, %v657, 0
        %v1091 = vsel %vm801, %v665, 0
        %v1094 = vsel %vm801, %v673, 0
        %v1097 = vsel %vm801, %v672, 0
        %v1100 = vsel %vm801, %v674, 0
        %v1103 = vsel %vm801, %v682, 0
        %v1106 = vsel %vm801, %v690, 0
        %v1109 = vsel %vm801, %v689, 0
        %v1112 = vsel %vm801, %v691, 0
        %v1115 = vsel %vm801, %v699, 0
        %v1118 = vsel %vm801, %v707, 0
        %v1121 = vsel %vm801, %v706, 0
        %v1124 = vsel %vm801, %v708, 0
        %v1127 = vsel %vm801, %v716, 0
        %v1130 = vsel %vm801, %v724, 0
        %v1133 = vsel %vm801, %v723, 0
        %v1136 = vsel %vm801, %v725, 0
        %v1139 = vsel %vm801, %v733, 0
        %v1142 = vsel %vm801, %v741, 0
        %v1145 = vsel %vm801, %v740, 0
        %v1148 = vsel %vm801, %v742, 0
        %v1151 = vsel %vm801, %v750, 0
        %v1154 = vsel %vm801, %v758, 0
        %v1157 = vsel %vm801, %v757, 0
        %v1160 = vsel %vm801, %v759, 0
        %v1163 = vsel %vm801, %v767, 0
        %v1166 = vsel %vm801, %v775, 0
        %v1169 = vsel %vm801, %v774, 0
        %v1172 = vsel %vm801, %v776, 0
        %v1175 = vsel %vm801, %v784, 0
        %v1178 = vsel %vm801, %v792, 0
        %v1181 = vsel %vm801, %v791, 0
        %v1184 = vsel %vm801, %v793, 0
        %1186 = vmatprep.subr.bf16.mxu0 %v806
        %1187 = vmatpush1.bf16.msra.mxu0 %v803
        %1188 = vmatprep.subr.bf16.mxu0 0
        %1189 = vmatpush1.bf16.msra.mxu0 0
        %1190 = vmatprep.subr.bf16.mxu0 0
        %1191 = vmatpush1.bf16.msra.mxu0 0
        %1192 = vmatprep.subr.bf16.mxu0 0
        %1193 = vmatpush1.bf16.msra.mxu0 0
        %1194 = vmatprep.subr.bf16.mxu0 0
        %1195 = vmatpush1.bf16.msra.mxu0 0
        %1196 = vmatprep.subr.bf16.mxu0 0
        %1197 = vmatpush1.bf16.msra.mxu0 0
        %1198 = vmatprep.subr.bf16.mxu0 0
        %1199 = vmatpush1.bf16.msra.mxu0 0
        %1200 = vmatprep.subr.bf16.mxu0 0
        %1201 = vmatpush1.bf16.msra.mxu0 0
        %1202 = vmatprep.subr.bf16.mxu0 0
        %1203 = vmatpush1.bf16.msra.mxu0 0
        %1204 = vmatprep.subr.bf16.mxu0 0
        %1205 = vmatpush1.bf16.msra.mxu0 0
        %1206 = vmatprep.subr.bf16.mxu0 0
        %1207 = vmatpush1.bf16.msra.mxu0 0
        %1208 = vmatprep.subr.bf16.mxu0 0
        %1209 = vmatpush1.bf16.msra.mxu0 0
        %1210 = vmatprep.subr.bf16.mxu0 0
        %1211 = vmatpush1.bf16.msra.mxu0 0
        %1212 = vmatprep.subr.bf16.mxu0 0
        %1213 = vmatpush1.bf16.msra.mxu0 0
        %1214 = vmatprep.subr.bf16.mxu0 0
        %1215 = vmatpush1.bf16.msra.mxu0 0
        %1216 = vmatprep.subr.bf16.mxu0 0
        %1217 = vmatpush1.bf16.msra.mxu0 0
        %1218 = vmatprep.mubr.bf16.mxu0 0
        %1219 = vmatmul.mubr.bf16.gmra.mrb[0].mxu0 %v796
        %v1220 = vpop.f32.mrb[0].mxu0
        %v1221 = vadd.f32 0.0, %v1220
        %v1222 = vpop.f32.mrb[0].mxu0
        %v1223 = vadd.f32 0.0, %v1222
        %v1224 = vpop.f32.mrb[0].mxu0
        %v1225 = vadd.f32 0.0, %v1224
        %v1226 = vpop.f32.mrb[0].mxu0
        %v1227 = vadd.f32 0.0, %v1226
        %1228 = vmatprep.mubr.bf16.mxu0 0
        %1229 = vmatmul.mubr.bf16.gmra.mrb[0].mxu0 %v799
        %v1230 = vpop.f32.mrb[0].mxu0
        %v1231 = vadd.f32 0.0, %v1230
        %v1232 = vpop.f32.mrb[0].mxu0
        %v1233 = vadd.f32 0.0, %v1232
        %v1234 = vpop.f32.mrb[0].mxu0
        %v1235 = vadd.f32 0.0, %v1234
        %v1236 = vpop.f32.mrb[0].mxu0
        %v1237 = vadd.f32 0.0, %v1236
        %1238 = vdwg.mxu0
        %1239 = vmatprep.subr.bf16.mxu0 %v812
        %1240 = vmatpush1.bf16.msra.mxu0 %v809
        %1241 = vmatprep.subr.bf16.mxu0 0
        %1242 = vmatpush1.bf16.msra.mxu0 0
        %1243 = vmatprep.subr.bf16.mxu0 0
        %1244 = vmatpush1.bf16.msra.mxu0 0
        %1245 = vmatprep.subr.bf16.mxu0 0
        %1246 = vmatpush1.bf16.msra.mxu0 0
        %1247 = vmatprep.subr.bf16.mxu0 0
        %1248 = vmatpush1.bf16.msra.mxu0 0
        %1249 = vmatprep.subr.bf16.mxu0 0
        %1250 = vmatpush1.bf16.msra.mxu0 0
        %1251 = vmatprep.subr.bf16.mxu0 0
        %1252 = vmatpush1.bf16.msra.mxu0 0
        %1253 = vmatprep.subr.bf16.mxu0 0
        %1254 = vmatpush1.bf16.msra.mxu0 0
        %1255 = vmatprep.subr.bf16.mxu0 0
        %1256 = vmatpush1.bf16.msra.mxu0 0
        %1257 = vmatprep.subr.bf16.mxu0 0
        %1258 = vmatpush1.bf16.msra.mxu0 0
        %1259 = vmatprep.subr.bf16.mxu0 0
        %1260 = vmatpush1.bf16.msra.mxu0 0
        %1261 = vmatprep.subr.bf16.mxu0 0
        %1262 = vmatpush1.bf16.msra.mxu0 0
        %1263 = vmatprep.subr.bf16.mxu0 0
        %1264 = vmatpush1.bf16.msra.mxu0 0
        %1265 = vmatprep.subr.bf16.mxu0 0
        %1266 = vmatpush1.bf16.msra.mxu0 0
        %1267 = vmatprep.subr.bf16.mxu0 0
        %1268 = vmatpush1.bf16.msra.mxu0 0
        %1269 = vmatprep.subr.bf16.mxu0 0
        %1270 = vmatpush1.bf16.msra.mxu0 0
        %1271 = vmatprep.mubr.bf16.mxu0 0
        %1272 = vmatmul.mubr.bf16.gmra.mrb[0].mxu0 %v796
        %v1273 = vpop.f32.mrb[0].mxu0
        %v1274 = vadd.f32 0.0, %v1273
        %v1275 = vpop.f32.mrb[0].mxu0
        %v1276 = vadd.f32 0.0, %v1275
        %v1277 = vpop.f32.mrb[0].mxu0
        %v1278 = vadd.f32 0.0, %v1277
        %v1279 = vpop.f32.mrb[0].mxu0
        %v1280 = vadd.f32 0.0, %v1279
        %1281 = vmatprep.mubr.bf16.mxu0 0
        %1282 = vmatmul.mubr.bf16.gmra.mrb[0].mxu0 %v799
        %v1283 = vpop.f32.mrb[0].mxu0
        %v1284 = vadd.f32 0.0, %v1283
        %v1285 = vpop.f32.mrb[0].mxu0
        %v1286 = vadd.f32 0.0, %v1285
        %v1287 = vpop.f32.mrb[0].mxu0
        %v1288 = vadd.f32 0.0, %v1287
        %v1289 = vpop.f32.mrb[0].mxu0
        %v1290 = vadd.f32 0.0, %v1289
        %1291 = vdwg.mxu0
        %1292 = vmatprep.subr.bf16.mxu0 %v818
        %1293 = vmatpush1.bf16.msra.mxu0 %v815
        %1294 = vmatprep.subr.bf16.mxu0 0
        %1295 = vmatpush1.bf16.msra.mxu0 0
        %1296 = vmatprep.subr.bf16.mxu0 0
        %1297 = vmatpush1.bf16.msra.mxu0 0
        %1298 = vmatprep.subr.bf16.mxu0 0
        %1299 = vmatpush1.bf16.msra.mxu0 0
        %1300 = vmatprep.subr.bf16.mxu0 0
        %1301 = vmatpush1.bf16.msra.mxu0 0
        %1302 = vmatprep.subr.bf16.mxu0 0
        %1303 = vmatpush1.bf16.msra.mxu0 0
        %1304 = vmatprep.subr.bf16.mxu0 0
        %1305 = vmatpush1.bf16.msra.mxu0 0
        %1306 = vmatprep.subr.bf16.mxu0 0
        %1307 = vmatpush1.bf16.msra.mxu0 0
        %1308 = vmatprep.subr.bf16.mxu0 0
        %1309 = vmatpush1.bf16.msra.mxu0 0
        %1310 = vmatprep.subr.bf16.mxu0 0
        %1311 = vmatpush1.bf16.msra.mxu0 0
        %1312 = vmatprep.subr.bf16.mxu0 0
        %1313 = vmatpush1.bf16.msra.mxu0 0
        %1314 = vmatprep.subr.bf16.mxu0 0
        %1315 = vmatpush1.bf16.msra.mxu0 0
        %1316 = vmatprep.subr.bf16.mxu0 0
        %1317 = vmatpush1.bf16.msra.mxu0 0
        %1318 = vmatprep.subr.bf16.mxu0 0
        %1319 = vmatpush1.bf16.msra.mxu0 0
        %1320 = vmatprep.subr.bf16.mxu0 0
        %1321 = vmatpush1.bf16.msra.mxu0 0
        %1322 = vmatprep.subr.bf16.mxu0 0
        %1323 = vmatpush1.bf16.msra.mxu0 0
        %1324 = vmatprep.mubr.bf16.mxu0 0
        %1325 = vmatmul.mubr.bf16.gmra.mrb[0].mxu0 %v796
        %v1326 = vpop.f32.mrb[0].mxu0
        %v1327 = vadd.f32 0.0, %v1326
        %v1328 = vpop.f32.mrb[0].mxu0
        %v1329 = vadd.f32 0.0, %v1328
        %v1330 = vpop.f32.mrb[0].mxu0
        %v1331 = vadd.f32 0.0, %v1330
        %v1332 = vpop.f32.mrb[0].mxu0
        %v1333 = vadd.f32 0.0, %v1332
        %1334 = vmatprep.mubr.bf16.mxu0 0
        %1335 = vmatmul.mubr.bf16.gmra.mrb[0].mxu0 %v799
        %v1336 = vpop.f32.mrb[0].mxu0
        %v1337 = vadd.f32 0.0, %v1336
        %v1338 = vpop.f32.mrb[0].mxu0
        %v1339 = vadd.f32 0.0, %v1338
        %v1340 = vpop.f32.mrb[0].mxu0
        %v1341 = vadd.f32 0.0, %v1340
        %v1342 = vpop.f32.mrb[0].mxu0
        %v1343 = vadd.f32 0.0, %v1342
        %1344 = vdwg.mxu0
        %1345 = vmatprep.subr.bf16.mxu0 %v824
        %1346 = vmatpush1.bf16.msra.mxu0 %v821
        %1347 = vmatprep.subr.bf16.mxu0 0
        %1348 = vmatpush1.bf16.msra.mxu0 0
        %1349 = vmatprep.subr.bf16.mxu0 0
        %1350 = vmatpush1.bf16.msra.mxu0 0
        %1351 = vmatprep.subr.bf16.mxu0 0
        %1352 = vmatpush1.bf16.msra.mxu0 0
        %1353 = vmatprep.subr.bf16.mxu0 0
        %1354 = vmatpush1.bf16.msra.mxu0 0
        %1355 = vmatprep.subr.bf16.mxu0 0
        %1356 = vmatpush1.bf16.msra.mxu0 0
        %1357 = vmatprep.subr.bf16.mxu0 0
        %1358 = vmatpush1.bf16.msra.mxu0 0
        %1359 = vmatprep.subr.bf16.mxu0 0
        %1360 = vmatpush1.bf16.msra.mxu0 0
        %1361 = vmatprep.subr.bf16.mxu0 0
        %1362 = vmatpush1.bf16.msra.mxu0 0
        %1363 = vmatprep.subr.bf16.mxu0 0
        %1364 = vmatpush1.bf16.msra.mxu0 0
        %1365 = vmatprep.subr.bf16.mxu0 0
        %1366 = vmatpush1.bf16.msra.mxu0 0
        %1367 = vmatprep.subr.bf16.mxu0 0
        %1368 = vmatpush1.bf16.msra.mxu0 0
        %1369 = vmatprep.subr.bf16.mxu0 0
        %1370 = vmatpush1.bf16.msra.mxu0 0
        %1371 = vmatprep.subr.bf16.mxu0 0
        %1372 = vmatpush1.bf16.msra.mxu0 0
        %1373 = vmatprep.subr.bf16.mxu0 0
        %1374 = vmatpush1.bf16.msra.mxu0 0
        %1375 = vmatprep.subr.bf16.mxu0 0
        %1376 = vmatpush1.bf16.msra.mxu0 0
        %1377 = vmatprep.mubr.bf16.mxu0 0
        %1378 = vmatmul.mubr.bf16.gmra.mrb[0].mxu0 %v796
        %v1379 = vpop.f32.mrb[0].mxu0
        %v1380 = vadd.f32 0.0, %v1379
        %v1381 = vpop.f32.mrb[0].mxu0
        %v1382 = vadd.f32 0.0, %v1381
        %v1383 = vpop.f32.mrb[0].mxu0
        %v1384 = vadd.f32 0.0, %v1383
        %v1385 = vpop.f32.mrb[0].mxu0
        %v1386 = vadd.f32 0.0, %v1385
        %1387 = vmatprep.mubr.bf16.mxu0 0
        %1388 = vmatmul.mubr.bf16.gmra.mrb[0].mxu0 %v799
        %v1389 = vpop.f32.mrb[0].mxu0
        %v1390 = vadd.f32 0.0, %v1389
        %v1391 = vpop.f32.mrb[0].mxu0
        %v1392 = vadd.f32 0.0, %v1391
        %v1393 = vpop.f32.mrb[0].mxu0
        %v1394 = vadd.f32 0.0, %v1393
        %v1395 = vpop.f32.mrb[0].mxu0
        %v1396 = vadd.f32 0.0, %v1395
        %1397 = vdwg.mxu0
        %1398 = vmatprep.subr.bf16.mxu0 %v830
        %1399 = vmatpush1.bf16.msra.mxu0 %v827
        %1400 = vmatprep.subr.bf16.mxu0 0
        %1401 = vmatpush1.bf16.msra.mxu0 0
        %1402 = vmatprep.subr.bf16.mxu0 0
        %1403 = vmatpush1.bf16.msra.mxu0 0
        %1404 = vmatprep.subr.bf16.mxu0 0
        %1405 = vmatpush1.bf16.msra.mxu0 0
        %1406 = vmatprep.subr.bf16.mxu0 0
        %1407 = vmatpush1.bf16.msra.mxu0 0
        %1408 = vmatprep.subr.bf16.mxu0 0
        %1409 = vmatpush1.bf16.msra.mxu0 0
        %1410 = vmatprep.subr.bf16.mxu0 0
        %1411 = vmatpush1.bf16.msra.mxu0 0
        %1412 = vmatprep.subr.bf16.mxu0 0
        %1413 = vmatpush1.bf16.msra.mxu0 0
        %1414 = vmatprep.subr.bf16.mxu0 0
        %1415 = vmatpush1.bf16.msra.mxu0 0
        %1416 = vmatprep.subr.bf16.mxu0 0
        %1417 = vmatpush1.bf16.msra.mxu0 0
        %1418 = vmatprep.subr.bf16.mxu0 0
        %1419 = vmatpush1.bf16.msra.mxu0 0
        %1420 = vmatprep.subr.bf16.mxu0 0
        %1421 = vmatpush1.bf16.msra.mxu0 0
        %1422 = vmatprep.subr.bf16.mxu0 0
        %1423 = vmatpush1.bf16.msra.mxu0 0
        %1424 = vmatprep.subr.bf16.mxu0 0
        %1425 = vmatpush1.bf16.msra.mxu0 0
        %1426 = vmatprep.subr.bf16.mxu0 0
        %1427 = vmatpush1.bf16.msra.mxu0 0
        %1428 = vmatprep.subr.bf16.mxu0 0
        %1429 = vmatpush1.bf16.msra.mxu0 0
        %1430 = vmatprep.mubr.bf16.mxu0 0
        %1431 = vmatmul.mubr.bf16.gmra.mrb[0].mxu0 %v796
        %v1432 = vpop.f32.mrb[0].mxu0
        %v1433 = vadd.f32 0.0, %v1432
        %v1434 = vpop.f32.mrb[0].mxu0
        %v1435 = vadd.f32 0.0, %v1434
        %v1436 = vpop.f32.mrb[0].mxu0
        %v1437 = vadd.f32 0.0, %v1436
        %v1438 = vpop.f32.mrb[0].mxu0
        %v1439 = vadd.f32 0.0, %v1438
        %1440 = vmatprep.mubr.bf16.mxu0 0
        %1441 = vmatmul.mubr.bf16.gmra.mrb[0].mxu0 %v799
        %v1442 = vpop.f32.mrb[0].mxu0
        %v1443 = vadd.f32 0.0, %v1442
        %v1444 = vpop.f32.mrb[0].mxu0
        %v1445 = vadd.f32 0.0, %v1444
        %v1446 = vpop.f32.mrb[0].mxu0
        %v1447 = vadd.f32 0.0, %v1446
        %v1448 = vpop.f32.mrb[0].mxu0
        %v1449 = vadd.f32 0.0, %v1448
        %1450 = vdwg.mxu0
        %1451 = vmatprep.subr.bf16.mxu0 %v836
        %1452 = vmatpush1.bf16.msra.mxu0 %v833
        %1453 = vmatprep.subr.bf16.mxu0 0
        %1454 = vmatpush1.bf16.msra.mxu0 0
        %1455 = vmatprep.subr.bf16.mxu0 0
        %1456 = vmatpush1.bf16.msra.mxu0 0
        %1457 = vmatprep.subr.bf16.mxu0 0
        %1458 = vmatpush1.bf16.msra.mxu0 0
        %1459 = vmatprep.subr.bf16.mxu0 0
        %1460 = vmatpush1.bf16.msra.mxu0 0
        %1461 = vmatprep.subr.bf16.mxu0 0
        %1462 = vmatpush1.bf16.msra.mxu0 0
        %1463 = vmatprep.subr.bf16.mxu0 0
        %1464 = vmatpush1.bf16.msra.mxu0 0
        %1465 = vmatprep.subr.bf16.mxu0 0
        %1466 = vmatpush1.bf16.msra.mxu0 0
        %1467 = vmatprep.subr.bf16.mxu0 0
        %1468 = vmatpush1.bf16.msra.mxu0 0
        %1469 = vmatprep.subr.bf16.mxu0 0
        %1470 = vmatpush1.bf16.msra.mxu0 0
        %1471 = vmatprep.subr.bf16.mxu0 0
        %1472 = vmatpush1.bf16.msra.mxu0 0
        %1473 = vmatprep.subr.bf16.mxu0 0
        %1474 = vmatpush1.bf16.msra.mxu0 0
        %1475 = vmatprep.subr.bf16.mxu0 0
        %1476 = vmatpush1.bf16.msra.mxu0 0
        %1477 = vmatprep.subr.bf16.mxu0 0
        %1478 = vmatpush1.bf16.msra.mxu0 0
        %1479 = vmatprep.subr.bf16.mxu0 0
        %1480 = vmatpush1.bf16.msra.mxu0 0
        %1481 = vmatprep.subr.bf16.mxu0 0
        %1482 = vmatpush1.bf16.msra.mxu0 0
        %1483 = vmatprep.mubr.bf16.mxu0 0
        %1484 = vmatmul.mubr.bf16.gmra.mrb[0].mxu0 %v796
        %v1485 = vpop.f32.mrb[0].mxu0
        %v1486 = vadd.f32 0.0, %v1485
        %v1487 = vpop.f32.mrb[0].mxu0
        %v1488 = vadd.f32 0.0, %v1487
        %v1489 = vpop.f32.mrb[0].mxu0
        %v1490 = vadd.f32 0.0, %v1489
        %v1491 = vpop.f32.mrb[0].mxu0
        %v1492 = vadd.f32 0.0, %v1491
        %1493 = vmatprep.mubr.bf16.mxu0 0
        %1494 = vmatmul.mubr.bf16.gmra.mrb[0].mxu0 %v799
        %v1495 = vpop.f32.mrb[0].mxu0
        %v1496 = vadd.f32 0.0, %v1495
        %v1497 = vpop.f32.mrb[0].mxu0
        %v1498 = vadd.f32 0.0, %v1497
        %v1499 = vpop.f32.mrb[0].mxu0
        %v1500 = vadd.f32 0.0, %v1499
        %v1501 = vpop.f32.mrb[0].mxu0
        %v1502 = vadd.f32 0.0, %v1501
        %1503 = vdwg.mxu0
        %1504 = vmatprep.subr.bf16.mxu0 %v842
        %1505 = vmatpush1.bf16.msra.mxu0 %v839
        %1506 = vmatprep.subr.bf16.mxu0 0
        %1507 = vmatpush1.bf16.msra.mxu0 0
        %1508 = vmatprep.subr.bf16.mxu0 0
        %1509 = vmatpush1.bf16.msra.mxu0 0
        %1510 = vmatprep.subr.bf16.mxu0 0
        %1511 = vmatpush1.bf16.msra.mxu0 0
        %1512 = vmatprep.subr.bf16.mxu0 0
        %1513 = vmatpush1.bf16.msra.mxu0 0
        %1514 = vmatprep.subr.bf16.mxu0 0
        %1515 = vmatpush1.bf16.msra.mxu0 0
        %1516 = vmatprep.subr.bf16.mxu0 0
        %1517 = vmatpush1.bf16.msra.mxu0 0
        %1518 = vmatprep.subr.bf16.mxu0 0
        %1519 = vmatpush1.bf16.msra.mxu0 0
        %1520 = vmatprep.subr.bf16.mxu0 0
        %1521 = vmatpush1.bf16.msra.mxu0 0
        %1522 = vmatprep.subr.bf16.mxu0 0
        %1523 = vmatpush1.bf16.msra.mxu0 0
        %1524 = vmatprep.subr.bf16.mxu0 0
        %1525 = vmatpush1.bf16.msra.mxu0 0
        %1526 = vmatprep.subr.bf16.mxu0 0
        %1527 = vmatpush1.bf16.msra.mxu0 0
        %1528 = vmatprep.subr.bf16.mxu0 0
        %1529 = vmatpush1.bf16.msra.mxu0 0
        %1530 = vmatprep.subr.bf16.mxu0 0
        %1531 = vmatpush1.bf16.msra.mxu0 0
        %1532 = vmatprep.subr.bf16.mxu0 0
        %1533 = vmatpush1.bf16.msra.mxu0 0
        %1534 = vmatprep.subr.bf16.mxu0 0
        %1535 = vmatpush1.bf16.msra.mxu0 0
        %1536 = vmatprep.mubr.bf16.mxu0 0
        %1537 = vmatmul.mubr.bf16.gmra.mrb[0].mxu0 %v796
        %v1538 = vpop.f32.mrb[0].mxu0
        %v1539 = vadd.f32 0.0, %v1538
        %v1540 = vpop.f32.mrb[0].mxu0
        %v1541 = vadd.f32 0.0, %v1540
        %v1542 = vpop.f32.mrb[0].mxu0
        %v1543 = vadd.f32 0.0, %v1542
        %v1544 = vpop.f32.mrb[0].mxu0
        %v1545 = vadd.f32 0.0, %v1544
        %1546 = vmatprep.mubr.bf16.mxu0 0
        %1547 = vmatmul.mubr.bf16.gmra.mrb[0].mxu0 %v799
        %v1548 = vpop.f32.mrb[0].mxu0
        %v1549 = vadd.f32 0.0, %v1548
        %v1550 = vpop.f32.mrb[0].mxu0
        %v1551 = vadd.f32 0.0, %v1550
        %v1552 = vpop.f32.mrb[0].mxu0
        %v1553 = vadd.f32 0.0, %v1552
        %v1554 = vpop.f32.mrb[0].mxu0
        %v1555 = vadd.f32 0.0, %v1554
        %1556 = vdwg.mxu0
        %1557 = vmatprep.subr.bf16.mxu0 %v848
        %1558 = vmatpush1.bf16.msra.mxu0 %v845
        %1559 = vmatprep.subr.bf16.mxu0 0
        %1560 = vmatpush1.bf16.msra.mxu0 0
        %1561 = vmatprep.subr.bf16.mxu0 0
        %1562 = vmatpush1.bf16.msra.mxu0 0
        %1563 = vmatprep.subr.bf16.mxu0 0
        %1564 = vmatpush1.bf16.msra.mxu0 0
        %1565 = vmatprep.subr.bf16.mxu0 0
        %1566 = vmatpush1.bf16.msra.mxu0 0
        %1567 = vmatprep.subr.bf16.mxu0 0
        %1568 = vmatpush1.bf16.msra.mxu0 0
        %1569 = vmatprep.subr.bf16.mxu0 0
        %1570 = vmatpush1.bf16.msra.mxu0 0
        %1571 = vmatprep.subr.bf16.mxu0 0
        %1572 = vmatpush1.bf16.msra.mxu0 0
        %1573 = vmatprep.subr.bf16.mxu0 0
        %1574 = vmatpush1.bf16.msra.mxu0 0
        %1575 = vmatprep.subr.bf16.mxu0 0
        %1576 = vmatpush1.bf16.msra.mxu0 0
        %1577 = vmatprep.subr.bf16.mxu0 0
        %1578 = vmatpush1.bf16.msra.mxu0 0
        %1579 = vmatprep.subr.bf16.mxu0 0
        %1580 = vmatpush1.bf16.msra.mxu0 0
        %1581 = vmatprep.subr.bf16.mxu0 0
        %1582 = vmatpush1.bf16.msra.mxu0 0
        %1583 = vmatprep.subr.bf16.mxu0 0
        %1584 = vmatpush1.bf16.msra.mxu0 0
        %1585 = vmatprep.subr.bf16.mxu0 0
        %1586 = vmatpush1.bf16.msra.mxu0 0
        %1587 = vmatprep.subr.bf16.mxu0 0
        %1588 = vmatpush1.bf16.msra.mxu0 0
        %1589 = vmatprep.mubr.bf16.mxu0 0
        %1590 = vmatmul.mubr.bf16.gmra.mrb[0].mxu0 %v796
        %v1591 = vpop.f32.mrb[0].mxu0
        %v1592 = vadd.f32 0.0, %v1591
        %v1593 = vpop.f32.mrb[0].mxu0
        %v1594 = vadd.f32 0.0, %v1593
        %v1595 = vpop.f32.mrb[0].mxu0
        %v1596 = vadd.f32 0.0, %v1595
        %v1597 = vpop.f32.mrb[0].mxu0
        %v1598 = vadd.f32 0.0, %v1597
        %1599 = vmatprep.mubr.bf16.mxu0 0
        %1600 = vmatmul.mubr.bf16.gmra.mrb[0].mxu0 %v799
        %v1601 = vpop.f32.mrb[0].mxu0
        %v1602 = vadd.f32 0.0, %v1601
        %v1603 = vpop.f32.mrb[0].mxu0
        %v1604 = vadd.f32 0.0, %v1603
        %v1605 = vpop.f32.mrb[0].mxu0
        %v1606 = vadd.f32 0.0, %v1605
        %v1607 = vpop.f32.mrb[0].mxu0
        %v1608 = vadd.f32 0.0, %v1607
        %1609 = vdwg.mxu0
        %1610 = vmatprep.subr.bf16.mxu0 %v854
        %1611 = vmatpush1.bf16.msra.mxu0 %v851
        %1612 = vmatprep.subr.bf16.mxu0 0
        %1613 = vmatpush1.bf16.msra.mxu0 0
        %1614 = vmatprep.subr.bf16.mxu0 0
        %1615 = vmatpush1.bf16.msra.mxu0 0
        %1616 = vmatprep.subr.bf16.mxu0 0
        %1617 = vmatpush1.bf16.msra.mxu0 0
        %1618 = vmatprep.subr.bf16.mxu0 0
        %1619 = vmatpush1.bf16.msra.mxu0 0
        %1620 = vmatprep.subr.bf16.mxu0 0
        %1621 = vmatpush1.bf16.msra.mxu0 0
        %1622 = vmatprep.subr.bf16.mxu0 0
        %1623 = vmatpush1.bf16.msra.mxu0 0
        %1624 = vmatprep.subr.bf16.mxu0 0
        %1625 = vmatpush1.bf16.msra.mxu0 0
        %1626 = vmatprep.subr.bf16.mxu0 0
        %1627 = vmatpush1.bf16.msra.mxu0 0
        %1628 = vmatprep.subr.bf16.mxu0 0
        %1629 = vmatpush1.bf16.msra.mxu0 0
        %1630 = vmatprep.subr.bf16.mxu0 0
        %1631 = vmatpush1.bf16.msra.mxu0 0
        %1632 = vmatprep.subr.bf16.mxu0 0
        %1633 = vmatpush1.bf16.msra.mxu0 0
        %1634 = vmatprep.subr.bf16.mxu0 0
        %1635 = vmatpush1.bf16.msra.mxu0 0
        %1636 = vmatprep.subr.bf16.mxu0 0
        %1637 = vmatpush1.bf16.msra.mxu0 0
        %1638 = vmatprep.subr.bf16.mxu0 0
        %1639 = vmatpush1.bf16.msra.mxu0 0
        %1640 = vmatprep.subr.bf16.mxu0 0
        %1641 = vmatpush1.bf16.msra.mxu0 0
        %1642 = vmatprep.mubr.bf16.mxu0 0
        %1643 = vmatmul.mubr.bf16.gmra.mrb[0].mxu0 %v796
        %v1644 = vpop.f32.mrb[0].mxu0
        %v1645 = vadd.f32 0.0, %v1644
        %v1646 = vpop.f32.mrb[0].mxu0
        %v1647 = vadd.f32 0.0, %v1646
        %v1648 = vpop.f32.mrb[0].mxu0
        %v1649 = vadd.f32 0.0, %v1648
        %v1650 = vpop.f32.mrb[0].mxu0
        %v1651 = vadd.f32 0.0, %v1650
        %1652 = vmatprep.mubr.bf16.mxu0 0
        %1653 = vmatmul.mubr.bf16.gmra.mrb[0].mxu0 %v799
        %v1654 = vpop.f32.mrb[0].mxu0
        %v1655 = vadd.f32 0.0, %v1654
        %v1656 = vpop.f32.mrb[0].mxu0
        %v1657 = vadd.f32 0.0, %v1656
        %v1658 = vpop.f32.mrb[0].mxu0
        %v1659 = vadd.f32 0.0, %v1658
        %v1660 = vpop.f32.mrb[0].mxu0
        %v1661 = vadd.f32 0.0, %v1660
        %1662 = vdwg.mxu0
        %1663 = vmatprep.subr.bf16.mxu0 %v860
        %1664 = vmatpush1.bf16.msra.mxu0 %v857
        %1665 = vmatprep.subr.bf16.mxu0 0
        %1666 = vmatpush1.bf16.msra.mxu0 0
        %1667 = vmatprep.subr.bf16.mxu0 0
        %1668 = vmatpush1.bf16.msra.mxu0 0
        %1669 = vmatprep.subr.bf16.mxu0 0
        %1670 = vmatpush1.bf16.msra.mxu0 0
        %1671 = vmatprep.subr.bf16.mxu0 0
        %1672 = vmatpush1.bf16.msra.mxu0 0
        %1673 = vmatprep.subr.bf16.mxu0 0
        %1674 = vmatpush1.bf16.msra.mxu0 0
        %1675 = vmatprep.subr.bf16.mxu0 0
        %1676 = vmatpush1.bf16.msra.mxu0 0
        %1677 = vmatprep.subr.bf16.mxu0 0
        %1678 = vmatpush1.bf16.msra.mxu0 0
        %1679 = vmatprep.subr.bf16.mxu0 0
        %1680 = vmatpush1.bf16.msra.mxu0 0
        %1681 = vmatprep.subr.bf16.mxu0 0
        %1682 = vmatpush1.bf16.msra.mxu0 0
        %1683 = vmatprep.subr.bf16.mxu0 0
        %1684 = vmatpush1.bf16.msra.mxu0 0
        %1685 = vmatprep.subr.bf16.mxu0 0
        %1686 = vmatpush1.bf16.msra.mxu0 0
        %1687 = vmatprep.subr.bf16.mxu0 0
        %1688 = vmatpush1.bf16.msra.mxu0 0
        %1689 = vmatprep.subr.bf16.mxu0 0
        %1690 = vmatpush1.bf16.msra.mxu0 0
        %1691 = vmatprep.subr.bf16.mxu0 0
        %1692 = vmatpush1.bf16.msra.mxu0 0
        %1693 = vmatprep.subr.bf16.mxu0 0
        %1694 = vmatpush1.bf16.msra.mxu0 0
        %1695 = vmatprep.mubr.bf16.mxu0 0
        %1696 = vmatmul.mubr.bf16.gmra.mrb[0].mxu0 %v796
        %v1697 = vpop.f32.mrb[0].mxu0
        %v1698 = vadd.f32 0.0, %v1697
        %v1699 = vpop.f32.mrb[0].mxu0
        %v1700 = vadd.f32 0.0, %v1699
        %v1701 = vpop.f32.mrb[0].mxu0
        %v1702 = vadd.f32 0.0, %v1701
        %v1703 = vpop.f32.mrb[0].mxu0
        %v1704 = vadd.f32 0.0, %v1703
        %1705 = vmatprep.mubr.bf16.mxu0 0
        %1706 = vmatmul.mubr.bf16.gmra.mrb[0].mxu0 %v799
        %v1707 = vpop.f32.mrb[0].mxu0
        %v1708 = vadd.f32 0.0, %v1707
        %v1709 = vpop.f32.mrb[0].mxu0
        %v1710 = vadd.f32 0.0, %v1709
        %v1711 = vpop.f32.mrb[0].mxu0
        %v1712 = vadd.f32 0.0, %v1711
        %v1713 = vpop.f32.mrb[0].mxu0
        %v1714 = vadd.f32 0.0, %v1713
        %1715 = vdwg.mxu0
        %1716 = vmatprep.subr.bf16.mxu0 %v866
        %1717 = vmatpush1.bf16.msra.mxu0 %v863
        %1718 = vmatprep.subr.bf16.mxu0 0
        %1719 = vmatpush1.bf16.msra.mxu0 0
        %1720 = vmatprep.subr.bf16.mxu0 0
        %1721 = vmatpush1.bf16.msra.mxu0 0
        %1722 = vmatprep.subr.bf16.mxu0 0
        %1723 = vmatpush1.bf16.msra.mxu0 0
        %1724 = vmatprep.subr.bf16.mxu0 0
        %1725 = vmatpush1.bf16.msra.mxu0 0
        %1726 = vmatprep.subr.bf16.mxu0 0
        %1727 = vmatpush1.bf16.msra.mxu0 0
        %1728 = vmatprep.subr.bf16.mxu0 0
        %1729 = vmatpush1.bf16.msra.mxu0 0
        %1730 = vmatprep.subr.bf16.mxu0 0
        %1731 = vmatpush1.bf16.msra.mxu0 0
        %1732 = vmatprep.subr.bf16.mxu0 0
        %1733 = vmatpush1.bf16.msra.mxu0 0
        %1734 = vmatprep.subr.bf16.mxu0 0
        %1735 = vmatpush1.bf16.msra.mxu0 0
        %1736 = vmatprep.subr.bf16.mxu0 0
        %1737 = vmatpush1.bf16.msra.mxu0 0
        %1738 = vmatprep.subr.bf16.mxu0 0
        %1739 = vmatpush1.bf16.msra.mxu0 0
        %1740 = vmatprep.subr.bf16.mxu0 0
        %1741 = vmatpush1.bf16.msra.mxu0 0
        %1742 = vmatprep.subr.bf16.mxu0 0
        %1743 = vmatpush1.bf16.msra.mxu0 0
        %1744 = vmatprep.subr.bf16.mxu0 0
        %1745 = vmatpush1.bf16.msra.mxu0 0
        %1746 = vmatprep.subr.bf16.mxu0 0
        %1747 = vmatpush1.bf16.msra.mxu0 0
        %1748 = vmatprep.mubr.bf16.mxu0 0
        %1749 = vmatmul.mubr.bf16.gmra.mrb[0].mxu0 %v796
        %v1750 = vpop.f32.mrb[0].mxu0
        %v1751 = vadd.f32 0.0, %v1750
        %v1752 = vpop.f32.mrb[0].mxu0
        %v1753 = vadd.f32 0.0, %v1752
        %v1754 = vpop.f32.mrb[0].mxu0
        %v1755 = vadd.f32 0.0, %v1754
        %v1756 = vpop.f32.mrb[0].mxu0
        %v1757 = vadd.f32 0.0, %v1756
        %1758 = vmatprep.mubr.bf16.mxu0 0
        %1759 = vmatmul.mubr.bf16.gmra.mrb[0].mxu0 %v799
        %v1760 = vpop.f32.mrb[0].mxu0
        %v1761 = vadd.f32 0.0, %v1760
        %v1762 = vpop.f32.mrb[0].mxu0
        %v1763 = vadd.f32 0.0, %v1762
        %v1764 = vpop.f32.mrb[0].mxu0
        %v1765 = vadd.f32 0.0, %v1764
        %v1766 = vpop.f32.mrb[0].mxu0
        %v1767 = vadd.f32 0.0, %v1766
        %1768 = vdwg.mxu0
        %1769 = vmatprep.subr.bf16.mxu0 %v872
        %1770 = vmatpush1.bf16.msra.mxu0 %v869
        %1771 = vmatprep.subr.bf16.mxu0 0
        %1772 = vmatpush1.bf16.msra.mxu0 0
        %1773 = vmatprep.subr.bf16.mxu0 0
        %1774 = vmatpush1.bf16.msra.mxu0 0
        %1775 = vmatprep.subr.bf16.mxu0 0
        %1776 = vmatpush1.bf16.msra.mxu0 0
        %1777 = vmatprep.subr.bf16.mxu0 0
        %1778 = vmatpush1.bf16.msra.mxu0 0
        %1779 = vmatprep.subr.bf16.mxu0 0
        %1780 = vmatpush1.bf16.msra.mxu0 0
        %1781 = vmatprep.subr.bf16.mxu0 0
        %1782 = vmatpush1.bf16.msra.mxu0 0
        %1783 = vmatprep.subr.bf16.mxu0 0
        %1784 = vmatpush1.bf16.msra.mxu0 0
        %1785 = vmatprep.subr.bf16.mxu0 0
        %1786 = vmatpush1.bf16.msra.mxu0 0
        %1787 = vmatprep.subr.bf16.mxu0 0
        %1788 = vmatpush1.bf16.msra.mxu0 0
        %1789 = vmatprep.subr.bf16.mxu0 0
        %1790 = vmatpush1.bf16.msra.mxu0 0
        %1791 = vmatprep.subr.bf16.mxu0 0
        %1792 = vmatpush1.bf16.msra.mxu0 0
        %1793 = vmatprep.subr.bf16.mxu0 0
        %1794 = vmatpush1.bf16.msra.mxu0 0
        %1795 = vmatprep.subr.bf16.mxu0 0
        %1796 = vmatpush1.bf16.msra.mxu0 0
        %1797 = vmatprep.subr.bf16.mxu0 0
        %1798 = vmatpush1.bf16.msra.mxu0 0
        %1799 = vmatprep.subr.bf16.mxu0 0
        %1800 = vmatpush1.bf16.msra.mxu0 0
        %1801 = vmatprep.mubr.bf16.mxu0 0
        %1802 = vmatmul.mubr.bf16.gmra.mrb[0].mxu0 %v796
        %v1803 = vpop.f32.mrb[0].mxu0
        %v1804 = vadd.f32 0.0, %v1803
        %v1805 = vpop.f32.mrb[0].mxu0
        %v1806 = vadd.f32 0.0, %v1805
        %v1807 = vpop.f32.mrb[0].mxu0
        %v1808 = vadd.f32 0.0, %v1807
        %v1809 = vpop.f32.mrb[0].mxu0
        %v1810 = vadd.f32 0.0, %v1809
        %1811 = vmatprep.mubr.bf16.mxu0 0
        %1812 = vmatmul.mubr.bf16.gmra.mrb[0].mxu0 %v799
        %v1813 = vpop.f32.mrb[0].mxu0
        %v1814 = vadd.f32 0.0, %v1813
        %v1815 = vpop.f32.mrb[0].mxu0
        %v1816 = vadd.f32 0.0, %v1815
        %v1817 = vpop.f32.mrb[0].mxu0
        %v1818 = vadd.f32 0.0, %v1817
        %v1819 = vpop.f32.mrb[0].mxu0
        %v1820 = vadd.f32 0.0, %v1819
        %1821 = vdwg.mxu0
        %1822 = vmatprep.subr.bf16.mxu0 %v878
        %1823 = vmatpush1.bf16.msra.mxu0 %v875
        %1824 = vmatprep.subr.bf16.mxu0 0
        %1825 = vmatpush1.bf16.msra.mxu0 0
        %1826 = vmatprep.subr.bf16.mxu0 0
        %1827 = vmatpush1.bf16.msra.mxu0 0
        %1828 = vmatprep.subr.bf16.mxu0 0
        %1829 = vmatpush1.bf16.msra.mxu0 0
        %1830 = vmatprep.subr.bf16.mxu0 0
        %1831 = vmatpush1.bf16.msra.mxu0 0
        %1832 = vmatprep.subr.bf16.mxu0 0
        %1833 = vmatpush1.bf16.msra.mxu0 0
        %1834 = vmatprep.subr.bf16.mxu0 0
        %1835 = vmatpush1.bf16.msra.mxu0 0
        %1836 = vmatprep.subr.bf16.mxu0 0
        %1837 = vmatpush1.bf16.msra.mxu0 0
        %1838 = vmatprep.subr.bf16.mxu0 0
        %1839 = vmatpush1.bf16.msra.mxu0 0
        %1840 = vmatprep.subr.bf16.mxu0 0
        %1841 = vmatpush1.bf16.msra.mxu0 0
        %1842 = vmatprep.subr.bf16.mxu0 0
        %1843 = vmatpush1.bf16.msra.mxu0 0
        %1844 = vmatprep.subr.bf16.mxu0 0
        %1845 = vmatpush1.bf16.msra.mxu0 0
        %1846 = vmatprep.subr.bf16.mxu0 0
        %1847 = vmatpush1.bf16.msra.mxu0 0
        %1848 = vmatprep.subr.bf16.mxu0 0
        %1849 = vmatpush1.bf16.msra.mxu0 0
        %1850 = vmatprep.subr.bf16.mxu0 0
        %1851 = vmatpush1.bf16.msra.mxu0 0
        %1852 = vmatprep.subr.bf16.mxu0 0
        %1853 = vmatpush1.bf16.msra.mxu0 0
        %1854 = vmatprep.mubr.bf16.mxu0 0
        %1855 = vmatmul.mubr.bf16.gmra.mrb[0].mxu0 %v796
        %v1856 = vpop.f32.mrb[0].mxu0
        %v1857 = vadd.f32 0.0, %v1856
        %v1858 = vpop.f32.mrb[0].mxu0
        %v1859 = vadd.f32 0.0, %v1858
        %v1860 = vpop.f32.mrb[0].mxu0
        %v1861 = vadd.f32 0.0, %v1860
        %v1862 = vpop.f32.mrb[0].mxu0
        %v1863 = vadd.f32 0.0, %v1862
        %1864 = vmatprep.mubr.bf16.mxu0 0
        %1865 = vmatmul.mubr.bf16.gmra.mrb[0].mxu0 %v799
        %v1866 = vpop.f32.mrb[0].mxu0
        %v1867 = vadd.f32 0.0, %v1866
        %v1868 = vpop.f32.mrb[0].mxu0
        %v1869 = vadd.f32 0.0, %v1868
        %v1870 = vpop.f32.mrb[0].mxu0
        %v1871 = vadd.f32 0.0, %v1870
        %v1872 = vpop.f32.mrb[0].mxu0
        %v1873 = vadd.f32 0.0, %v1872
        %1874 = vdwg.mxu0
        %1875 = vmatprep.subr.bf16.mxu0 %v884
        %1876 = vmatpush1.bf16.msra.mxu0 %v881
        %1877 = vmatprep.subr.bf16.mxu0 0
        %1878 = vmatpush1.bf16.msra.mxu0 0
        %1879 = vmatprep.subr.bf16.mxu0 0
        %1880 = vmatpush1.bf16.msra.mxu0 0
        %1881 = vmatprep.subr.bf16.mxu0 0
        %1882 = vmatpush1.bf16.msra.mxu0 0
        %1883 = vmatprep.subr.bf16.mxu0 0
        %1884 = vmatpush1.bf16.msra.mxu0 0
        %1885 = vmatprep.subr.bf16.mxu0 0
        %1886 = vmatpush1.bf16.msra.mxu0 0
        %1887 = vmatprep.subr.bf16.mxu0 0
        %1888 = vmatpush1.bf16.msra.mxu0 0
        %1889 = vmatprep.subr.bf16.mxu0 0
        %1890 = vmatpush1.bf16.msra.mxu0 0
        %1891 = vmatprep.subr.bf16.mxu0 0
        %1892 = vmatpush1.bf16.msra.mxu0 0
        %1893 = vmatprep.subr.bf16.mxu0 0
        %1894 = vmatpush1.bf16.msra.mxu0 0
        %1895 = vmatprep.subr.bf16.mxu0 0
        %1896 = vmatpush1.bf16.msra.mxu0 0
        %1897 = vmatprep.subr.bf16.mxu0 0
        %1898 = vmatpush1.bf16.msra.mxu0 0
        %1899 = vmatprep.subr.bf16.mxu0 0
        %1900 = vmatpush1.bf16.msra.mxu0 0
        %1901 = vmatprep.subr.bf16.mxu0 0
        %1902 = vmatpush1.bf16.msra.mxu0 0
        %1903 = vmatprep.subr.bf16.mxu0 0
        %1904 = vmatpush1.bf16.msra.mxu0 0
        %1905 = vmatprep.subr.bf16.mxu0 0
        %1906 = vmatpush1.bf16.msra.mxu0 0
        %1907 = vmatprep.mubr.bf16.mxu0 0
        %1908 = vmatmul.mubr.bf16.gmra.mrb[0].mxu0 %v796
        %v1909 = vpop.f32.mrb[0].mxu0
        %v1910 = vadd.f32 0.0, %v1909
        %v1911 = vpop.f32.mrb[0].mxu0
        %v1912 = vadd.f32 0.0, %v1911
        %v1913 = vpop.f32.mrb[0].mxu0
        %v1914 = vadd.f32 0.0, %v1913
        %v1915 = vpop.f32.mrb[0].mxu0
        %v1916 = vadd.f32 0.0, %v1915
        %1917 = vmatprep.mubr.bf16.mxu0 0
        %1918 = vmatmul.mubr.bf16.gmra.mrb[0].mxu0 %v799
        %v1919 = vpop.f32.mrb[0].mxu0
        %v1920 = vadd.f32 0.0, %v1919
        %v1921 = vpop.f32.mrb[0].mxu0
        %v1922 = vadd.f32 0.0, %v1921
        %v1923 = vpop.f32.mrb[0].mxu0
        %v1924 = vadd.f32 0.0, %v1923
        %v1925 = vpop.f32.mrb[0].mxu0
        %v1926 = vadd.f32 0.0, %v1925
        %1927 = vdwg.mxu0
        %1928 = vmatprep.subr.bf16.mxu0 %v890
        %1929 = vmatpush1.bf16.msra.mxu0 %v887
        %1930 = vmatprep.subr.bf16.mxu0 0
        %1931 = vmatpush1.bf16.msra.mxu0 0
        %1932 = vmatprep.subr.bf16.mxu0 0
        %1933 = vmatpush1.bf16.msra.mxu0 0
        %1934 = vmatprep.subr.bf16.mxu0 0
        %1935 = vmatpush1.bf16.msra.mxu0 0
        %1936 = vmatprep.subr.bf16.mxu0 0
        %1937 = vmatpush1.bf16.msra.mxu0 0
        %1938 = vmatprep.subr.bf16.mxu0 0
        %1939 = vmatpush1.bf16.msra.mxu0 0
        %1940 = vmatprep.subr.bf16.mxu0 0
        %1941 = vmatpush1.bf16.msra.mxu0 0
        %1942 = vmatprep.subr.bf16.mxu0 0
        %1943 = vmatpush1.bf16.msra.mxu0 0
        %1944 = vmatprep.subr.bf16.mxu0 0
        %1945 = vmatpush1.bf16.msra.mxu0 0
        %1946 = vmatprep.subr.bf16.mxu0 0
        %1947 = vmatpush1.bf16.msra.mxu0 0
        %1948 = vmatprep.subr.bf16.mxu0 0
        %1949 = vmatpush1.bf16.msra.mxu0 0
        %1950 = vmatprep.subr.bf16.mxu0 0
        %1951 = vmatpush1.bf16.msra.mxu0 0
        %1952 = vmatprep.subr.bf16.mxu0 0
        %1953 = vmatpush1.bf16.msra.mxu0 0
        %1954 = vmatprep.subr.bf16.mxu0 0
        %1955 = vmatpush1.bf16.msra.mxu0 0
        %1956 = vmatprep.subr.bf16.mxu0 0
        %1957 = vmatpush1.bf16.msra.mxu0 0
        %1958 = vmatprep.subr.bf16.mxu0 0
        %1959 = vmatpush1.bf16.msra.mxu0 0
        %1960 = vmatprep.mubr.bf16.mxu0 0
        %1961 = vmatmul.mubr.bf16.gmra.mrb[0].mxu0 %v796
        %v1962 = vpop.f32.mrb[0].mxu0
        %v1963 = vadd.f32 0.0, %v1962
        %v1964 = vpop.f32.mrb[0].mxu0
        %v1965 = vadd.f32 0.0, %v1964
        %v1966 = vpop.f32.mrb[0].mxu0
        %v1967 = vadd.f32 0.0, %v1966
        %v1968 = vpop.f32.mrb[0].mxu0
        %v1969 = vadd.f32 0.0, %v1968
        %1970 = vmatprep.mubr.bf16.mxu0 0
        %1971 = vmatmul.mubr.bf16.gmra.mrb[0].mxu0 %v799
        %v1972 = vpop.f32.mrb[0].mxu0
        %v1973 = vadd.f32 0.0, %v1972
        %v1974 = vpop.f32.mrb[0].mxu0
        %v1975 = vadd.f32 0.0, %v1974
        %v1976 = vpop.f32.mrb[0].mxu0
        %v1977 = vadd.f32 0.0, %v1976
        %v1978 = vpop.f32.mrb[0].mxu0
        %v1979 = vadd.f32 0.0, %v1978
        %1980 = vdwg.mxu0
        %1981 = vmatprep.subr.bf16.mxu0 %v896
        %1982 = vmatpush1.bf16.msra.mxu0 %v893
        %1983 = vmatprep.subr.bf16.mxu0 0
        %1984 = vmatpush1.bf16.msra.mxu0 0
        %1985 = vmatprep.subr.bf16.mxu0 0
        %1986 = vmatpush1.bf16.msra.mxu0 0
        %1987 = vmatprep.subr.bf16.mxu0 0
        %1988 = vmatpush1.bf16.msra.mxu0 0
        %1989 = vmatprep.subr.bf16.mxu0 0
        %1990 = vmatpush1.bf16.msra.mxu0 0
        %1991 = vmatprep.subr.bf16.mxu0 0
        %1992 = vmatpush1.bf16.msra.mxu0 0
        %1993 = vmatprep.subr.bf16.mxu0 0
        %1994 = vmatpush1.bf16.msra.mxu0 0
        %1995 = vmatprep.subr.bf16.mxu0 0
        %1996 = vmatpush1.bf16.msra.mxu0 0
        %1997 = vmatprep.subr.bf16.mxu0 0
        %1998 = vmatpush1.bf16.msra.mxu0 0
        %1999 = vmatprep.subr.bf16.mxu0 0
        %2000 = vmatpush1.bf16.msra.mxu0 0
        %2001 = vmatprep.subr.bf16.mxu0 0
        %2002 = vmatpush1.bf16.msra.mxu0 0
        %2003 = vmatprep.subr.bf16.mxu0 0
        %2004 = vmatpush1.bf16.msra.mxu0 0
        %2005 = vmatprep.subr.bf16.mxu0 0
        %2006 = vmatpush1.bf16.msra.mxu0 0
        %2007 = vmatprep.subr.bf16.mxu0 0
        %2008 = vmatpush1.bf16.msra.mxu0 0
        %2009 = vmatprep.subr.bf16.mxu0 0
        %2010 = vmatpush1.bf16.msra.mxu0 0
        %2011 = vmatprep.subr.bf16.mxu0 0
        %2012 = vmatpush1.bf16.msra.mxu0 0
        %2013 = vmatprep.mubr.bf16.mxu0 0
        %2014 = vmatmul.mubr.bf16.gmra.mrb[0].mxu0 %v796
        %v2015 = vpop.f32.mrb[0].mxu0
        %v2016 = vadd.f32 0.0, %v2015
        %v2017 = vpop.f32.mrb[0].mxu0
        %v2018 = vadd.f32 0.0, %v2017
        %v2019 = vpop.f32.mrb[0].mxu0
        %v2020 = vadd.f32 0.0, %v2019
        %v2021 = vpop.f32.mrb[0].mxu0
        %v2022 = vadd.f32 0.0, %v2021
        %2023 = vmatprep.mubr.bf16.mxu0 0
        %2024 = vmatmul.mubr.bf16.gmra.mrb[0].mxu0 %v799
        %v2025 = vpop.f32.mrb[0].mxu0
        %v2026 = vadd.f32 0.0, %v2025
        %v2027 = vpop.f32.mrb[0].mxu0
        %v2028 = vadd.f32 0.0, %v2027
        %v2029 = vpop.f32.mrb[0].mxu0
        %v2030 = vadd.f32 0.0, %v2029
        %v2031 = vpop.f32.mrb[0].mxu0
        %v2032 = vadd.f32 0.0, %v2031
        %2033 = vdwg.mxu0
        %2034 = vmatprep.subr.bf16.mxu0 %v902
        %2035 = vmatpush1.bf16.msra.mxu0 %v899
        %2036 = vmatprep.subr.bf16.mxu0 0
        %2037 = vmatpush1.bf16.msra.mxu0 0
        %2038 = vmatprep.subr.bf16.mxu0 0
        %2039 = vmatpush1.bf16.msra.mxu0 0
        %2040 = vmatprep.subr.bf16.mxu0 0
        %2041 = vmatpush1.bf16.msra.mxu0 0
        %2042 = vmatprep.subr.bf16.mxu0 0
        %2043 = vmatpush1.bf16.msra.mxu0 0
        %2044 = vmatprep.subr.bf16.mxu0 0
        %2045 = vmatpush1.bf16.msra.mxu0 0
        %2046 = vmatprep.subr.bf16.mxu0 0
        %2047 = vmatpush1.bf16.msra.mxu0 0
        %2048 = vmatprep.subr.bf16.mxu0 0
        %2049 = vmatpush1.bf16.msra.mxu0 0
        %2050 = vmatprep.subr.bf16.mxu0 0
        %2051 = vmatpush1.bf16.msra.mxu0 0
        %2052 = vmatprep.subr.bf16.mxu0 0
        %2053 = vmatpush1.bf16.msra.mxu0 0
        %2054 = vmatprep.subr.bf16.mxu0 0
        %2055 = vmatpush1.bf16.msra.mxu0 0
        %2056 = vmatprep.subr.bf16.mxu0 0
        %2057 = vmatpush1.bf16.msra.mxu0 0
        %2058 = vmatprep.subr.bf16.mxu0 0
        %2059 = vmatpush1.bf16.msra.mxu0 0
        %2060 = vmatprep.subr.bf16.mxu0 0
        %2061 = vmatpush1.bf16.msra.mxu0 0
        %2062 = vmatprep.subr.bf16.mxu0 0
        %2063 = vmatpush1.bf16.msra.mxu0 0
        %2064 = vmatprep.subr.bf16.mxu0 0
        %2065 = vmatpush1.bf16.msra.mxu0 0
        %2066 = vmatprep.mubr.bf16.mxu0 0
        %2067 = vmatmul.mubr.bf16.gmra.mrb[0].mxu0 %v796
        %v2068 = vpop.f32.mrb[0].mxu0
        %v2069 = vadd.f32 0.0, %v2068
        %v2070 = vpop.f32.mrb[0].mxu0
        %v2071 = vadd.f32 0.0, %v2070
        %v2072 = vpop.f32.mrb[0].mxu0
        %v2073 = vadd.f32 0.0, %v2072
        %v2074 = vpop.f32.mrb[0].mxu0
        %v2075 = vadd.f32 0.0, %v2074
        %2076 = vmatprep.mubr.bf16.mxu0 0
        %2077 = vmatmul.mubr.bf16.gmra.mrb[0].mxu0 %v799
        %v2078 = vpop.f32.mrb[0].mxu0
        %v2079 = vadd.f32 0.0, %v2078
        %v2080 = vpop.f32.mrb[0].mxu0
        %v2081 = vadd.f32 0.0, %v2080
        %v2082 = vpop.f32.mrb[0].mxu0
        %v2083 = vadd.f32 0.0, %v2082
        %v2084 = vpop.f32.mrb[0].mxu0
        %v2085 = vadd.f32 0.0, %v2084
        %2086 = vdwg.mxu0
        %2087 = vmatprep.subr.bf16.mxu0 %v908
        %2088 = vmatpush1.bf16.msra.mxu0 %v905
        %2089 = vmatprep.subr.bf16.mxu0 0
        %2090 = vmatpush1.bf16.msra.mxu0 0
        %2091 = vmatprep.subr.bf16.mxu0 0
        %2092 = vmatpush1.bf16.msra.mxu0 0
        %2093 = vmatprep.subr.bf16.mxu0 0
        %2094 = vmatpush1.bf16.msra.mxu0 0
        %2095 = vmatprep.subr.bf16.mxu0 0
        %2096 = vmatpush1.bf16.msra.mxu0 0
        %2097 = vmatprep.subr.bf16.mxu0 0
        %2098 = vmatpush1.bf16.msra.mxu0 0
        %2099 = vmatprep.subr.bf16.mxu0 0
        %2100 = vmatpush1.bf16.msra.mxu0 0
        %2101 = vmatprep.subr.bf16.mxu0 0
        %2102 = vmatpush1.bf16.msra.mxu0 0
        %2103 = vmatprep.subr.bf16.mxu0 0
        %2104 = vmatpush1.bf16.msra.mxu0 0
        %2105 = vmatprep.subr.bf16.mxu0 0
        %2106 = vmatpush1.bf16.msra.mxu0 0
        %2107 = vmatprep.subr.bf16.mxu0 0
        %2108 = vmatpush1.bf16.msra.mxu0 0
        %2109 = vmatprep.subr.bf16.mxu0 0
        %2110 = vmatpush1.bf16.msra.mxu0 0
        %2111 = vmatprep.subr.bf16.mxu0 0
        %2112 = vmatpush1.bf16.msra.mxu0 0
        %2113 = vmatprep.subr.bf16.mxu0 0
        %2114 = vmatpush1.bf16.msra.mxu0 0
        %2115 = vmatprep.subr.bf16.mxu0 0
        %2116 = vmatpush1.bf16.msra.mxu0 0
        %2117 = vmatprep.subr.bf16.mxu0 0
        %2118 = vmatpush1.bf16.msra.mxu0 0
        %2119 = vmatprep.mubr.bf16.mxu0 0
        %2120 = vmatmul.mubr.bf16.gmra.mrb[0].mxu0 %v796
        %v2121 = vpop.f32.mrb[0].mxu0
        %v2122 = vadd.f32 0.0, %v2121
        %v2123 = vpop.f32.mrb[0].mxu0
        %v2124 = vadd.f32 0.0, %v2123
        %v2125 = vpop.f32.mrb[0].mxu0
        %v2126 = vadd.f32 0.0, %v2125
        %v2127 = vpop.f32.mrb[0].mxu0
        %v2128 = vadd.f32 0.0, %v2127
        %2129 = vmatprep.mubr.bf16.mxu0 0
        %2130 = vmatmul.mubr.bf16.gmra.mrb[0].mxu0 %v799
        %v2131 = vpop.f32.mrb[0].mxu0
        %v2132 = vadd.f32 0.0, %v2131
        %v2133 = vpop.f32.mrb[0].mxu0
        %v2134 = vadd.f32 0.0, %v2133
        %v2135 = vpop.f32.mrb[0].mxu0
        %v2136 = vadd.f32 0.0, %v2135
        %v2137 = vpop.f32.mrb[0].mxu0
        %v2138 = vadd.f32 0.0, %v2137
        %2139 = vdwg.mxu0
        %2140 = vmatprep.subr.bf16.mxu0 %v914
        %2141 = vmatpush1.bf16.msra.mxu0 %v911
        %2142 = vmatprep.subr.bf16.mxu0 0
        %2143 = vmatpush1.bf16.msra.mxu0 0
        %2144 = vmatprep.subr.bf16.mxu0 0
        %2145 = vmatpush1.bf16.msra.mxu0 0
        %2146 = vmatprep.subr.bf16.mxu0 0
        %2147 = vmatpush1.bf16.msra.mxu0 0
        %2148 = vmatprep.subr.bf16.mxu0 0
        %2149 = vmatpush1.bf16.msra.mxu0 0
        %2150 = vmatprep.subr.bf16.mxu0 0
        %2151 = vmatpush1.bf16.msra.mxu0 0
        %2152 = vmatprep.subr.bf16.mxu0 0
        %2153 = vmatpush1.bf16.msra.mxu0 0
        %2154 = vmatprep.subr.bf16.mxu0 0
        %2155 = vmatpush1.bf16.msra.mxu0 0
        %2156 = vmatprep.subr.bf16.mxu0 0
        %2157 = vmatpush1.bf16.msra.mxu0 0
        %2158 = vmatprep.subr.bf16.mxu0 0
        %2159 = vmatpush1.bf16.msra.mxu0 0
        %2160 = vmatprep.subr.bf16.mxu0 0
        %2161 = vmatpush1.bf16.msra.mxu0 0
        %2162 = vmatprep.subr.bf16.mxu0 0
        %2163 = vmatpush1.bf16.msra.mxu0 0
        %2164 = vmatprep.subr.bf16.mxu0 0
        %2165 = vmatpush1.bf16.msra.mxu0 0
        %2166 = vmatprep.subr.bf16.mxu0 0
        %2167 = vmatpush1.bf16.msra.mxu0 0
        %2168 = vmatprep.subr.bf16.mxu0 0
        %2169 = vmatpush1.bf16.msra.mxu0 0
        %2170 = vmatprep.subr.bf16.mxu0 0
        %2171 = vmatpush1.bf16.msra.mxu0 0
        %2172 = vmatprep.mubr.bf16.mxu0 0
        %2173 = vmatmul.mubr.bf16.gmra.mrb[0].mxu0 %v796
        %v2174 = vpop.f32.mrb[0].mxu0
        %v2175 = vadd.f32 0.0, %v2174
        %v2176 = vpop.f32.mrb[0].mxu0
        %v2177 = vadd.f32 0.0, %v2176
        %v2178 = vpop.f32.mrb[0].mxu0
        %v2179 = vadd.f32 0.0, %v2178
        %v2180 = vpop.f32.mrb[0].mxu0
        %v2181 = vadd.f32 0.0, %v2180
        %2182 = vmatprep.mubr.bf16.mxu0 0
        %2183 = vmatmul.mubr.bf16.gmra.mrb[0].mxu0 %v799
        %v2184 = vpop.f32.mrb[0].mxu0
        %v2185 = vadd.f32 0.0, %v2184
        %v2186 = vpop.f32.mrb[0].mxu0
        %v2187 = vadd.f32 0.0, %v2186
        %v2188 = vpop.f32.mrb[0].mxu0
        %v2189 = vadd.f32 0.0, %v2188
        %v2190 = vpop.f32.mrb[0].mxu0
        %v2191 = vadd.f32 0.0, %v2190
        %2192 = vdwg.mxu0
        %2193 = vmatprep.subr.bf16.mxu0 %v920
        %2194 = vmatpush1.bf16.msra.mxu0 %v917
        %2195 = vmatprep.subr.bf16.mxu0 0
        %2196 = vmatpush1.bf16.msra.mxu0 0
        %2197 = vmatprep.subr.bf16.mxu0 0
        %2198 = vmatpush1.bf16.msra.mxu0 0
        %2199 = vmatprep.subr.bf16.mxu0 0
        %2200 = vmatpush1.bf16.msra.mxu0 0
        %2201 = vmatprep.subr.bf16.mxu0 0
        %2202 = vmatpush1.bf16.msra.mxu0 0
        %2203 = vmatprep.subr.bf16.mxu0 0
        %2204 = vmatpush1.bf16.msra.mxu0 0
        %2205 = vmatprep.subr.bf16.mxu0 0
        %2206 = vmatpush1.bf16.msra.mxu0 0
        %2207 = vmatprep.subr.bf16.mxu0 0
        %2208 = vmatpush1.bf16.msra.mxu0 0
        %2209 = vmatprep.subr.bf16.mxu0 0
        %2210 = vmatpush1.bf16.msra.mxu0 0
        %2211 = vmatprep.subr.bf16.mxu0 0
        %2212 = vmatpush1.bf16.msra.mxu0 0
        %2213 = vmatprep.subr.bf16.mxu0 0
        %2214 = vmatpush1.bf16.msra.mxu0 0
        %2215 = vmatprep.subr.bf16.mxu0 0
        %2216 = vmatpush1.bf16.msra.mxu0 0
        %2217 = vmatprep.subr.bf16.mxu0 0
        %2218 = vmatpush1.bf16.msra.mxu0 0
        %2219 = vmatprep.subr.bf16.mxu0 0
        %2220 = vmatpush1.bf16.msra.mxu0 0
        %2221 = vmatprep.subr.bf16.mxu0 0
        %2222 = vmatpush1.bf16.msra.mxu0 0
        %2223 = vmatprep.subr.bf16.mxu0 0
        %2224 = vmatpush1.bf16.msra.mxu0 0
        %2225 = vmatprep.mubr.bf16.mxu0 0
        %2226 = vmatmul.mubr.bf16.gmra.mrb[0].mxu0 %v796
        %v2227 = vpop.f32.mrb[0].mxu0
        %v2228 = vadd.f32 0.0, %v2227
        %v2229 = vpop.f32.mrb[0].mxu0
        %v2230 = vadd.f32 0.0, %v2229
        %v2231 = vpop.f32.mrb[0].mxu0
        %v2232 = vadd.f32 0.0, %v2231
        %v2233 = vpop.f32.mrb[0].mxu0
        %v2234 = vadd.f32 0.0, %v2233
        %2235 = vmatprep.mubr.bf16.mxu0 0
        %2236 = vmatmul.mubr.bf16.gmra.mrb[0].mxu0 %v799
        %v2237 = vpop.f32.mrb[0].mxu0
        %v2238 = vadd.f32 0.0, %v2237
        %v2239 = vpop.f32.mrb[0].mxu0
        %v2240 = vadd.f32 0.0, %v2239
        %v2241 = vpop.f32.mrb[0].mxu0
        %v2242 = vadd.f32 0.0, %v2241
        %v2243 = vpop.f32.mrb[0].mxu0
        %v2244 = vadd.f32 0.0, %v2243
        %2245 = vdwg.mxu0
        %2246 = vmatprep.subr.bf16.mxu0 %v926
        %2247 = vmatpush1.bf16.msra.mxu0 %v923
        %2248 = vmatprep.subr.bf16.mxu0 0
        %2249 = vmatpush1.bf16.msra.mxu0 0
        %2250 = vmatprep.subr.bf16.mxu0 0
        %2251 = vmatpush1.bf16.msra.mxu0 0
        %2252 = vmatprep.subr.bf16.mxu0 0
        %2253 = vmatpush1.bf16.msra.mxu0 0
        %2254 = vmatprep.subr.bf16.mxu0 0
        %2255 = vmatpush1.bf16.msra.mxu0 0
        %2256 = vmatprep.subr.bf16.mxu0 0
        %2257 = vmatpush1.bf16.msra.mxu0 0
        %2258 = vmatprep.subr.bf16.mxu0 0
        %2259 = vmatpush1.bf16.msra.mxu0 0
        %2260 = vmatprep.subr.bf16.mxu0 0
        %2261 = vmatpush1.bf16.msra.mxu0 0
        %2262 = vmatprep.subr.bf16.mxu0 0
        %2263 = vmatpush1.bf16.msra.mxu0 0
        %2264 = vmatprep.subr.bf16.mxu0 0
        %2265 = vmatpush1.bf16.msra.mxu0 0
        %2266 = vmatprep.subr.bf16.mxu0 0
        %2267 = vmatpush1.bf16.msra.mxu0 0
        %2268 = vmatprep.subr.bf16.mxu0 0
        %2269 = vmatpush1.bf16.msra.mxu0 0
        %2270 = vmatprep.subr.bf16.mxu0 0
        %2271 = vmatpush1.bf16.msra.mxu0 0
        %2272 = vmatprep.subr.bf16.mxu0 0
        %2273 = vmatpush1.bf16.msra.mxu0 0
        %2274 = vmatprep.subr.bf16.mxu0 0
        %2275 = vmatpush1.bf16.msra.mxu0 0
        %2276 = vmatprep.subr.bf16.mxu0 0
        %2277 = vmatpush1.bf16.msra.mxu0 0
        %2278 = vmatprep.mubr.bf16.mxu0 0
        %2279 = vmatmul.mubr.bf16.gmra.mrb[0].mxu0 %v796
        %v2280 = vpop.f32.mrb[0].mxu0
        %v2281 = vadd.f32 0.0, %v2280
        %v2282 = vpop.f32.mrb[0].mxu0
        %v2283 = vadd.f32 0.0, %v2282
        %v2284 = vpop.f32.mrb[0].mxu0
        %v2285 = vadd.f32 0.0, %v2284
        %v2286 = vpop.f32.mrb[0].mxu0
        %v2287 = vadd.f32 0.0, %v2286
        %2288 = vmatprep.mubr.bf16.mxu0 0
        %2289 = vmatmul.mubr.bf16.gmra.mrb[0].mxu0 %v799
        %v2290 = vpop.f32.mrb[0].mxu0
        %v2291 = vadd.f32 0.0, %v2290
        %v2292 = vpop.f32.mrb[0].mxu0
        %v2293 = vadd.f32 0.0, %v2292
        %v2294 = vpop.f32.mrb[0].mxu0
        %v2295 = vadd.f32 0.0, %v2294
        %v2296 = vpop.f32.mrb[0].mxu0
        %v2297 = vadd.f32 0.0, %v2296
        %2298 = vdwg.mxu0
        %2299 = vmatprep.subr.bf16.mxu0 %v932
        %2300 = vmatpush1.bf16.msra.mxu0 %v929
        %2301 = vmatprep.subr.bf16.mxu0 0
        %2302 = vmatpush1.bf16.msra.mxu0 0
        %2303 = vmatprep.subr.bf16.mxu0 0
        %2304 = vmatpush1.bf16.msra.mxu0 0
        %2305 = vmatprep.subr.bf16.mxu0 0
        %2306 = vmatpush1.bf16.msra.mxu0 0
        %2307 = vmatprep.subr.bf16.mxu0 0
        %2308 = vmatpush1.bf16.msra.mxu0 0
        %2309 = vmatprep.subr.bf16.mxu0 0
        %2310 = vmatpush1.bf16.msra.mxu0 0
        %2311 = vmatprep.subr.bf16.mxu0 0
        %2312 = vmatpush1.bf16.msra.mxu0 0
        %2313 = vmatprep.subr.bf16.mxu0 0
        %2314 = vmatpush1.bf16.msra.mxu0 0
        %2315 = vmatprep.subr.bf16.mxu0 0
        %2316 = vmatpush1.bf16.msra.mxu0 0
        %2317 = vmatprep.subr.bf16.mxu0 0
        %2318 = vmatpush1.bf16.msra.mxu0 0
        %2319 = vmatprep.subr.bf16.mxu0 0
        %2320 = vmatpush1.bf16.msra.mxu0 0
        %2321 = vmatprep.subr.bf16.mxu0 0
        %2322 = vmatpush1.bf16.msra.mxu0 0
        %2323 = vmatprep.subr.bf16.mxu0 0
        %2324 = vmatpush1.bf16.msra.mxu0 0
        %2325 = vmatprep.subr.bf16.mxu0 0
        %2326 = vmatpush1.bf16.msra.mxu0 0
        %2327 = vmatprep.subr.bf16.mxu0 0
        %2328 = vmatpush1.bf16.msra.mxu0 0
        %2329 = vmatprep.subr.bf16.mxu0 0
        %2330 = vmatpush1.bf16.msra.mxu0 0
        %2331 = vmatprep.mubr.bf16.mxu0 0
        %2332 = vmatmul.mubr.bf16.gmra.mrb[0].mxu0 %v796
        %v2333 = vpop.f32.mrb[0].mxu0
        %v2334 = vadd.f32 0.0, %v2333
        %v2335 = vpop.f32.mrb[0].mxu0
        %v2336 = vadd.f32 0.0, %v2335
        %v2337 = vpop.f32.mrb[0].mxu0
        %v2338 = vadd.f32 0.0, %v2337
        %v2339 = vpop.f32.mrb[0].mxu0
        %v2340 = vadd.f32 0.0, %v2339
        %2341 = vmatprep.mubr.bf16.mxu0 0
        %2342 = vmatmul.mubr.bf16.gmra.mrb[0].mxu0 %v799
        %v2343 = vpop.f32.mrb[0].mxu0
        %v2344 = vadd.f32 0.0, %v2343
        %v2345 = vpop.f32.mrb[0].mxu0
        %v2346 = vadd.f32 0.0, %v2345
        %v2347 = vpop.f32.mrb[0].mxu0
        %v2348 = vadd.f32 0.0, %v2347
        %v2349 = vpop.f32.mrb[0].mxu0
        %v2350 = vadd.f32 0.0, %v2349
        %2351 = vdwg.mxu0
        %2352 = vmatprep.subr.bf16.mxu0 %v938
        %2353 = vmatpush1.bf16.msra.mxu0 %v935
        %2354 = vmatprep.subr.bf16.mxu0 0
        %2355 = vmatpush1.bf16.msra.mxu0 0
        %2356 = vmatprep.subr.bf16.mxu0 0
        %2357 = vmatpush1.bf16.msra.mxu0 0
        %2358 = vmatprep.subr.bf16.mxu0 0
        %2359 = vmatpush1.bf16.msra.mxu0 0
        %2360 = vmatprep.subr.bf16.mxu0 0
        %2361 = vmatpush1.bf16.msra.mxu0 0
        %2362 = vmatprep.subr.bf16.mxu0 0
        %2363 = vmatpush1.bf16.msra.mxu0 0
        %2364 = vmatprep.subr.bf16.mxu0 0
        %2365 = vmatpush1.bf16.msra.mxu0 0
        %2366 = vmatprep.subr.bf16.mxu0 0
        %2367 = vmatpush1.bf16.msra.mxu0 0
        %2368 = vmatprep.subr.bf16.mxu0 0
        %2369 = vmatpush1.bf16.msra.mxu0 0
        %2370 = vmatprep.subr.bf16.mxu0 0
        %2371 = vmatpush1.bf16.msra.mxu0 0
        %2372 = vmatprep.subr.bf16.mxu0 0
        %2373 = vmatpush1.bf16.msra.mxu0 0
        %2374 = vmatprep.subr.bf16.mxu0 0
        %2375 = vmatpush1.bf16.msra.mxu0 0
        %2376 = vmatprep.subr.bf16.mxu0 0
        %2377 = vmatpush1.bf16.msra.mxu0 0
        %2378 = vmatprep.subr.bf16.mxu0 0
        %2379 = vmatpush1.bf16.msra.mxu0 0
        %2380 = vmatprep.subr.bf16.mxu0 0
        %2381 = vmatpush1.bf16.msra.mxu0 0
        %2382 = vmatprep.subr.bf16.mxu0 0
        %2383 = vmatpush1.bf16.msra.mxu0 0
        %2384 = vmatprep.mubr.bf16.mxu0 0
        %2385 = vmatmul.mubr.bf16.gmra.mrb[0].mxu0 %v796
        %v2386 = vpop.f32.mrb[0].mxu0
        %v2387 = vadd.f32 0.0, %v2386
        %v2388 = vpop.f32.mrb[0].mxu0
        %v2389 = vadd.f32 0.0, %v2388
        %v2390 = vpop.f32.mrb[0].mxu0
        %v2391 = vadd.f32 0.0, %v2390
        %v2392 = vpop.f32.mrb[0].mxu0
        %v2393 = vadd.f32 0.0, %v2392
        %2394 = vmatprep.mubr.bf16.mxu0 0
        %2395 = vmatmul.mubr.bf16.gmra.mrb[0].mxu0 %v799
        %v2396 = vpop.f32.mrb[0].mxu0
        %v2397 = vadd.f32 0.0, %v2396
        %v2398 = vpop.f32.mrb[0].mxu0
        %v2399 = vadd.f32 0.0, %v2398
        %v2400 = vpop.f32.mrb[0].mxu0
        %v2401 = vadd.f32 0.0, %v2400
        %v2402 = vpop.f32.mrb[0].mxu0
        %v2403 = vadd.f32 0.0, %v2402
        %2404 = vdwg.mxu0
        %2405 = vmatprep.subr.bf16.mxu0 %v944
        %2406 = vmatpush1.bf16.msra.mxu0 %v941
        %2407 = vmatprep.subr.bf16.mxu0 0
        %2408 = vmatpush1.bf16.msra.mxu0 0
        %2409 = vmatprep.subr.bf16.mxu0 0
        %2410 = vmatpush1.bf16.msra.mxu0 0
        %2411 = vmatprep.subr.bf16.mxu0 0
        %2412 = vmatpush1.bf16.msra.mxu0 0
        %2413 = vmatprep.subr.bf16.mxu0 0
        %2414 = vmatpush1.bf16.msra.mxu0 0
        %2415 = vmatprep.subr.bf16.mxu0 0
        %2416 = vmatpush1.bf16.msra.mxu0 0
        %2417 = vmatprep.subr.bf16.mxu0 0
        %2418 = vmatpush1.bf16.msra.mxu0 0
        %2419 = vmatprep.subr.bf16.mxu0 0
        %2420 = vmatpush1.bf16.msra.mxu0 0
        %2421 = vmatprep.subr.bf16.mxu0 0
        %2422 = vmatpush1.bf16.msra.mxu0 0
        %2423 = vmatprep.subr.bf16.mxu0 0
        %2424 = vmatpush1.bf16.msra.mxu0 0
        %2425 = vmatprep.subr.bf16.mxu0 0
        %2426 = vmatpush1.bf16.msra.mxu0 0
        %2427 = vmatprep.subr.bf16.mxu0 0
        %2428 = vmatpush1.bf16.msra.mxu0 0
        %2429 = vmatprep.subr.bf16.mxu0 0
        %2430 = vmatpush1.bf16.msra.mxu0 0
        %2431 = vmatprep.subr.bf16.mxu0 0
        %2432 = vmatpush1.bf16.msra.mxu0 0
        %2433 = vmatprep.subr.bf16.mxu0 0
        %2434 = vmatpush1.bf16.msra.mxu0 0
        %2435 = vmatprep.subr.bf16.mxu0 0
        %2436 = vmatpush1.bf16.msra.mxu0 0
        %2437 = vmatprep.mubr.bf16.mxu0 0
        %2438 = vmatmul.mubr.bf16.gmra.mrb[0].mxu0 %v796
        %v2439 = vpop.f32.mrb[0].mxu0
        %v2440 = vadd.f32 0.0, %v2439
        %v2441 = vpop.f32.mrb[0].mxu0
        %v2442 = vadd.f32 0.0, %v2441
        %v2443 = vpop.f32.mrb[0].mxu0
        %v2444 = vadd.f32 0.0, %v2443
        %v2445 = vpop.f32.mrb[0].mxu0
        %v2446 = vadd.f32 0.0, %v2445
        %2447 = vmatprep.mubr.bf16.mxu0 0
        %2448 = vmatmul.mubr.bf16.gmra.mrb[0].mxu0 %v799
        %v2449 = vpop.f32.mrb[0].mxu0
        %v2450 = vadd.f32 0.0, %v2449
        %v2451 = vpop.f32.mrb[0].mxu0
        %v2452 = vadd.f32 0.0, %v2451
        %v2453 = vpop.f32.mrb[0].mxu0
        %v2454 = vadd.f32 0.0, %v2453
        %v2455 = vpop.f32.mrb[0].mxu0
        %v2456 = vadd.f32 0.0, %v2455
        %2457 = vdwg.mxu0
        %2458 = vmatprep.subr.bf16.mxu0 %v950
        %2459 = vmatpush1.bf16.msra.mxu0 %v947
        %2460 = vmatprep.subr.bf16.mxu0 0
        %2461 = vmatpush1.bf16.msra.mxu0 0
        %2462 = vmatprep.subr.bf16.mxu0 0
        %2463 = vmatpush1.bf16.msra.mxu0 0
        %2464 = vmatprep.subr.bf16.mxu0 0
        %2465 = vmatpush1.bf16.msra.mxu0 0
        %2466 = vmatprep.subr.bf16.mxu0 0
        %2467 = vmatpush1.bf16.msra.mxu0 0
        %2468 = vmatprep.subr.bf16.mxu0 0
        %2469 = vmatpush1.bf16.msra.mxu0 0
        %2470 = vmatprep.subr.bf16.mxu0 0
        %2471 = vmatpush1.bf16.msra.mxu0 0
        %2472 = vmatprep.subr.bf16.mxu0 0
        %2473 = vmatpush1.bf16.msra.mxu0 0
        %2474 = vmatprep.subr.bf16.mxu0 0
        %2475 = vmatpush1.bf16.msra.mxu0 0
        %2476 = vmatprep.subr.bf16.mxu0 0
        %2477 = vmatpush1.bf16.msra.mxu0 0
        %2478 = vmatprep.subr.bf16.mxu0 0
        %2479 = vmatpush1.bf16.msra.mxu0 0
        %2480 = vmatprep.subr.bf16.mxu0 0
        %2481 = vmatpush1.bf16.msra.mxu0 0
        %2482 = vmatprep.subr.bf16.mxu0 0
        %2483 = vmatpush1.bf16.msra.mxu0 0
        %2484 = vmatprep.subr.bf16.mxu0 0
        %2485 = vmatpush1.bf16.msra.mxu0 0
        %2486 = vmatprep.subr.bf16.mxu0 0
        %2487 = vmatpush1.bf16.msra.mxu0 0
        %2488 = vmatprep.subr.bf16.mxu0 0
        %2489 = vmatpush1.bf16.msra.mxu0 0
        %2490 = vmatprep.mubr.bf16.mxu0 0
        %2491 = vmatmul.mubr.bf16.gmra.mrb[0].mxu0 %v796
        %v2492 = vpop.f32.mrb[0].mxu0
        %v2493 = vadd.f32 0.0, %v2492
        %v2494 = vpop.f32.mrb[0].mxu0
        %v2495 = vadd.f32 0.0, %v2494
        %v2496 = vpop.f32.mrb[0].mxu0
        %v2497 = vadd.f32 0.0, %v2496
        %v2498 = vpop.f32.mrb[0].mxu0
        %v2499 = vadd.f32 0.0, %v2498
        %2500 = vmatprep.mubr.bf16.mxu0 0
        %2501 = vmatmul.mubr.bf16.gmra.mrb[0].mxu0 %v799
        %v2502 = vpop.f32.mrb[0].mxu0
        %v2503 = vadd.f32 0.0, %v2502
        %v2504 = vpop.f32.mrb[0].mxu0
        %v2505 = vadd.f32 0.0, %v2504
        %v2506 = vpop.f32.mrb[0].mxu0
        %v2507 = vadd.f32 0.0, %v2506
        %v2508 = vpop.f32.mrb[0].mxu0
        %v2509 = vadd.f32 0.0, %v2508
        %2510 = vdwg.mxu0
        %2511 = vmatprep.subr.bf16.mxu0 %v956
        %2512 = vmatpush1.bf16.msra.mxu0 %v953
        %2513 = vmatprep.subr.bf16.mxu0 0
        %2514 = vmatpush1.bf16.msra.mxu0 0
        %2515 = vmatprep.subr.bf16.mxu0 0
        %2516 = vmatpush1.bf16.msra.mxu0 0
        %2517 = vmatprep.subr.bf16.mxu0 0
        %2518 = vmatpush1.bf16.msra.mxu0 0
        %2519 = vmatprep.subr.bf16.mxu0 0
        %2520 = vmatpush1.bf16.msra.mxu0 0
        %2521 = vmatprep.subr.bf16.mxu0 0
        %2522 = vmatpush1.bf16.msra.mxu0 0
        %2523 = vmatprep.subr.bf16.mxu0 0
        %2524 = vmatpush1.bf16.msra.mxu0 0
        %2525 = vmatprep.subr.bf16.mxu0 0
        %2526 = vmatpush1.bf16.msra.mxu0 0
        %2527 = vmatprep.subr.bf16.mxu0 0
        %2528 = vmatpush1.bf16.msra.mxu0 0
        %2529 = vmatprep.subr.bf16.mxu0 0
        %2530 = vmatpush1.bf16.msra.mxu0 0
        %2531 = vmatprep.subr.bf16.mxu0 0
        %2532 = vmatpush1.bf16.msra.mxu0 0
        %2533 = vmatprep.subr.bf16.mxu0 0
        %2534 = vmatpush1.bf16.msra.mxu0 0
        %2535 = vmatprep.subr.bf16.mxu0 0
        %2536 = vmatpush1.bf16.msra.mxu0 0
        %2537 = vmatprep.subr.bf16.mxu0 0
        %2538 = vmatpush1.bf16.msra.mxu0 0
        %2539 = vmatprep.subr.bf16.mxu0 0
        %2540 = vmatpush1.bf16.msra.mxu0 0
        %2541 = vmatprep.subr.bf16.mxu0 0
        %2542 = vmatpush1.bf16.msra.mxu0 0
        %2543 = vmatprep.mubr.bf16.mxu0 0
        %2544 = vmatmul.mubr.bf16.gmra.mrb[0].mxu0 %v796
        %v2545 = vpop.f32.mrb[0].mxu0
        %v2546 = vadd.f32 0.0, %v2545
        %v2547 = vpop.f32.mrb[0].mxu0
        %v2548 = vadd.f32 0.0, %v2547
        %v2549 = vpop.f32.mrb[0].mxu0
        %v2550 = vadd.f32 0.0, %v2549
        %v2551 = vpop.f32.mrb[0].mxu0
        %v2552 = vadd.f32 0.0, %v2551
        %2553 = vmatprep.mubr.bf16.mxu0 0
        %2554 = vmatmul.mubr.bf16.gmra.mrb[0].mxu0 %v799
        %v2555 = vpop.f32.mrb[0].mxu0
        %v2556 = vadd.f32 0.0, %v2555
        %v2557 = vpop.f32.mrb[0].mxu0
        %v2558 = vadd.f32 0.0, %v2557
        %v2559 = vpop.f32.mrb[0].mxu0
        %v2560 = vadd.f32 0.0, %v2559
        %v2561 = vpop.f32.mrb[0].mxu0
        %v2562 = vadd.f32 0.0, %v2561
        %2563 = vdwg.mxu0
        %2564 = vmatprep.subr.bf16.mxu0 %v962
        %2565 = vmatpush1.bf16.msra.mxu0 %v959
        %2566 = vmatprep.subr.bf16.mxu0 0
        %2567 = vmatpush1.bf16.msra.mxu0 0
        %2568 = vmatprep.subr.bf16.mxu0 0
        %2569 = vmatpush1.bf16.msra.mxu0 0
        %2570 = vmatprep.subr.bf16.mxu0 0
        %2571 = vmatpush1.bf16.msra.mxu0 0
        %2572 = vmatprep.subr.bf16.mxu0 0
        %2573 = vmatpush1.bf16.msra.mxu0 0
        %2574 = vmatprep.subr.bf16.mxu0 0
        %2575 = vmatpush1.bf16.msra.mxu0 0
        %2576 = vmatprep.subr.bf16.mxu0 0
        %2577 = vmatpush1.bf16.msra.mxu0 0
        %2578 = vmatprep.subr.bf16.mxu0 0
        %2579 = vmatpush1.bf16.msra.mxu0 0
        %2580 = vmatprep.subr.bf16.mxu0 0
        %2581 = vmatpush1.bf16.msra.mxu0 0
        %2582 = vmatprep.subr.bf16.mxu0 0
        %2583 = vmatpush1.bf16.msra.mxu0 0
        %2584 = vmatprep.subr.bf16.mxu0 0
        %2585 = vmatpush1.bf16.msra.mxu0 0
        %2586 = vmatprep.subr.bf16.mxu0 0
        %2587 = vmatpush1.bf16.msra.mxu0 0
        %2588 = vmatprep.subr.bf16.mxu0 0
        %2589 = vmatpush1.bf16.msra.mxu0 0
        %2590 = vmatprep.subr.bf16.mxu0 0
        %2591 = vmatpush1.bf16.msra.mxu0 0
        %2592 = vmatprep.subr.bf16.mxu0 0
        %2593 = vmatpush1.bf16.msra.mxu0 0
        %2594 = vmatprep.subr.bf16.mxu0 0
        %2595 = vmatpush1.bf16.msra.mxu0 0
        %2596 = vmatprep.mubr.bf16.mxu0 0
        %2597 = vmatmul.mubr.bf16.gmra.mrb[0].mxu0 %v796
        %v2598 = vpop.f32.mrb[0].mxu0
        %v2599 = vadd.f32 0.0, %v2598
        %v2600 = vpop.f32.mrb[0].mxu0
        %v2601 = vadd.f32 0.0, %v2600
        %v2602 = vpop.f32.mrb[0].mxu0
        %v2603 = vadd.f32 0.0, %v2602
        %v2604 = vpop.f32.mrb[0].mxu0
        %v2605 = vadd.f32 0.0, %v2604
        %2606 = vmatprep.mubr.bf16.mxu0 0
        %2607 = vmatmul.mubr.bf16.gmra.mrb[0].mxu0 %v799
        %v2608 = vpop.f32.mrb[0].mxu0
        %v2609 = vadd.f32 0.0, %v2608
        %v2610 = vpop.f32.mrb[0].mxu0
        %v2611 = vadd.f32 0.0, %v2610
        %v2612 = vpop.f32.mrb[0].mxu0
        %v2613 = vadd.f32 0.0, %v2612
        %v2614 = vpop.f32.mrb[0].mxu0
        %v2615 = vadd.f32 0.0, %v2614
        %2616 = vdwg.mxu0
        %2617 = vmatprep.subr.bf16.mxu0 %v968
        %2618 = vmatpush1.bf16.msra.mxu0 %v965
        %2619 = vmatprep.subr.bf16.mxu0 0
        %2620 = vmatpush1.bf16.msra.mxu0 0
        %2621 = vmatprep.subr.bf16.mxu0 0
        %2622 = vmatpush1.bf16.msra.mxu0 0
        %2623 = vmatprep.subr.bf16.mxu0 0
        %2624 = vmatpush1.bf16.msra.mxu0 0
        %2625 = vmatprep.subr.bf16.mxu0 0
        %2626 = vmatpush1.bf16.msra.mxu0 0
        %2627 = vmatprep.subr.bf16.mxu0 0
        %2628 = vmatpush1.bf16.msra.mxu0 0
        %2629 = vmatprep.subr.bf16.mxu0 0
        %2630 = vmatpush1.bf16.msra.mxu0 0
        %2631 = vmatprep.subr.bf16.mxu0 0
        %2632 = vmatpush1.bf16.msra.mxu0 0
        %2633 = vmatprep.subr.bf16.mxu0 0
        %2634 = vmatpush1.bf16.msra.mxu0 0
        %2635 = vmatprep.subr.bf16.mxu0 0
        %2636 = vmatpush1.bf16.msra.mxu0 0
        %2637 = vmatprep.subr.bf16.mxu0 0
        %2638 = vmatpush1.bf16.msra.mxu0 0
        %2639 = vmatprep.subr.bf16.mxu0 0
        %2640 = vmatpush1.bf16.msra.mxu0 0
        %2641 = vmatprep.subr.bf16.mxu0 0
        %2642 = vmatpush1.bf16.msra.mxu0 0
        %2643 = vmatprep.subr.bf16.mxu0 0
        %2644 = vmatpush1.bf16.msra.mxu0 0
        %2645 = vmatprep.subr.bf16.mxu0 0
        %2646 = vmatpush1.bf16.msra.mxu0 0
        %2647 = vmatprep.subr.bf16.mxu0 0
        %2648 = vmatpush1.bf16.msra.mxu0 0
        %2649 = vmatprep.mubr.bf16.mxu0 0
        %2650 = vmatmul.mubr.bf16.gmra.mrb[0].mxu0 %v796
        %v2651 = vpop.f32.mrb[0].mxu0
        %v2652 = vadd.f32 0.0, %v2651
        %v2653 = vpop.f32.mrb[0].mxu0
        %v2654 = vadd.f32 0.0, %v2653
        %v2655 = vpop.f32.mrb[0].mxu0
        %v2656 = vadd.f32 0.0, %v2655
        %v2657 = vpop.f32.mrb[0].mxu0
        %v2658 = vadd.f32 0.0, %v2657
        %2659 = vmatprep.mubr.bf16.mxu0 0
        %2660 = vmatmul.mubr.bf16.gmra.mrb[0].mxu0 %v799
        %v2661 = vpop.f32.mrb[0].mxu0
        %v2662 = vadd.f32 0.0, %v2661
        %v2663 = vpop.f32.mrb[0].mxu0
        %v2664 = vadd.f32 0.0, %v2663
        %v2665 = vpop.f32.mrb[0].mxu0
        %v2666 = vadd.f32 0.0, %v2665
        %v2667 = vpop.f32.mrb[0].mxu0
        %v2668 = vadd.f32 0.0, %v2667
        %2669 = vdwg.mxu0
        %2670 = vmatprep.subr.bf16.mxu0 %v974
        %2671 = vmatpush1.bf16.msra.mxu0 %v971
        %2672 = vmatprep.subr.bf16.mxu0 0
        %2673 = vmatpush1.bf16.msra.mxu0 0
        %2674 = vmatprep.subr.bf16.mxu0 0
        %2675 = vmatpush1.bf16.msra.mxu0 0
        %2676 = vmatprep.subr.bf16.mxu0 0
        %2677 = vmatpush1.bf16.msra.mxu0 0
        %2678 = vmatprep.subr.bf16.mxu0 0
        %2679 = vmatpush1.bf16.msra.mxu0 0
        %2680 = vmatprep.subr.bf16.mxu0 0
        %2681 = vmatpush1.bf16.msra.mxu0 0
        %2682 = vmatprep.subr.bf16.mxu0 0
        %2683 = vmatpush1.bf16.msra.mxu0 0
        %2684 = vmatprep.subr.bf16.mxu0 0
        %2685 = vmatpush1.bf16.msra.mxu0 0
        %2686 = vmatprep.subr.bf16.mxu0 0
        %2687 = vmatpush1.bf16.msra.mxu0 0
        %2688 = vmatprep.subr.bf16.mxu0 0
        %2689 = vmatpush1.bf16.msra.mxu0 0
        %2690 = vmatprep.subr.bf16.mxu0 0
        %2691 = vmatpush1.bf16.msra.mxu0 0
        %2692 = vmatprep.subr.bf16.mxu0 0
        %2693 = vmatpush1.bf16.msra.mxu0 0
        %2694 = vmatprep.subr.bf16.mxu0 0
        %2695 = vmatpush1.bf16.msra.mxu0 0
        %2696 = vmatprep.subr.bf16.mxu0 0
        %2697 = vmatpush1.bf16.msra.mxu0 0
        %2698 = vmatprep.subr.bf16.mxu0 0
        %2699 = vmatpush1.bf16.msra.mxu0 0
        %2700 = vmatprep.subr.bf16.mxu0 0
        %2701 = vmatpush1.bf16.msra.mxu0 0
        %2702 = vmatprep.mubr.bf16.mxu0 0
        %2703 = vmatmul.mubr.bf16.gmra.mrb[0].mxu0 %v796
        %v2704 = vpop.f32.mrb[0].mxu0
        %v2705 = vadd.f32 0.0, %v2704
        %v2706 = vpop.f32.mrb[0].mxu0
        %v2707 = vadd.f32 0.0, %v2706
        %v2708 = vpop.f32.mrb[0].mxu0
        %v2709 = vadd.f32 0.0, %v2708
        %v2710 = vpop.f32.mrb[0].mxu0
        %v2711 = vadd.f32 0.0, %v2710
        %2712 = vmatprep.mubr.bf16.mxu0 0
        %2713 = vmatmul.mubr.bf16.gmra.mrb[0].mxu0 %v799
        %v2714 = vpop.f32.mrb[0].mxu0
        %v2715 = vadd.f32 0.0, %v2714
        %v2716 = vpop.f32.mrb[0].mxu0
        %v2717 = vadd.f32 0.0, %v2716
        %v2718 = vpop.f32.mrb[0].mxu0
        %v2719 = vadd.f32 0.0, %v2718
        %v2720 = vpop.f32.mrb[0].mxu0
        %v2721 = vadd.f32 0.0, %v2720
        %2722 = vdwg.mxu0
        %2723 = vmatprep.subr.bf16.mxu0 %v980
        %2724 = vmatpush1.bf16.msra.mxu0 %v977
        %2725 = vmatprep.subr.bf16.mxu0 0
        %2726 = vmatpush1.bf16.msra.mxu0 0
        %2727 = vmatprep.subr.bf16.mxu0 0
        %2728 = vmatpush1.bf16.msra.mxu0 0
        %2729 = vmatprep.subr.bf16.mxu0 0
        %2730 = vmatpush1.bf16.msra.mxu0 0
        %2731 = vmatprep.subr.bf16.mxu0 0
        %2732 = vmatpush1.bf16.msra.mxu0 0
        %2733 = vmatprep.subr.bf16.mxu0 0
        %2734 = vmatpush1.bf16.msra.mxu0 0
        %2735 = vmatprep.subr.bf16.mxu0 0
        %2736 = vmatpush1.bf16.msra.mxu0 0
        %2737 = vmatprep.subr.bf16.mxu0 0
        %2738 = vmatpush1.bf16.msra.mxu0 0
        %2739 = vmatprep.subr.bf16.mxu0 0
        %2740 = vmatpush1.bf16.msra.mxu0 0
        %2741 = vmatprep.subr.bf16.mxu0 0
        %2742 = vmatpush1.bf16.msra.mxu0 0
        %2743 = vmatprep.subr.bf16.mxu0 0
        %2744 = vmatpush1.bf16.msra.mxu0 0
        %2745 = vmatprep.subr.bf16.mxu0 0
        %2746 = vmatpush1.bf16.msra.mxu0 0
        %2747 = vmatprep.subr.bf16.mxu0 0
        %2748 = vmatpush1.bf16.msra.mxu0 0
        %2749 = vmatprep.subr.bf16.mxu0 0
        %2750 = vmatpush1.bf16.msra.mxu0 0
        %2751 = vmatprep.subr.bf16.mxu0 0
        %2752 = vmatpush1.bf16.msra.mxu0 0
        %2753 = vmatprep.subr.bf16.mxu0 0
        %2754 = vmatpush1.bf16.msra.mxu0 0
        %2755 = vmatprep.mubr.bf16.mxu0 0
        %2756 = vmatmul.mubr.bf16.gmra.mrb[0].mxu0 %v796
        %v2757 = vpop.f32.mrb[0].mxu0
        %v2758 = vadd.f32 0.0, %v2757
        %v2759 = vpop.f32.mrb[0].mxu0
        %v2760 = vadd.f32 0.0, %v2759
        %v2761 = vpop.f32.mrb[0].mxu0
        %v2762 = vadd.f32 0.0, %v2761
        %v2763 = vpop.f32.mrb[0].mxu0
        %v2764 = vadd.f32 0.0, %v2763
        %2765 = vmatprep.mubr.bf16.mxu0 0
        %2766 = vmatmul.mubr.bf16.gmra.mrb[0].mxu0 %v799
        %v2767 = vpop.f32.mrb[0].mxu0
        %v2768 = vadd.f32 0.0, %v2767
        %v2769 = vpop.f32.mrb[0].mxu0
        %v2770 = vadd.f32 0.0, %v2769
        %v2771 = vpop.f32.mrb[0].mxu0
        %v2772 = vadd.f32 0.0, %v2771
        %v2773 = vpop.f32.mrb[0].mxu0
        %v2774 = vadd.f32 0.0, %v2773
        %2775 = vdwg.mxu0
        %2776 = vmatprep.subr.bf16.mxu0 %v986
        %2777 = vmatpush1.bf16.msra.mxu0 %v983
        %2778 = vmatprep.subr.bf16.mxu0 0
        %2779 = vmatpush1.bf16.msra.mxu0 0
        %2780 = vmatprep.subr.bf16.mxu0 0
        %2781 = vmatpush1.bf16.msra.mxu0 0
        %2782 = vmatprep.subr.bf16.mxu0 0
        %2783 = vmatpush1.bf16.msra.mxu0 0
        %2784 = vmatprep.subr.bf16.mxu0 0
        %2785 = vmatpush1.bf16.msra.mxu0 0
        %2786 = vmatprep.subr.bf16.mxu0 0
        %2787 = vmatpush1.bf16.msra.mxu0 0
        %2788 = vmatprep.subr.bf16.mxu0 0
        %2789 = vmatpush1.bf16.msra.mxu0 0
        %2790 = vmatprep.subr.bf16.mxu0 0
        %2791 = vmatpush1.bf16.msra.mxu0 0
        %2792 = vmatprep.subr.bf16.mxu0 0
        %2793 = vmatpush1.bf16.msra.mxu0 0
        %2794 = vmatprep.subr.bf16.mxu0 0
        %2795 = vmatpush1.bf16.msra.mxu0 0
        %2796 = vmatprep.subr.bf16.mxu0 0
        %2797 = vmatpush1.bf16.msra.mxu0 0
        %2798 = vmatprep.subr.bf16.mxu0 0
        %2799 = vmatpush1.bf16.msra.mxu0 0
        %2800 = vmatprep.subr.bf16.mxu0 0
        %2801 = vmatpush1.bf16.msra.mxu0 0
        %2802 = vmatprep.subr.bf16.mxu0 0
        %2803 = vmatpush1.bf16.msra.mxu0 0
        %2804 = vmatprep.subr.bf16.mxu0 0
        %2805 = vmatpush1.bf16.msra.mxu0 0
        %2806 = vmatprep.subr.bf16.mxu0 0
        %2807 = vmatpush1.bf16.msra.mxu0 0
        %2808 = vmatprep.mubr.bf16.mxu0 0
        %2809 = vmatmul.mubr.bf16.gmra.mrb[0].mxu0 %v796
        %v2810 = vpop.f32.mrb[0].mxu0
        %v2811 = vadd.f32 0.0, %v2810
        %v2812 = vpop.f32.mrb[0].mxu0
        %v2813 = vadd.f32 0.0, %v2812
        %v2814 = vpop.f32.mrb[0].mxu0
        %v2815 = vadd.f32 0.0, %v2814
        %v2816 = vpop.f32.mrb[0].mxu0
        %v2817 = vadd.f32 0.0, %v2816
        %2818 = vmatprep.mubr.bf16.mxu0 0
        %2819 = vmatmul.mubr.bf16.gmra.mrb[0].mxu0 %v799
        %v2820 = vpop.f32.mrb[0].mxu0
        %v2821 = vadd.f32 0.0, %v2820
        %v2822 = vpop.f32.mrb[0].mxu0
        %v2823 = vadd.f32 0.0, %v2822
        %v2824 = vpop.f32.mrb[0].mxu0
        %v2825 = vadd.f32 0.0, %v2824
        %v2826 = vpop.f32.mrb[0].mxu0
        %v2827 = vadd.f32 0.0, %v2826
        %2828 = vdwg.mxu0
        %2829 = vmatprep.subr.bf16.mxu0 %v992
        %2830 = vmatpush1.bf16.msra.mxu0 %v989
        %2831 = vmatprep.subr.bf16.mxu0 0
        %2832 = vmatpush1.bf16.msra.mxu0 0
        %2833 = vmatprep.subr.bf16.mxu0 0
        %2834 = vmatpush1.bf16.msra.mxu0 0
        %2835 = vmatprep.subr.bf16.mxu0 0
        %2836 = vmatpush1.bf16.msra.mxu0 0
        %2837 = vmatprep.subr.bf16.mxu0 0
        %2838 = vmatpush1.bf16.msra.mxu0 0
        %2839 = vmatprep.subr.bf16.mxu0 0
        %2840 = vmatpush1.bf16.msra.mxu0 0
        %2841 = vmatprep.subr.bf16.mxu0 0
        %2842 = vmatpush1.bf16.msra.mxu0 0
        %2843 = vmatprep.subr.bf16.mxu0 0
        %2844 = vmatpush1.bf16.msra.mxu0 0
        %2845 = vmatprep.subr.bf16.mxu0 0
        %2846 = vmatpush1.bf16.msra.mxu0 0
        %2847 = vmatprep.subr.bf16.mxu0 0
        %2848 = vmatpush1.bf16.msra.mxu0 0
        %2849 = vmatprep.subr.bf16.mxu0 0
        %2850 = vmatpush1.bf16.msra.mxu0 0
        %2851 = vmatprep.subr.bf16.mxu0 0
        %2852 = vmatpush1.bf16.msra.mxu0 0
        %2853 = vmatprep.subr.bf16.mxu0 0
        %2854 = vmatpush1.bf16.msra.mxu0 0
        %2855 = vmatprep.subr.bf16.mxu0 0
        %2856 = vmatpush1.bf16.msra.mxu0 0
        %2857 = vmatprep.subr.bf16.mxu0 0
        %2858 = vmatpush1.bf16.msra.mxu0 0
        %2859 = vmatprep.subr.bf16.mxu0 0
        %2860 = vmatpush1.bf16.msra.mxu0 0
        %2861 = vmatprep.mubr.bf16.mxu0 0
        %2862 = vmatmul.mubr.bf16.gmra.mrb[0].mxu0 %v796
        %v2863 = vpop.f32.mrb[0].mxu0
        %v2864 = vadd.f32 0.0, %v2863
        %v2865 = vpop.f32.mrb[0].mxu0
        %v2866 = vadd.f32 0.0, %v2865
        %v2867 = vpop.f32.mrb[0].mxu0
        %v2868 = vadd.f32 0.0, %v2867
        %v2869 = vpop.f32.mrb[0].mxu0
        %v2870 = vadd.f32 0.0, %v2869
        %2871 = vmatprep.mubr.bf16.mxu0 0
        %2872 = vmatmul.mubr.bf16.gmra.mrb[0].mxu0 %v799
        %v2873 = vpop.f32.mrb[0].mxu0
        %v2874 = vadd.f32 0.0, %v2873
        %v2875 = vpop.f32.mrb[0].mxu0
        %v2876 = vadd.f32 0.0, %v2875
        %v2877 = vpop.f32.mrb[0].mxu0
        %v2878 = vadd.f32 0.0, %v2877
        %v2879 = vpop.f32.mrb[0].mxu0
        %v2880 = vadd.f32 0.0, %v2879
        %2881 = vdwg.mxu0
        %2882 = vmatprep.subr.bf16.mxu0 %v998
        %2883 = vmatpush1.bf16.msra.mxu0 %v995
        %2884 = vmatprep.subr.bf16.mxu0 0
        %2885 = vmatpush1.bf16.msra.mxu0 0
        %2886 = vmatprep.subr.bf16.mxu0 0
        %2887 = vmatpush1.bf16.msra.mxu0 0
        %2888 = vmatprep.subr.bf16.mxu0 0
        %2889 = vmatpush1.bf16.msra.mxu0 0
        %2890 = vmatprep.subr.bf16.mxu0 0
        %2891 = vmatpush1.bf16.msra.mxu0 0
        %2892 = vmatprep.subr.bf16.mxu0 0
        %2893 = vmatpush1.bf16.msra.mxu0 0
        %2894 = vmatprep.subr.bf16.mxu0 0
        %2895 = vmatpush1.bf16.msra.mxu0 0
        %2896 = vmatprep.subr.bf16.mxu0 0
        %2897 = vmatpush1.bf16.msra.mxu0 0
        %2898 = vmatprep.subr.bf16.mxu0 0
        %2899 = vmatpush1.bf16.msra.mxu0 0
        %2900 = vmatprep.subr.bf16.mxu0 0
        %2901 = vmatpush1.bf16.msra.mxu0 0
        %2902 = vmatprep.subr.bf16.mxu0 0
        %2903 = vmatpush1.bf16.msra.mxu0 0
        %2904 = vmatprep.subr.bf16.mxu0 0
        %2905 = vmatpush1.bf16.msra.mxu0 0
        %2906 = vmatprep.subr.bf16.mxu0 0
        %2907 = vmatpush1.bf16.msra.mxu0 0
        %2908 = vmatprep.subr.bf16.mxu0 0
        %2909 = vmatpush1.bf16.msra.mxu0 0
        %2910 = vmatprep.subr.bf16.mxu0 0
        %2911 = vmatpush1.bf16.msra.mxu0 0
        %2912 = vmatprep.subr.bf16.mxu0 0
        %2913 = vmatpush1.bf16.msra.mxu0 0
        %2914 = vmatprep.mubr.bf16.mxu0 0
        %2915 = vmatmul.mubr.bf16.gmra.mrb[0].mxu0 %v796
        %v2916 = vpop.f32.mrb[0].mxu0
        %v2917 = vadd.f32 0.0, %v2916
        %v2918 = vpop.f32.mrb[0].mxu0
        %v2919 = vadd.f32 0.0, %v2918
        %v2920 = vpop.f32.mrb[0].mxu0
        %v2921 = vadd.f32 0.0, %v2920
        %v2922 = vpop.f32.mrb[0].mxu0
        %v2923 = vadd.f32 0.0, %v2922
        %2924 = vmatprep.mubr.bf16.mxu0 0
        %2925 = vmatmul.mubr.bf16.gmra.mrb[0].mxu0 %v799
        %v2926 = vpop.f32.mrb[0].mxu0
        %v2927 = vadd.f32 0.0, %v2926
        %v2928 = vpop.f32.mrb[0].mxu0
        %v2929 = vadd.f32 0.0, %v2928
        %v2930 = vpop.f32.mrb[0].mxu0
        %v2931 = vadd.f32 0.0, %v2930
        %v2932 = vpop.f32.mrb[0].mxu0
        %v2933 = vadd.f32 0.0, %v2932
        %2934 = vdwg.mxu0
        %2935 = vmatprep.subr.bf16.mxu0 %v1004
        %2936 = vmatpush1.bf16.msra.mxu0 %v1001
        %2937 = vmatprep.subr.bf16.mxu0 0
        %2938 = vmatpush1.bf16.msra.mxu0 0
        %2939 = vmatprep.subr.bf16.mxu0 0
        %2940 = vmatpush1.bf16.msra.mxu0 0
        %2941 = vmatprep.subr.bf16.mxu0 0
        %2942 = vmatpush1.bf16.msra.mxu0 0
        %2943 = vmatprep.subr.bf16.mxu0 0
        %2944 = vmatpush1.bf16.msra.mxu0 0
        %2945 = vmatprep.subr.bf16.mxu0 0
        %2946 = vmatpush1.bf16.msra.mxu0 0
        %2947 = vmatprep.subr.bf16.mxu0 0
        %2948 = vmatpush1.bf16.msra.mxu0 0
        %2949 = vmatprep.subr.bf16.mxu0 0
        %2950 = vmatpush1.bf16.msra.mxu0 0
        %2951 = vmatprep.subr.bf16.mxu0 0
        %2952 = vmatpush1.bf16.msra.mxu0 0
        %2953 = vmatprep.subr.bf16.mxu0 0
        %2954 = vmatpush1.bf16.msra.mxu0 0
        %2955 = vmatprep.subr.bf16.mxu0 0
        %2956 = vmatpush1.bf16.msra.mxu0 0
        %2957 = vmatprep.subr.bf16.mxu0 0
        %2958 = vmatpush1.bf16.msra.mxu0 0
        %2959 = vmatprep.subr.bf16.mxu0 0
        %2960 = vmatpush1.bf16.msra.mxu0 0
        %2961 = vmatprep.subr.bf16.mxu0 0
        %2962 = vmatpush1.bf16.msra.mxu0 0
        %2963 = vmatprep.subr.bf16.mxu0 0
        %2964 = vmatpush1.bf16.msra.mxu0 0
        %2965 = vmatprep.subr.bf16.mxu0 0
        %2966 = vmatpush1.bf16.msra.mxu0 0
        %2967 = vmatprep.mubr.bf16.mxu0 0
        %2968 = vmatmul.mubr.bf16.gmra.mrb[0].mxu0 %v796
        %v2969 = vpop.f32.mrb[0].mxu0
        %v2970 = vadd.f32 0.0, %v2969
        %v2971 = vpop.f32.mrb[0].mxu0
        %v2972 = vadd.f32 0.0, %v2971
        %v2973 = vpop.f32.mrb[0].mxu0
        %v2974 = vadd.f32 0.0, %v2973
        %v2975 = vpop.f32.mrb[0].mxu0
        %v2976 = vadd.f32 0.0, %v2975
        %2977 = vmatprep.mubr.bf16.mxu0 0
        %2978 = vmatmul.mubr.bf16.gmra.mrb[0].mxu0 %v799
        %v2979 = vpop.f32.mrb[0].mxu0
        %v2980 = vadd.f32 0.0, %v2979
        %v2981 = vpop.f32.mrb[0].mxu0
        %v2982 = vadd.f32 0.0, %v2981
        %v2983 = vpop.f32.mrb[0].mxu0
        %v2984 = vadd.f32 0.0, %v2983
        %v2985 = vpop.f32.mrb[0].mxu0
        %v2986 = vadd.f32 0.0, %v2985
        %2987 = vdwg.mxu0
        %2988 = vmatprep.subr.bf16.mxu0 %v1010
        %2989 = vmatpush1.bf16.msra.mxu0 %v1007
        %2990 = vmatprep.subr.bf16.mxu0 0
        %2991 = vmatpush1.bf16.msra.mxu0 0
        %2992 = vmatprep.subr.bf16.mxu0 0
        %2993 = vmatpush1.bf16.msra.mxu0 0
        %2994 = vmatprep.subr.bf16.mxu0 0
        %2995 = vmatpush1.bf16.msra.mxu0 0
        %2996 = vmatprep.subr.bf16.mxu0 0
        %2997 = vmatpush1.bf16.msra.mxu0 0
        %2998 = vmatprep.subr.bf16.mxu0 0
        %2999 = vmatpush1.bf16.msra.mxu0 0
        %3000 = vmatprep.subr.bf16.mxu0 0
        %3001 = vmatpush1.bf16.msra.mxu0 0
        %3002 = vmatprep.subr.bf16.mxu0 0
        %3003 = vmatpush1.bf16.msra.mxu0 0
        %3004 = vmatprep.subr.bf16.mxu0 0
        %3005 = vmatpush1.bf16.msra.mxu0 0
        %3006 = vmatprep.subr.bf16.mxu0 0
        %3007 = vmatpush1.bf16.msra.mxu0 0
        %3008 = vmatprep.subr.bf16.mxu0 0
        %3009 = vmatpush1.bf16.msra.mxu0 0
        %3010 = vmatprep.subr.bf16.mxu0 0
        %3011 = vmatpush1.bf16.msra.mxu0 0
        %3012 = vmatprep.subr.bf16.mxu0 0
        %3013 = vmatpush1.bf16.msra.mxu0 0
        %3014 = vmatprep.subr.bf16.mxu0 0
        %3015 = vmatpush1.bf16.msra.mxu0 0
        %3016 = vmatprep.subr.bf16.mxu0 0
        %3017 = vmatpush1.bf16.msra.mxu0 0
        %3018 = vmatprep.subr.bf16.mxu0 0
        %3019 = vmatpush1.bf16.msra.mxu0 0
        %3020 = vmatprep.mubr.bf16.mxu0 0
        %3021 = vmatmul.mubr.bf16.gmra.mrb[0].mxu0 %v796
        %v3022 = vpop.f32.mrb[0].mxu0
        %v3023 = vadd.f32 0.0, %v3022
        %v3024 = vpop.f32.mrb[0].mxu0
        %v3025 = vadd.f32 0.0, %v3024
        %v3026 = vpop.f32.mrb[0].mxu0
        %v3027 = vadd.f32 0.0, %v3026
        %v3028 = vpop.f32.mrb[0].mxu0
        %v3029 = vadd.f32 0.0, %v3028
        %3030 = vmatprep.mubr.bf16.mxu0 0
        %3031 = vmatmul.mubr.bf16.gmra.mrb[0].mxu0 %v799
        %v3032 = vpop.f32.mrb[0].mxu0
        %v3033 = vadd.f32 0.0, %v3032
        %v3034 = vpop.f32.mrb[0].mxu0
        %v3035 = vadd.f32 0.0, %v3034
        %v3036 = vpop.f32.mrb[0].mxu0
        %v3037 = vadd.f32 0.0, %v3036
        %v3038 = vpop.f32.mrb[0].mxu0
        %v3039 = vadd.f32 0.0, %v3038
        %3040 = vdwg.mxu0
        %3041 = vmatprep.subr.bf16.mxu0 %v1016
        %3042 = vmatpush1.bf16.msra.mxu0 %v1013
        %3043 = vmatprep.subr.bf16.mxu0 0
        %3044 = vmatpush1.bf16.msra.mxu0 0
        %3045 = vmatprep.subr.bf16.mxu0 0
        %3046 = vmatpush1.bf16.msra.mxu0 0
        %3047 = vmatprep.subr.bf16.mxu0 0
        %3048 = vmatpush1.bf16.msra.mxu0 0
        %3049 = vmatprep.subr.bf16.mxu0 0
        %3050 = vmatpush1.bf16.msra.mxu0 0
        %3051 = vmatprep.subr.bf16.mxu0 0
        %3052 = vmatpush1.bf16.msra.mxu0 0
        %3053 = vmatprep.subr.bf16.mxu0 0
        %3054 = vmatpush1.bf16.msra.mxu0 0
        %3055 = vmatprep.subr.bf16.mxu0 0
        %3056 = vmatpush1.bf16.msra.mxu0 0
        %3057 = vmatprep.subr.bf16.mxu0 0
        %3058 = vmatpush1.bf16.msra.mxu0 0
        %3059 = vmatprep.subr.bf16.mxu0 0
        %3060 = vmatpush1.bf16.msra.mxu0 0
        %3061 = vmatprep.subr.bf16.mxu0 0
        %3062 = vmatpush1.bf16.msra.mxu0 0
        %3063 = vmatprep.subr.bf16.mxu0 0
        %3064 = vmatpush1.bf16.msra.mxu0 0
        %3065 = vmatprep.subr.bf16.mxu0 0
        %3066 = vmatpush1.bf16.msra.mxu0 0
        %3067 = vmatprep.subr.bf16.mxu0 0
        %3068 = vmatpush1.bf16.msra.mxu0 0
        %3069 = vmatprep.subr.bf16.mxu0 0
        %3070 = vmatpush1.bf16.msra.mxu0 0
        %3071 = vmatprep.subr.bf16.mxu0 0
        %3072 = vmatpush1.bf16.msra.mxu0 0
        %3073 = vmatprep.mubr.bf16.mxu0 0
        %3074 = vmatmul.mubr.bf16.gmra.mrb[0].mxu0 %v796
        %v3075 = vpop.f32.mrb[0].mxu0
        %v3076 = vadd.f32 0.0, %v3075
        %v3077 = vpop.f32.mrb[0].mxu0
        %v3078 = vadd.f32 0.0, %v3077
        %v3079 = vpop.f32.mrb[0].mxu0
        %v3080 = vadd.f32 0.0, %v3079
        %v3081 = vpop.f32.mrb[0].mxu0
        %v3082 = vadd.f32 0.0, %v3081
        %3083 = vmatprep.mubr.bf16.mxu0 0
        %3084 = vmatmul.mubr.bf16.gmra.mrb[0].mxu0 %v799
        %v3085 = vpop.f32.mrb[0].mxu0
        %v3086 = vadd.f32 0.0, %v3085
        %v3087 = vpop.f32.mrb[0].mxu0
        %v3088 = vadd.f32 0.0, %v3087
        %v3089 = vpop.f32.mrb[0].mxu0
        %v3090 = vadd.f32 0.0, %v3089
        %v3091 = vpop.f32.mrb[0].mxu0
        %v3092 = vadd.f32 0.0, %v3091
        %3093 = vdwg.mxu0
        %3094 = vmatprep.subr.bf16.mxu0 %v1022
        %3095 = vmatpush1.bf16.msra.mxu0 %v1019
        %3096 = vmatprep.subr.bf16.mxu0 0
        %3097 = vmatpush1.bf16.msra.mxu0 0
        %3098 = vmatprep.subr.bf16.mxu0 0
        %3099 = vmatpush1.bf16.msra.mxu0 0
        %3100 = vmatprep.subr.bf16.mxu0 0
        %3101 = vmatpush1.bf16.msra.mxu0 0
        %3102 = vmatprep.subr.bf16.mxu0 0
        %3103 = vmatpush1.bf16.msra.mxu0 0
        %3104 = vmatprep.subr.bf16.mxu0 0
        %3105 = vmatpush1.bf16.msra.mxu0 0
        %3106 = vmatprep.subr.bf16.mxu0 0
        %3107 = vmatpush1.bf16.msra.mxu0 0
        %3108 = vmatprep.subr.bf16.mxu0 0
        %3109 = vmatpush1.bf16.msra.mxu0 0
        %3110 = vmatprep.subr.bf16.mxu0 0
        %3111 = vmatpush1.bf16.msra.mxu0 0
        %3112 = vmatprep.subr.bf16.mxu0 0
        %3113 = vmatpush1.bf16.msra.mxu0 0
        %3114 = vmatprep.subr.bf16.mxu0 0
        %3115 = vmatpush1.bf16.msra.mxu0 0
        %3116 = vmatprep.subr.bf16.mxu0 0
        %3117 = vmatpush1.bf16.msra.mxu0 0
        %3118 = vmatprep.subr.bf16.mxu0 0
        %3119 = vmatpush1.bf16.msra.mxu0 0
        %3120 = vmatprep.subr.bf16.mxu0 0
        %3121 = vmatpush1.bf16.msra.mxu0 0
        %3122 = vmatprep.subr.bf16.mxu0 0
        %3123 = vmatpush1.bf16.msra.mxu0 0
        %3124 = vmatprep.subr.bf16.mxu0 0
        %3125 = vmatpush1.bf16.msra.mxu0 0
        %3126 = vmatprep.mubr.bf16.mxu0 0
        %3127 = vmatmul.mubr.bf16.gmra.mrb[0].mxu0 %v796
        %v3128 = vpop.f32.mrb[0].mxu0
        %v3129 = vadd.f32 0.0, %v3128
        %v3130 = vpop.f32.mrb[0].mxu0
        %v3131 = vadd.f32 0.0, %v3130
        %v3132 = vpop.f32.mrb[0].mxu0
        %v3133 = vadd.f32 0.0, %v3132
        %v3134 = vpop.f32.mrb[0].mxu0
        %v3135 = vadd.f32 0.0, %v3134
        %3136 = vmatprep.mubr.bf16.mxu0 0
        %3137 = vmatmul.mubr.bf16.gmra.mrb[0].mxu0 %v799
        %v3138 = vpop.f32.mrb[0].mxu0
        %v3139 = vadd.f32 0.0, %v3138
        %v3140 = vpop.f32.mrb[0].mxu0
        %v3141 = vadd.f32 0.0, %v3140
        %v3142 = vpop.f32.mrb[0].mxu0
        %v3143 = vadd.f32 0.0, %v3142
        %v3144 = vpop.f32.mrb[0].mxu0
        %v3145 = vadd.f32 0.0, %v3144
        %3146 = vdwg.mxu0
        %3147 = vmatprep.subr.bf16.mxu0 %v1028
        %3148 = vmatpush1.bf16.msra.mxu0 %v1025
        %3149 = vmatprep.subr.bf16.mxu0 0
        %3150 = vmatpush1.bf16.msra.mxu0 0
        %3151 = vmatprep.subr.bf16.mxu0 0
        %3152 = vmatpush1.bf16.msra.mxu0 0
        %3153 = vmatprep.subr.bf16.mxu0 0
        %3154 = vmatpush1.bf16.msra.mxu0 0
        %3155 = vmatprep.subr.bf16.mxu0 0
        %3156 = vmatpush1.bf16.msra.mxu0 0
        %3157 = vmatprep.subr.bf16.mxu0 0
        %3158 = vmatpush1.bf16.msra.mxu0 0
        %3159 = vmatprep.subr.bf16.mxu0 0
        %3160 = vmatpush1.bf16.msra.mxu0 0
        %3161 = vmatprep.subr.bf16.mxu0 0
        %3162 = vmatpush1.bf16.msra.mxu0 0
        %3163 = vmatprep.subr.bf16.mxu0 0
        %3164 = vmatpush1.bf16.msra.mxu0 0
        %3165 = vmatprep.subr.bf16.mxu0 0
        %3166 = vmatpush1.bf16.msra.mxu0 0
        %3167 = vmatprep.subr.bf16.mxu0 0
        %3168 = vmatpush1.bf16.msra.mxu0 0
        %3169 = vmatprep.subr.bf16.mxu0 0
        %3170 = vmatpush1.bf16.msra.mxu0 0
        %3171 = vmatprep.subr.bf16.mxu0 0
        %3172 = vmatpush1.bf16.msra.mxu0 0
        %3173 = vmatprep.subr.bf16.mxu0 0
        %3174 = vmatpush1.bf16.msra.mxu0 0
        %3175 = vmatprep.subr.bf16.mxu0 0
        %3176 = vmatpush1.bf16.msra.mxu0 0
        %3177 = vmatprep.subr.bf16.mxu0 0
        %3178 = vmatpush1.bf16.msra.mxu0 0
        %3179 = vmatprep.mubr.bf16.mxu0 0
        %3180 = vmatmul.mubr.bf16.gmra.mrb[0].mxu0 %v796
        %v3181 = vpop.f32.mrb[0].mxu0
        %v3182 = vadd.f32 0.0, %v3181
        %v3183 = vpop.f32.mrb[0].mxu0
        %v3184 = vadd.f32 0.0, %v3183
        %v3185 = vpop.f32.mrb[0].mxu0
        %v3186 = vadd.f32 0.0, %v3185
        %v3187 = vpop.f32.mrb[0].mxu0
        %v3188 = vadd.f32 0.0, %v3187
        %3189 = vmatprep.mubr.bf16.mxu0 0
        %3190 = vmatmul.mubr.bf16.gmra.mrb[0].mxu0 %v799
        %v3191 = vpop.f32.mrb[0].mxu0
        %v3192 = vadd.f32 0.0, %v3191
        %v3193 = vpop.f32.mrb[0].mxu0
        %v3194 = vadd.f32 0.0, %v3193
        %v3195 = vpop.f32.mrb[0].mxu0
        %v3196 = vadd.f32 0.0, %v3195
        %v3197 = vpop.f32.mrb[0].mxu0
        %v3198 = vadd.f32 0.0, %v3197
        %3199 = vdwg.mxu0
        %3200 = vmatprep.subr.bf16.mxu0 %v1034
        %3201 = vmatpush1.bf16.msra.mxu0 %v1031
        %3202 = vmatprep.subr.bf16.mxu0 0
        %3203 = vmatpush1.bf16.msra.mxu0 0
        %3204 = vmatprep.subr.bf16.mxu0 0
        %3205 = vmatpush1.bf16.msra.mxu0 0
        %3206 = vmatprep.subr.bf16.mxu0 0
        %3207 = vmatpush1.bf16.msra.mxu0 0
        %3208 = vmatprep.subr.bf16.mxu0 0
        %3209 = vmatpush1.bf16.msra.mxu0 0
        %3210 = vmatprep.subr.bf16.mxu0 0
        %3211 = vmatpush1.bf16.msra.mxu0 0
        %3212 = vmatprep.subr.bf16.mxu0 0
        %3213 = vmatpush1.bf16.msra.mxu0 0
        %3214 = vmatprep.subr.bf16.mxu0 0
        %3215 = vmatpush1.bf16.msra.mxu0 0
        %3216 = vmatprep.subr.bf16.mxu0 0
        %3217 = vmatpush1.bf16.msra.mxu0 0
        %3218 = vmatprep.subr.bf16.mxu0 0
        %3219 = vmatpush1.bf16.msra.mxu0 0
        %3220 = vmatprep.subr.bf16.mxu0 0
        %3221 = vmatpush1.bf16.msra.mxu0 0
        %3222 = vmatprep.subr.bf16.mxu0 0
        %3223 = vmatpush1.bf16.msra.mxu0 0
        %3224 = vmatprep.subr.bf16.mxu0 0
        %3225 = vmatpush1.bf16.msra.mxu0 0
        %3226 = vmatprep.subr.bf16.mxu0 0
        %3227 = vmatpush1.bf16.msra.mxu0 0
        %3228 = vmatprep.subr.bf16.mxu0 0
        %3229 = vmatpush1.bf16.msra.mxu0 0
        %3230 = vmatprep.subr.bf16.mxu0 0
        %3231 = vmatpush1.bf16.msra.mxu0 0
        %3232 = vmatprep.mubr.bf16.mxu0 0
        %3233 = vmatmul.mubr.bf16.gmra.mrb[0].mxu0 %v796
        %v3234 = vpop.f32.mrb[0].mxu0
        %v3235 = vadd.f32 0.0, %v3234
        %v3236 = vpop.f32.mrb[0].mxu0
        %v3237 = vadd.f32 0.0, %v3236
        %v3238 = vpop.f32.mrb[0].mxu0
        %v3239 = vadd.f32 0.0, %v3238
        %v3240 = vpop.f32.mrb[0].mxu0
        %v3241 = vadd.f32 0.0, %v3240
        %3242 = vmatprep.mubr.bf16.mxu0 0
        %3243 = vmatmul.mubr.bf16.gmra.mrb[0].mxu0 %v799
        %v3244 = vpop.f32.mrb[0].mxu0
        %v3245 = vadd.f32 0.0, %v3244
        %v3246 = vpop.f32.mrb[0].mxu0
        %v3247 = vadd.f32 0.0, %v3246
        %v3248 = vpop.f32.mrb[0].mxu0
        %v3249 = vadd.f32 0.0, %v3248
        %v3250 = vpop.f32.mrb[0].mxu0
        %v3251 = vadd.f32 0.0, %v3250
        %3252 = vdwg.mxu0
        %3253 = vmatprep.subr.bf16.mxu0 %v1040
        %3254 = vmatpush1.bf16.msra.mxu0 %v1037
        %3255 = vmatprep.subr.bf16.mxu0 0
        %3256 = vmatpush1.bf16.msra.mxu0 0
        %3257 = vmatprep.subr.bf16.mxu0 0
        %3258 = vmatpush1.bf16.msra.mxu0 0
        %3259 = vmatprep.subr.bf16.mxu0 0
        %3260 = vmatpush1.bf16.msra.mxu0 0
        %3261 = vmatprep.subr.bf16.mxu0 0
        %3262 = vmatpush1.bf16.msra.mxu0 0
        %3263 = vmatprep.subr.bf16.mxu0 0
        %3264 = vmatpush1.bf16.msra.mxu0 0
        %3265 = vmatprep.subr.bf16.mxu0 0
        %3266 = vmatpush1.bf16.msra.mxu0 0
        %3267 = vmatprep.subr.bf16.mxu0 0
        %3268 = vmatpush1.bf16.msra.mxu0 0
        %3269 = vmatprep.subr.bf16.mxu0 0
        %3270 = vmatpush1.bf16.msra.mxu0 0
        %3271 = vmatprep.subr.bf16.mxu0 0
        %3272 = vmatpush1.bf16.msra.mxu0 0
        %3273 = vmatprep.subr.bf16.mxu0 0
        %3274 = vmatpush1.bf16.msra.mxu0 0
        %3275 = vmatprep.subr.bf16.mxu0 0
        %3276 = vmatpush1.bf16.msra.mxu0 0
        %3277 = vmatprep.subr.bf16.mxu0 0
        %3278 = vmatpush1.bf16.msra.mxu0 0
        %3279 = vmatprep.subr.bf16.mxu0 0
        %3280 = vmatpush1.bf16.msra.mxu0 0
        %3281 = vmatprep.subr.bf16.mxu0 0
        %3282 = vmatpush1.bf16.msra.mxu0 0
        %3283 = vmatprep.subr.bf16.mxu0 0
        %3284 = vmatpush1.bf16.msra.mxu0 0
        %3285 = vmatprep.mubr.bf16.mxu0 0
        %3286 = vmatmul.mubr.bf16.gmra.mrb[0].mxu0 %v796
        %v3287 = vpop.f32.mrb[0].mxu0
        %v3288 = vadd.f32 0.0, %v3287
        %v3289 = vpop.f32.mrb[0].mxu0
        %v3290 = vadd.f32 0.0, %v3289
        %v3291 = vpop.f32.mrb[0].mxu0
        %v3292 = vadd.f32 0.0, %v3291
        %v3293 = vpop.f32.mrb[0].mxu0
        %v3294 = vadd.f32 0.0, %v3293
        %3295 = vmatprep.mubr.bf16.mxu0 0
        %3296 = vmatmul.mubr.bf16.gmra.mrb[0].mxu0 %v799
        %v3297 = vpop.f32.mrb[0].mxu0
        %v3298 = vadd.f32 0.0, %v3297
        %v3299 = vpop.f32.mrb[0].mxu0
        %v3300 = vadd.f32 0.0, %v3299
        %v3301 = vpop.f32.mrb[0].mxu0
        %v3302 = vadd.f32 0.0, %v3301
        %v3303 = vpop.f32.mrb[0].mxu0
        %v3304 = vadd.f32 0.0, %v3303
        %3305 = vdwg.mxu0
        %3306 = vmatprep.subr.bf16.mxu0 %v1046
        %3307 = vmatpush1.bf16.msra.mxu0 %v1043
        %3308 = vmatprep.subr.bf16.mxu0 0
        %3309 = vmatpush1.bf16.msra.mxu0 0
        %3310 = vmatprep.subr.bf16.mxu0 0
        %3311 = vmatpush1.bf16.msra.mxu0 0
        %3312 = vmatprep.subr.bf16.mxu0 0
        %3313 = vmatpush1.bf16.msra.mxu0 0
        %3314 = vmatprep.subr.bf16.mxu0 0
        %3315 = vmatpush1.bf16.msra.mxu0 0
        %3316 = vmatprep.subr.bf16.mxu0 0
        %3317 = vmatpush1.bf16.msra.mxu0 0
        %3318 = vmatprep.subr.bf16.mxu0 0
        %3319 = vmatpush1.bf16.msra.mxu0 0
        %3320 = vmatprep.subr.bf16.mxu0 0
        %3321 = vmatpush1.bf16.msra.mxu0 0
        %3322 = vmatprep.subr.bf16.mxu0 0
        %3323 = vmatpush1.bf16.msra.mxu0 0
        %3324 = vmatprep.subr.bf16.mxu0 0
        %3325 = vmatpush1.bf16.msra.mxu0 0
        %3326 = vmatprep.subr.bf16.mxu0 0
        %3327 = vmatpush1.bf16.msra.mxu0 0
        %3328 = vmatprep.subr.bf16.mxu0 0
        %3329 = vmatpush1.bf16.msra.mxu0 0
        %3330 = vmatprep.subr.bf16.mxu0 0
        %3331 = vmatpush1.bf16.msra.mxu0 0
        %3332 = vmatprep.subr.bf16.mxu0 0
        %3333 = vmatpush1.bf16.msra.mxu0 0
        %3334 = vmatprep.subr.bf16.mxu0 0
        %3335 = vmatpush1.bf16.msra.mxu0 0
        %3336 = vmatprep.subr.bf16.mxu0 0
        %3337 = vmatpush1.bf16.msra.mxu0 0
        %3338 = vmatprep.mubr.bf16.mxu0 0
        %3339 = vmatmul.mubr.bf16.gmra.mrb[0].mxu0 %v796
        %v3340 = vpop.f32.mrb[0].mxu0
        %v3341 = vadd.f32 0.0, %v3340
        %v3342 = vpop.f32.mrb[0].mxu0
        %v3343 = vadd.f32 0.0, %v3342
        %v3344 = vpop.f32.mrb[0].mxu0
        %v3345 = vadd.f32 0.0, %v3344
        %v3346 = vpop.f32.mrb[0].mxu0
        %v3347 = vadd.f32 0.0, %v3346
        %3348 = vmatprep.mubr.bf16.mxu0 0
        %3349 = vmatmul.mubr.bf16.gmra.mrb[0].mxu0 %v799
        %v3350 = vpop.f32.mrb[0].mxu0
        %v3351 = vadd.f32 0.0, %v3350
        %v3352 = vpop.f32.mrb[0].mxu0
        %v3353 = vadd.f32 0.0, %v3352
        %v3354 = vpop.f32.mrb[0].mxu0
        %v3355 = vadd.f32 0.0, %v3354
        %v3356 = vpop.f32.mrb[0].mxu0
        %v3357 = vadd.f32 0.0, %v3356
        %3358 = vdwg.mxu0
        %3359 = vmatprep.subr.bf16.mxu0 %v1052
        %3360 = vmatpush1.bf16.msra.mxu0 %v1049
        %3361 = vmatprep.subr.bf16.mxu0 0
        %3362 = vmatpush1.bf16.msra.mxu0 0
        %3363 = vmatprep.subr.bf16.mxu0 0
        %3364 = vmatpush1.bf16.msra.mxu0 0
        %3365 = vmatprep.subr.bf16.mxu0 0
        %3366 = vmatpush1.bf16.msra.mxu0 0
        %3367 = vmatprep.subr.bf16.mxu0 0
        %3368 = vmatpush1.bf16.msra.mxu0 0
        %3369 = vmatprep.subr.bf16.mxu0 0
        %3370 = vmatpush1.bf16.msra.mxu0 0
        %3371 = vmatprep.subr.bf16.mxu0 0
        %3372 = vmatpush1.bf16.msra.mxu0 0
        %3373 = vmatprep.subr.bf16.mxu0 0
        %3374 = vmatpush1.bf16.msra.mxu0 0
        %3375 = vmatprep.subr.bf16.mxu0 0
        %3376 = vmatpush1.bf16.msra.mxu0 0
        %3377 = vmatprep.subr.bf16.mxu0 0
        %3378 = vmatpush1.bf16.msra.mxu0 0
        %3379 = vmatprep.subr.bf16.mxu0 0
        %3380 = vmatpush1.bf16.msra.mxu0 0
        %3381 = vmatprep.subr.bf16.mxu0 0
        %3382 = vmatpush1.bf16.msra.mxu0 0
        %3383 = vmatprep.subr.bf16.mxu0 0
        %3384 = vmatpush1.bf16.msra.mxu0 0
        %3385 = vmatprep.subr.bf16.mxu0 0
        %3386 = vmatpush1.bf16.msra.mxu0 0
        %3387 = vmatprep.subr.bf16.mxu0 0
        %3388 = vmatpush1.bf16.msra.mxu0 0
        %3389 = vmatprep.subr.bf16.mxu0 0
        %3390 = vmatpush1.bf16.msra.mxu0 0
        %3391 = vmatprep.mubr.bf16.mxu0 0
        %3392 = vmatmul.mubr.bf16.gmra.mrb[0].mxu0 %v796
        %v3393 = vpop.f32.mrb[0].mxu0
        %v3394 = vadd.f32 0.0, %v3393
        %v3395 = vpop.f32.mrb[0].mxu0
        %v3396 = vadd.f32 0.0, %v3395
        %v3397 = vpop.f32.mrb[0].mxu0
        %v3398 = vadd.f32 0.0, %v3397
        %v3399 = vpop.f32.mrb[0].mxu0
        %v3400 = vadd.f32 0.0, %v3399
        %3401 = vmatprep.mubr.bf16.mxu0 0
        %3402 = vmatmul.mubr.bf16.gmra.mrb[0].mxu0 %v799
        %v3403 = vpop.f32.mrb[0].mxu0
        %v3404 = vadd.f32 0.0, %v3403
        %v3405 = vpop.f32.mrb[0].mxu0
        %v3406 = vadd.f32 0.0, %v3405
        %v3407 = vpop.f32.mrb[0].mxu0
        %v3408 = vadd.f32 0.0, %v3407
        %v3409 = vpop.f32.mrb[0].mxu0
        %v3410 = vadd.f32 0.0, %v3409
        %3411 = vdwg.mxu0
        %3412 = vmatprep.subr.bf16.mxu0 %v1058
        %3413 = vmatpush1.bf16.msra.mxu0 %v1055
        %3414 = vmatprep.subr.bf16.mxu0 0
        %3415 = vmatpush1.bf16.msra.mxu0 0
        %3416 = vmatprep.subr.bf16.mxu0 0
        %3417 = vmatpush1.bf16.msra.mxu0 0
        %3418 = vmatprep.subr.bf16.mxu0 0
        %3419 = vmatpush1.bf16.msra.mxu0 0
        %3420 = vmatprep.subr.bf16.mxu0 0
        %3421 = vmatpush1.bf16.msra.mxu0 0
        %3422 = vmatprep.subr.bf16.mxu0 0
        %3423 = vmatpush1.bf16.msra.mxu0 0
        %3424 = vmatprep.subr.bf16.mxu0 0
        %3425 = vmatpush1.bf16.msra.mxu0 0
        %3426 = vmatprep.subr.bf16.mxu0 0
        %3427 = vmatpush1.bf16.msra.mxu0 0
        %3428 = vmatprep.subr.bf16.mxu0 0
        %3429 = vmatpush1.bf16.msra.mxu0 0
        %3430 = vmatprep.subr.bf16.mxu0 0
        %3431 = vmatpush1.bf16.msra.mxu0 0
        %3432 = vmatprep.subr.bf16.mxu0 0
        %3433 = vmatpush1.bf16.msra.mxu0 0
        %3434 = vmatprep.subr.bf16.mxu0 0
        %3435 = vmatpush1.bf16.msra.mxu0 0
        %3436 = vmatprep.subr.bf16.mxu0 0
        %3437 = vmatpush1.bf16.msra.mxu0 0
        %3438 = vmatprep.subr.bf16.mxu0 0
        %3439 = vmatpush1.bf16.msra.mxu0 0
        %3440 = vmatprep.subr.bf16.mxu0 0
        %3441 = vmatpush1.bf16.msra.mxu0 0
        %3442 = vmatprep.subr.bf16.mxu0 0
        %3443 = vmatpush1.bf16.msra.mxu0 0
        %3444 = vmatprep.mubr.bf16.mxu0 0
        %3445 = vmatmul.mubr.bf16.gmra.mrb[0].mxu0 %v796
        %v3446 = vpop.f32.mrb[0].mxu0
        %v3447 = vadd.f32 0.0, %v3446
        %v3448 = vpop.f32.mrb[0].mxu0
        %v3449 = vadd.f32 0.0, %v3448
        %v3450 = vpop.f32.mrb[0].mxu0
        %v3451 = vadd.f32 0.0, %v3450
        %v3452 = vpop.f32.mrb[0].mxu0
        %v3453 = vadd.f32 0.0, %v3452
        %3454 = vmatprep.mubr.bf16.mxu0 0
        %3455 = vmatmul.mubr.bf16.gmra.mrb[0].mxu0 %v799
        %v3456 = vpop.f32.mrb[0].mxu0
        %v3457 = vadd.f32 0.0, %v3456
        %v3458 = vpop.f32.mrb[0].mxu0
        %v3459 = vadd.f32 0.0, %v3458
        %v3460 = vpop.f32.mrb[0].mxu0
        %v3461 = vadd.f32 0.0, %v3460
        %v3462 = vpop.f32.mrb[0].mxu0
        %v3463 = vadd.f32 0.0, %v3462
        %3464 = vdwg.mxu0
        %3465 = vmatprep.subr.bf16.mxu0 %v1064
        %3466 = vmatpush1.bf16.msra.mxu0 %v1061
        %3467 = vmatprep.subr.bf16.mxu0 0
        %3468 = vmatpush1.bf16.msra.mxu0 0
        %3469 = vmatprep.subr.bf16.mxu0 0
        %3470 = vmatpush1.bf16.msra.mxu0 0
        %3471 = vmatprep.subr.bf16.mxu0 0
        %3472 = vmatpush1.bf16.msra.mxu0 0
        %3473 = vmatprep.subr.bf16.mxu0 0
        %3474 = vmatpush1.bf16.msra.mxu0 0
        %3475 = vmatprep.subr.bf16.mxu0 0
        %3476 = vmatpush1.bf16.msra.mxu0 0
        %3477 = vmatprep.subr.bf16.mxu0 0
        %3478 = vmatpush1.bf16.msra.mxu0 0
        %3479 = vmatprep.subr.bf16.mxu0 0
        %3480 = vmatpush1.bf16.msra.mxu0 0
        %3481 = vmatprep.subr.bf16.mxu0 0
        %3482 = vmatpush1.bf16.msra.mxu0 0
        %3483 = vmatprep.subr.bf16.mxu0 0
        %3484 = vmatpush1.bf16.msra.mxu0 0
        %3485 = vmatprep.subr.bf16.mxu0 0
        %3486 = vmatpush1.bf16.msra.mxu0 0
        %3487 = vmatprep.subr.bf16.mxu0 0
        %3488 = vmatpush1.bf16.msra.mxu0 0
        %3489 = vmatprep.subr.bf16.mxu0 0
        %3490 = vmatpush1.bf16.msra.mxu0 0
        %3491 = vmatprep.subr.bf16.mxu0 0
        %3492 = vmatpush1.bf16.msra.mxu0 0
        %3493 = vmatprep.subr.bf16.mxu0 0
        %3494 = vmatpush1.bf16.msra.mxu0 0
        %3495 = vmatprep.subr.bf16.mxu0 0
        %3496 = vmatpush1.bf16.msra.mxu0 0
        %3497 = vmatprep.mubr.bf16.mxu0 0
        %3498 = vmatmul.mubr.bf16.gmra.mrb[0].mxu0 %v796
        %v3499 = vpop.f32.mrb[0].mxu0
        %v3500 = vadd.f32 0.0, %v3499
        %v3501 = vpop.f32.mrb[0].mxu0
        %v3502 = vadd.f32 0.0, %v3501
        %v3503 = vpop.f32.mrb[0].mxu0
        %v3504 = vadd.f32 0.0, %v3503
        %v3505 = vpop.f32.mrb[0].mxu0
        %v3506 = vadd.f32 0.0, %v3505
        %3507 = vmatprep.mubr.bf16.mxu0 0
        %3508 = vmatmul.mubr.bf16.gmra.mrb[0].mxu0 %v799
        %v3509 = vpop.f32.mrb[0].mxu0
        %v3510 = vadd.f32 0.0, %v3509
        %v3511 = vpop.f32.mrb[0].mxu0
        %v3512 = vadd.f32 0.0, %v3511
        %v3513 = vpop.f32.mrb[0].mxu0
        %v3514 = vadd.f32 0.0, %v3513
        %v3515 = vpop.f32.mrb[0].mxu0
        %v3516 = vadd.f32 0.0, %v3515
        %3517 = vdwg.mxu0
        %3518 = vmatprep.subr.bf16.mxu0 %v1070
        %3519 = vmatpush1.bf16.msra.mxu0 %v1067
        %3520 = vmatprep.subr.bf16.mxu0 0
        %3521 = vmatpush1.bf16.msra.mxu0 0
        %3522 = vmatprep.subr.bf16.mxu0 0
        %3523 = vmatpush1.bf16.msra.mxu0 0
        %3524 = vmatprep.subr.bf16.mxu0 0
        %3525 = vmatpush1.bf16.msra.mxu0 0
        %3526 = vmatprep.subr.bf16.mxu0 0
        %3527 = vmatpush1.bf16.msra.mxu0 0
        %3528 = vmatprep.subr.bf16.mxu0 0
        %3529 = vmatpush1.bf16.msra.mxu0 0
        %3530 = vmatprep.subr.bf16.mxu0 0
        %3531 = vmatpush1.bf16.msra.mxu0 0
        %3532 = vmatprep.subr.bf16.mxu0 0
        %3533 = vmatpush1.bf16.msra.mxu0 0
        %3534 = vmatprep.subr.bf16.mxu0 0
        %3535 = vmatpush1.bf16.msra.mxu0 0
        %3536 = vmatprep.subr.bf16.mxu0 0
        %3537 = vmatpush1.bf16.msra.mxu0 0
        %3538 = vmatprep.subr.bf16.mxu0 0
        %3539 = vmatpush1.bf16.msra.mxu0 0
        %3540 = vmatprep.subr.bf16.mxu0 0
        %3541 = vmatpush1.bf16.msra.mxu0 0
        %3542 = vmatprep.subr.bf16.mxu0 0
        %3543 = vmatpush1.bf16.msra.mxu0 0
        %3544 = vmatprep.subr.bf16.mxu0 0
        %3545 = vmatpush1.bf16.msra.mxu0 0
        %3546 = vmatprep.subr.bf16.mxu0 0
        %3547 = vmatpush1.bf16.msra.mxu0 0
        %3548 = vmatprep.subr.bf16.mxu0 0
        %3549 = vmatpush1.bf16.msra.mxu0 0
        %3550 = vmatprep.mubr.bf16.mxu0 0
        %3551 = vmatmul.mubr.bf16.gmra.mrb[0].mxu0 %v796
        %v3552 = vpop.f32.mrb[0].mxu0
        %v3553 = vadd.f32 0.0, %v3552
        %v3554 = vpop.f32.mrb[0].mxu0
        %v3555 = vadd.f32 0.0, %v3554
        %v3556 = vpop.f32.mrb[0].mxu0
        %v3557 = vadd.f32 0.0, %v3556
        %v3558 = vpop.f32.mrb[0].mxu0
        %v3559 = vadd.f32 0.0, %v3558
        %3560 = vmatprep.mubr.bf16.mxu0 0
        %3561 = vmatmul.mubr.bf16.gmra.mrb[0].mxu0 %v799
        %v3562 = vpop.f32.mrb[0].mxu0
        %v3563 = vadd.f32 0.0, %v3562
        %v3564 = vpop.f32.mrb[0].mxu0
        %v3565 = vadd.f32 0.0, %v3564
        %v3566 = vpop.f32.mrb[0].mxu0
        %v3567 = vadd.f32 0.0, %v3566
        %v3568 = vpop.f32.mrb[0].mxu0
        %v3569 = vadd.f32 0.0, %v3568
        %3570 = vdwg.mxu0
        %3571 = vmatprep.subr.bf16.mxu0 %v1076
        %3572 = vmatpush1.bf16.msra.mxu0 %v1073
        %3573 = vmatprep.subr.bf16.mxu0 0
        %3574 = vmatpush1.bf16.msra.mxu0 0
        %3575 = vmatprep.subr.bf16.mxu0 0
        %3576 = vmatpush1.bf16.msra.mxu0 0
        %3577 = vmatprep.subr.bf16.mxu0 0
        %3578 = vmatpush1.bf16.msra.mxu0 0
        %3579 = vmatprep.subr.bf16.mxu0 0
        %3580 = vmatpush1.bf16.msra.mxu0 0
        %3581 = vmatprep.subr.bf16.mxu0 0
        %3582 = vmatpush1.bf16.msra.mxu0 0
        %3583 = vmatprep.subr.bf16.mxu0 0
        %3584 = vmatpush1.bf16.msra.mxu0 0
        %3585 = vmatprep.subr.bf16.mxu0 0
        %3586 = vmatpush1.bf16.msra.mxu0 0
        %3587 = vmatprep.subr.bf16.mxu0 0
        %3588 = vmatpush1.bf16.msra.mxu0 0
        %3589 = vmatprep.subr.bf16.mxu0 0
        %3590 = vmatpush1.bf16.msra.mxu0 0
        %3591 = vmatprep.subr.bf16.mxu0 0
        %3592 = vmatpush1.bf16.msra.mxu0 0
        %3593 = vmatprep.subr.bf16.mxu0 0
        %3594 = vmatpush1.bf16.msra.mxu0 0
        %3595 = vmatprep.subr.bf16.mxu0 0
        %3596 = vmatpush1.bf16.msra.mxu0 0
        %3597 = vmatprep.subr.bf16.mxu0 0
        %3598 = vmatpush1.bf16.msra.mxu0 0
        %3599 = vmatprep.subr.bf16.mxu0 0
        %3600 = vmatpush1.bf16.msra.mxu0 0
        %3601 = vmatprep.subr.bf16.mxu0 0
        %3602 = vmatpush1.bf16.msra.mxu0 0
        %3603 = vmatprep.mubr.bf16.mxu0 0
        %3604 = vmatmul.mubr.bf16.gmra.mrb[0].mxu0 %v796
        %v3605 = vpop.f32.mrb[0].mxu0
        %v3606 = vadd.f32 0.0, %v3605
        %v3607 = vpop.f32.mrb[0].mxu0
        %v3608 = vadd.f32 0.0, %v3607
        %v3609 = vpop.f32.mrb[0].mxu0
        %v3610 = vadd.f32 0.0, %v3609
        %v3611 = vpop.f32.mrb[0].mxu0
        %v3612 = vadd.f32 0.0, %v3611
        %3613 = vmatprep.mubr.bf16.mxu0 0
        %3614 = vmatmul.mubr.bf16.gmra.mrb[0].mxu0 %v799
        %v3615 = vpop.f32.mrb[0].mxu0
        %v3616 = vadd.f32 0.0, %v3615
        %v3617 = vpop.f32.mrb[0].mxu0
        %v3618 = vadd.f32 0.0, %v3617
        %v3619 = vpop.f32.mrb[0].mxu0
        %v3620 = vadd.f32 0.0, %v3619
        %v3621 = vpop.f32.mrb[0].mxu0
        %v3622 = vadd.f32 0.0, %v3621
        %3623 = vdwg.mxu0
        %3624 = vmatprep.subr.bf16.mxu0 %v1082
        %3625 = vmatpush1.bf16.msra.mxu0 %v1079
        %3626 = vmatprep.subr.bf16.mxu0 0
        %3627 = vmatpush1.bf16.msra.mxu0 0
        %3628 = vmatprep.subr.bf16.mxu0 0
        %3629 = vmatpush1.bf16.msra.mxu0 0
        %3630 = vmatprep.subr.bf16.mxu0 0
        %3631 = vmatpush1.bf16.msra.mxu0 0
        %3632 = vmatprep.subr.bf16.mxu0 0
        %3633 = vmatpush1.bf16.msra.mxu0 0
        %3634 = vmatprep.subr.bf16.mxu0 0
        %3635 = vmatpush1.bf16.msra.mxu0 0
        %3636 = vmatprep.subr.bf16.mxu0 0
        %3637 = vmatpush1.bf16.msra.mxu0 0
        %3638 = vmatprep.subr.bf16.mxu0 0
        %3639 = vmatpush1.bf16.msra.mxu0 0
        %3640 = vmatprep.subr.bf16.mxu0 0
        %3641 = vmatpush1.bf16.msra.mxu0 0
        %3642 = vmatprep.subr.bf16.mxu0 0
        %3643 = vmatpush1.bf16.msra.mxu0 0
        %3644 = vmatprep.subr.bf16.mxu0 0
        %3645 = vmatpush1.bf16.msra.mxu0 0
        %3646 = vmatprep.subr.bf16.mxu0 0
        %3647 = vmatpush1.bf16.msra.mxu0 0
        %3648 = vmatprep.subr.bf16.mxu0 0
        %3649 = vmatpush1.bf16.msra.mxu0 0
        %3650 = vmatprep.subr.bf16.mxu0 0
        %3651 = vmatpush1.bf16.msra.mxu0 0
        %3652 = vmatprep.subr.bf16.mxu0 0
        %3653 = vmatpush1.bf16.msra.mxu0 0
        %3654 = vmatprep.subr.bf16.mxu0 0
        %3655 = vmatpush1.bf16.msra.mxu0 0
        %3656 = vmatprep.mubr.bf16.mxu0 0
        %3657 = vmatmul.mubr.bf16.gmra.mrb[0].mxu0 %v796
        %v3658 = vpop.f32.mrb[0].mxu0
        %v3659 = vadd.f32 0.0, %v3658
        %v3660 = vpop.f32.mrb[0].mxu0
        %v3661 = vadd.f32 0.0, %v3660
        %v3662 = vpop.f32.mrb[0].mxu0
        %v3663 = vadd.f32 0.0, %v3662
        %v3664 = vpop.f32.mrb[0].mxu0
        %v3665 = vadd.f32 0.0, %v3664
        %3666 = vmatprep.mubr.bf16.mxu0 0
        %3667 = vmatmul.mubr.bf16.gmra.mrb[0].mxu0 %v799
        %v3668 = vpop.f32.mrb[0].mxu0
        %v3669 = vadd.f32 0.0, %v3668
        %v3670 = vpop.f32.mrb[0].mxu0
        %v3671 = vadd.f32 0.0, %v3670
        %v3672 = vpop.f32.mrb[0].mxu0
        %v3673 = vadd.f32 0.0, %v3672
        %v3674 = vpop.f32.mrb[0].mxu0
        %v3675 = vadd.f32 0.0, %v3674
        %3676 = vdwg.mxu0
        %3677 = vmatprep.subr.bf16.mxu0 %v1088
        %3678 = vmatpush1.bf16.msra.mxu0 %v1085
        %3679 = vmatprep.subr.bf16.mxu0 0
        %3680 = vmatpush1.bf16.msra.mxu0 0
        %3681 = vmatprep.subr.bf16.mxu0 0
        %3682 = vmatpush1.bf16.msra.mxu0 0
        %3683 = vmatprep.subr.bf16.mxu0 0
        %3684 = vmatpush1.bf16.msra.mxu0 0
        %3685 = vmatprep.subr.bf16.mxu0 0
        %3686 = vmatpush1.bf16.msra.mxu0 0
        %3687 = vmatprep.subr.bf16.mxu0 0
        %3688 = vmatpush1.bf16.msra.mxu0 0
        %3689 = vmatprep.subr.bf16.mxu0 0
        %3690 = vmatpush1.bf16.msra.mxu0 0
        %3691 = vmatprep.subr.bf16.mxu0 0
        %3692 = vmatpush1.bf16.msra.mxu0 0
        %3693 = vmatprep.subr.bf16.mxu0 0
        %3694 = vmatpush1.bf16.msra.mxu0 0
        %3695 = vmatprep.subr.bf16.mxu0 0
        %3696 = vmatpush1.bf16.msra.mxu0 0
        %3697 = vmatprep.subr.bf16.mxu0 0
        %3698 = vmatpush1.bf16.msra.mxu0 0
        %3699 = vmatprep.subr.bf16.mxu0 0
        %3700 = vmatpush1.bf16.msra.mxu0 0
        %3701 = vmatprep.subr.bf16.mxu0 0
        %3702 = vmatpush1.bf16.msra.mxu0 0
        %3703 = vmatprep.subr.bf16.mxu0 0
        %3704 = vmatpush1.bf16.msra.mxu0 0
        %3705 = vmatprep.subr.bf16.mxu0 0
        %3706 = vmatpush1.bf16.msra.mxu0 0
        %3707 = vmatprep.subr.bf16.mxu0 0
        %3708 = vmatpush1.bf16.msra.mxu0 0
        %3709 = vmatprep.mubr.bf16.mxu0 0
        %3710 = vmatmul.mubr.bf16.gmra.mrb[0].mxu0 %v796
        %v3711 = vpop.f32.mrb[0].mxu0
        %v3712 = vadd.f32 0.0, %v3711
        %v3713 = vpop.f32.mrb[0].mxu0
        %v3714 = vadd.f32 0.0, %v3713
        %v3715 = vpop.f32.mrb[0].mxu0
        %v3716 = vadd.f32 0.0, %v3715
        %v3717 = vpop.f32.mrb[0].mxu0
        %v3718 = vadd.f32 0.0, %v3717
        %3719 = vmatprep.mubr.bf16.mxu0 0
        %3720 = vmatmul.mubr.bf16.gmra.mrb[0].mxu0 %v799
        %v3721 = vpop.f32.mrb[0].mxu0
        %v3722 = vadd.f32 0.0, %v3721
        %v3723 = vpop.f32.mrb[0].mxu0
        %v3724 = vadd.f32 0.0, %v3723
        %v3725 = vpop.f32.mrb[0].mxu0
        %v3726 = vadd.f32 0.0, %v3725
        %v3727 = vpop.f32.mrb[0].mxu0
        %v3728 = vadd.f32 0.0, %v3727
        %3729 = vdwg.mxu0
        %3730 = vmatprep.subr.bf16.mxu0 %v1094
        %3731 = vmatpush1.bf16.msra.mxu0 %v1091
        %3732 = vmatprep.subr.bf16.mxu0 0
        %3733 = vmatpush1.bf16.msra.mxu0 0
        %3734 = vmatprep.subr.bf16.mxu0 0
        %3735 = vmatpush1.bf16.msra.mxu0 0
        %3736 = vmatprep.subr.bf16.mxu0 0
        %3737 = vmatpush1.bf16.msra.mxu0 0
        %3738 = vmatprep.subr.bf16.mxu0 0
        %3739 = vmatpush1.bf16.msra.mxu0 0
        %3740 = vmatprep.subr.bf16.mxu0 0
        %3741 = vmatpush1.bf16.msra.mxu0 0
        %3742 = vmatprep.subr.bf16.mxu0 0
        %3743 = vmatpush1.bf16.msra.mxu0 0
        %3744 = vmatprep.subr.bf16.mxu0 0
        %3745 = vmatpush1.bf16.msra.mxu0 0
        %3746 = vmatprep.subr.bf16.mxu0 0
        %3747 = vmatpush1.bf16.msra.mxu0 0
        %3748 = vmatprep.subr.bf16.mxu0 0
        %3749 = vmatpush1.bf16.msra.mxu0 0
        %3750 = vmatprep.subr.bf16.mxu0 0
        %3751 = vmatpush1.bf16.msra.mxu0 0
        %3752 = vmatprep.subr.bf16.mxu0 0
        %3753 = vmatpush1.bf16.msra.mxu0 0
        %3754 = vmatprep.subr.bf16.mxu0 0
        %3755 = vmatpush1.bf16.msra.mxu0 0
        %3756 = vmatprep.subr.bf16.mxu0 0
        %3757 = vmatpush1.bf16.msra.mxu0 0
        %3758 = vmatprep.subr.bf16.mxu0 0
        %3759 = vmatpush1.bf16.msra.mxu0 0
        %3760 = vmatprep.subr.bf16.mxu0 0
        %3761 = vmatpush1.bf16.msra.mxu0 0
        %3762 = vmatprep.mubr.bf16.mxu0 0
        %3763 = vmatmul.mubr.bf16.gmra.mrb[0].mxu0 %v796
        %v3764 = vpop.f32.mrb[0].mxu0
        %v3765 = vadd.f32 0.0, %v3764
        %v3766 = vpop.f32.mrb[0].mxu0
        %v3767 = vadd.f32 0.0, %v3766
        %v3768 = vpop.f32.mrb[0].mxu0
        %v3769 = vadd.f32 0.0, %v3768
        %v3770 = vpop.f32.mrb[0].mxu0
        %v3771 = vadd.f32 0.0, %v3770
        %3772 = vmatprep.mubr.bf16.mxu0 0
        %3773 = vmatmul.mubr.bf16.gmra.mrb[0].mxu0 %v799
        %v3774 = vpop.f32.mrb[0].mxu0
        %v3775 = vadd.f32 0.0, %v3774
        %v3776 = vpop.f32.mrb[0].mxu0
        %v3777 = vadd.f32 0.0, %v3776
        %v3778 = vpop.f32.mrb[0].mxu0
        %v3779 = vadd.f32 0.0, %v3778
        %v3780 = vpop.f32.mrb[0].mxu0
        %v3781 = vadd.f32 0.0, %v3780
        %3782 = vdwg.mxu0
        %3783 = vmatprep.subr.bf16.mxu0 %v1100
        %3784 = vmatpush1.bf16.msra.mxu0 %v1097
        %3785 = vmatprep.subr.bf16.mxu0 0
        %3786 = vmatpush1.bf16.msra.mxu0 0
        %3787 = vmatprep.subr.bf16.mxu0 0
        %3788 = vmatpush1.bf16.msra.mxu0 0
        %3789 = vmatprep.subr.bf16.mxu0 0
        %3790 = vmatpush1.bf16.msra.mxu0 0
        %3791 = vmatprep.subr.bf16.mxu0 0
        %3792 = vmatpush1.bf16.msra.mxu0 0
        %3793 = vmatprep.subr.bf16.mxu0 0
        %3794 = vmatpush1.bf16.msra.mxu0 0
        %3795 = vmatprep.subr.bf16.mxu0 0
        %3796 = vmatpush1.bf16.msra.mxu0 0
        %3797 = vmatprep.subr.bf16.mxu0 0
        %3798 = vmatpush1.bf16.msra.mxu0 0
        %3799 = vmatprep.subr.bf16.mxu0 0
        %3800 = vmatpush1.bf16.msra.mxu0 0
        %3801 = vmatprep.subr.bf16.mxu0 0
        %3802 = vmatpush1.bf16.msra.mxu0 0
        %3803 = vmatprep.subr.bf16.mxu0 0
        %3804 = vmatpush1.bf16.msra.mxu0 0
        %3805 = vmatprep.subr.bf16.mxu0 0
        %3806 = vmatpush1.bf16.msra.mxu0 0
        %3807 = vmatprep.subr.bf16.mxu0 0
        %3808 = vmatpush1.bf16.msra.mxu0 0
        %3809 = vmatprep.subr.bf16.mxu0 0
        %3810 = vmatpush1.bf16.msra.mxu0 0
        %3811 = vmatprep.subr.bf16.mxu0 0
        %3812 = vmatpush1.bf16.msra.mxu0 0
        %3813 = vmatprep.subr.bf16.mxu0 0
        %3814 = vmatpush1.bf16.msra.mxu0 0
        %3815 = vmatprep.mubr.bf16.mxu0 0
        %3816 = vmatmul.mubr.bf16.gmra.mrb[0].mxu0 %v796
        %v3817 = vpop.f32.mrb[0].mxu0
        %v3818 = vadd.f32 0.0, %v3817
        %v3819 = vpop.f32.mrb[0].mxu0
        %v3820 = vadd.f32 0.0, %v3819
        %v3821 = vpop.f32.mrb[0].mxu0
        %v3822 = vadd.f32 0.0, %v3821
        %v3823 = vpop.f32.mrb[0].mxu0
        %v3824 = vadd.f32 0.0, %v3823
        %3825 = vmatprep.mubr.bf16.mxu0 0
        %3826 = vmatmul.mubr.bf16.gmra.mrb[0].mxu0 %v799
        %v3827 = vpop.f32.mrb[0].mxu0
        %v3828 = vadd.f32 0.0, %v3827
        %v3829 = vpop.f32.mrb[0].mxu0
        %v3830 = vadd.f32 0.0, %v3829
        %v3831 = vpop.f32.mrb[0].mxu0
        %v3832 = vadd.f32 0.0, %v3831
        %v3833 = vpop.f32.mrb[0].mxu0
        %v3834 = vadd.f32 0.0, %v3833
        %3835 = vdwg.mxu0
        %3836 = vmatprep.subr.bf16.mxu0 %v1106
        %3837 = vmatpush1.bf16.msra.mxu0 %v1103
        %3838 = vmatprep.subr.bf16.mxu0 0
        %3839 = vmatpush1.bf16.msra.mxu0 0
        %3840 = vmatprep.subr.bf16.mxu0 0
        %3841 = vmatpush1.bf16.msra.mxu0 0
        %3842 = vmatprep.subr.bf16.mxu0 0
        %3843 = vmatpush1.bf16.msra.mxu0 0
        %3844 = vmatprep.subr.bf16.mxu0 0
        %3845 = vmatpush1.bf16.msra.mxu0 0
        %3846 = vmatprep.subr.bf16.mxu0 0
        %3847 = vmatpush1.bf16.msra.mxu0 0
        %3848 = vmatprep.subr.bf16.mxu0 0
        %3849 = vmatpush1.bf16.msra.mxu0 0
        %3850 = vmatprep.subr.bf16.mxu0 0
        %3851 = vmatpush1.bf16.msra.mxu0 0
        %3852 = vmatprep.subr.bf16.mxu0 0
        %3853 = vmatpush1.bf16.msra.mxu0 0
        %3854 = vmatprep.subr.bf16.mxu0 0
        %3855 = vmatpush1.bf16.msra.mxu0 0
        %3856 = vmatprep.subr.bf16.mxu0 0
        %3857 = vmatpush1.bf16.msra.mxu0 0
        %3858 = vmatprep.subr.bf16.mxu0 0
        %3859 = vmatpush1.bf16.msra.mxu0 0
        %3860 = vmatprep.subr.bf16.mxu0 0
        %3861 = vmatpush1.bf16.msra.mxu0 0
        %3862 = vmatprep.subr.bf16.mxu0 0
        %3863 = vmatpush1.bf16.msra.mxu0 0
        %3864 = vmatprep.subr.bf16.mxu0 0
        %3865 = vmatpush1.bf16.msra.mxu0 0
        %3866 = vmatprep.subr.bf16.mxu0 0
        %3867 = vmatpush1.bf16.msra.mxu0 0
        %3868 = vmatprep.mubr.bf16.mxu0 0
        %3869 = vmatmul.mubr.bf16.gmra.mrb[0].mxu0 %v796
        %v3870 = vpop.f32.mrb[0].mxu0
        %v3871 = vadd.f32 0.0, %v3870
        %v3872 = vpop.f32.mrb[0].mxu0
        %v3873 = vadd.f32 0.0, %v3872
        %v3874 = vpop.f32.mrb[0].mxu0
        %v3875 = vadd.f32 0.0, %v3874
        %v3876 = vpop.f32.mrb[0].mxu0
        %v3877 = vadd.f32 0.0, %v3876
        %3878 = vmatprep.mubr.bf16.mxu0 0
        %3879 = vmatmul.mubr.bf16.gmra.mrb[0].mxu0 %v799
        %v3880 = vpop.f32.mrb[0].mxu0
        %v3881 = vadd.f32 0.0, %v3880
        %v3882 = vpop.f32.mrb[0].mxu0
        %v3883 = vadd.f32 0.0, %v3882
        %v3884 = vpop.f32.mrb[0].mxu0
        %v3885 = vadd.f32 0.0, %v3884
        %v3886 = vpop.f32.mrb[0].mxu0
        %v3887 = vadd.f32 0.0, %v3886
        %3888 = vdwg.mxu0
        %3889 = vmatprep.subr.bf16.mxu0 %v1112
        %3890 = vmatpush1.bf16.msra.mxu0 %v1109
        %3891 = vmatprep.subr.bf16.mxu0 0
        %3892 = vmatpush1.bf16.msra.mxu0 0
        %3893 = vmatprep.subr.bf16.mxu0 0
        %3894 = vmatpush1.bf16.msra.mxu0 0
        %3895 = vmatprep.subr.bf16.mxu0 0
        %3896 = vmatpush1.bf16.msra.mxu0 0
        %3897 = vmatprep.subr.bf16.mxu0 0
        %3898 = vmatpush1.bf16.msra.mxu0 0
        %3899 = vmatprep.subr.bf16.mxu0 0
        %3900 = vmatpush1.bf16.msra.mxu0 0
        %3901 = vmatprep.subr.bf16.mxu0 0
        %3902 = vmatpush1.bf16.msra.mxu0 0
        %3903 = vmatprep.subr.bf16.mxu0 0
        %3904 = vmatpush1.bf16.msra.mxu0 0
        %3905 = vmatprep.subr.bf16.mxu0 0
        %3906 = vmatpush1.bf16.msra.mxu0 0
        %3907 = vmatprep.subr.bf16.mxu0 0
        %3908 = vmatpush1.bf16.msra.mxu0 0
        %3909 = vmatprep.subr.bf16.mxu0 0
        %3910 = vmatpush1.bf16.msra.mxu0 0
        %3911 = vmatprep.subr.bf16.mxu0 0
        %3912 = vmatpush1.bf16.msra.mxu0 0
        %3913 = vmatprep.subr.bf16.mxu0 0
        %3914 = vmatpush1.bf16.msra.mxu0 0
        %3915 = vmatprep.subr.bf16.mxu0 0
        %3916 = vmatpush1.bf16.msra.mxu0 0
        %3917 = vmatprep.subr.bf16.mxu0 0
        %3918 = vmatpush1.bf16.msra.mxu0 0
        %3919 = vmatprep.subr.bf16.mxu0 0
        %3920 = vmatpush1.bf16.msra.mxu0 0
        %3921 = vmatprep.mubr.bf16.mxu0 0
        %3922 = vmatmul.mubr.bf16.gmra.mrb[0].mxu0 %v796
        %v3923 = vpop.f32.mrb[0].mxu0
        %v3924 = vadd.f32 0.0, %v3923
        %v3925 = vpop.f32.mrb[0].mxu0
        %v3926 = vadd.f32 0.0, %v3925
        %v3927 = vpop.f32.mrb[0].mxu0
        %v3928 = vadd.f32 0.0, %v3927
        %v3929 = vpop.f32.mrb[0].mxu0
        %v3930 = vadd.f32 0.0, %v3929
        %3931 = vmatprep.mubr.bf16.mxu0 0
        %3932 = vmatmul.mubr.bf16.gmra.mrb[0].mxu0 %v799
        %v3933 = vpop.f32.mrb[0].mxu0
        %v3934 = vadd.f32 0.0, %v3933
        %v3935 = vpop.f32.mrb[0].mxu0
        %v3936 = vadd.f32 0.0, %v3935
        %v3937 = vpop.f32.mrb[0].mxu0
        %v3938 = vadd.f32 0.0, %v3937
        %v3939 = vpop.f32.mrb[0].mxu0
        %v3940 = vadd.f32 0.0, %v3939
        %3941 = vdwg.mxu0
        %3942 = vmatprep.subr.bf16.mxu0 %v1118
        %3943 = vmatpush1.bf16.msra.mxu0 %v1115
        %3944 = vmatprep.subr.bf16.mxu0 0
        %3945 = vmatpush1.bf16.msra.mxu0 0
        %3946 = vmatprep.subr.bf16.mxu0 0
        %3947 = vmatpush1.bf16.msra.mxu0 0
        %3948 = vmatprep.subr.bf16.mxu0 0
        %3949 = vmatpush1.bf16.msra.mxu0 0
        %3950 = vmatprep.subr.bf16.mxu0 0
        %3951 = vmatpush1.bf16.msra.mxu0 0
        %3952 = vmatprep.subr.bf16.mxu0 0
        %3953 = vmatpush1.bf16.msra.mxu0 0
        %3954 = vmatprep.subr.bf16.mxu0 0
        %3955 = vmatpush1.bf16.msra.mxu0 0
        %3956 = vmatprep.subr.bf16.mxu0 0
        %3957 = vmatpush1.bf16.msra.mxu0 0
        %3958 = vmatprep.subr.bf16.mxu0 0
        %3959 = vmatpush1.bf16.msra.mxu0 0
        %3960 = vmatprep.subr.bf16.mxu0 0
        %3961 = vmatpush1.bf16.msra.mxu0 0
        %3962 = vmatprep.subr.bf16.mxu0 0
        %3963 = vmatpush1.bf16.msra.mxu0 0
        %3964 = vmatprep.subr.bf16.mxu0 0
        %3965 = vmatpush1.bf16.msra.mxu0 0
        %3966 = vmatprep.subr.bf16.mxu0 0
        %3967 = vmatpush1.bf16.msra.mxu0 0
        %3968 = vmatprep.subr.bf16.mxu0 0
        %3969 = vmatpush1.bf16.msra.mxu0 0
        %3970 = vmatprep.subr.bf16.mxu0 0
        %3971 = vmatpush1.bf16.msra.mxu0 0
        %3972 = vmatprep.subr.bf16.mxu0 0
        %3973 = vmatpush1.bf16.msra.mxu0 0
        %3974 = vmatprep.mubr.bf16.mxu0 0
        %3975 = vmatmul.mubr.bf16.gmra.mrb[0].mxu0 %v796
        %v3976 = vpop.f32.mrb[0].mxu0
        %v3977 = vadd.f32 0.0, %v3976
        %v3978 = vpop.f32.mrb[0].mxu0
        %v3979 = vadd.f32 0.0, %v3978
        %v3980 = vpop.f32.mrb[0].mxu0
        %v3981 = vadd.f32 0.0, %v3980
        %v3982 = vpop.f32.mrb[0].mxu0
        %v3983 = vadd.f32 0.0, %v3982
        %3984 = vmatprep.mubr.bf16.mxu0 0
        %3985 = vmatmul.mubr.bf16.gmra.mrb[0].mxu0 %v799
        %v3986 = vpop.f32.mrb[0].mxu0
        %v3987 = vadd.f32 0.0, %v3986
        %v3988 = vpop.f32.mrb[0].mxu0
        %v3989 = vadd.f32 0.0, %v3988
        %v3990 = vpop.f32.mrb[0].mxu0
        %v3991 = vadd.f32 0.0, %v3990
        %v3992 = vpop.f32.mrb[0].mxu0
        %v3993 = vadd.f32 0.0, %v3992
        %3994 = vdwg.mxu0
        %3995 = vmatprep.subr.bf16.mxu0 %v1124
        %3996 = vmatpush1.bf16.msra.mxu0 %v1121
        %3997 = vmatprep.subr.bf16.mxu0 0
        %3998 = vmatpush1.bf16.msra.mxu0 0
        %3999 = vmatprep.subr.bf16.mxu0 0
        %4000 = vmatpush1.bf16.msra.mxu0 0
        %4001 = vmatprep.subr.bf16.mxu0 0
        %4002 = vmatpush1.bf16.msra.mxu0 0
        %4003 = vmatprep.subr.bf16.mxu0 0
        %4004 = vmatpush1.bf16.msra.mxu0 0
        %4005 = vmatprep.subr.bf16.mxu0 0
        %4006 = vmatpush1.bf16.msra.mxu0 0
        %4007 = vmatprep.subr.bf16.mxu0 0
        %4008 = vmatpush1.bf16.msra.mxu0 0
        %4009 = vmatprep.subr.bf16.mxu0 0
        %4010 = vmatpush1.bf16.msra.mxu0 0
        %4011 = vmatprep.subr.bf16.mxu0 0
        %4012 = vmatpush1.bf16.msra.mxu0 0
        %4013 = vmatprep.subr.bf16.mxu0 0
        %4014 = vmatpush1.bf16.msra.mxu0 0
        %4015 = vmatprep.subr.bf16.mxu0 0
        %4016 = vmatpush1.bf16.msra.mxu0 0
        %4017 = vmatprep.subr.bf16.mxu0 0
        %4018 = vmatpush1.bf16.msra.mxu0 0
        %4019 = vmatprep.subr.bf16.mxu0 0
        %4020 = vmatpush1.bf16.msra.mxu0 0
        %4021 = vmatprep.subr.bf16.mxu0 0
        %4022 = vmatpush1.bf16.msra.mxu0 0
        %4023 = vmatprep.subr.bf16.mxu0 0
        %4024 = vmatpush1.bf16.msra.mxu0 0
        %4025 = vmatprep.subr.bf16.mxu0 0
        %4026 = vmatpush1.bf16.msra.mxu0 0
        %4027 = vmatprep.mubr.bf16.mxu0 0
        %4028 = vmatmul.mubr.bf16.gmra.mrb[0].mxu0 %v796
        %v4029 = vpop.f32.mrb[0].mxu0
        %v4030 = vadd.f32 0.0, %v4029
        %v4031 = vpop.f32.mrb[0].mxu0
        %v4032 = vadd.f32 0.0, %v4031
        %v4033 = vpop.f32.mrb[0].mxu0
        %v4034 = vadd.f32 0.0, %v4033
        %v4035 = vpop.f32.mrb[0].mxu0
        %v4036 = vadd.f32 0.0, %v4035
        %4037 = vmatprep.mubr.bf16.mxu0 0
        %4038 = vmatmul.mubr.bf16.gmra.mrb[0].mxu0 %v799
        %v4039 = vpop.f32.mrb[0].mxu0
        %v4040 = vadd.f32 0.0, %v4039
        %v4041 = vpop.f32.mrb[0].mxu0
        %v4042 = vadd.f32 0.0, %v4041
        %v4043 = vpop.f32.mrb[0].mxu0
        %v4044 = vadd.f32 0.0, %v4043
        %v4045 = vpop.f32.mrb[0].mxu0
        %v4046 = vadd.f32 0.0, %v4045
        %4047 = vdwg.mxu0
        %4048 = vmatprep.subr.bf16.mxu0 %v1130
        %4049 = vmatpush1.bf16.msra.mxu0 %v1127
        %4050 = vmatprep.subr.bf16.mxu0 0
        %4051 = vmatpush1.bf16.msra.mxu0 0
        %4052 = vmatprep.subr.bf16.mxu0 0
        %4053 = vmatpush1.bf16.msra.mxu0 0
        %4054 = vmatprep.subr.bf16.mxu0 0
        %4055 = vmatpush1.bf16.msra.mxu0 0
        %4056 = vmatprep.subr.bf16.mxu0 0
        %4057 = vmatpush1.bf16.msra.mxu0 0
        %4058 = vmatprep.subr.bf16.mxu0 0
        %4059 = vmatpush1.bf16.msra.mxu0 0
        %4060 = vmatprep.subr.bf16.mxu0 0
        %4061 = vmatpush1.bf16.msra.mxu0 0
        %4062 = vmatprep.subr.bf16.mxu0 0
        %4063 = vmatpush1.bf16.msra.mxu0 0
        %4064 = vmatprep.subr.bf16.mxu0 0
        %4065 = vmatpush1.bf16.msra.mxu0 0
        %4066 = vmatprep.subr.bf16.mxu0 0
        %4067 = vmatpush1.bf16.msra.mxu0 0
        %4068 = vmatprep.subr.bf16.mxu0 0
        %4069 = vmatpush1.bf16.msra.mxu0 0
        %4070 = vmatprep.subr.bf16.mxu0 0
        %4071 = vmatpush1.bf16.msra.mxu0 0
        %4072 = vmatprep.subr.bf16.mxu0 0
        %4073 = vmatpush1.bf16.msra.mxu0 0
        %4074 = vmatprep.subr.bf16.mxu0 0
        %4075 = vmatpush1.bf16.msra.mxu0 0
        %4076 = vmatprep.subr.bf16.mxu0 0
        %4077 = vmatpush1.bf16.msra.mxu0 0
        %4078 = vmatprep.subr.bf16.mxu0 0
        %4079 = vmatpush1.bf16.msra.mxu0 0
        %4080 = vmatprep.mubr.bf16.mxu0 0
        %4081 = vmatmul.mubr.bf16.gmra.mrb[0].mxu0 %v796
        %v4082 = vpop.f32.mrb[0].mxu0
        %v4083 = vadd.f32 0.0, %v4082
        %v4084 = vpop.f32.mrb[0].mxu0
        %v4085 = vadd.f32 0.0, %v4084
        %v4086 = vpop.f32.mrb[0].mxu0
        %v4087 = vadd.f32 0.0, %v4086
        %v4088 = vpop.f32.mrb[0].mxu0
        %v4089 = vadd.f32 0.0, %v4088
        %4090 = vmatprep.mubr.bf16.mxu0 0
        %4091 = vmatmul.mubr.bf16.gmra.mrb[0].mxu0 %v799
        %v4092 = vpop.f32.mrb[0].mxu0
        %v4093 = vadd.f32 0.0, %v4092
        %v4094 = vpop.f32.mrb[0].mxu0
        %v4095 = vadd.f32 0.0, %v4094
        %v4096 = vpop.f32.mrb[0].mxu0
        %v4097 = vadd.f32 0.0, %v4096
        %v4098 = vpop.f32.mrb[0].mxu0
        %v4099 = vadd.f32 0.0, %v4098
        %4100 = vdwg.mxu0
        %4101 = vmatprep.subr.bf16.mxu0 %v1136
        %4102 = vmatpush1.bf16.msra.mxu0 %v1133
        %4103 = vmatprep.subr.bf16.mxu0 0
        %4104 = vmatpush1.bf16.msra.mxu0 0
        %4105 = vmatprep.subr.bf16.mxu0 0
        %4106 = vmatpush1.bf16.msra.mxu0 0
        %4107 = vmatprep.subr.bf16.mxu0 0
        %4108 = vmatpush1.bf16.msra.mxu0 0
        %4109 = vmatprep.subr.bf16.mxu0 0
        %4110 = vmatpush1.bf16.msra.mxu0 0
        %4111 = vmatprep.subr.bf16.mxu0 0
        %4112 = vmatpush1.bf16.msra.mxu0 0
        %4113 = vmatprep.subr.bf16.mxu0 0
        %4114 = vmatpush1.bf16.msra.mxu0 0
        %4115 = vmatprep.subr.bf16.mxu0 0
        %4116 = vmatpush1.bf16.msra.mxu0 0
        %4117 = vmatprep.subr.bf16.mxu0 0
        %4118 = vmatpush1.bf16.msra.mxu0 0
        %4119 = vmatprep.subr.bf16.mxu0 0
        %4120 = vmatpush1.bf16.msra.mxu0 0
        %4121 = vmatprep.subr.bf16.mxu0 0
        %4122 = vmatpush1.bf16.msra.mxu0 0
        %4123 = vmatprep.subr.bf16.mxu0 0
        %4124 = vmatpush1.bf16.msra.mxu0 0
        %4125 = vmatprep.subr.bf16.mxu0 0
        %4126 = vmatpush1.bf16.msra.mxu0 0
        %4127 = vmatprep.subr.bf16.mxu0 0
        %4128 = vmatpush1.bf16.msra.mxu0 0
        %4129 = vmatprep.subr.bf16.mxu0 0
        %4130 = vmatpush1.bf16.msra.mxu0 0
        %4131 = vmatprep.subr.bf16.mxu0 0
        %4132 = vmatpush1.bf16.msra.mxu0 0
        %4133 = vmatprep.mubr.bf16.mxu0 0
        %4134 = vmatmul.mubr.bf16.gmra.mrb[0].mxu0 %v796
        %v4135 = vpop.f32.mrb[0].mxu0
        %v4136 = vadd.f32 0.0, %v4135
        %v4137 = vpop.f32.mrb[0].mxu0
        %v4138 = vadd.f32 0.0, %v4137
        %v4139 = vpop.f32.mrb[0].mxu0
        %v4140 = vadd.f32 0.0, %v4139
        %v4141 = vpop.f32.mrb[0].mxu0
        %v4142 = vadd.f32 0.0, %v4141
        %4143 = vmatprep.mubr.bf16.mxu0 0
        %4144 = vmatmul.mubr.bf16.gmra.mrb[0].mxu0 %v799
        %v4145 = vpop.f32.mrb[0].mxu0
        %v4146 = vadd.f32 0.0, %v4145
        %v4147 = vpop.f32.mrb[0].mxu0
        %v4148 = vadd.f32 0.0, %v4147
        %v4149 = vpop.f32.mrb[0].mxu0
        %v4150 = vadd.f32 0.0, %v4149
        %v4151 = vpop.f32.mrb[0].mxu0
        %v4152 = vadd.f32 0.0, %v4151
        %4153 = vdwg.mxu0
        %4154 = vmatprep.subr.bf16.mxu0 %v1142
        %4155 = vmatpush1.bf16.msra.mxu0 %v1139
        %4156 = vmatprep.subr.bf16.mxu0 0
        %4157 = vmatpush1.bf16.msra.mxu0 0
        %4158 = vmatprep.subr.bf16.mxu0 0
        %4159 = vmatpush1.bf16.msra.mxu0 0
        %4160 = vmatprep.subr.bf16.mxu0 0
        %4161 = vmatpush1.bf16.msra.mxu0 0
        %4162 = vmatprep.subr.bf16.mxu0 0
        %4163 = vmatpush1.bf16.msra.mxu0 0
        %4164 = vmatprep.subr.bf16.mxu0 0
        %4165 = vmatpush1.bf16.msra.mxu0 0
        %4166 = vmatprep.subr.bf16.mxu0 0
        %4167 = vmatpush1.bf16.msra.mxu0 0
        %4168 = vmatprep.subr.bf16.mxu0 0
        %4169 = vmatpush1.bf16.msra.mxu0 0
        %4170 = vmatprep.subr.bf16.mxu0 0
        %4171 = vmatpush1.bf16.msra.mxu0 0
        %4172 = vmatprep.subr.bf16.mxu0 0
        %4173 = vmatpush1.bf16.msra.mxu0 0
        %4174 = vmatprep.subr.bf16.mxu0 0
        %4175 = vmatpush1.bf16.msra.mxu0 0
        %4176 = vmatprep.subr.bf16.mxu0 0
        %4177 = vmatpush1.bf16.msra.mxu0 0
        %4178 = vmatprep.subr.bf16.mxu0 0
        %4179 = vmatpush1.bf16.msra.mxu0 0
        %4180 = vmatprep.subr.bf16.mxu0 0
        %4181 = vmatpush1.bf16.msra.mxu0 0
        %4182 = vmatprep.subr.bf16.mxu0 0
        %4183 = vmatpush1.bf16.msra.mxu0 0
        %4184 = vmatprep.subr.bf16.mxu0 0
        %4185 = vmatpush1.bf16.msra.mxu0 0
        %4186 = vmatprep.mubr.bf16.mxu0 0
        %4187 = vmatmul.mubr.bf16.gmra.mrb[0].mxu0 %v796
        %v4188 = vpop.f32.mrb[0].mxu0
        %v4189 = vadd.f32 0.0, %v4188
        %v4190 = vpop.f32.mrb[0].mxu0
        %v4191 = vadd.f32 0.0, %v4190
        %v4192 = vpop.f32.mrb[0].mxu0
        %v4193 = vadd.f32 0.0, %v4192
        %v4194 = vpop.f32.mrb[0].mxu0
        %v4195 = vadd.f32 0.0, %v4194
        %4196 = vmatprep.mubr.bf16.mxu0 0
        %4197 = vmatmul.mubr.bf16.gmra.mrb[0].mxu0 %v799
        %v4198 = vpop.f32.mrb[0].mxu0
        %v4199 = vadd.f32 0.0, %v4198
        %v4200 = vpop.f32.mrb[0].mxu0
        %v4201 = vadd.f32 0.0, %v4200
        %v4202 = vpop.f32.mrb[0].mxu0
        %v4203 = vadd.f32 0.0, %v4202
        %v4204 = vpop.f32.mrb[0].mxu0
        %v4205 = vadd.f32 0.0, %v4204
        %4206 = vdwg.mxu0
        %4207 = vmatprep.subr.bf16.mxu0 %v1148
        %4208 = vmatpush1.bf16.msra.mxu0 %v1145
        %4209 = vmatprep.subr.bf16.mxu0 0
        %4210 = vmatpush1.bf16.msra.mxu0 0
        %4211 = vmatprep.subr.bf16.mxu0 0
        %4212 = vmatpush1.bf16.msra.mxu0 0
        %4213 = vmatprep.subr.bf16.mxu0 0
        %4214 = vmatpush1.bf16.msra.mxu0 0
        %4215 = vmatprep.subr.bf16.mxu0 0
        %4216 = vmatpush1.bf16.msra.mxu0 0
        %4217 = vmatprep.subr.bf16.mxu0 0
        %4218 = vmatpush1.bf16.msra.mxu0 0
        %4219 = vmatprep.subr.bf16.mxu0 0
        %4220 = vmatpush1.bf16.msra.mxu0 0
        %4221 = vmatprep.subr.bf16.mxu0 0
        %4222 = vmatpush1.bf16.msra.mxu0 0
        %4223 = vmatprep.subr.bf16.mxu0 0
        %4224 = vmatpush1.bf16.msra.mxu0 0
        %4225 = vmatprep.subr.bf16.mxu0 0
        %4226 = vmatpush1.bf16.msra.mxu0 0
        %4227 = vmatprep.subr.bf16.mxu0 0
        %4228 = vmatpush1.bf16.msra.mxu0 0
        %4229 = vmatprep.subr.bf16.mxu0 0
        %4230 = vmatpush1.bf16.msra.mxu0 0
        %4231 = vmatprep.subr.bf16.mxu0 0
        %4232 = vmatpush1.bf16.msra.mxu0 0
        %4233 = vmatprep.subr.bf16.mxu0 0
        %4234 = vmatpush1.bf16.msra.mxu0 0
        %4235 = vmatprep.subr.bf16.mxu0 0
        %4236 = vmatpush1.bf16.msra.mxu0 0
        %4237 = vmatprep.subr.bf16.mxu0 0
        %4238 = vmatpush1.bf16.msra.mxu0 0
        %4239 = vmatprep.mubr.bf16.mxu0 0
        %4240 = vmatmul.mubr.bf16.gmra.mrb[0].mxu0 %v796
        %v4241 = vpop.f32.mrb[0].mxu0
        %v4242 = vadd.f32 0.0, %v4241
        %v4243 = vpop.f32.mrb[0].mxu0
        %v4244 = vadd.f32 0.0, %v4243
        %v4245 = vpop.f32.mrb[0].mxu0
        %v4246 = vadd.f32 0.0, %v4245
        %v4247 = vpop.f32.mrb[0].mxu0
        %v4248 = vadd.f32 0.0, %v4247
        %4249 = vmatprep.mubr.bf16.mxu0 0
        %4250 = vmatmul.mubr.bf16.gmra.mrb[0].mxu0 %v799
        %v4251 = vpop.f32.mrb[0].mxu0
        %v4252 = vadd.f32 0.0, %v4251
        %v4253 = vpop.f32.mrb[0].mxu0
        %v4254 = vadd.f32 0.0, %v4253
        %v4255 = vpop.f32.mrb[0].mxu0
        %v4256 = vadd.f32 0.0, %v4255
        %v4257 = vpop.f32.mrb[0].mxu0
        %v4258 = vadd.f32 0.0, %v4257
        %4259 = vdwg.mxu0
        %4260 = vmatprep.subr.bf16.mxu0 %v1154
        %4261 = vmatpush1.bf16.msra.mxu0 %v1151
        %4262 = vmatprep.subr.bf16.mxu0 0
        %4263 = vmatpush1.bf16.msra.mxu0 0
        %4264 = vmatprep.subr.bf16.mxu0 0
        %4265 = vmatpush1.bf16.msra.mxu0 0
        %4266 = vmatprep.subr.bf16.mxu0 0
        %4267 = vmatpush1.bf16.msra.mxu0 0
        %4268 = vmatprep.subr.bf16.mxu0 0
        %4269 = vmatpush1.bf16.msra.mxu0 0
        %4270 = vmatprep.subr.bf16.mxu0 0
        %4271 = vmatpush1.bf16.msra.mxu0 0
        %4272 = vmatprep.subr.bf16.mxu0 0
        %4273 = vmatpush1.bf16.msra.mxu0 0
        %4274 = vmatprep.subr.bf16.mxu0 0
        %4275 = vmatpush1.bf16.msra.mxu0 0
        %4276 = vmatprep.subr.bf16.mxu0 0
        %4277 = vmatpush1.bf16.msra.mxu0 0
        %4278 = vmatprep.subr.bf16.mxu0 0
        %4279 = vmatpush1.bf16.msra.mxu0 0
        %4280 = vmatprep.subr.bf16.mxu0 0
        %4281 = vmatpush1.bf16.msra.mxu0 0
        %4282 = vmatprep.subr.bf16.mxu0 0
        %4283 = vmatpush1.bf16.msra.mxu0 0
        %4284 = vmatprep.subr.bf16.mxu0 0
        %4285 = vmatpush1.bf16.msra.mxu0 0
        %4286 = vmatprep.subr.bf16.mxu0 0
        %4287 = vmatpush1.bf16.msra.mxu0 0
        %4288 = vmatprep.subr.bf16.mxu0 0
        %4289 = vmatpush1.bf16.msra.mxu0 0
        %4290 = vmatprep.subr.bf16.mxu0 0
        %4291 = vmatpush1.bf16.msra.mxu0 0
        %4292 = vmatprep.mubr.bf16.mxu0 0
        %4293 = vmatmul.mubr.bf16.gmra.mrb[0].mxu0 %v796
        %v4294 = vpop.f32.mrb[0].mxu0
        %v4295 = vadd.f32 0.0, %v4294
        %v4296 = vpop.f32.mrb[0].mxu0
        %v4297 = vadd.f32 0.0, %v4296
        %v4298 = vpop.f32.mrb[0].mxu0
        %v4299 = vadd.f32 0.0, %v4298
        %v4300 = vpop.f32.mrb[0].mxu0
        %v4301 = vadd.f32 0.0, %v4300
        %4302 = vmatprep.mubr.bf16.mxu0 0
        %4303 = vmatmul.mubr.bf16.gmra.mrb[0].mxu0 %v799
        %v4304 = vpop.f32.mrb[0].mxu0
        %v4305 = vadd.f32 0.0, %v4304
        %v4306 = vpop.f32.mrb[0].mxu0
        %v4307 = vadd.f32 0.0, %v4306
        %v4308 = vpop.f32.mrb[0].mxu0
        %v4309 = vadd.f32 0.0, %v4308
        %v4310 = vpop.f32.mrb[0].mxu0
        %v4311 = vadd.f32 0.0, %v4310
        %4312 = vdwg.mxu0
        %4313 = vmatprep.subr.bf16.mxu0 %v1160
        %4314 = vmatpush1.bf16.msra.mxu0 %v1157
        %4315 = vmatprep.subr.bf16.mxu0 0
        %4316 = vmatpush1.bf16.msra.mxu0 0
        %4317 = vmatprep.subr.bf16.mxu0 0
        %4318 = vmatpush1.bf16.msra.mxu0 0
        %4319 = vmatprep.subr.bf16.mxu0 0
        %4320 = vmatpush1.bf16.msra.mxu0 0
        %4321 = vmatprep.subr.bf16.mxu0 0
        %4322 = vmatpush1.bf16.msra.mxu0 0
        %4323 = vmatprep.subr.bf16.mxu0 0
        %4324 = vmatpush1.bf16.msra.mxu0 0
        %4325 = vmatprep.subr.bf16.mxu0 0
        %4326 = vmatpush1.bf16.msra.mxu0 0
        %4327 = vmatprep.subr.bf16.mxu0 0
        %4328 = vmatpush1.bf16.msra.mxu0 0
        %4329 = vmatprep.subr.bf16.mxu0 0
        %4330 = vmatpush1.bf16.msra.mxu0 0
        %4331 = vmatprep.subr.bf16.mxu0 0
        %4332 = vmatpush1.bf16.msra.mxu0 0
        %4333 = vmatprep.subr.bf16.mxu0 0
        %4334 = vmatpush1.bf16.msra.mxu0 0
        %4335 = vmatprep.subr.bf16.mxu0 0
        %4336 = vmatpush1.bf16.msra.mxu0 0
        %4337 = vmatprep.subr.bf16.mxu0 0
        %4338 = vmatpush1.bf16.msra.mxu0 0
        %4339 = vmatprep.subr.bf16.mxu0 0
        %4340 = vmatpush1.bf16.msra.mxu0 0
        %4341 = vmatprep.subr.bf16.mxu0 0
        %4342 = vmatpush1.bf16.msra.mxu0 0
        %4343 = vmatprep.subr.bf16.mxu0 0
        %4344 = vmatpush1.bf16.msra.mxu0 0
        %4345 = vmatprep.mubr.bf16.mxu0 0
        %4346 = vmatmul.mubr.bf16.gmra.mrb[0].mxu0 %v796
        %v4347 = vpop.f32.mrb[0].mxu0
        %v4348 = vadd.f32 0.0, %v4347
        %v4349 = vpop.f32.mrb[0].mxu0
        %v4350 = vadd.f32 0.0, %v4349
        %v4351 = vpop.f32.mrb[0].mxu0
        %v4352 = vadd.f32 0.0, %v4351
        %v4353 = vpop.f32.mrb[0].mxu0
        %v4354 = vadd.f32 0.0, %v4353
        %4355 = vmatprep.mubr.bf16.mxu0 0
        %4356 = vmatmul.mubr.bf16.gmra.mrb[0].mxu0 %v799
        %v4357 = vpop.f32.mrb[0].mxu0
        %v4358 = vadd.f32 0.0, %v4357
        %v4359 = vpop.f32.mrb[0].mxu0
        %v4360 = vadd.f32 0.0, %v4359
        %v4361 = vpop.f32.mrb[0].mxu0
        %v4362 = vadd.f32 0.0, %v4361
        %v4363 = vpop.f32.mrb[0].mxu0
        %v4364 = vadd.f32 0.0, %v4363
        %4365 = vdwg.mxu0
        %4366 = vmatprep.subr.bf16.mxu0 %v1166
        %4367 = vmatpush1.bf16.msra.mxu0 %v1163
        %4368 = vmatprep.subr.bf16.mxu0 0
        %4369 = vmatpush1.bf16.msra.mxu0 0
        %4370 = vmatprep.subr.bf16.mxu0 0
        %4371 = vmatpush1.bf16.msra.mxu0 0
        %4372 = vmatprep.subr.bf16.mxu0 0
        %4373 = vmatpush1.bf16.msra.mxu0 0
        %4374 = vmatprep.subr.bf16.mxu0 0
        %4375 = vmatpush1.bf16.msra.mxu0 0
        %4376 = vmatprep.subr.bf16.mxu0 0
        %4377 = vmatpush1.bf16.msra.mxu0 0
        %4378 = vmatprep.subr.bf16.mxu0 0
        %4379 = vmatpush1.bf16.msra.mxu0 0
        %4380 = vmatprep.subr.bf16.mxu0 0
        %4381 = vmatpush1.bf16.msra.mxu0 0
        %4382 = vmatprep.subr.bf16.mxu0 0
        %4383 = vmatpush1.bf16.msra.mxu0 0
        %4384 = vmatprep.subr.bf16.mxu0 0
        %4385 = vmatpush1.bf16.msra.mxu0 0
        %4386 = vmatprep.subr.bf16.mxu0 0
        %4387 = vmatpush1.bf16.msra.mxu0 0
        %4388 = vmatprep.subr.bf16.mxu0 0
        %4389 = vmatpush1.bf16.msra.mxu0 0
        %4390 = vmatprep.subr.bf16.mxu0 0
        %4391 = vmatpush1.bf16.msra.mxu0 0
        %4392 = vmatprep.subr.bf16.mxu0 0
        %4393 = vmatpush1.bf16.msra.mxu0 0
        %4394 = vmatprep.subr.bf16.mxu0 0
        %4395 = vmatpush1.bf16.msra.mxu0 0
        %4396 = vmatprep.subr.bf16.mxu0 0
        %4397 = vmatpush1.bf16.msra.mxu0 0
        %4398 = vmatprep.mubr.bf16.mxu0 0
        %4399 = vmatmul.mubr.bf16.gmra.mrb[0].mxu0 %v796
        %v4400 = vpop.f32.mrb[0].mxu0
        %v4401 = vadd.f32 0.0, %v4400
        %v4402 = vpop.f32.mrb[0].mxu0
        %v4403 = vadd.f32 0.0, %v4402
        %v4404 = vpop.f32.mrb[0].mxu0
        %v4405 = vadd.f32 0.0, %v4404
        %v4406 = vpop.f32.mrb[0].mxu0
        %v4407 = vadd.f32 0.0, %v4406
        %4408 = vmatprep.mubr.bf16.mxu0 0
        %4409 = vmatmul.mubr.bf16.gmra.mrb[0].mxu0 %v799
        %v4410 = vpop.f32.mrb[0].mxu0
        %v4411 = vadd.f32 0.0, %v4410
        %v4412 = vpop.f32.mrb[0].mxu0
        %v4413 = vadd.f32 0.0, %v4412
        %v4414 = vpop.f32.mrb[0].mxu0
        %v4415 = vadd.f32 0.0, %v4414
        %v4416 = vpop.f32.mrb[0].mxu0
        %v4417 = vadd.f32 0.0, %v4416
        %4418 = vdwg.mxu0
        %4419 = vmatprep.subr.bf16.mxu0 %v1172
        %4420 = vmatpush1.bf16.msra.mxu0 %v1169
        %4421 = vmatprep.subr.bf16.mxu0 0
        %4422 = vmatpush1.bf16.msra.mxu0 0
        %4423 = vmatprep.subr.bf16.mxu0 0
        %4424 = vmatpush1.bf16.msra.mxu0 0
        %4425 = vmatprep.subr.bf16.mxu0 0
        %4426 = vmatpush1.bf16.msra.mxu0 0
        %4427 = vmatprep.subr.bf16.mxu0 0
        %4428 = vmatpush1.bf16.msra.mxu0 0
        %4429 = vmatprep.subr.bf16.mxu0 0
        %4430 = vmatpush1.bf16.msra.mxu0 0
        %4431 = vmatprep.subr.bf16.mxu0 0
        %4432 = vmatpush1.bf16.msra.mxu0 0
        %4433 = vmatprep.subr.bf16.mxu0 0
        %4434 = vmatpush1.bf16.msra.mxu0 0
        %4435 = vmatprep.subr.bf16.mxu0 0
        %4436 = vmatpush1.bf16.msra.mxu0 0
        %4437 = vmatprep.subr.bf16.mxu0 0
        %4438 = vmatpush1.bf16.msra.mxu0 0
        %4439 = vmatprep.subr.bf16.mxu0 0
        %4440 = vmatpush1.bf16.msra.mxu0 0
        %4441 = vmatprep.subr.bf16.mxu0 0
        %4442 = vmatpush1.bf16.msra.mxu0 0
        %4443 = vmatprep.subr.bf16.mxu0 0
        %4444 = vmatpush1.bf16.msra.mxu0 0
        %4445 = vmatprep.subr.bf16.mxu0 0
        %4446 = vmatpush1.bf16.msra.mxu0 0
        %4447 = vmatprep.subr.bf16.mxu0 0
        %4448 = vmatpush1.bf16.msra.mxu0 0
        %4449 = vmatprep.subr.bf16.mxu0 0
        %4450 = vmatpush1.bf16.msra.mxu0 0
        %4451 = vmatprep.mubr.bf16.mxu0 0
        %4452 = vmatmul.mubr.bf16.gmra.mrb[0].mxu0 %v796
        %v4453 = vpop.f32.mrb[0].mxu0
        %v4454 = vadd.f32 0.0, %v4453
        %v4455 = vpop.f32.mrb[0].mxu0
        %v4456 = vadd.f32 0.0, %v4455
        %v4457 = vpop.f32.mrb[0].mxu0
        %v4458 = vadd.f32 0.0, %v4457
        %v4459 = vpop.f32.mrb[0].mxu0
        %v4460 = vadd.f32 0.0, %v4459
        %4461 = vmatprep.mubr.bf16.mxu0 0
        %4462 = vmatmul.mubr.bf16.gmra.mrb[0].mxu0 %v799
        %v4463 = vpop.f32.mrb[0].mxu0
        %v4464 = vadd.f32 0.0, %v4463
        %v4465 = vpop.f32.mrb[0].mxu0
        %v4466 = vadd.f32 0.0, %v4465
        %v4467 = vpop.f32.mrb[0].mxu0
        %v4468 = vadd.f32 0.0, %v4467
        %v4469 = vpop.f32.mrb[0].mxu0
        %v4470 = vadd.f32 0.0, %v4469
        %4471 = vdwg.mxu0
        %4472 = vmatprep.subr.bf16.mxu0 %v1178
        %4473 = vmatpush1.bf16.msra.mxu0 %v1175
        %4474 = vmatprep.subr.bf16.mxu0 0
        %4475 = vmatpush1.bf16.msra.mxu0 0
        %4476 = vmatprep.subr.bf16.mxu0 0
        %4477 = vmatpush1.bf16.msra.mxu0 0
        %4478 = vmatprep.subr.bf16.mxu0 0
        %4479 = vmatpush1.bf16.msra.mxu0 0
        %4480 = vmatprep.subr.bf16.mxu0 0
        %4481 = vmatpush1.bf16.msra.mxu0 0
        %4482 = vmatprep.subr.bf16.mxu0 0
        %4483 = vmatpush1.bf16.msra.mxu0 0
        %4484 = vmatprep.subr.bf16.mxu0 0
        %4485 = vmatpush1.bf16.msra.mxu0 0
        %4486 = vmatprep.subr.bf16.mxu0 0
        %4487 = vmatpush1.bf16.msra.mxu0 0
        %4488 = vmatprep.subr.bf16.mxu0 0
        %4489 = vmatpush1.bf16.msra.mxu0 0
        %4490 = vmatprep.subr.bf16.mxu0 0
        %4491 = vmatpush1.bf16.msra.mxu0 0
        %4492 = vmatprep.subr.bf16.mxu0 0
        %4493 = vmatpush1.bf16.msra.mxu0 0
        %4494 = vmatprep.subr.bf16.mxu0 0
        %4495 = vmatpush1.bf16.msra.mxu0 0
        %4496 = vmatprep.subr.bf16.mxu0 0
        %4497 = vmatpush1.bf16.msra.mxu0 0
        %4498 = vmatprep.subr.bf16.mxu0 0
        %4499 = vmatpush1.bf16.msra.mxu0 0
        %4500 = vmatprep.subr.bf16.mxu0 0
        %4501 = vmatpush1.bf16.msra.mxu0 0
        %4502 = vmatprep.subr.bf16.mxu0 0
        %4503 = vmatpush1.bf16.msra.mxu0 0
        %4504 = vmatprep.mubr.bf16.mxu0 0
        %4505 = vmatmul.mubr.bf16.gmra.mrb[0].mxu0 %v796
        %v4506 = vpop.f32.mrb[0].mxu0
        %v4507 = vadd.f32 0.0, %v4506
        %v4508 = vpop.f32.mrb[0].mxu0
        %v4509 = vadd.f32 0.0, %v4508
        %v4510 = vpop.f32.mrb[0].mxu0
        %v4511 = vadd.f32 0.0, %v4510
        %v4512 = vpop.f32.mrb[0].mxu0
        %v4513 = vadd.f32 0.0, %v4512
        %4514 = vmatprep.mubr.bf16.mxu0 0
        %4515 = vmatmul.mubr.bf16.gmra.mrb[0].mxu0 %v799
        %v4516 = vpop.f32.mrb[0].mxu0
        %v4517 = vadd.f32 0.0, %v4516
        %v4518 = vpop.f32.mrb[0].mxu0
        %v4519 = vadd.f32 0.0, %v4518
        %v4520 = vpop.f32.mrb[0].mxu0
        %v4521 = vadd.f32 0.0, %v4520
        %v4522 = vpop.f32.mrb[0].mxu0
        %v4523 = vadd.f32 0.0, %v4522
        %4524 = vdwg.mxu0
        %4525 = vmatprep.subr.bf16.mxu0 %v1184
        %4526 = vmatpush1.bf16.msra.mxu0 %v1181
        %4527 = vmatprep.subr.bf16.mxu0 0
        %4528 = vmatpush1.bf16.msra.mxu0 0
        %4529 = vmatprep.subr.bf16.mxu0 0
        %4530 = vmatpush1.bf16.msra.mxu0 0
        %4531 = vmatprep.subr.bf16.mxu0 0
        %4532 = vmatpush1.bf16.msra.mxu0 0
        %4533 = vmatprep.subr.bf16.mxu0 0
        %4534 = vmatpush1.bf16.msra.mxu0 0
        %4535 = vmatprep.subr.bf16.mxu0 0
        %4536 = vmatpush1.bf16.msra.mxu0 0
        %4537 = vmatprep.subr.bf16.mxu0 0
        %4538 = vmatpush1.bf16.msra.mxu0 0
        %4539 = vmatprep.subr.bf16.mxu0 0
        %4540 = vmatpush1.bf16.msra.mxu0 0
        %4541 = vmatprep.subr.bf16.mxu0 0
        %4542 = vmatpush1.bf16.msra.mxu0 0
        %4543 = vmatprep.subr.bf16.mxu0 0
        %4544 = vmatpush1.bf16.msra.mxu0 0
        %4545 = vmatprep.subr.bf16.mxu0 0
        %4546 = vmatpush1.bf16.msra.mxu0 0
        %4547 = vmatprep.subr.bf16.mxu0 0
        %4548 = vmatpush1.bf16.msra.mxu0 0
        %4549 = vmatprep.subr.bf16.mxu0 0
        %4550 = vmatpush1.bf16.msra.mxu0 0
        %4551 = vmatprep.subr.bf16.mxu0 0
        %4552 = vmatpush1.bf16.msra.mxu0 0
        %4553 = vmatprep.subr.bf16.mxu0 0
        %4554 = vmatpush1.bf16.msra.mxu0 0
        %4555 = vmatprep.subr.bf16.mxu0 0
        %4556 = vmatpush1.bf16.msra.mxu0 0
        %4557 = vmatprep.mubr.bf16.mxu0 0
        %4558 = vmatmul.mubr.bf16.gmra.mrb[0].mxu0 %v796
        %v4559 = vpop.f32.mrb[0].mxu0
        %v4560 = vadd.f32 0.0, %v4559
        %v4561 = vpop.f32.mrb[0].mxu0
        %v4562 = vadd.f32 0.0, %v4561
        %v4563 = vpop.f32.mrb[0].mxu0
        %v4564 = vadd.f32 0.0, %v4563
        %v4565 = vpop.f32.mrb[0].mxu0
        %v4566 = vadd.f32 0.0, %v4565
        %4567 = vmatprep.mubr.bf16.mxu0 0
        %4568 = vmatmul.mubr.bf16.gmra.mrb[0].mxu0 %v799
        %v4569 = vpop.f32.mrb[0].mxu0
        %v4570 = vadd.f32 0.0, %v4569
        %v4571 = vpop.f32.mrb[0].mxu0
        %v4572 = vadd.f32 0.0, %v4571
        %v4573 = vpop.f32.mrb[0].mxu0
        %v4574 = vadd.f32 0.0, %v4573
        %v4575 = vpop.f32.mrb[0].mxu0
        %v4576 = vadd.f32 0.0, %v4575
        %4577 = vdwg.mxu0
        %v4578 = vld [vmem:[%s1] sm:$0xff]
        %v4579 = vld [vmem:[%s1 + $0x8] sm:$0xff]
        %v4580 = vld [vmem:[%s1 + $0x10] sm:$0xff]
        %v4581 = vld [vmem:[%s1 + $0x18] sm:$0xff]
        %4583 = vset.pattern.permute.xlu0 0
        %4584 = vperm.xlu0 %4583, %v4578
        %v4585 = vpop.permute.xlu0 %4584
        %4588 = vset.pattern.permute.xlu0 0
        %4589 = vperm.xlu0 %4588, %v4579
        %v4590 = vpop.permute.xlu0 %4589
        %4593 = vset.pattern.permute.xlu0 0
        %4594 = vperm.xlu0 %4593, %v4580
        %v4595 = vpop.permute.xlu0 %4594
        %4598 = vset.pattern.permute.xlu0 0
        %4599 = vperm.xlu0 %4598, %v4581
        %v4600 = vpop.permute.xlu0 %4599
        %v4602 = vadd.f32 %v1221, %v4585
        %v4603 = vadd.f32 %v1225, %v4590
        %v4604 = vadd.f32 %v1231, %v4595
        %v4605 = vadd.f32 %v1235, %v4600
        %v4606 = vmax.f32 %v4602, 0.0
        %v4607 = vmax.f32 %v4603, 0.0
        %v4608 = vmax.f32 %v4604, 0.0
        %v4609 = vmax.f32 %v4605, 0.0
        %v4610 = vadd.f32 %v1223, %v4585
        %v4611 = vadd.f32 %v1227, %v4590
        %v4612 = vadd.f32 %v1233, %v4595
        %v4613 = vadd.f32 %v1237, %v4600
        %v4614 = vmax.f32 %v4610, 0.0
        %v4615 = vmax.f32 %v4611, 0.0
        %v4616 = vmax.f32 %v4612, 0.0
        %v4617 = vmax.f32 %v4613, 0.0
        %v4618 = vadd.f32 %v1274, %v4585
        %v4619 = vadd.f32 %v1278, %v4590
        %v4620 = vadd.f32 %v1284, %v4595
        %v4621 = vadd.f32 %v1288, %v4600
        %v4622 = vmax.f32 %v4618, 0.0
        %v4623 = vmax.f32 %v4619, 0.0
        %v4624 = vmax.f32 %v4620, 0.0
        %v4625 = vmax.f32 %v4621, 0.0
        %v4626 = vadd.f32 %v1276, %v4585
        %v4627 = vadd.f32 %v1280, %v4590
        %v4628 = vadd.f32 %v1286, %v4595
        %v4629 = vadd.f32 %v1290, %v4600
        %v4630 = vmax.f32 %v4626, 0.0
        %v4631 = vmax.f32 %v4627, 0.0
        %v4632 = vmax.f32 %v4628, 0.0
        %v4633 = vmax.f32 %v4629, 0.0
        %v4634 = vadd.f32 %v1327, %v4585
        %v4635 = vadd.f32 %v1331, %v4590
        %v4636 = vadd.f32 %v1337, %v4595
        %v4637 = vadd.f32 %v1341, %v4600
        %v4638 = vmax.f32 %v4634, 0.0
        %v4639 = vmax.f32 %v4635, 0.0
        %v4640 = vmax.f32 %v4636, 0.0
        %v4641 = vmax.f32 %v4637, 0.0
        %v4642 = vadd.f32 %v1329, %v4585
        %v4643 = vadd.f32 %v1333, %v4590
        %v4644 = vadd.f32 %v1339, %v4595
        %v4645 = vadd.f32 %v1343, %v4600
        %v4646 = vmax.f32 %v4642, 0.0
        %v4647 = vmax.f32 %v4643, 0.0
        %v4648 = vmax.f32 %v4644, 0.0
        %v4649 = vmax.f32 %v4645, 0.0
        %v4650 = vadd.f32 %v1380, %v4585
        %v4651 = vadd.f32 %v1384, %v4590
        %v4652 = vadd.f32 %v1390, %v4595
        %v4653 = vadd.f32 %v1394, %v4600
        %v4654 = vmax.f32 %v4650, 0.0
        %v4655 = vmax.f32 %v4651, 0.0
        %v4656 = vmax.f32 %v4652, 0.0
        %v4657 = vmax.f32 %v4653, 0.0
        %v4658 = vadd.f32 %v1382, %v4585
        %v4659 = vadd.f32 %v1386, %v4590
        %v4660 = vadd.f32 %v1392, %v4595
        %v4661 = vadd.f32 %v1396, %v4600
        %v4662 = vmax.f32 %v4658, 0.0
        %v4663 = vmax.f32 %v4659, 0.0
        %v4664 = vmax.f32 %v4660, 0.0
        %v4665 = vmax.f32 %v4661, 0.0
        %v4666 = vadd.f32 %v1433, %v4585
        %v4667 = vadd.f32 %v1437, %v4590
        %v4668 = vadd.f32 %v1443, %v4595
        %v4669 = vadd.f32 %v1447, %v4600
        %v4670 = vmax.f32 %v4666, 0.0
        %v4671 = vmax.f32 %v4667, 0.0
        %v4672 = vmax.f32 %v4668, 0.0
        %v4673 = vmax.f32 %v4669, 0.0
        %v4674 = vadd.f32 %v1435, %v4585
        %v4675 = vadd.f32 %v1439, %v4590
        %v4676 = vadd.f32 %v1445, %v4595
        %v4677 = vadd.f32 %v1449, %v4600
        %v4678 = vmax.f32 %v4674, 0.0
        %v4679 = vmax.f32 %v4675, 0.0
        %v4680 = vmax.f32 %v4676, 0.0
        %v4681 = vmax.f32 %v4677, 0.0
        %v4682 = vadd.f32 %v1486, %v4585
        %v4683 = vadd.f32 %v1490, %v4590
        %v4684 = vadd.f32 %v1496, %v4595
        %v4685 = vadd.f32 %v1500, %v4600
        %v4686 = vmax.f32 %v4682, 0.0
        %v4687 = vmax.f32 %v4683, 0.0
        %v4688 = vmax.f32 %v4684, 0.0
        %v4689 = vmax.f32 %v4685, 0.0
        %v4690 = vadd.f32 %v1488, %v4585
        %v4691 = vadd.f32 %v1492, %v4590
        %v4692 = vadd.f32 %v1498, %v4595
        %v4693 = vadd.f32 %v1502, %v4600
        %v4694 = vmax.f32 %v4690, 0.0
        %v4695 = vmax.f32 %v4691, 0.0
        %v4696 = vmax.f32 %v4692, 0.0
        %v4697 = vmax.f32 %v4693, 0.0
        %v4698 = vadd.f32 %v1539, %v4585
        %v4699 = vadd.f32 %v1543, %v4590
        %v4700 = vadd.f32 %v1549, %v4595
        %v4701 = vadd.f32 %v1553, %v4600
        %v4702 = vmax.f32 %v4698, 0.0
        %v4703 = vmax.f32 %v4699, 0.0
        %v4704 = vmax.f32 %v4700, 0.0
        %v4705 = vmax.f32 %v4701, 0.0
        %v4706 = vadd.f32 %v1541, %v4585
        %v4707 = vadd.f32 %v1545, %v4590
        %v4708 = vadd.f32 %v1551, %v4595
        %v4709 = vadd.f32 %v1555, %v4600
        %v4710 = vmax.f32 %v4706, 0.0
        %v4711 = vmax.f32 %v4707, 0.0
        %v4712 = vmax.f32 %v4708, 0.0
        %v4713 = vmax.f32 %v4709, 0.0
        %v4714 = vadd.f32 %v1592, %v4585
        %v4715 = vadd.f32 %v1596, %v4590
        %v4716 = vadd.f32 %v1602, %v4595
        %v4717 = vadd.f32 %v1606, %v4600
        %v4718 = vmax.f32 %v4714, 0.0
        %v4719 = vmax.f32 %v4715, 0.0
        %v4720 = vmax.f32 %v4716, 0.0
        %v4721 = vmax.f32 %v4717, 0.0
        %v4722 = vadd.f32 %v1594, %v4585
        %v4723 = vadd.f32 %v1598, %v4590
        %v4724 = vadd.f32 %v1604, %v4595
        %v4725 = vadd.f32 %v1608, %v4600
        %v4726 = vmax.f32 %v4722, 0.0
        %v4727 = vmax.f32 %v4723, 0.0
        %v4728 = vmax.f32 %v4724, 0.0
        %v4729 = vmax.f32 %v4725, 0.0
        %v4730 = vadd.f32 %v1645, %v4585
        %v4731 = vadd.f32 %v1649, %v4590
        %v4732 = vadd.f32 %v1655, %v4595
        %v4733 = vadd.f32 %v1659, %v4600
        %v4734 = vmax.f32 %v4730, 0.0
        %v4735 = vmax.f32 %v4731, 0.0
        %v4736 = vmax.f32 %v4732, 0.0
        %v4737 = vmax.f32 %v4733, 0.0
        %v4738 = vadd.f32 %v1647, %v4585
        %v4739 = vadd.f32 %v1651, %v4590
        %v4740 = vadd.f32 %v1657, %v4595
        %v4741 = vadd.f32 %v1661, %v4600
        %v4742 = vmax.f32 %v4738, 0.0
        %v4743 = vmax.f32 %v4739, 0.0
        %v4744 = vmax.f32 %v4740, 0.0
        %v4745 = vmax.f32 %v4741, 0.0
        %v4746 = vadd.f32 %v1698, %v4585
        %v4747 = vadd.f32 %v1702, %v4590
        %v4748 = vadd.f32 %v1708, %v4595
        %v4749 = vadd.f32 %v1712, %v4600
        %v4750 = vmax.f32 %v4746, 0.0
        %v4751 = vmax.f32 %v4747, 0.0
        %v4752 = vmax.f32 %v4748, 0.0
        %v4753 = vmax.f32 %v4749, 0.0
        %v4754 = vadd.f32 %v1700, %v4585
        %v4755 = vadd.f32 %v1704, %v4590
        %v4756 = vadd.f32 %v1710, %v4595
        %v4757 = vadd.f32 %v1714, %v4600
        %v4758 = vmax.f32 %v4754, 0.0
        %v4759 = vmax.f32 %v4755, 0.0
        %v4760 = vmax.f32 %v4756, 0.0
        %v4761 = vmax.f32 %v4757, 0.0
        %v4762 = vadd.f32 %v1751, %v4585
        %v4763 = vadd.f32 %v1755, %v4590
        %v4764 = vadd.f32 %v1761, %v4595
        %v4765 = vadd.f32 %v1765, %v4600
        %v4766 = vmax.f32 %v4762, 0.0
        %v4767 = vmax.f32 %v4763, 0.0
        %v4768 = vmax.f32 %v4764, 0.0
        %v4769 = vmax.f32 %v4765, 0.0
        %v4770 = vadd.f32 %v1753, %v4585
        %v4771 = vadd.f32 %v1757, %v4590
        %v4772 = vadd.f32 %v1763, %v4595
        %v4773 = vadd.f32 %v1767, %v4600
        %v4774 = vmax.f32 %v4770, 0.0
        %v4775 = vmax.f32 %v4771, 0.0
        %v4776 = vmax.f32 %v4772, 0.0
        %v4777 = vmax.f32 %v4773, 0.0
        %v4778 = vadd.f32 %v1804, %v4585
        %v4779 = vadd.f32 %v1808, %v4590
        %v4780 = vadd.f32 %v1814, %v4595
        %v4781 = vadd.f32 %v1818, %v4600
        %v4782 = vmax.f32 %v4778, 0.0
        %v4783 = vmax.f32 %v4779, 0.0
        %v4784 = vmax.f32 %v4780, 0.0
        %v4785 = vmax.f32 %v4781, 0.0
        %v4786 = vadd.f32 %v1806, %v4585
        %v4787 = vadd.f32 %v1810, %v4590
        %v4788 = vadd.f32 %v1816, %v4595
        %v4789 = vadd.f32 %v1820, %v4600
        %v4790 = vmax.f32 %v4786, 0.0
        %v4791 = vmax.f32 %v4787, 0.0
        %v4792 = vmax.f32 %v4788, 0.0
        %v4793 = vmax.f32 %v4789, 0.0
        %v4794 = vadd.f32 %v1857, %v4585
        %v4795 = vadd.f32 %v1861, %v4590
        %v4796 = vadd.f32 %v1867, %v4595
        %v4797 = vadd.f32 %v1871, %v4600
        %v4798 = vmax.f32 %v4794, 0.0
        %v4799 = vmax.f32 %v4795, 0.0
        %v4800 = vmax.f32 %v4796, 0.0
        %v4801 = vmax.f32 %v4797, 0.0
        %v4802 = vadd.f32 %v1859, %v4585
        %v4803 = vadd.f32 %v1863, %v4590
        %v4804 = vadd.f32 %v1869, %v4595
        %v4805 = vadd.f32 %v1873, %v4600
        %v4806 = vmax.f32 %v4802, 0.0
        %v4807 = vmax.f32 %v4803, 0.0
        %v4808 = vmax.f32 %v4804, 0.0
        %v4809 = vmax.f32 %v4805, 0.0
        %v4810 = vadd.f32 %v1910, %v4585
        %v4811 = vadd.f32 %v1914, %v4590
        %v4812 = vadd.f32 %v1920, %v4595
        %v4813 = vadd.f32 %v1924, %v4600
        %v4814 = vmax.f32 %v4810, 0.0
        %v4815 = vmax.f32 %v4811, 0.0
        %v4816 = vmax.f32 %v4812, 0.0
        %v4817 = vmax.f32 %v4813, 0.0
        %v4818 = vadd.f32 %v1912, %v4585
        %v4819 = vadd.f32 %v1916, %v4590
        %v4820 = vadd.f32 %v1922, %v4595
        %v4821 = vadd.f32 %v1926, %v4600
        %v4822 = vmax.f32 %v4818, 0.0
        %v4823 = vmax.f32 %v4819, 0.0
        %v4824 = vmax.f32 %v4820, 0.0
        %v4825 = vmax.f32 %v4821, 0.0
        %v4826 = vadd.f32 %v1963, %v4585
        %v4827 = vadd.f32 %v1967, %v4590
        %v4828 = vadd.f32 %v1973, %v4595
        %v4829 = vadd.f32 %v1977, %v4600
        %v4830 = vmax.f32 %v4826, 0.0
        %v4831 = vmax.f32 %v4827, 0.0
        %v4832 = vmax.f32 %v4828, 0.0
        %v4833 = vmax.f32 %v4829, 0.0
        %v4834 = vadd.f32 %v1965, %v4585
        %v4835 = vadd.f32 %v1969, %v4590
        %v4836 = vadd.f32 %v1975, %v4595
        %v4837 = vadd.f32 %v1979, %v4600
        %v4838 = vmax.f32 %v4834, 0.0
        %v4839 = vmax.f32 %v4835, 0.0
        %v4840 = vmax.f32 %v4836, 0.0
        %v4841 = vmax.f32 %v4837, 0.0
        %v4842 = vadd.f32 %v2016, %v4585
        %v4843 = vadd.f32 %v2020, %v4590
        %v4844 = vadd.f32 %v2026, %v4595
        %v4845 = vadd.f32 %v2030, %v4600
        %v4846 = vmax.f32 %v4842, 0.0
        %v4847 = vmax.f32 %v4843, 0.0
        %v4848 = vmax.f32 %v4844, 0.0
        %v4849 = vmax.f32 %v4845, 0.0
        %v4850 = vadd.f32 %v2018, %v4585
        %v4851 = vadd.f32 %v2022, %v4590
        %v4852 = vadd.f32 %v2028, %v4595
        %v4853 = vadd.f32 %v2032, %v4600
        %v4854 = vmax.f32 %v4850, 0.0
        %v4855 = vmax.f32 %v4851, 0.0
        %v4856 = vmax.f32 %v4852, 0.0
        %v4857 = vmax.f32 %v4853, 0.0
        %v4858 = vadd.f32 %v2069, %v4585
        %v4859 = vadd.f32 %v2073, %v4590
        %v4860 = vadd.f32 %v2079, %v4595
        %v4861 = vadd.f32 %v2083, %v4600
        %v4862 = vmax.f32 %v4858, 0.0
        %v4863 = vmax.f32 %v4859, 0.0
        %v4864 = vmax.f32 %v4860, 0.0
        %v4865 = vmax.f32 %v4861, 0.0
        %v4866 = vadd.f32 %v2071, %v4585
        %v4867 = vadd.f32 %v2075, %v4590
        %v4868 = vadd.f32 %v2081, %v4595
        %v4869 = vadd.f32 %v2085, %v4600
        %v4870 = vmax.f32 %v4866, 0.0
        %v4871 = vmax.f32 %v4867, 0.0
        %v4872 = vmax.f32 %v4868, 0.0
        %v4873 = vmax.f32 %v4869, 0.0
        %v4874 = vadd.f32 %v2122, %v4585
        %v4875 = vadd.f32 %v2126, %v4590
        %v4876 = vadd.f32 %v2132, %v4595
        %v4877 = vadd.f32 %v2136, %v4600
        %v4878 = vmax.f32 %v4874, 0.0
        %v4879 = vmax.f32 %v4875, 0.0
        %v4880 = vmax.f32 %v4876, 0.0
        %v4881 = vmax.f32 %v4877, 0.0
        %v4882 = vadd.f32 %v2124, %v4585
        %v4883 = vadd.f32 %v2128, %v4590
        %v4884 = vadd.f32 %v2134, %v4595
        %v4885 = vadd.f32 %v2138, %v4600
        %v4886 = vmax.f32 %v4882, 0.0
        %v4887 = vmax.f32 %v4883, 0.0
        %v4888 = vmax.f32 %v4884, 0.0
        %v4889 = vmax.f32 %v4885, 0.0
        %v4890 = vadd.f32 %v2175, %v4585
        %v4891 = vadd.f32 %v2179, %v4590
        %v4892 = vadd.f32 %v2185, %v4595
        %v4893 = vadd.f32 %v2189, %v4600
        %v4894 = vmax.f32 %v4890, 0.0
        %v4895 = vmax.f32 %v4891, 0.0
        %v4896 = vmax.f32 %v4892, 0.0
        %v4897 = vmax.f32 %v4893, 0.0
        %v4898 = vadd.f32 %v2177, %v4585
        %v4899 = vadd.f32 %v2181, %v4590
        %v4900 = vadd.f32 %v2187, %v4595
        %v4901 = vadd.f32 %v2191, %v4600
        %v4902 = vmax.f32 %v4898, 0.0
        %v4903 = vmax.f32 %v4899, 0.0
        %v4904 = vmax.f32 %v4900, 0.0
        %v4905 = vmax.f32 %v4901, 0.0
        %v4906 = vadd.f32 %v2228, %v4585
        %v4907 = vadd.f32 %v2232, %v4590
        %v4908 = vadd.f32 %v2238, %v4595
        %v4909 = vadd.f32 %v2242, %v4600
        %v4910 = vmax.f32 %v4906, 0.0
        %v4911 = vmax.f32 %v4907, 0.0
        %v4912 = vmax.f32 %v4908, 0.0
        %v4913 = vmax.f32 %v4909, 0.0
        %v4914 = vadd.f32 %v2230, %v4585
        %v4915 = vadd.f32 %v2234, %v4590
        %v4916 = vadd.f32 %v2240, %v4595
        %v4917 = vadd.f32 %v2244, %v4600
        %v4918 = vmax.f32 %v4914, 0.0
        %v4919 = vmax.f32 %v4915, 0.0
        %v4920 = vmax.f32 %v4916, 0.0
        %v4921 = vmax.f32 %v4917, 0.0
        %v4922 = vadd.f32 %v2281, %v4585
        %v4923 = vadd.f32 %v2285, %v4590
        %v4924 = vadd.f32 %v2291, %v4595
        %v4925 = vadd.f32 %v2295, %v4600
        %v4926 = vmax.f32 %v4922, 0.0
        %v4927 = vmax.f32 %v4923, 0.0
        %v4928 = vmax.f32 %v4924, 0.0
        %v4929 = vmax.f32 %v4925, 0.0
        %v4930 = vadd.f32 %v2283, %v4585
        %v4931 = vadd.f32 %v2287, %v4590
        %v4932 = vadd.f32 %v2293, %v4595
        %v4933 = vadd.f32 %v2297, %v4600
        %v4934 = vmax.f32 %v4930, 0.0
        %v4935 = vmax.f32 %v4931, 0.0
        %v4936 = vmax.f32 %v4932, 0.0
        %v4937 = vmax.f32 %v4933, 0.0
        %v4938 = vadd.f32 %v2334, %v4585
        %v4939 = vadd.f32 %v2338, %v4590
        %v4940 = vadd.f32 %v2344, %v4595
        %v4941 = vadd.f32 %v2348, %v4600
        %v4942 = vmax.f32 %v4938, 0.0
        %v4943 = vmax.f32 %v4939, 0.0
        %v4944 = vmax.f32 %v4940, 0.0
        %v4945 = vmax.f32 %v4941, 0.0
        %v4946 = vadd.f32 %v2336, %v4585
        %v4947 = vadd.f32 %v2340, %v4590
        %v4948 = vadd.f32 %v2346, %v4595
        %v4949 = vadd.f32 %v2350, %v4600
        %v4950 = vmax.f32 %v4946, 0.0
        %v4951 = vmax.f32 %v4947, 0.0
        %v4952 = vmax.f32 %v4948, 0.0
        %v4953 = vmax.f32 %v4949, 0.0
        %v4954 = vadd.f32 %v2387, %v4585
        %v4955 = vadd.f32 %v2391, %v4590
        %v4956 = vadd.f32 %v2397, %v4595
        %v4957 = vadd.f32 %v2401, %v4600
        %v4958 = vmax.f32 %v4954, 0.0
        %v4959 = vmax.f32 %v4955, 0.0
        %v4960 = vmax.f32 %v4956, 0.0
        %v4961 = vmax.f32 %v4957, 0.0
        %v4962 = vadd.f32 %v2389, %v4585
        %v4963 = vadd.f32 %v2393, %v4590
        %v4964 = vadd.f32 %v2399, %v4595
        %v4965 = vadd.f32 %v2403, %v4600
        %v4966 = vmax.f32 %v4962, 0.0
        %v4967 = vmax.f32 %v4963, 0.0
        %v4968 = vmax.f32 %v4964, 0.0
        %v4969 = vmax.f32 %v4965, 0.0
        %v4970 = vadd.f32 %v2440, %v4585
        %v4971 = vadd.f32 %v2444, %v4590
        %v4972 = vadd.f32 %v2450, %v4595
        %v4973 = vadd.f32 %v2454, %v4600
        %v4974 = vmax.f32 %v4970, 0.0
        %v4975 = vmax.f32 %v4971, 0.0
        %v4976 = vmax.f32 %v4972, 0.0
        %v4977 = vmax.f32 %v4973, 0.0
        %v4978 = vadd.f32 %v2442, %v4585
        %v4979 = vadd.f32 %v2446, %v4590
        %v4980 = vadd.f32 %v2452, %v4595
        %v4981 = vadd.f32 %v2456, %v4600
        %v4982 = vmax.f32 %v4978, 0.0
        %v4983 = vmax.f32 %v4979, 0.0
        %v4984 = vmax.f32 %v4980, 0.0
        %v4985 = vmax.f32 %v4981, 0.0
        %v4986 = vadd.f32 %v2493, %v4585
        %v4987 = vadd.f32 %v2497, %v4590
        %v4988 = vadd.f32 %v2503, %v4595
        %v4989 = vadd.f32 %v2507, %v4600
        %v4990 = vmax.f32 %v4986, 0.0
        %v4991 = vmax.f32 %v4987, 0.0
        %v4992 = vmax.f32 %v4988, 0.0
        %v4993 = vmax.f32 %v4989, 0.0
        %v4994 = vadd.f32 %v2495, %v4585
        %v4995 = vadd.f32 %v2499, %v4590
        %v4996 = vadd.f32 %v2505, %v4595
        %v4997 = vadd.f32 %v2509, %v4600
        %v4998 = vmax.f32 %v4994, 0.0
        %v4999 = vmax.f32 %v4995, 0.0
        %v5000 = vmax.f32 %v4996, 0.0
        %v5001 = vmax.f32 %v4997, 0.0
        %v5002 = vadd.f32 %v2546, %v4585
        %v5003 = vadd.f32 %v2550, %v4590
        %v5004 = vadd.f32 %v2556, %v4595
        %v5005 = vadd.f32 %v2560, %v4600
        %v5006 = vmax.f32 %v5002, 0.0
        %v5007 = vmax.f32 %v5003, 0.0
        %v5008 = vmax.f32 %v5004, 0.0
        %v5009 = vmax.f32 %v5005, 0.0
        %v5010 = vadd.f32 %v2548, %v4585
        %v5011 = vadd.f32 %v2552, %v4590
        %v5012 = vadd.f32 %v2558, %v4595
        %v5013 = vadd.f32 %v2562, %v4600
        %v5014 = vmax.f32 %v5010, 0.0
        %v5015 = vmax.f32 %v5011, 0.0
        %v5016 = vmax.f32 %v5012, 0.0
        %v5017 = vmax.f32 %v5013, 0.0
        %v5018 = vadd.f32 %v2599, %v4585
        %v5019 = vadd.f32 %v2603, %v4590
        %v5020 = vadd.f32 %v2609, %v4595
        %v5021 = vadd.f32 %v2613, %v4600
        %v5022 = vmax.f32 %v5018, 0.0
        %v5023 = vmax.f32 %v5019, 0.0
        %v5024 = vmax.f32 %v5020, 0.0
        %v5025 = vmax.f32 %v5021, 0.0
        %v5026 = vadd.f32 %v2601, %v4585
        %v5027 = vadd.f32 %v2605, %v4590
        %v5028 = vadd.f32 %v2611, %v4595
        %v5029 = vadd.f32 %v2615, %v4600
        %v5030 = vmax.f32 %v5026, 0.0
        %v5031 = vmax.f32 %v5027, 0.0
        %v5032 = vmax.f32 %v5028, 0.0
        %v5033 = vmax.f32 %v5029, 0.0
        %v5034 = vadd.f32 %v2652, %v4585
        %v5035 = vadd.f32 %v2656, %v4590
        %v5036 = vadd.f32 %v2662, %v4595
        %v5037 = vadd.f32 %v2666, %v4600
        %v5038 = vmax.f32 %v5034, 0.0
        %v5039 = vmax.f32 %v5035, 0.0
        %v5040 = vmax.f32 %v5036, 0.0
        %v5041 = vmax.f32 %v5037, 0.0
        %v5042 = vadd.f32 %v2654, %v4585
        %v5043 = vadd.f32 %v2658, %v4590
        %v5044 = vadd.f32 %v2664, %v4595
        %v5045 = vadd.f32 %v2668, %v4600
        %v5046 = vmax.f32 %v5042, 0.0
        %v5047 = vmax.f32 %v5043, 0.0
        %v5048 = vmax.f32 %v5044, 0.0
        %v5049 = vmax.f32 %v5045, 0.0
        %v5050 = vadd.f32 %v2705, %v4585
        %v5051 = vadd.f32 %v2709, %v4590
        %v5052 = vadd.f32 %v2715, %v4595
        %v5053 = vadd.f32 %v2719, %v4600
        %v5054 = vmax.f32 %v5050, 0.0
        %v5055 = vmax.f32 %v5051, 0.0
        %v5056 = vmax.f32 %v5052, 0.0
        %v5057 = vmax.f32 %v5053, 0.0
        %v5058 = vadd.f32 %v2707, %v4585
        %v5059 = vadd.f32 %v2711, %v4590
        %v5060 = vadd.f32 %v2717, %v4595
        %v5061 = vadd.f32 %v2721, %v4600
        %v5062 = vmax.f32 %v5058, 0.0
        %v5063 = vmax.f32 %v5059, 0.0
        %v5064 = vmax.f32 %v5060, 0.0
        %v5065 = vmax.f32 %v5061, 0.0
        %v5066 = vadd.f32 %v2758, %v4585
        %v5067 = vadd.f32 %v2762, %v4590
        %v5068 = vadd.f32 %v2768, %v4595
        %v5069 = vadd.f32 %v2772, %v4600
        %v5070 = vmax.f32 %v5066, 0.0
        %v5071 = vmax.f32 %v5067, 0.0
        %v5072 = vmax.f32 %v5068, 0.0
        %v5073 = vmax.f32 %v5069, 0.0
        %v5074 = vadd.f32 %v2760, %v4585
        %v5075 = vadd.f32 %v2764, %v4590
        %v5076 = vadd.f32 %v2770, %v4595
        %v5077 = vadd.f32 %v2774, %v4600
        %v5078 = vmax.f32 %v5074, 0.0
        %v5079 = vmax.f32 %v5075, 0.0
        %v5080 = vmax.f32 %v5076, 0.0
        %v5081 = vmax.f32 %v5077, 0.0
        %v5082 = vadd.f32 %v2811, %v4585
        %v5083 = vadd.f32 %v2815, %v4590
        %v5084 = vadd.f32 %v2821, %v4595
        %v5085 = vadd.f32 %v2825, %v4600
        %v5086 = vmax.f32 %v5082, 0.0
        %v5087 = vmax.f32 %v5083, 0.0
        %v5088 = vmax.f32 %v5084, 0.0
        %v5089 = vmax.f32 %v5085, 0.0
        %v5090 = vadd.f32 %v2813, %v4585
        %v5091 = vadd.f32 %v2817, %v4590
        %v5092 = vadd.f32 %v2823, %v4595
        %v5093 = vadd.f32 %v2827, %v4600
        %v5094 = vmax.f32 %v5090, 0.0
        %v5095 = vmax.f32 %v5091, 0.0
        %v5096 = vmax.f32 %v5092, 0.0
        %v5097 = vmax.f32 %v5093, 0.0
        %v5098 = vadd.f32 %v2864, %v4585
        %v5099 = vadd.f32 %v2868, %v4590
        %v5100 = vadd.f32 %v2874, %v4595
        %v5101 = vadd.f32 %v2878, %v4600
        %v5102 = vmax.f32 %v5098, 0.0
        %v5103 = vmax.f32 %v5099, 0.0
        %v5104 = vmax.f32 %v5100, 0.0
        %v5105 = vmax.f32 %v5101, 0.0
        %v5106 = vadd.f32 %v2866, %v4585
        %v5107 = vadd.f32 %v2870, %v4590
        %v5108 = vadd.f32 %v2876, %v4595
        %v5109 = vadd.f32 %v2880, %v4600
        %v5110 = vmax.f32 %v5106, 0.0
        %v5111 = vmax.f32 %v5107, 0.0
        %v5112 = vmax.f32 %v5108, 0.0
        %v5113 = vmax.f32 %v5109, 0.0
        %v5114 = vadd.f32 %v2917, %v4585
        %v5115 = vadd.f32 %v2921, %v4590
        %v5116 = vadd.f32 %v2927, %v4595
        %v5117 = vadd.f32 %v2931, %v4600
        %v5118 = vmax.f32 %v5114, 0.0
        %v5119 = vmax.f32 %v5115, 0.0
        %v5120 = vmax.f32 %v5116, 0.0
        %v5121 = vmax.f32 %v5117, 0.0
        %v5122 = vadd.f32 %v2919, %v4585
        %v5123 = vadd.f32 %v2923, %v4590
        %v5124 = vadd.f32 %v2929, %v4595
        %v5125 = vadd.f32 %v2933, %v4600
        %v5126 = vmax.f32 %v5122, 0.0
        %v5127 = vmax.f32 %v5123, 0.0
        %v5128 = vmax.f32 %v5124, 0.0
        %v5129 = vmax.f32 %v5125, 0.0
        %v5130 = vadd.f32 %v2970, %v4585
        %v5131 = vadd.f32 %v2974, %v4590
        %v5132 = vadd.f32 %v2980, %v4595
        %v5133 = vadd.f32 %v2984, %v4600
        %v5134 = vmax.f32 %v5130, 0.0
        %v5135 = vmax.f32 %v5131, 0.0
        %v5136 = vmax.f32 %v5132, 0.0
        %v5137 = vmax.f32 %v5133, 0.0
        %v5138 = vadd.f32 %v2972, %v4585
        %v5139 = vadd.f32 %v2976, %v4590
        %v5140 = vadd.f32 %v2982, %v4595
        %v5141 = vadd.f32 %v2986, %v4600
        %v5142 = vmax.f32 %v5138, 0.0
        %v5143 = vmax.f32 %v5139, 0.0
        %v5144 = vmax.f32 %v5140, 0.0
        %v5145 = vmax.f32 %v5141, 0.0
        %v5146 = vadd.f32 %v3023, %v4585
        %v5147 = vadd.f32 %v3027, %v4590
        %v5148 = vadd.f32 %v3033, %v4595
        %v5149 = vadd.f32 %v3037, %v4600
        %v5150 = vmax.f32 %v5146, 0.0
        %v5151 = vmax.f32 %v5147, 0.0
        %v5152 = vmax.f32 %v5148, 0.0
        %v5153 = vmax.f32 %v5149, 0.0
        %v5154 = vadd.f32 %v3025, %v4585
        %v5155 = vadd.f32 %v3029, %v4590
        %v5156 = vadd.f32 %v3035, %v4595
        %v5157 = vadd.f32 %v3039, %v4600
        %v5158 = vmax.f32 %v5154, 0.0
        %v5159 = vmax.f32 %v5155, 0.0
        %v5160 = vmax.f32 %v5156, 0.0
        %v5161 = vmax.f32 %v5157, 0.0
        %v5162 = vadd.f32 %v3076, %v4585
        %v5163 = vadd.f32 %v3080, %v4590
        %v5164 = vadd.f32 %v3086, %v4595
        %v5165 = vadd.f32 %v3090, %v4600
        %v5166 = vmax.f32 %v5162, 0.0
        %v5167 = vmax.f32 %v5163, 0.0
        %v5168 = vmax.f32 %v5164, 0.0
        %v5169 = vmax.f32 %v5165, 0.0
        %v5170 = vadd.f32 %v3078, %v4585
        %v5171 = vadd.f32 %v3082, %v4590
        %v5172 = vadd.f32 %v3088, %v4595
        %v5173 = vadd.f32 %v3092, %v4600
        %v5174 = vmax.f32 %v5170, 0.0
        %v5175 = vmax.f32 %v5171, 0.0
        %v5176 = vmax.f32 %v5172, 0.0
        %v5177 = vmax.f32 %v5173, 0.0
        %v5178 = vadd.f32 %v3129, %v4585
        %v5179 = vadd.f32 %v3133, %v4590
        %v5180 = vadd.f32 %v3139, %v4595
        %v5181 = vadd.f32 %v3143, %v4600
        %v5182 = vmax.f32 %v5178, 0.0
        %v5183 = vmax.f32 %v5179, 0.0
        %v5184 = vmax.f32 %v5180, 0.0
        %v5185 = vmax.f32 %v5181, 0.0
        %v5186 = vadd.f32 %v3131, %v4585
        %v5187 = vadd.f32 %v3135, %v4590
        %v5188 = vadd.f32 %v3141, %v4595
        %v5189 = vadd.f32 %v3145, %v4600
        %v5190 = vmax.f32 %v5186, 0.0
        %v5191 = vmax.f32 %v5187, 0.0
        %v5192 = vmax.f32 %v5188, 0.0
        %v5193 = vmax.f32 %v5189, 0.0
        %v5194 = vadd.f32 %v3182, %v4585
        %v5195 = vadd.f32 %v3186, %v4590
        %v5196 = vadd.f32 %v3192, %v4595
        %v5197 = vadd.f32 %v3196, %v4600
        %v5198 = vmax.f32 %v5194, 0.0
        %v5199 = vmax.f32 %v5195, 0.0
        %v5200 = vmax.f32 %v5196, 0.0
        %v5201 = vmax.f32 %v5197, 0.0
        %v5202 = vadd.f32 %v3184, %v4585
        %v5203 = vadd.f32 %v3188, %v4590
        %v5204 = vadd.f32 %v3194, %v4595
        %v5205 = vadd.f32 %v3198, %v4600
        %v5206 = vmax.f32 %v5202, 0.0
        %v5207 = vmax.f32 %v5203, 0.0
        %v5208 = vmax.f32 %v5204, 0.0
        %v5209 = vmax.f32 %v5205, 0.0
        %v5210 = vadd.f32 %v3235, %v4585
        %v5211 = vadd.f32 %v3239, %v4590
        %v5212 = vadd.f32 %v3245, %v4595
        %v5213 = vadd.f32 %v3249, %v4600
        %v5214 = vmax.f32 %v5210, 0.0
        %v5215 = vmax.f32 %v5211, 0.0
        %v5216 = vmax.f32 %v5212, 0.0
        %v5217 = vmax.f32 %v5213, 0.0
        %v5218 = vadd.f32 %v3237, %v4585
        %v5219 = vadd.f32 %v3241, %v4590
        %v5220 = vadd.f32 %v3247, %v4595
        %v5221 = vadd.f32 %v3251, %v4600
        %v5222 = vmax.f32 %v5218, 0.0
        %v5223 = vmax.f32 %v5219, 0.0
        %v5224 = vmax.f32 %v5220, 0.0
        %v5225 = vmax.f32 %v5221, 0.0
        %v5226 = vadd.f32 %v3288, %v4585
        %v5227 = vadd.f32 %v3292, %v4590
        %v5228 = vadd.f32 %v3298, %v4595
        %v5229 = vadd.f32 %v3302, %v4600
        %v5230 = vmax.f32 %v5226, 0.0
        %v5231 = vmax.f32 %v5227, 0.0
        %v5232 = vmax.f32 %v5228, 0.0
        %v5233 = vmax.f32 %v5229, 0.0
        %v5234 = vadd.f32 %v3290, %v4585
        %v5235 = vadd.f32 %v3294, %v4590
        %v5236 = vadd.f32 %v3300, %v4595
        %v5237 = vadd.f32 %v3304, %v4600
        %v5238 = vmax.f32 %v5234, 0.0
        %v5239 = vmax.f32 %v5235, 0.0
        %v5240 = vmax.f32 %v5236, 0.0
        %v5241 = vmax.f32 %v5237, 0.0
        %v5242 = vadd.f32 %v3341, %v4585
        %v5243 = vadd.f32 %v3345, %v4590
        %v5244 = vadd.f32 %v3351, %v4595
        %v5245 = vadd.f32 %v3355, %v4600
        %v5246 = vmax.f32 %v5242, 0.0
        %v5247 = vmax.f32 %v5243, 0.0
        %v5248 = vmax.f32 %v5244, 0.0
        %v5249 = vmax.f32 %v5245, 0.0
        %v5250 = vadd.f32 %v3343, %v4585
        %v5251 = vadd.f32 %v3347, %v4590
        %v5252 = vadd.f32 %v3353, %v4595
        %v5253 = vadd.f32 %v3357, %v4600
        %v5254 = vmax.f32 %v5250, 0.0
        %v5255 = vmax.f32 %v5251, 0.0
        %v5256 = vmax.f32 %v5252, 0.0
        %v5257 = vmax.f32 %v5253, 0.0
        %v5258 = vadd.f32 %v3394, %v4585
        %v5259 = vadd.f32 %v3398, %v4590
        %v5260 = vadd.f32 %v3404, %v4595
        %v5261 = vadd.f32 %v3408, %v4600
        %v5262 = vmax.f32 %v5258, 0.0
        %v5263 = vmax.f32 %v5259, 0.0
        %v5264 = vmax.f32 %v5260, 0.0
        %v5265 = vmax.f32 %v5261, 0.0
        %v5266 = vadd.f32 %v3396, %v4585
        %v5267 = vadd.f32 %v3400, %v4590
        %v5268 = vadd.f32 %v3406, %v4595
        %v5269 = vadd.f32 %v3410, %v4600
        %v5270 = vmax.f32 %v5266, 0.0
        %v5271 = vmax.f32 %v5267, 0.0
        %v5272 = vmax.f32 %v5268, 0.0
        %v5273 = vmax.f32 %v5269, 0.0
        %v5274 = vadd.f32 %v3447, %v4585
        %v5275 = vadd.f32 %v3451, %v4590
        %v5276 = vadd.f32 %v3457, %v4595
        %v5277 = vadd.f32 %v3461, %v4600
        %v5278 = vmax.f32 %v5274, 0.0
        %v5279 = vmax.f32 %v5275, 0.0
        %v5280 = vmax.f32 %v5276, 0.0
        %v5281 = vmax.f32 %v5277, 0.0
        %v5282 = vadd.f32 %v3449, %v4585
        %v5283 = vadd.f32 %v3453, %v4590
        %v5284 = vadd.f32 %v3459, %v4595
        %v5285 = vadd.f32 %v3463, %v4600
        %v5286 = vmax.f32 %v5282, 0.0
        %v5287 = vmax.f32 %v5283, 0.0
        %v5288 = vmax.f32 %v5284, 0.0
        %v5289 = vmax.f32 %v5285, 0.0
        %v5290 = vadd.f32 %v3500, %v4585
        %v5291 = vadd.f32 %v3504, %v4590
        %v5292 = vadd.f32 %v3510, %v4595
        %v5293 = vadd.f32 %v3514, %v4600
        %v5294 = vmax.f32 %v5290, 0.0
        %v5295 = vmax.f32 %v5291, 0.0
        %v5296 = vmax.f32 %v5292, 0.0
        %v5297 = vmax.f32 %v5293, 0.0
        %v5298 = vadd.f32 %v3502, %v4585
        %v5299 = vadd.f32 %v3506, %v4590
        %v5300 = vadd.f32 %v3512, %v4595
        %v5301 = vadd.f32 %v3516, %v4600
        %v5302 = vmax.f32 %v5298, 0.0
        %v5303 = vmax.f32 %v5299, 0.0
        %v5304 = vmax.f32 %v5300, 0.0
        %v5305 = vmax.f32 %v5301, 0.0
        %v5306 = vadd.f32 %v3553, %v4585
        %v5307 = vadd.f32 %v3557, %v4590
        %v5308 = vadd.f32 %v3563, %v4595
        %v5309 = vadd.f32 %v3567, %v4600
        %v5310 = vmax.f32 %v5306, 0.0
        %v5311 = vmax.f32 %v5307, 0.0
        %v5312 = vmax.f32 %v5308, 0.0
        %v5313 = vmax.f32 %v5309, 0.0
        %v5314 = vadd.f32 %v3555, %v4585
        %v5315 = vadd.f32 %v3559, %v4590
        %v5316 = vadd.f32 %v3565, %v4595
        %v5317 = vadd.f32 %v3569, %v4600
        %v5318 = vmax.f32 %v5314, 0.0
        %v5319 = vmax.f32 %v5315, 0.0
        %v5320 = vmax.f32 %v5316, 0.0
        %v5321 = vmax.f32 %v5317, 0.0
        %v5322 = vadd.f32 %v3606, %v4585
        %v5323 = vadd.f32 %v3610, %v4590
        %v5324 = vadd.f32 %v3616, %v4595
        %v5325 = vadd.f32 %v3620, %v4600
        %v5326 = vmax.f32 %v5322, 0.0
        %v5327 = vmax.f32 %v5323, 0.0
        %v5328 = vmax.f32 %v5324, 0.0
        %v5329 = vmax.f32 %v5325, 0.0
        %v5330 = vadd.f32 %v3608, %v4585
        %v5331 = vadd.f32 %v3612, %v4590
        %v5332 = vadd.f32 %v3618, %v4595
        %v5333 = vadd.f32 %v3622, %v4600
        %v5334 = vmax.f32 %v5330, 0.0
        %v5335 = vmax.f32 %v5331, 0.0
        %v5336 = vmax.f32 %v5332, 0.0
        %v5337 = vmax.f32 %v5333, 0.0
        %v5338 = vadd.f32 %v3659, %v4585
        %v5339 = vadd.f32 %v3663, %v4590
        %v5340 = vadd.f32 %v3669, %v4595
        %v5341 = vadd.f32 %v3673, %v4600
        %v5342 = vmax.f32 %v5338, 0.0
        %v5343 = vmax.f32 %v5339, 0.0
        %v5344 = vmax.f32 %v5340, 0.0
        %v5345 = vmax.f32 %v5341, 0.0
        %v5346 = vadd.f32 %v3661, %v4585
        %v5347 = vadd.f32 %v3665, %v4590
        %v5348 = vadd.f32 %v3671, %v4595
        %v5349 = vadd.f32 %v3675, %v4600
        %v5350 = vmax.f32 %v5346, 0.0
        %v5351 = vmax.f32 %v5347, 0.0
        %v5352 = vmax.f32 %v5348, 0.0
        %v5353 = vmax.f32 %v5349, 0.0
        %v5354 = vadd.f32 %v3712, %v4585
        %v5355 = vadd.f32 %v3716, %v4590
        %v5356 = vadd.f32 %v3722, %v4595
        %v5357 = vadd.f32 %v3726, %v4600
        %v5358 = vmax.f32 %v5354, 0.0
        %v5359 = vmax.f32 %v5355, 0.0
        %v5360 = vmax.f32 %v5356, 0.0
        %v5361 = vmax.f32 %v5357, 0.0
        %v5362 = vadd.f32 %v3714, %v4585
        %v5363 = vadd.f32 %v3718, %v4590
        %v5364 = vadd.f32 %v3724, %v4595
        %v5365 = vadd.f32 %v3728, %v4600
        %v5366 = vmax.f32 %v5362, 0.0
        %v5367 = vmax.f32 %v5363, 0.0
        %v5368 = vmax.f32 %v5364, 0.0
        %v5369 = vmax.f32 %v5365, 0.0
        %v5370 = vadd.f32 %v3765, %v4585
        %v5371 = vadd.f32 %v3769, %v4590
        %v5372 = vadd.f32 %v3775, %v4595
        %v5373 = vadd.f32 %v3779, %v4600
        %v5374 = vmax.f32 %v5370, 0.0
        %v5375 = vmax.f32 %v5371, 0.0
        %v5376 = vmax.f32 %v5372, 0.0
        %v5377 = vmax.f32 %v5373, 0.0
        %v5378 = vadd.f32 %v3767, %v4585
        %v5379 = vadd.f32 %v3771, %v4590
        %v5380 = vadd.f32 %v3777, %v4595
        %v5381 = vadd.f32 %v3781, %v4600
        %v5382 = vmax.f32 %v5378, 0.0
        %v5383 = vmax.f32 %v5379, 0.0
        %v5384 = vmax.f32 %v5380, 0.0
        %v5385 = vmax.f32 %v5381, 0.0
        %v5386 = vadd.f32 %v3818, %v4585
        %v5387 = vadd.f32 %v3822, %v4590
        %v5388 = vadd.f32 %v3828, %v4595
        %v5389 = vadd.f32 %v3832, %v4600
        %v5390 = vmax.f32 %v5386, 0.0
        %v5391 = vmax.f32 %v5387, 0.0
        %v5392 = vmax.f32 %v5388, 0.0
        %v5393 = vmax.f32 %v5389, 0.0
        %v5394 = vadd.f32 %v3820, %v4585
        %v5395 = vadd.f32 %v3824, %v4590
        %v5396 = vadd.f32 %v3830, %v4595
        %v5397 = vadd.f32 %v3834, %v4600
        %v5398 = vmax.f32 %v5394, 0.0
        %v5399 = vmax.f32 %v5395, 0.0
        %v5400 = vmax.f32 %v5396, 0.0
        %v5401 = vmax.f32 %v5397, 0.0
        %v5402 = vadd.f32 %v3871, %v4585
        %v5403 = vadd.f32 %v3875, %v4590
        %v5404 = vadd.f32 %v3881, %v4595
        %v5405 = vadd.f32 %v3885, %v4600
        %v5406 = vmax.f32 %v5402, 0.0
        %v5407 = vmax.f32 %v5403, 0.0
        %v5408 = vmax.f32 %v5404, 0.0
        %v5409 = vmax.f32 %v5405, 0.0
        %v5410 = vadd.f32 %v3873, %v4585
        %v5411 = vadd.f32 %v3877, %v4590
        %v5412 = vadd.f32 %v3883, %v4595
        %v5413 = vadd.f32 %v3887, %v4600
        %v5414 = vmax.f32 %v5410, 0.0
        %v5415 = vmax.f32 %v5411, 0.0
        %v5416 = vmax.f32 %v5412, 0.0
        %v5417 = vmax.f32 %v5413, 0.0
        %v5418 = vadd.f32 %v3924, %v4585
        %v5419 = vadd.f32 %v3928, %v4590
        %v5420 = vadd.f32 %v3934, %v4595
        %v5421 = vadd.f32 %v3938, %v4600
        %v5422 = vmax.f32 %v5418, 0.0
        %v5423 = vmax.f32 %v5419, 0.0
        %v5424 = vmax.f32 %v5420, 0.0
        %v5425 = vmax.f32 %v5421, 0.0
        %v5426 = vadd.f32 %v3926, %v4585
        %v5427 = vadd.f32 %v3930, %v4590
        %v5428 = vadd.f32 %v3936, %v4595
        %v5429 = vadd.f32 %v3940, %v4600
        %v5430 = vmax.f32 %v5426, 0.0
        %v5431 = vmax.f32 %v5427, 0.0
        %v5432 = vmax.f32 %v5428, 0.0
        %v5433 = vmax.f32 %v5429, 0.0
        %v5434 = vadd.f32 %v3977, %v4585
        %v5435 = vadd.f32 %v3981, %v4590
        %v5436 = vadd.f32 %v3987, %v4595
        %v5437 = vadd.f32 %v3991, %v4600
        %v5438 = vmax.f32 %v5434, 0.0
        %v5439 = vmax.f32 %v5435, 0.0
        %v5440 = vmax.f32 %v5436, 0.0
        %v5441 = vmax.f32 %v5437, 0.0
        %v5442 = vadd.f32 %v3979, %v4585
        %v5443 = vadd.f32 %v3983, %v4590
        %v5444 = vadd.f32 %v3989, %v4595
        %v5445 = vadd.f32 %v3993, %v4600
        %v5446 = vmax.f32 %v5442, 0.0
        %v5447 = vmax.f32 %v5443, 0.0
        %v5448 = vmax.f32 %v5444, 0.0
        %v5449 = vmax.f32 %v5445, 0.0
        %v5450 = vadd.f32 %v4030, %v4585
        %v5451 = vadd.f32 %v4034, %v4590
        %v5452 = vadd.f32 %v4040, %v4595
        %v5453 = vadd.f32 %v4044, %v4600
        %v5454 = vmax.f32 %v5450, 0.0
        %v5455 = vmax.f32 %v5451, 0.0
        %v5456 = vmax.f32 %v5452, 0.0
        %v5457 = vmax.f32 %v5453, 0.0
        %v5458 = vadd.f32 %v4032, %v4585
        %v5459 = vadd.f32 %v4036, %v4590
        %v5460 = vadd.f32 %v4042, %v4595
        %v5461 = vadd.f32 %v4046, %v4600
        %v5462 = vmax.f32 %v5458, 0.0
        %v5463 = vmax.f32 %v5459, 0.0
        %v5464 = vmax.f32 %v5460, 0.0
        %v5465 = vmax.f32 %v5461, 0.0
        %v5466 = vadd.f32 %v4083, %v4585
        %v5467 = vadd.f32 %v4087, %v4590
        %v5468 = vadd.f32 %v4093, %v4595
        %v5469 = vadd.f32 %v4097, %v4600
        %v5470 = vmax.f32 %v5466, 0.0
        %v5471 = vmax.f32 %v5467, 0.0
        %v5472 = vmax.f32 %v5468, 0.0
        %v5473 = vmax.f32 %v5469, 0.0
        %v5474 = vadd.f32 %v4085, %v4585
        %v5475 = vadd.f32 %v4089, %v4590
        %v5476 = vadd.f32 %v4095, %v4595
        %v5477 = vadd.f32 %v4099, %v4600
        %v5478 = vmax.f32 %v5474, 0.0
        %v5479 = vmax.f32 %v5475, 0.0
        %v5480 = vmax.f32 %v5476, 0.0
        %v5481 = vmax.f32 %v5477, 0.0
        %v5482 = vadd.f32 %v4136, %v4585
        %v5483 = vadd.f32 %v4140, %v4590
        %v5484 = vadd.f32 %v4146, %v4595
        %v5485 = vadd.f32 %v4150, %v4600
        %v5486 = vmax.f32 %v5482, 0.0
        %v5487 = vmax.f32 %v5483, 0.0
        %v5488 = vmax.f32 %v5484, 0.0
        %v5489 = vmax.f32 %v5485, 0.0
        %v5490 = vadd.f32 %v4138, %v4585
        %v5491 = vadd.f32 %v4142, %v4590
        %v5492 = vadd.f32 %v4148, %v4595
        %v5493 = vadd.f32 %v4152, %v4600
        %v5494 = vmax.f32 %v5490, 0.0
        %v5495 = vmax.f32 %v5491, 0.0
        %v5496 = vmax.f32 %v5492, 0.0
        %v5497 = vmax.f32 %v5493, 0.0
        %v5498 = vadd.f32 %v4189, %v4585
        %v5499 = vadd.f32 %v4193, %v4590
        %v5500 = vadd.f32 %v4199, %v4595
        %v5501 = vadd.f32 %v4203, %v4600
        %v5502 = vmax.f32 %v5498, 0.0
        %v5503 = vmax.f32 %v5499, 0.0
        %v5504 = vmax.f32 %v5500, 0.0
        %v5505 = vmax.f32 %v5501, 0.0
        %v5506 = vadd.f32 %v4191, %v4585
        %v5507 = vadd.f32 %v4195, %v4590
        %v5508 = vadd.f32 %v4201, %v4595
        %v5509 = vadd.f32 %v4205, %v4600
        %v5510 = vmax.f32 %v5506, 0.0
        %v5511 = vmax.f32 %v5507, 0.0
        %v5512 = vmax.f32 %v5508, 0.0
        %v5513 = vmax.f32 %v5509, 0.0
        %v5514 = vadd.f32 %v4242, %v4585
        %v5515 = vadd.f32 %v4246, %v4590
        %v5516 = vadd.f32 %v4252, %v4595
        %v5517 = vadd.f32 %v4256, %v4600
        %v5518 = vmax.f32 %v5514, 0.0
        %v5519 = vmax.f32 %v5515, 0.0
        %v5520 = vmax.f32 %v5516, 0.0
        %v5521 = vmax.f32 %v5517, 0.0
        %v5522 = vadd.f32 %v4244, %v4585
        %v5523 = vadd.f32 %v4248, %v4590
        %v5524 = vadd.f32 %v4254, %v4595
        %v5525 = vadd.f32 %v4258, %v4600
        %v5526 = vmax.f32 %v5522, 0.0
        %v5527 = vmax.f32 %v5523, 0.0
        %v5528 = vmax.f32 %v5524, 0.0
        %v5529 = vmax.f32 %v5525, 0.0
        %v5530 = vadd.f32 %v4295, %v4585
        %v5531 = vadd.f32 %v4299, %v4590
        %v5532 = vadd.f32 %v4305, %v4595
        %v5533 = vadd.f32 %v4309, %v4600
        %v5534 = vmax.f32 %v5530, 0.0
        %v5535 = vmax.f32 %v5531, 0.0
        %v5536 = vmax.f32 %v5532, 0.0
        %v5537 = vmax.f32 %v5533, 0.0
        %v5538 = vadd.f32 %v4297, %v4585
        %v5539 = vadd.f32 %v4301, %v4590
        %v5540 = vadd.f32 %v4307, %v4595
        %v5541 = vadd.f32 %v4311, %v4600
        %v5542 = vmax.f32 %v5538, 0.0
        %v5543 = vmax.f32 %v5539, 0.0
        %v5544 = vmax.f32 %v5540, 0.0
        %v5545 = vmax.f32 %v5541, 0.0
        %v5546 = vadd.f32 %v4348, %v4585
        %v5547 = vadd.f32 %v4352, %v4590
        %v5548 = vadd.f32 %v4358, %v4595
        %v5549 = vadd.f32 %v4362, %v4600
        %v5550 = vmax.f32 %v5546, 0.0
        %v5551 = vmax.f32 %v5547, 0.0
        %v5552 = vmax.f32 %v5548, 0.0
        %v5553 = vmax.f32 %v5549, 0.0
        %v5554 = vadd.f32 %v4350, %v4585
        %v5555 = vadd.f32 %v4354, %v4590
        %v5556 = vadd.f32 %v4360, %v4595
        %v5557 = vadd.f32 %v4364, %v4600
        %v5558 = vmax.f32 %v5554, 0.0
        %v5559 = vmax.f32 %v5555, 0.0
        %v5560 = vmax.f32 %v5556, 0.0
        %v5561 = vmax.f32 %v5557, 0.0
        %v5562 = vadd.f32 %v4401, %v4585
        %v5563 = vadd.f32 %v4405, %v4590
        %v5564 = vadd.f32 %v4411, %v4595
        %v5565 = vadd.f32 %v4415, %v4600
        %v5566 = vmax.f32 %v5562, 0.0
        %v5567 = vmax.f32 %v5563, 0.0
        %v5568 = vmax.f32 %v5564, 0.0
        %v5569 = vmax.f32 %v5565, 0.0
        %v5570 = vadd.f32 %v4403, %v4585
        %v5571 = vadd.f32 %v4407, %v4590
        %v5572 = vadd.f32 %v4413, %v4595
        %v5573 = vadd.f32 %v4417, %v4600
        %v5574 = vmax.f32 %v5570, 0.0
        %v5575 = vmax.f32 %v5571, 0.0
        %v5576 = vmax.f32 %v5572, 0.0
        %v5577 = vmax.f32 %v5573, 0.0
        %v5578 = vadd.f32 %v4454, %v4585
        %v5579 = vadd.f32 %v4458, %v4590
        %v5580 = vadd.f32 %v4464, %v4595
        %v5581 = vadd.f32 %v4468, %v4600
        %v5582 = vmax.f32 %v5578, 0.0
        %v5583 = vmax.f32 %v5579, 0.0
        %v5584 = vmax.f32 %v5580, 0.0
        %v5585 = vmax.f32 %v5581, 0.0
        %v5586 = vadd.f32 %v4456, %v4585
        %v5587 = vadd.f32 %v4460, %v4590
        %v5588 = vadd.f32 %v4466, %v4595
        %v5589 = vadd.f32 %v4470, %v4600
        %v5590 = vmax.f32 %v5586, 0.0
        %v5591 = vmax.f32 %v5587, 0.0
        %v5592 = vmax.f32 %v5588, 0.0
        %v5593 = vmax.f32 %v5589, 0.0
        %v5594 = vadd.f32 %v4507, %v4585
        %v5595 = vadd.f32 %v4511, %v4590
        %v5596 = vadd.f32 %v4517, %v4595
        %v5597 = vadd.f32 %v4521, %v4600
        %v5598 = vmax.f32 %v5594, 0.0
        %v5599 = vmax.f32 %v5595, 0.0
        %v5600 = vmax.f32 %v5596, 0.0
        %v5601 = vmax.f32 %v5597, 0.0
        %v5602 = vadd.f32 %v4509, %v4585
        %v5603 = vadd.f32 %v4513, %v4590
        %v5604 = vadd.f32 %v4519, %v4595
        %v5605 = vadd.f32 %v4523, %v4600
        %v5606 = vmax.f32 %v5602, 0.0
        %v5607 = vmax.f32 %v5603, 0.0
        %v5608 = vmax.f32 %v5604, 0.0
        %v5609 = vmax.f32 %v5605, 0.0
        %v5610 = vadd.f32 %v4560, %v4585
        %v5611 = vadd.f32 %v4564, %v4590
        %v5612 = vadd.f32 %v4570, %v4595
        %v5613 = vadd.f32 %v4574, %v4600
        %v5614 = vmax.f32 %v5610, 0.0
        %v5615 = vmax.f32 %v5611, 0.0
        %v5616 = vmax.f32 %v5612, 0.0
        %v5617 = vmax.f32 %v5613, 0.0
        %v5618 = vadd.f32 %v4562, %v4585
        %v5619 = vadd.f32 %v4566, %v4590
        %v5620 = vadd.f32 %v4572, %v4595
        %v5621 = vadd.f32 %v4576, %v4600
        %v5622 = vmax.f32 %v5618, 0.0
        %v5623 = vmax.f32 %v5619, 0.0
        %v5624 = vmax.f32 %v5620, 0.0
        %v5625 = vmax.f32 %v5621, 0.0
        %v5626 = vadd.f32 %v4606, %v4614
        %v5627 = vadd.f32 %v4607, %v4615
        %v5628 = vadd.f32 %v4608, %v4616
        %v5629 = vadd.f32 %v4609, %v4617
        %v5630 = vadd.f32 %v4622, %v4630
        %v5631 = vadd.f32 %v4623, %v4631
        %v5632 = vadd.f32 %v4624, %v4632
        %v5633 = vadd.f32 %v4625, %v4633
        %v5634 = vadd.f32 %v4638, %v4646
        %v5635 = vadd.f32 %v4639, %v4647
        %v5636 = vadd.f32 %v4640, %v4648
        %v5637 = vadd.f32 %v4641, %v4649
        %v5638 = vadd.f32 %v4654, %v4662
        %v5639 = vadd.f32 %v4655, %v4663
        %v5640 = vadd.f32 %v4656, %v4664
        %v5641 = vadd.f32 %v4657, %v4665
        %v5642 = vadd.f32 %v4670, %v4678
        %v5643 = vadd.f32 %v4671, %v4679
        %v5644 = vadd.f32 %v4672, %v4680
        %v5645 = vadd.f32 %v4673, %v4681
        %v5646 = vadd.f32 %v4686, %v4694
        %v5647 = vadd.f32 %v4687, %v4695
        %v5648 = vadd.f32 %v4688, %v4696
        %v5649 = vadd.f32 %v4689, %v4697
        %v5650 = vadd.f32 %v4702, %v4710
        %v5651 = vadd.f32 %v4703, %v4711
        %v5652 = vadd.f32 %v4704, %v4712
        %v5653 = vadd.f32 %v4705, %v4713
        %v5654 = vadd.f32 %v4718, %v4726
        %v5655 = vadd.f32 %v4719, %v4727
        %v5656 = vadd.f32 %v4720, %v4728
        %v5657 = vadd.f32 %v4721, %v4729
        %v5658 = vadd.f32 %v4734, %v4742
        %v5659 = vadd.f32 %v4735, %v4743
        %v5660 = vadd.f32 %v4736, %v4744
        %v5661 = vadd.f32 %v4737, %v4745
        %v5662 = vadd.f32 %v4750, %v4758
        %v5663 = vadd.f32 %v4751, %v4759
        %v5664 = vadd.f32 %v4752, %v4760
        %v5665 = vadd.f32 %v4753, %v4761
        %v5666 = vadd.f32 %v4766, %v4774
        %v5667 = vadd.f32 %v4767, %v4775
        %v5668 = vadd.f32 %v4768, %v4776
        %v5669 = vadd.f32 %v4769, %v4777
        %v5670 = vadd.f32 %v4782, %v4790
        %v5671 = vadd.f32 %v4783, %v4791
        %v5672 = vadd.f32 %v4784, %v4792
        %v5673 = vadd.f32 %v4785, %v4793
        %v5674 = vadd.f32 %v4798, %v4806
        %v5675 = vadd.f32 %v4799, %v4807
        %v5676 = vadd.f32 %v4800, %v4808
        %v5677 = vadd.f32 %v4801, %v4809
        %v5678 = vadd.f32 %v4814, %v4822
        %v5679 = vadd.f32 %v4815, %v4823
        %v5680 = vadd.f32 %v4816, %v4824
        %v5681 = vadd.f32 %v4817, %v4825
        %v5682 = vadd.f32 %v4830, %v4838
        %v5683 = vadd.f32 %v4831, %v4839
        %v5684 = vadd.f32 %v4832, %v4840
        %v5685 = vadd.f32 %v4833, %v4841
        %v5686 = vadd.f32 %v4846, %v4854
        %v5687 = vadd.f32 %v4847, %v4855
        %v5688 = vadd.f32 %v4848, %v4856
        %v5689 = vadd.f32 %v4849, %v4857
        %v5690 = vadd.f32 %v4862, %v4870
        %v5691 = vadd.f32 %v4863, %v4871
        %v5692 = vadd.f32 %v4864, %v4872
        %v5693 = vadd.f32 %v4865, %v4873
        %v5694 = vadd.f32 %v4878, %v4886
        %v5695 = vadd.f32 %v4879, %v4887
        %v5696 = vadd.f32 %v4880, %v4888
        %v5697 = vadd.f32 %v4881, %v4889
        %v5698 = vadd.f32 %v4894, %v4902
        %v5699 = vadd.f32 %v4895, %v4903
        %v5700 = vadd.f32 %v4896, %v4904
        %v5701 = vadd.f32 %v4897, %v4905
        %v5702 = vadd.f32 %v4910, %v4918
        %v5703 = vadd.f32 %v4911, %v4919
        %v5704 = vadd.f32 %v4912, %v4920
        %v5705 = vadd.f32 %v4913, %v4921
        %v5706 = vadd.f32 %v4926, %v4934
        %v5707 = vadd.f32 %v4927, %v4935
        %v5708 = vadd.f32 %v4928, %v4936
        %v5709 = vadd.f32 %v4929, %v4937
        %v5710 = vadd.f32 %v4942, %v4950
        %v5711 = vadd.f32 %v4943, %v4951
        %v5712 = vadd.f32 %v4944, %v4952
        %v5713 = vadd.f32 %v4945, %v4953
        %v5714 = vadd.f32 %v4958, %v4966
        %v5715 = vadd.f32 %v4959, %v4967
        %v5716 = vadd.f32 %v4960, %v4968
        %v5717 = vadd.f32 %v4961, %v4969
        %v5718 = vadd.f32 %v4974, %v4982
        %v5719 = vadd.f32 %v4975, %v4983
        %v5720 = vadd.f32 %v4976, %v4984
        %v5721 = vadd.f32 %v4977, %v4985
        %v5722 = vadd.f32 %v4990, %v4998
        %v5723 = vadd.f32 %v4991, %v4999
        %v5724 = vadd.f32 %v4992, %v5000
        %v5725 = vadd.f32 %v4993, %v5001
        %v5726 = vadd.f32 %v5006, %v5014
        %v5727 = vadd.f32 %v5007, %v5015
        %v5728 = vadd.f32 %v5008, %v5016
        %v5729 = vadd.f32 %v5009, %v5017
        %v5730 = vadd.f32 %v5022, %v5030
        %v5731 = vadd.f32 %v5023, %v5031
        %v5732 = vadd.f32 %v5024, %v5032
        %v5733 = vadd.f32 %v5025, %v5033
        %v5734 = vadd.f32 %v5038, %v5046
        %v5735 = vadd.f32 %v5039, %v5047
        %v5736 = vadd.f32 %v5040, %v5048
        %v5737 = vadd.f32 %v5041, %v5049
        %v5738 = vadd.f32 %v5054, %v5062
        %v5739 = vadd.f32 %v5055, %v5063
        %v5740 = vadd.f32 %v5056, %v5064
        %v5741 = vadd.f32 %v5057, %v5065
        %v5742 = vadd.f32 %v5070, %v5078
        %v5743 = vadd.f32 %v5071, %v5079
        %v5744 = vadd.f32 %v5072, %v5080
        %v5745 = vadd.f32 %v5073, %v5081
        %v5746 = vadd.f32 %v5086, %v5094
        %v5747 = vadd.f32 %v5087, %v5095
        %v5748 = vadd.f32 %v5088, %v5096
        %v5749 = vadd.f32 %v5089, %v5097
        %v5750 = vadd.f32 %v5102, %v5110
        %v5751 = vadd.f32 %v5103, %v5111
        %v5752 = vadd.f32 %v5104, %v5112
        %v5753 = vadd.f32 %v5105, %v5113
        %v5754 = vadd.f32 %v5118, %v5126
        %v5755 = vadd.f32 %v5119, %v5127
        %v5756 = vadd.f32 %v5120, %v5128
        %v5757 = vadd.f32 %v5121, %v5129
        %v5758 = vadd.f32 %v5134, %v5142
        %v5759 = vadd.f32 %v5135, %v5143
        %v5760 = vadd.f32 %v5136, %v5144
        %v5761 = vadd.f32 %v5137, %v5145
        %v5762 = vadd.f32 %v5150, %v5158
        %v5763 = vadd.f32 %v5151, %v5159
        %v5764 = vadd.f32 %v5152, %v5160
        %v5765 = vadd.f32 %v5153, %v5161
        %v5766 = vadd.f32 %v5166, %v5174
        %v5767 = vadd.f32 %v5167, %v5175
        %v5768 = vadd.f32 %v5168, %v5176
        %v5769 = vadd.f32 %v5169, %v5177
        %v5770 = vadd.f32 %v5182, %v5190
        %v5771 = vadd.f32 %v5183, %v5191
        %v5772 = vadd.f32 %v5184, %v5192
        %v5773 = vadd.f32 %v5185, %v5193
        %v5774 = vadd.f32 %v5198, %v5206
        %v5775 = vadd.f32 %v5199, %v5207
        %v5776 = vadd.f32 %v5200, %v5208
        %v5777 = vadd.f32 %v5201, %v5209
        %v5778 = vadd.f32 %v5214, %v5222
        %v5779 = vadd.f32 %v5215, %v5223
        %v5780 = vadd.f32 %v5216, %v5224
        %v5781 = vadd.f32 %v5217, %v5225
        %v5782 = vadd.f32 %v5230, %v5238
        %v5783 = vadd.f32 %v5231, %v5239
        %v5784 = vadd.f32 %v5232, %v5240
        %v5785 = vadd.f32 %v5233, %v5241
        %v5786 = vadd.f32 %v5246, %v5254
        %v5787 = vadd.f32 %v5247, %v5255
        %v5788 = vadd.f32 %v5248, %v5256
        %v5789 = vadd.f32 %v5249, %v5257
        %v5790 = vadd.f32 %v5262, %v5270
        %v5791 = vadd.f32 %v5263, %v5271
        %v5792 = vadd.f32 %v5264, %v5272
        %v5793 = vadd.f32 %v5265, %v5273
        %v5794 = vadd.f32 %v5278, %v5286
        %v5795 = vadd.f32 %v5279, %v5287
        %v5796 = vadd.f32 %v5280, %v5288
        %v5797 = vadd.f32 %v5281, %v5289
        %v5798 = vadd.f32 %v5294, %v5302
        %v5799 = vadd.f32 %v5295, %v5303
        %v5800 = vadd.f32 %v5296, %v5304
        %v5801 = vadd.f32 %v5297, %v5305
        %v5802 = vadd.f32 %v5310, %v5318
        %v5803 = vadd.f32 %v5311, %v5319
        %v5804 = vadd.f32 %v5312, %v5320
        %v5805 = vadd.f32 %v5313, %v5321
        %v5806 = vadd.f32 %v5326, %v5334
        %v5807 = vadd.f32 %v5327, %v5335
        %v5808 = vadd.f32 %v5328, %v5336
        %v5809 = vadd.f32 %v5329, %v5337
        %v5810 = vadd.f32 %v5342, %v5350
        %v5811 = vadd.f32 %v5343, %v5351
        %v5812 = vadd.f32 %v5344, %v5352
        %v5813 = vadd.f32 %v5345, %v5353
        %v5814 = vadd.f32 %v5358, %v5366
        %v5815 = vadd.f32 %v5359, %v5367
        %v5816 = vadd.f32 %v5360, %v5368
        %v5817 = vadd.f32 %v5361, %v5369
        %v5818 = vadd.f32 %v5374, %v5382
        %v5819 = vadd.f32 %v5375, %v5383
        %v5820 = vadd.f32 %v5376, %v5384
        %v5821 = vadd.f32 %v5377, %v5385
        %v5822 = vadd.f32 %v5390, %v5398
        %v5823 = vadd.f32 %v5391, %v5399
        %v5824 = vadd.f32 %v5392, %v5400
        %v5825 = vadd.f32 %v5393, %v5401
        %v5826 = vadd.f32 %v5406, %v5414
        %v5827 = vadd.f32 %v5407, %v5415
        %v5828 = vadd.f32 %v5408, %v5416
        %v5829 = vadd.f32 %v5409, %v5417
        %v5830 = vadd.f32 %v5422, %v5430
        %v5831 = vadd.f32 %v5423, %v5431
        %v5832 = vadd.f32 %v5424, %v5432
        %v5833 = vadd.f32 %v5425, %v5433
        %v5834 = vadd.f32 %v5438, %v5446
        %v5835 = vadd.f32 %v5439, %v5447
        %v5836 = vadd.f32 %v5440, %v5448
        %v5837 = vadd.f32 %v5441, %v5449
        %v5838 = vadd.f32 %v5454, %v5462
        %v5839 = vadd.f32 %v5455, %v5463
        %v5840 = vadd.f32 %v5456, %v5464
        %v5841 = vadd.f32 %v5457, %v5465
        %v5842 = vadd.f32 %v5470, %v5478
        %v5843 = vadd.f32 %v5471, %v5479
        %v5844 = vadd.f32 %v5472, %v5480
        %v5845 = vadd.f32 %v5473, %v5481
        %v5846 = vadd.f32 %v5486, %v5494
        %v5847 = vadd.f32 %v5487, %v5495
        %v5848 = vadd.f32 %v5488, %v5496
        %v5849 = vadd.f32 %v5489, %v5497
        %v5850 = vadd.f32 %v5502, %v5510
        %v5851 = vadd.f32 %v5503, %v5511
        %v5852 = vadd.f32 %v5504, %v5512
        %v5853 = vadd.f32 %v5505, %v5513
        %v5854 = vadd.f32 %v5518, %v5526
        %v5855 = vadd.f32 %v5519, %v5527
        %v5856 = vadd.f32 %v5520, %v5528
        %v5857 = vadd.f32 %v5521, %v5529
        %v5858 = vadd.f32 %v5534, %v5542
        %v5859 = vadd.f32 %v5535, %v5543
        %v5860 = vadd.f32 %v5536, %v5544
        %v5861 = vadd.f32 %v5537, %v5545
        %v5862 = vadd.f32 %v5550, %v5558
        %v5863 = vadd.f32 %v5551, %v5559
        %v5864 = vadd.f32 %v5552, %v5560
        %v5865 = vadd.f32 %v5553, %v5561
        %v5866 = vadd.f32 %v5566, %v5574
        %v5867 = vadd.f32 %v5567, %v5575
        %v5868 = vadd.f32 %v5568, %v5576
        %v5869 = vadd.f32 %v5569, %v5577
        %v5870 = vadd.f32 %v5582, %v5590
        %v5871 = vadd.f32 %v5583, %v5591
        %v5872 = vadd.f32 %v5584, %v5592
        %v5873 = vadd.f32 %v5585, %v5593
        %v5874 = vadd.f32 %v5598, %v5606
        %v5875 = vadd.f32 %v5599, %v5607
        %v5876 = vadd.f32 %v5600, %v5608
        %v5877 = vadd.f32 %v5601, %v5609
        %v5878 = vadd.f32 %v5614, %v5622
        %v5879 = vadd.f32 %v5615, %v5623
        %v5880 = vadd.f32 %v5616, %v5624
        %v5881 = vadd.f32 %v5617, %v5625
        %v5882 = vadd.f32 %v5626, %v5630
        %v5883 = vadd.f32 %v5627, %v5631
        %v5884 = vadd.f32 %v5628, %v5632
        %v5885 = vadd.f32 %v5629, %v5633
        %v5886 = vadd.f32 %v5634, %v5638
        %v5887 = vadd.f32 %v5635, %v5639
        %v5888 = vadd.f32 %v5636, %v5640
        %v5889 = vadd.f32 %v5637, %v5641
        %v5890 = vadd.f32 %v5642, %v5646
        %v5891 = vadd.f32 %v5643, %v5647
        %v5892 = vadd.f32 %v5644, %v5648
        %v5893 = vadd.f32 %v5645, %v5649
        %v5894 = vadd.f32 %v5650, %v5654
        %v5895 = vadd.f32 %v5651, %v5655
        %v5896 = vadd.f32 %v5652, %v5656
        %v5897 = vadd.f32 %v5653, %v5657
        %v5898 = vadd.f32 %v5658, %v5662
        %v5899 = vadd.f32 %v5659, %v5663
        %v5900 = vadd.f32 %v5660, %v5664
        %v5901 = vadd.f32 %v5661, %v5665
        %v5902 = vadd.f32 %v5666, %v5670
        %v5903 = vadd.f32 %v5667, %v5671
        %v5904 = vadd.f32 %v5668, %v5672
        %v5905 = vadd.f32 %v5669, %v5673
        %v5906 = vadd.f32 %v5674, %v5678
        %v5907 = vadd.f32 %v5675, %v5679
        %v5908 = vadd.f32 %v5676, %v5680
        %v5909 = vadd.f32 %v5677, %v5681
        %v5910 = vadd.f32 %v5682, %v5686
        %v5911 = vadd.f32 %v5683, %v5687
        %v5912 = vadd.f32 %v5684, %v5688
        %v5913 = vadd.f32 %v5685, %v5689
        %v5914 = vadd.f32 %v5690, %v5694
        %v5915 = vadd.f32 %v5691, %v5695
        %v5916 = vadd.f32 %v5692, %v5696
        %v5917 = vadd.f32 %v5693, %v5697
        %v5918 = vadd.f32 %v5698, %v5702
        %v5919 = vadd.f32 %v5699, %v5703
        %v5920 = vadd.f32 %v5700, %v5704
        %v5921 = vadd.f32 %v5701, %v5705
        %v5922 = vadd.f32 %v5706, %v5710
        %v5923 = vadd.f32 %v5707, %v5711
        %v5924 = vadd.f32 %v5708, %v5712
        %v5925 = vadd.f32 %v5709, %v5713
        %v5926 = vadd.f32 %v5714, %v5718
        %v5927 = vadd.f32 %v5715, %v5719
        %v5928 = vadd.f32 %v5716, %v5720
        %v5929 = vadd.f32 %v5717, %v5721
        %v5930 = vadd.f32 %v5722, %v5726
        %v5931 = vadd.f32 %v5723, %v5727
        %v5932 = vadd.f32 %v5724, %v5728
        %v5933 = vadd.f32 %v5725, %v5729
        %v5934 = vadd.f32 %v5730, %v5734
        %v5935 = vadd.f32 %v5731, %v5735
        %v5936 = vadd.f32 %v5732, %v5736
        %v5937 = vadd.f32 %v5733, %v5737
        %v5938 = vadd.f32 %v5738, %v5742
        %v5939 = vadd.f32 %v5739, %v5743
        %v5940 = vadd.f32 %v5740, %v5744
        %v5941 = vadd.f32 %v5741, %v5745
        %v5942 = vadd.f32 %v5746, %v5750
        %v5943 = vadd.f32 %v5747, %v5751
        %v5944 = vadd.f32 %v5748, %v5752
        %v5945 = vadd.f32 %v5749, %v5753
        %v5946 = vadd.f32 %v5754, %v5758
        %v5947 = vadd.f32 %v5755, %v5759
        %v5948 = vadd.f32 %v5756, %v5760
        %v5949 = vadd.f32 %v5757, %v5761
        %v5950 = vadd.f32 %v5762, %v5766
        %v5951 = vadd.f32 %v5763, %v5767
        %v5952 = vadd.f32 %v5764, %v5768
        %v5953 = vadd.f32 %v5765, %v5769
        %v5954 = vadd.f32 %v5770, %v5774
        %v5955 = vadd.f32 %v5771, %v5775
        %v5956 = vadd.f32 %v5772, %v5776
        %v5957 = vadd.f32 %v5773, %v5777
        %v5958 = vadd.f32 %v5778, %v5782
        %v5959 = vadd.f32 %v5779, %v5783
        %v5960 = vadd.f32 %v5780, %v5784
        %v5961 = vadd.f32 %v5781, %v5785
        %v5962 = vadd.f32 %v5786, %v5790
        %v5963 = vadd.f32 %v5787, %v5791
        %v5964 = vadd.f32 %v5788, %v5792
        %v5965 = vadd.f32 %v5789, %v5793
        %v5966 = vadd.f32 %v5794, %v5798
        %v5967 = vadd.f32 %v5795, %v5799
        %v5968 = vadd.f32 %v5796, %v5800
        %v5969 = vadd.f32 %v5797, %v5801
        %v5970 = vadd.f32 %v5802, %v5806
        %v5971 = vadd.f32 %v5803, %v5807
        %v5972 = vadd.f32 %v5804, %v5808
        %v5973 = vadd.f32 %v5805, %v5809
        %v5974 = vadd.f32 %v5810, %v5814
        %v5975 = vadd.f32 %v5811, %v5815
        %v5976 = vadd.f32 %v5812, %v5816
        %v5977 = vadd.f32 %v5813, %v5817
        %v5978 = vadd.f32 %v5818, %v5822
        %v5979 = vadd.f32 %v5819, %v5823
        %v5980 = vadd.f32 %v5820, %v5824
        %v5981 = vadd.f32 %v5821, %v5825
        %v5982 = vadd.f32 %v5826, %v5830
        %v5983 = vadd.f32 %v5827, %v5831
        %v5984 = vadd.f32 %v5828, %v5832
        %v5985 = vadd.f32 %v5829, %v5833
        %v5986 = vadd.f32 %v5834, %v5838
        %v5987 = vadd.f32 %v5835, %v5839
        %v5988 = vadd.f32 %v5836, %v5840
        %v5989 = vadd.f32 %v5837, %v5841
        %v5990 = vadd.f32 %v5842, %v5846
        %v5991 = vadd.f32 %v5843, %v5847
        %v5992 = vadd.f32 %v5844, %v5848
        %v5993 = vadd.f32 %v5845, %v5849
        %v5994 = vadd.f32 %v5850, %v5854
        %v5995 = vadd.f32 %v5851, %v5855
        %v5996 = vadd.f32 %v5852, %v5856
        %v5997 = vadd.f32 %v5853, %v5857
        %v5998 = vadd.f32 %v5858, %v5862
        %v5999 = vadd.f32 %v5859, %v5863
        %v6000 = vadd.f32 %v5860, %v5864
        %v6001 = vadd.f32 %v5861, %v5865
        %v6002 = vadd.f32 %v5866, %v5870
        %v6003 = vadd.f32 %v5867, %v5871
        %v6004 = vadd.f32 %v5868, %v5872
        %v6005 = vadd.f32 %v5869, %v5873
        %v6006 = vadd.f32 %v5874, %v5878
        %v6007 = vadd.f32 %v5875, %v5879
        %v6008 = vadd.f32 %v5876, %v5880
        %v6009 = vadd.f32 %v5877, %v5881
        %v6010 = vadd.f32 %v5882, %v5886
        %v6011 = vadd.f32 %v5883, %v5887
        %v6012 = vadd.f32 %v5884, %v5888
        %v6013 = vadd.f32 %v5885, %v5889
        %v6014 = vadd.f32 %v5890, %v5894
        %v6015 = vadd.f32 %v5891, %v5895
        %v6016 = vadd.f32 %v5892, %v5896
        %v6017 = vadd.f32 %v5893, %v5897
        %v6018 = vadd.f32 %v5898, %v5902
        %v6019 = vadd.f32 %v5899, %v5903
        %v6020 = vadd.f32 %v5900, %v5904
        %v6021 = vadd.f32 %v5901, %v5905
        %v6022 = vadd.f32 %v5906, %v5910
        %v6023 = vadd.f32 %v5907, %v5911
        %v6024 = vadd.f32 %v5908, %v5912
        %v6025 = vadd.f32 %v5909, %v5913
        %v6026 = vadd.f32 %v5914, %v5918
        %v6027 = vadd.f32 %v5915, %v5919
        %v6028 = vadd.f32 %v5916, %v5920
        %v6029 = vadd.f32 %v5917, %v5921
        %v6030 = vadd.f32 %v5922, %v5926
        %v6031 = vadd.f32 %v5923, %v5927
        %v6032 = vadd.f32 %v5924, %v5928
        %v6033 = vadd.f32 %v5925, %v5929
        %v6034 = vadd.f32 %v5930, %v5934
        %v6035 = vadd.f32 %v5931, %v5935
        %v6036 = vadd.f32 %v5932, %v5936
        %v6037 = vadd.f32 %v5933, %v5937
        %v6038 = vadd.f32 %v5938, %v5942
        %v6039 = vadd.f32 %v5939, %v5943
        %v6040 = vadd.f32 %v5940, %v5944
        %v6041 = vadd.f32 %v5941, %v5945
        %v6042 = vadd.f32 %v5946, %v5950
        %v6043 = vadd.f32 %v5947, %v5951
        %v6044 = vadd.f32 %v5948, %v5952
        %v6045 = vadd.f32 %v5949, %v5953
        %v6046 = vadd.f32 %v5954, %v5958
        %v6047 = vadd.f32 %v5955, %v5959
        %v6048 = vadd.f32 %v5956, %v5960
        %v6049 = vadd.f32 %v5957, %v5961
        %v6050 = vadd.f32 %v5962, %v5966
        %v6051 = vadd.f32 %v5963, %v5967
        %v6052 = vadd.f32 %v5964, %v5968
        %v6053 = vadd.f32 %v5965, %v5969
        %v6054 = vadd.f32 %v5970, %v5974
        %v6055 = vadd.f32 %v5971, %v5975
        %v6056 = vadd.f32 %v5972, %v5976
        %v6057 = vadd.f32 %v5973, %v5977
        %v6058 = vadd.f32 %v5978, %v5982
        %v6059 = vadd.f32 %v5979, %v5983
        %v6060 = vadd.f32 %v5980, %v5984
        %v6061 = vadd.f32 %v5981, %v5985
        %v6062 = vadd.f32 %v5986, %v5990
        %v6063 = vadd.f32 %v5987, %v5991
        %v6064 = vadd.f32 %v5988, %v5992
        %v6065 = vadd.f32 %v5989, %v5993
        %v6066 = vadd.f32 %v5994, %v5998
        %v6067 = vadd.f32 %v5995, %v5999
        %v6068 = vadd.f32 %v5996, %v6000
        %v6069 = vadd.f32 %v5997, %v6001
        %v6070 = vadd.f32 %v6002, %v6006
        %v6071 = vadd.f32 %v6003, %v6007
        %v6072 = vadd.f32 %v6004, %v6008
        %v6073 = vadd.f32 %v6005, %v6009
        %v6074 = vadd.f32 %v6010, %v6014
        %v6075 = vadd.f32 %v6011, %v6015
        %v6076 = vadd.f32 %v6012, %v6016
        %v6077 = vadd.f32 %v6013, %v6017
        %v6078 = vadd.f32 %v6018, %v6022
        %v6079 = vadd.f32 %v6019, %v6023
        %v6080 = vadd.f32 %v6020, %v6024
        %v6081 = vadd.f32 %v6021, %v6025
        %v6082 = vadd.f32 %v6026, %v6030
        %v6083 = vadd.f32 %v6027, %v6031
        %v6084 = vadd.f32 %v6028, %v6032
        %v6085 = vadd.f32 %v6029, %v6033
        %v6086 = vadd.f32 %v6034, %v6038
        %v6087 = vadd.f32 %v6035, %v6039
        %v6088 = vadd.f32 %v6036, %v6040
        %v6089 = vadd.f32 %v6037, %v6041
        %v6090 = vadd.f32 %v6042, %v6046
        %v6091 = vadd.f32 %v6043, %v6047
        %v6092 = vadd.f32 %v6044, %v6048
        %v6093 = vadd.f32 %v6045, %v6049
        %v6094 = vadd.f32 %v6050, %v6054
        %v6095 = vadd.f32 %v6051, %v6055
        %v6096 = vadd.f32 %v6052, %v6056
        %v6097 = vadd.f32 %v6053, %v6057
        %v6098 = vadd.f32 %v6058, %v6062
        %v6099 = vadd.f32 %v6059, %v6063
        %v6100 = vadd.f32 %v6060, %v6064
        %v6101 = vadd.f32 %v6061, %v6065
        %v6102 = vadd.f32 %v6066, %v6070
        %v6103 = vadd.f32 %v6067, %v6071
        %v6104 = vadd.f32 %v6068, %v6072
        %v6105 = vadd.f32 %v6069, %v6073
        %v6106 = vadd.f32 %v6074, %v6078
        %v6107 = vadd.f32 %v6075, %v6079
        %v6108 = vadd.f32 %v6076, %v6080
        %v6109 = vadd.f32 %v6077, %v6081
        %v6110 = vadd.f32 %v6082, %v6086
        %v6111 = vadd.f32 %v6083, %v6087
        %v6112 = vadd.f32 %v6084, %v6088
        %v6113 = vadd.f32 %v6085, %v6089
        %v6114 = vadd.f32 %v6090, %v6094
        %v6115 = vadd.f32 %v6091, %v6095
        %v6116 = vadd.f32 %v6092, %v6096
        %v6117 = vadd.f32 %v6093, %v6097
        %v6118 = vadd.f32 %v6098, %v6102
        %v6119 = vadd.f32 %v6099, %v6103
        %v6120 = vadd.f32 %v6100, %v6104
        %v6121 = vadd.f32 %v6101, %v6105
        %v6122 = vadd.f32 %v6106, %v6110
        %v6123 = vadd.f32 %v6107, %v6111
        %v6124 = vadd.f32 %v6108, %v6112
        %v6125 = vadd.f32 %v6109, %v6113
        %v6126 = vadd.f32 %v6114, %v6118
        %v6127 = vadd.f32 %v6115, %v6119
        %v6128 = vadd.f32 %v6116, %v6120
        %v6129 = vadd.f32 %v6117, %v6121
        %v6130 = vadd.f32 %v6122, %v6126
        %v6131 = vadd.f32 %v6123, %v6127
        %v6132 = vadd.f32 %v6124, %v6128
        %v6133 = vadd.f32 %v6125, %v6129
        %v6134 = vmul.f32 %v6130, 0.0078125
        %v6135 = vmul.f32 %v6131, 0.0078125
        %v6136 = vmul.f32 %v6132, 0.0078125
        %v6137 = vmul.f32 %v6133, 0.0078125
        %6138 = vst [vmem:[%s164] sm:$0xff] %v6134
        %6139 = vst [vmem:[%s164 + $0x8] sm:$0xff] %v6135
        %6140 = vst [vmem:[%s164 + $0x10] sm:$0xff] %v6136
        %6141 = vst [vmem:[%s164 + $0x18] sm:$0xff] %v6137
        %s6142 = sand.u32 %s93, 1
        %s6143 = scalar_lea.sflag [#allocation3], %s6142
        %s6144 = sand.u32 %s93, 1
        %s6145 = smul.addr %s6144, 32
        %s6146 = scalar_lea.vmem [#allocation2], %s6145
        // Predicated region
        $region33: #{chunked_forward.1} parent=31 // pred_check
          %p6147 = pneg %p103
        $region34: #{chunked_forward.1} parent=31 // pred_check_branch
          %6149 = sbr.rel (%p6147) target = $region36
        $region35: #{chunked_forward.1} parent=31 // pred_region
          %s6151 = ssub.s32 512, 512
          %6152 = vsyncadd %s6143, %s6151
          %s6153 = smul.addr %s17, 128
          %s6154 = scalar_lea.hbm %s3, %s6153
          %s6155 = sshll.u32 %s6146, 4
          %s6156 = int_to_ptr.vmem [resolvable:$true] %s6155
          %6161 = dma.vmem_to_hbm [thread:$0]  %s6156, 512, %s6154, %s6143, 128, 256, 8
        $region36: #{chunked_forward.1} parent=31 // pred_fallthru
          _
      $region32: #{chunked_forward.1} parent=5 // pred_fallthru
        _
      %p6162 = scmp.le.s32.totalorder 2, %s12
      // Predicated region
      $region37: #{chunked_forward.1} parent=5 // pred_check
        %p6163 = pneg %p6162
      $region38: #{chunked_forward.1} parent=5 // pred_check_branch
        %6165 = sbr.rel (%p6163) target = $region40
      $region39: #{chunked_forward.1} parent=5 // pred_region
        %s6166 = ssub.s32 %s12, 2
        // Predicated region
        $region41: #{chunked_forward.1} parent=39 // pred_check
          %p6167 = pneg %p109
        $region42: #{chunked_forward.1} parent=39 // pred_check_branch
          %6169 = sbr.rel (%p6167) target = $region44
        $region43: #{chunked_forward.1} parent=39 // pred_region
          %s6170 = sand.u32 %s94, 1
          %s6171 = scalar_lea.sflag [#allocation3], %s6170
          %s6172 = sand.u32 %s94, 1
          %s6173 = smul.addr %s6172, 32
          %s6174 = scalar_lea.vmem [#allocation2], %s6173
          %6175 = dma.done %s6171, 512
        $region44: #{chunked_forward.1} parent=39 // pred_fallthru
          _
      $region40: #{chunked_forward.1} parent=5 // pred_fallthru
        _
    $region6: #{chunked_forward.1} parent=1 // loop_footer
      %s16 = sadd.s32 1, %s12
    $region7: #{chunked_forward.1} parent=1 // loop_footer_branch
      %11 = sbr.rel target = $region3
    $region8: #{chunked_forward.1} parent=1 // loop_exit
      _
    %6176 = vsyncpa [#allocation3], 1
    %s6177 = scalar_lea.sflag [#allocation3], 1
    %6178 = vsyncpa %s6177, 1

</llo_original>
